<compile_context>
chip_gen: v7x
topology: tpu7x:2x2x1
jax: 0.10.0
libtpu: 0.0.40
codegen_flags: <defaults>
</compile_context>

<pallas_src>
import jax
import jax.numpy as jnp
from jax.experimental import pallas as pl

# ---------------- config (small synthetic shapes) ----------------
B, L, D, H = 2, 8, 32, 2            # batch, seq, d_model, n_head
D2 = D // 2                         # q/k projection width = 16
DK = D2 // H                        # q/k per-head dim = 8
DV = D // H                         # v per-head dim = head_dim = 16
KG_MID = 16                         # k_gate hidden width (folded away host-side)
KEY_DIM = D // H
SCALING = KEY_DIM ** -0.5           # 0.25 (module uses head_dim, not DK)
NORMALIZER = 16.0
MLP_RATIO, MULTIPLE_OF = 4, 16
MLP_HIDDEN = MULTIPLE_OF * ((int(D * MLP_RATIO * 2 / 3) + MULTIPLE_OF - 1) // MULTIPLE_OF)  # 96
MH_PAD = 128                        # lane-padded MLP hidden
EPS = 1e-5
M = B * L                           # flattened rows = 16
LOG2_L = L.bit_length() - 1         # 3 (L must be a power of two)
LOG2_DV = DV.bit_length() - 1       # 4 (DV must be a power of two)

# lane offsets inside the fused projection weight [q | k*scaling | v | g | k_gate(folded) | pad]
OFF_Q, OFF_K, OFF_V, OFF_G, OFF_KG = 0, D2, 2 * D2, 2 * D2 + D, 2 * D2 + 2 * D
WCAT = OFF_KG + D2                  # 112
WCAT_PAD = 128


def _rms(x, w):
    return x * jax.lax.rsqrt(jnp.mean(x * x, axis=-1, keepdims=True) + EPS) * w


# ---------------- the fused kernel ----------------
def gla_block_kernel(x_ref, slab_ref, wcat_ref, w13_ref, woc_ref, out_ref, state_ref):
    f32 = jnp.float32
    hi = jax.lax.Precision.HIGHEST
    x = x_ref[...]                                                     # (M, D)

    # small params packed in one (4, 128) slab
    ln1 = slab_ref[0:1, 0:D]
    ln2 = slab_ref[1:2, 0:D]
    bg = slab_ref[2:3, 0:D]
    bkg2 = slab_ref[3:4, 0:D2]

    # ---- ln_1 (RMSNorm, eps=1e-5) ----
    xn = _rms(x, ln1)

    # ---- fused projections: one lane-dense (M,128) matmul for [q|k|v|g|k_gate] ----
    proj = jnp.dot(xn, wcat_ref[...], preferred_element_type=f32)      # (M, 128)
    q = proj[:, OFF_Q:OFF_Q + D2]
    k = proj[:, OFF_K:OFF_K + D2]             # key_dim**-0.5 already folded into weight
    v = proj[:, OFF_V:OFF_V + D]
    g = proj[:, OFF_G:OFF_G + D] + bg
    kg = proj[:, OFF_KG:OFF_KG + D2] + bkg2   # both k_gate linears folded host-side
    # logsigmoid(kg) / normalizer ; logsigmoid(x) = min(x,0) - log1p(exp(-|x|))
    gk = (jnp.minimum(kg, 0.0) - jnp.log1p(jnp.exp(-jnp.abs(kg)))) / NORMALIZER  # (M, D2)

    # ---- block-diagonal inclusive causal mask via iota + shifts (no concats, no int div) ----
    rM = jax.lax.broadcasted_iota(jnp.int32, (M, M), 0)
    cM = jax.lax.broadcasted_iota(jnp.int32, (M, M), 1)
    same_b = (rM >> LOG2_L) == (cM >> LOG2_L)
    causal = jnp.where((cM <= rM) & same_b, 1.0, 0.0).astype(f32)      # (M, M)

    # per-batch inclusive cumsum of log gates for all head lanes (one masked matmul,
    # default precision: gk is a small bounded value, no HIGHEST needed here).
    G = jnp.dot(causal, gk, preferred_element_type=f32)                # (M, D2)

    # hoisted full-vreg gating (review: avoid per-head partial-vreg multiplies)
    qg = q * jnp.exp(G)                                                # (M, D2)
    kd = k * jnp.exp(-G)                                               # (M, D2)

    # ---- gated linear attention: all batches at once, heads unrolled ----
    # S_t = diag(exp(gk_t)) S_{t-1} + k_t v_t^T ;  o_t = q_t S_t   (closed form at L=8)
    acc = jnp.zeros((M, D), f32)                                       # out_proj accumulator
    for h in range(H):
        sk = slice(h * DK, (h + 1) * DK)
        sv = slice(h * DV, (h + 1) * DV)
        A = jax.lax.dot_general(qg[:, sk], kd[:, sk], (((1,), (1,)), ((), ())),
                                preferred_element_type=f32, precision=hi)        # (M, M)
        oh = jnp.dot(A * causal, v[:, sv], preferred_element_type=f32,
                     precision=hi)                                                # (M, DV)
        # group_norm = LayerNorm over head_dim, no affine, eps=1e-5
        mu = jnp.mean(oh, axis=-1, keepdims=True)
        ohc = oh - mu
        ohn = ohc * jax.lax.rsqrt(jnp.mean(ohc * ohc, axis=-1, keepdims=True) + EPS)
        # output gate + per-head out_proj accumulate (no lane concatenation of heads)
        gh = g[:, sv]
        acc = acc + jnp.dot((gh * jax.nn.sigmoid(gh)) * ohn, woc_ref[sv, :],
                            preferred_element_type=f32)                           # (M, D)

    # ---- final hidden state, lane-dense (B*H, DK*DV) = (4, 128) ----
    # S_L = sum_t exp(G_L - G_t) k_t v_t^T  (argument of exp is <= 0: no overflow).
    # Each (DK, DV) state is flattened into one 128-lane row with two constant 0/1
    # selection matmuls (no sublane->lane reshape, no masked 16-lane stores).
    ei = jax.lax.broadcasted_iota(jnp.int32, (DK, DK * DV), 0)
    ec = jax.lax.broadcasted_iota(jnp.int32, (DK, DK * DV), 1)
    Emat = jnp.where((ec >> LOG2_DV) == ei, 1.0, 0.0).astype(f32)      # (DK, 128) repeat-each
    fi = jax.lax.broadcasted_iota(jnp.int32, (DV, DK * DV), 0)
    fc = jax.lax.broadcasted_iota(jnp.int32, (DV, DK * DV), 1)
    Fmat = jnp.where((fc & (DV - 1)) == fi, 1.0, 0.0).astype(f32)      # (DV, 128) tile

    state_rows = []
    for b in range(B):
        rows = slice(b * L, (b + 1) * L)
        g_last = G[b * L + L - 1:b * L + L, :]                         # (1, D2)
        kdec = k[rows, :] * jnp.exp(g_last - G[rows, :])               # (L, D2)
        for h in range(H):
            sk = slice(h * DK, (h + 1) * DK)
            sv = slice(h * DV, (h + 1) * DV)
            kexp = jnp.dot(kdec[:, sk], Emat, preferred_element_type=f32,
                           precision=hi)                               # (L, 128)
            vexp = jnp.dot(v[rows, sv], Fmat, preferred_element_type=f32,
                           precision=hi)                               # (L, 128)
            state_rows.append(jnp.sum(kexp * vexp, axis=0, keepdims=True))  # (1, 128)
    state_ref[...] = jnp.concatenate(state_rows, axis=0)               # (B*H, 128) lane-dense

    # ---- residual + ln_2 + SwiGLU MLP (hidden padded to 128 lanes) + residual ----
    x_att = x + acc
    xn2 = _rms(x_att, ln2)
    h13 = jnp.dot(xn2, w13_ref[...], preferred_element_type=f32)       # (M, 256) = [h1|h3]
    h1 = h13[:, :MH_PAD]
    h3 = h13[:, MH_PAD:]
    mlp = jnp.dot((h1 * jax.nn.sigmoid(h1)) * h3, woc_ref[D:D + MH_PAD, :],
                  preferred_element_type=f32)
    out_ref[...] = x_att + mlp


# ---------------- wrapper ----------------
def _fs(shape):
    """Full-array BlockSpec (single invocation, no grid)."""
    n = len(shape)
    return pl.BlockSpec(tuple(shape), lambda *_: (0,) * n)


def prepare_params(p):
    """Host-side packing; compute ONCE and reuse across forward calls.
    PyTorch (out,in) -> (in,out); fold key_dim**-0.5 into wk; fold the two k_gate
    linears into one (D, D2) weight; pack all projections into one lane-padded
    (D, 128) weight; pad MLP hidden 96->128 and fuse w1|w3; pack small vectors
    (ln1, ln2, bg, bkg2) into one (4, 128) slab; stack wo on top of padded w2."""
    def row128(vec):
        v = vec.reshape(1, -1).astype(jnp.float32)
        return jnp.pad(v, ((0, 0), (0, 128 - v.shape[1])))

    wcat = jnp.concatenate(
        [p["wq"].T, p["wk"].T * SCALING, p["wv"].T, p["wg"].T,
         p["wkg1"].T @ p["wkg2"].T,                       # fold 2-layer linear k_gate
         jnp.zeros((D, WCAT_PAD - WCAT), jnp.float32)], axis=1)          # (D, 128)
    slab = jnp.concatenate([row128(p["ln1_w"]), row128(p["ln2_w"]),
                            row128(p["bg"]), row128(p["bkg2"])], axis=0)  # (4, 128)
    w13 = jnp.concatenate(
        [jnp.pad(p["w1"].T, ((0, 0), (0, MH_PAD - MLP_HIDDEN))),
         jnp.pad(p["w3"].T, ((0, 0), (0, MH_PAD - MLP_HIDDEN)))], axis=1)  # (D, 256)
    woc = jnp.concatenate(
        [p["wo"].T,
         jnp.pad(p["w2"].T, ((0, MH_PAD - MLP_HIDDEN), (0, 0)))], axis=0)  # (D+128, D)
    return dict(slab=slab, wcat=wcat, w13=w13, woc=woc)


def gla_block_forward(x, prep):
    args = (x.reshape(M, D), prep["slab"], prep["wcat"], prep["w13"], prep["woc"])
    out_shapes = (jax.ShapeDtypeStruct((M, D), jnp.float32),              # block output
                  jax.ShapeDtypeStruct((B * H, DK * DV), jnp.float32))    # lane-dense state
    # Single fused pallas_call: the whole problem (~70 KiB) fits in VMEM, no grid needed.
    out, state = pl.pallas_call(
        gla_block_kernel,
        in_specs=[_fs(a.shape) for a in args],
        out_specs=tuple(_fs(s.shape) for s in out_shapes),
        out_shape=out_shapes,
    )(*args)
    return out.reshape(B, L, D), state.reshape(B, H, DK, DV)


# ---------------- deterministic parameter init ----------------
def init_params(key):
    ks = jax.random.split(key, 12)

    def xavier(k, shape, gain=2 ** -2.5):
        fan_out, fan_in = shape
        bound = gain * (6.0 / (fan_in + fan_out)) ** 0.5
        return jax.random.uniform(k, shape, jnp.float32, -bound, bound)

    def default_linear(k, shape):
        bound = 1.0 / (shape[-1] ** 0.5)
        return jax.random.uniform(k, shape, jnp.float32, -bound, bound)

    return {
        "ln1_w": jnp.ones((D,), jnp.float32),
        "ln2_w": jnp.ones((D,), jnp.float32),
        "wq": xavier(ks[0], (D // 2, D)),
        "wk": xavier(ks[1], (D // 2, D)),
        "wkg1": xavier(ks[2], (KG_MID, D)),
        "wkg2": xavier(ks[3], (D // 2, KG_MID)),
        "bkg2": jax.random.uniform(ks[4], (D // 2,), jnp.float32, -0.25, 0.25),
        "wv": default_linear(ks[5], (D, D)),
        "wg": default_linear(ks[6], (D, D)),
        "bg": jax.random.uniform(ks[7], (D,), jnp.float32, -(D ** -0.5), D ** -0.5),
        "wo": default_linear(ks[8], (D, D)),
        "w1": default_linear(ks[9], (MLP_HIDDEN, D)),
        "w2": default_linear(ks[10], (D, MLP_HIDDEN)),
        "w3": default_linear(ks[11], (MLP_HIDDEN, D)),
    }


# ---------------- pure-JAX reference (for verification) ----------------
def reference_forward(x, p):
    def rmsnorm(t, w):
        return t * jax.lax.rsqrt(jnp.mean(t * t, axis=-1, keepdims=True) + EPS) * w

    xn = rmsnorm(x, p["ln1_w"])
    q = xn @ p["wq"].T
    k = (xn @ p["wk"].T) * SCALING
    kg = (xn @ p["wkg1"].T) @ p["wkg2"].T + p["bkg2"]
    gk = jax.nn.log_sigmoid(kg) / NORMALIZER
    v = xn @ p["wv"].T
    g = xn @ p["wg"].T + p["bg"]

    def to_heads(t, d):
        return t.reshape(B, L, H, d).transpose(0, 2, 1, 3)

    qh, kh, gkh, vh = to_heads(q, DK), to_heads(k, DK), to_heads(gk, DK), to_heads(v, DV)

    def scan_head(q1, k1, g1, v1):
        def step(s, inp):
            qt, kt, gt, vt = inp
            s = jnp.exp(gt)[:, None] * s + kt[:, None] * vt[None, :]
            return s, qt @ s
        s, o = jax.lax.scan(step, jnp.zeros((DK, DV), jnp.float32), (q1, k1, g1, v1))
        return o, s

    o, state = jax.vmap(jax.vmap(scan_head))(qh, kh, gkh, vh)
    mu = jnp.mean(o, -1, keepdims=True)
    var = jnp.mean((o - mu) ** 2, -1, keepdims=True)
    o = (o - mu) * jax.lax.rsqrt(var + EPS)
    o = o.transpose(0, 2, 1, 3).reshape(B, L, D)
    x_att = x + (jax.nn.silu(g) * o) @ p["wo"].T
    xn2 = rmsnorm(x_att, p["ln2_w"])
    h = jax.nn.silu(xn2 @ p["w1"].T) * (xn2 @ p["w3"].T)
    return x_att + h @ p["w2"].T, state


# ---------------- main ----------------
if __name__ == "__main__":
    params = init_params(jax.random.PRNGKey(1))
    x = jax.random.normal(jax.random.PRNGKey(0), (B, L, D), jnp.float32)

    prep = prepare_params(params)          # packed once; reused every step
    fwd = jax.jit(gla_block_forward)
    out, state = fwd(x, prep)
    jax.block_until_ready(out)
    jax.block_until_ready(state)

    ref_out, ref_state = reference_forward(x, params)
    assert bool(jnp.allclose(out, ref_out, rtol=1e-2, atol=1e-2)), "output mismatch"
    assert bool(jnp.allclose(state, ref_state, rtol=1e-2, atol=1e-2)), "state mismatch"
    print("KERNEL_OK")
</pallas_src>

<mosaic_0001>
module attributes {stable_mosaic.version = 11 : i64} {
  func.func @gla_block_kernel(%arg0: memref<16x32xf32, #tpu.memory_space<vmem>>, %arg1: memref<4x128xf32, #tpu.memory_space<vmem>>, %arg2: memref<32x128xf32, #tpu.memory_space<vmem>>, %arg3: memref<32x256xf32, #tpu.memory_space<vmem>>, %arg4: memref<160x32xf32, #tpu.memory_space<vmem>>, %arg5: memref<16x32xf32, #tpu.memory_space<vmem>>, %arg6: memref<4x128xf32, #tpu.memory_space<vmem>>) attributes {dimension_semantics = [], scalar_prefetch = 0 : i64, scratch_operands = 0 : i64, tpu.core_type = #tpu.core_type<tc>} {
    %c0 = arith.constant 0 : index
    %c0_0 = arith.constant 0 : index
    %0 = vector.load %arg0[%c0, %c0_0] : memref<16x32xf32, #tpu.memory_space<vmem>>, vector<16x32xf32>
    %c0_1 = arith.constant 0 : index
    %c0_2 = arith.constant 0 : index
    %1 = vector.load %arg1[%c0_1, %c0_2] : memref<4x128xf32, #tpu.memory_space<vmem>>, vector<1x32xf32>
    %c1 = arith.constant 1 : index
    %c0_3 = arith.constant 0 : index
    %2 = vector.load %arg1[%c1, %c0_3] : memref<4x128xf32, #tpu.memory_space<vmem>>, vector<1x32xf32>
    %c2 = arith.constant 2 : index
    %c0_4 = arith.constant 0 : index
    %3 = vector.load %arg1[%c2, %c0_4] : memref<4x128xf32, #tpu.memory_space<vmem>>, vector<1x32xf32>
    %c3 = arith.constant 3 : index
    %c0_5 = arith.constant 0 : index
    %4 = vector.load %arg1[%c3, %c0_5] : memref<4x128xf32, #tpu.memory_space<vmem>>, vector<1x16xf32>
    %5 = arith.mulf %0, %0 : vector<16x32xf32>
    %cst = arith.constant dense<0.000000e+00> : vector<16xf32>
    %6 = vector.multi_reduction <add>, %5, %cst [1] : vector<16x32xf32> to vector<16xf32>
    %7 = vector.shape_cast %6 : vector<16xf32> to vector<16x1xf32>
    %cst_6 = arith.constant 3.200000e+01 : f32
    %8 = vector.broadcast %cst_6 : f32 to vector<16x1xf32>
    %9 = arith.divf %7, %8 : vector<16x1xf32>
    %cst_7 = arith.constant 9.99999974E-6 : f32
    %10 = vector.broadcast %cst_7 : f32 to vector<16x1xf32>
    %11 = arith.addf %9, %10 : vector<16x1xf32>
    %12 = math.rsqrt %11 : vector<16x1xf32>
    %13 = vector.broadcast %12 : vector<16x1xf32> to vector<16x32xf32>
    %14 = arith.mulf %0, %13 : vector<16x32xf32>
    %15 = vector.broadcast %1 : vector<1x32xf32> to vector<16x32xf32>
    %16 = arith.mulf %14, %15 : vector<16x32xf32>
    %c0_8 = arith.constant 0 : index
    %c0_9 = arith.constant 0 : index
    %17 = vector.load %arg2[%c0_8, %c0_9] : memref<32x128xf32, #tpu.memory_space<vmem>>, vector<32x128xf32>
    %cst_10 = arith.constant dense<0.000000e+00> : vector<16x128xf32>
    %18 = tpu.matmul %16, %17, %cst_10 {dimension_numbers = #tpu.dot_dimension_numbers<[1], [0], [0], [1], [0, 0, 1, 1], [], []>} : vector<16x32xf32>, vector<32x128xf32>, vector<16x128xf32> -> vector<16x128xf32>
    %19 = vector.extract_strided_slice %18 {offsets = [0, 0], sizes = [16, 16], strides = [1, 1]} : vector<16x128xf32> to vector<16x16xf32>
    %20 = vector.extract_strided_slice %18 {offsets = [0, 16], sizes = [16, 16], strides = [1, 1]} : vector<16x128xf32> to vector<16x16xf32>
    %21 = vector.extract_strided_slice %18 {offsets = [0, 32], sizes = [16, 32], strides = [1, 1]} : vector<16x128xf32> to vector<16x32xf32>
    %22 = vector.extract_strided_slice %18 {offsets = [0, 64], sizes = [16, 32], strides = [1, 1]} : vector<16x128xf32> to vector<16x32xf32>
    %23 = vector.broadcast %3 : vector<1x32xf32> to vector<16x32xf32>
    %24 = arith.addf %22, %23 : vector<16x32xf32>
    %25 = vector.extract_strided_slice %18 {offsets = [0, 96], sizes = [16, 16], strides = [1, 1]} : vector<16x128xf32> to vector<16x16xf32>
    %26 = vector.broadcast %4 : vector<1x16xf32> to vector<16x16xf32>
    %27 = arith.addf %25, %26 : vector<16x16xf32>
    %cst_11 = arith.constant 0.000000e+00 : f32
    %28 = vector.broadcast %cst_11 : f32 to vector<16x16xf32>
    %29 = arith.minimumf %27, %28 : vector<16x16xf32>
    %30 = math.absf %27 : vector<16x16xf32>
    %cst_12 = arith.constant 0.000000e+00 : f32
    %31 = vector.broadcast %cst_12 : f32 to vector<16x16xf32>
    %32 = arith.subf %31, %30 : vector<16x16xf32>
    %33 = math.exp %32 : vector<16x16xf32>
    %34 = math.log1p %33 : vector<16x16xf32>
    %35 = arith.subf %29, %34 : vector<16x16xf32>
    %cst_13 = arith.constant 1.600000e+01 : f32
    %36 = vector.broadcast %cst_13 : f32 to vector<16x16xf32>
    %37 = arith.divf %35, %36 : vector<16x16xf32>
    %38 = tpu.iota {dimensions = array<i32: 0>} : vector<16x16xi32>
    %39 = tpu.iota {dimensions = array<i32: 1>} : vector<16x16xi32>
    %c3_i32 = arith.constant 3 : i32
    %40 = vector.broadcast %c3_i32 : i32 to vector<16x16xi32>
    %41 = arith.shrsi %38, %40 : vector<16x16xi32>
    %c3_i32_14 = arith.constant 3 : i32
    %42 = vector.broadcast %c3_i32_14 : i32 to vector<16x16xi32>
    %43 = arith.shrsi %39, %42 : vector<16x16xi32>
    %44 = arith.cmpi eq, %41, %43 : vector<16x16xi32>
    %45 = arith.cmpi sle, %39, %38 : vector<16x16xi32>
    %46 = arith.andi %45, %44 : vector<16x16xi1>
    %cst_15 = arith.constant 1.000000e+00 : f32
    %cst_16 = arith.constant 0.000000e+00 : f32
    %47 = vector.broadcast %cst_15 : f32 to vector<16x16xf32>
    %48 = vector.broadcast %cst_16 : f32 to vector<16x16xf32>
    %49 = arith.select %46, %47, %48 : vector<16x16xi1>, vector<16x16xf32>
    %cst_17 = arith.constant dense<0.000000e+00> : vector<16x16xf32>
    %50 = tpu.matmul %49, %37, %cst_17 {dimension_numbers = #tpu.dot_dimension_numbers<[1], [0], [0], [1], [0, 0, 1, 1], [], []>} : vector<16x16xf32>, vector<16x16xf32>, vector<16x16xf32> -> vector<16x16xf32>
    %51 = math.exp %50 : vector<16x16xf32>
    %52 = arith.mulf %19, %51 : vector<16x16xf32>
    %cst_18 = arith.constant 0.000000e+00 : f32
    %53 = vector.broadcast %cst_18 : f32 to vector<16x16xf32>
    %54 = arith.subf %53, %50 : vector<16x16xf32>
    %55 = math.exp %54 : vector<16x16xf32>
    %56 = arith.mulf %20, %55 : vector<16x16xf32>
    %cst_19 = arith.constant 0.000000e+00 : f32
    %57 = vector.broadcast %cst_19 : f32 to vector<16x32xf32>
    %58 = vector.extract_strided_slice %52 {offsets = [0, 0], sizes = [16, 8], strides = [1, 1]} : vector<16x16xf32> to vector<16x8xf32>
    %59 = vector.extract_strided_slice %56 {offsets = [0, 0], sizes = [16, 8], strides = [1, 1]} : vector<16x16xf32> to vector<16x8xf32>
    %cst_20 = arith.constant dense<0.000000e+00> : vector<16x16xf32>
    %60 = tpu.matmul %58, %59, %cst_20 {dimension_numbers = #tpu.dot_dimension_numbers<[1], [1], [0], [0], [0, 0, 1, 0], [], []>, precision = #tpu.contract_precision<fp32>} : vector<16x8xf32>, vector<16x8xf32>, vector<16x16xf32> -> vector<16x16xf32>
    %61 = arith.mulf %60, %49 : vector<16x16xf32>
    %62 = vector.extract_strided_slice %21 {offsets = [0, 0], sizes = [16, 16], strides = [1, 1]} : vector<16x32xf32> to vector<16x16xf32>
    %cst_21 = arith.constant dense<0.000000e+00> : vector<16x16xf32>
    %63 = tpu.matmul %61, %62, %cst_21 {dimension_numbers = #tpu.dot_dimension_numbers<[1], [0], [0], [1], [0, 0, 1, 1], [], []>, precision = #tpu.contract_precision<fp32>} : vector<16x16xf32>, vector<16x16xf32>, vector<16x16xf32> -> vector<16x16xf32>
    %cst_22 = arith.constant dense<0.000000e+00> : vector<16xf32>
    %64 = vector.multi_reduction <add>, %63, %cst_22 [1] : vector<16x16xf32> to vector<16xf32>
    %65 = vector.shape_cast %64 : vector<16xf32> to vector<16x1xf32>
    %cst_23 = arith.constant 1.600000e+01 : f32
    %66 = vector.broadcast %cst_23 : f32 to vector<16x1xf32>
    %67 = arith.divf %65, %66 : vector<16x1xf32>
    %68 = vector.broadcast %67 : vector<16x1xf32> to vector<16x16xf32>
    %69 = arith.subf %63, %68 : vector<16x16xf32>
    %70 = arith.mulf %69, %69 : vector<16x16xf32>
    %cst_24 = arith.constant dense<0.000000e+00> : vector<16xf32>
    %71 = vector.multi_reduction <add>, %70, %cst_24 [1] : vector<16x16xf32> to vector<16xf32>
    %72 = vector.shape_cast %71 : vector<16xf32> to vector<16x1xf32>
    %cst_25 = arith.constant 1.600000e+01 : f32
    %73 = vector.broadcast %cst_25 : f32 to vector<16x1xf32>
    %74 = arith.divf %72, %73 : vector<16x1xf32>
    %cst_26 = arith.constant 9.99999974E-6 : f32
    %75 = vector.broadcast %cst_26 : f32 to vector<16x1xf32>
    %76 = arith.addf %74, %75 : vector<16x1xf32>
    %77 = math.rsqrt %76 : vector<16x1xf32>
    %78 = vector.broadcast %77 : vector<16x1xf32> to vector<16x16xf32>
    %79 = arith.mulf %69, %78 : vector<16x16xf32>
    %80 = vector.extract_strided_slice %24 {offsets = [0, 0], sizes = [16, 16], strides = [1, 1]} : vector<16x32xf32> to vector<16x16xf32>
    %81 = arith.negf %80 : vector<16x16xf32>
    %82 = math.exp %81 : vector<16x16xf32>
    %cst_27 = arith.constant 1.000000e+00 : f32
    %83 = vector.broadcast %cst_27 : f32 to vector<16x16xf32>
    %84 = arith.addf %83, %82 : vector<16x16xf32>
    %85 = arith.divf %83, %84 : vector<16x16xf32>
    %86 = arith.mulf %80, %85 : vector<16x16xf32>
    %87 = arith.mulf %86, %79 : vector<16x16xf32>
    %c0_28 = arith.constant 0 : index
    %c0_29 = arith.constant 0 : index
    %88 = vector.load %arg4[%c0_28, %c0_29] : memref<160x32xf32, #tpu.memory_space<vmem>>, vector<16x32xf32>
    %cst_30 = arith.constant dense<0.000000e+00> : vector<16x32xf32>
    %89 = tpu.matmul %87, %88, %cst_30 {dimension_numbers = #tpu.dot_dimension_numbers<[1], [0], [0], [1], [0, 0, 1, 1], [], []>} : vector<16x16xf32>, vector<16x32xf32>, vector<16x32xf32> -> vector<16x32xf32>
    %90 = arith.addf %57, %89 : vector<16x32xf32>
    %91 = vector.extract_strided_slice %52 {offsets = [0, 8], sizes = [16, 8], strides = [1, 1]} : vector<16x16xf32> to vector<16x8xf32>
    %92 = vector.extract_strided_slice %56 {offsets = [0, 8], sizes = [16, 8], strides = [1, 1]} : vector<16x16xf32> to vector<16x8xf32>
    %cst_31 = arith.constant dense<0.000000e+00> : vector<16x16xf32>
    %93 = tpu.matmul %91, %92, %cst_31 {dimension_numbers = #tpu.dot_dimension_numbers<[1], [1], [0], [0], [0, 0, 1, 0], [], []>, precision = #tpu.contract_precision<fp32>} : vector<16x8xf32>, vector<16x8xf32>, vector<16x16xf32> -> vector<16x16xf32>
    %94 = arith.mulf %93, %49 : vector<16x16xf32>
    %95 = vector.extract_strided_slice %21 {offsets = [0, 16], sizes = [16, 16], strides = [1, 1]} : vector<16x32xf32> to vector<16x16xf32>
    %cst_32 = arith.constant dense<0.000000e+00> : vector<16x16xf32>
    %96 = tpu.matmul %94, %95, %cst_32 {dimension_numbers = #tpu.dot_dimension_numbers<[1], [0], [0], [1], [0, 0, 1, 1], [], []>, precision = #tpu.contract_precision<fp32>} : vector<16x16xf32>, vector<16x16xf32>, vector<16x16xf32> -> vector<16x16xf32>
    %cst_33 = arith.constant dense<0.000000e+00> : vector<16xf32>
    %97 = vector.multi_reduction <add>, %96, %cst_33 [1] : vector<16x16xf32> to vector<16xf32>
    %98 = vector.shape_cast %97 : vector<16xf32> to vector<16x1xf32>
    %cst_34 = arith.constant 1.600000e+01 : f32
    %99 = vector.broadcast %cst_34 : f32 to vector<16x1xf32>
    %100 = arith.divf %98, %99 : vector<16x1xf32>
    %101 = vector.broadcast %100 : vector<16x1xf32> to vector<16x16xf32>
    %102 = arith.subf %96, %101 : vector<16x16xf32>
    %103 = arith.mulf %102, %102 : vector<16x16xf32>
    %cst_35 = arith.constant dense<0.000000e+00> : vector<16xf32>
    %104 = vector.multi_reduction <add>, %103, %cst_35 [1] : vector<16x16xf32> to vector<16xf32>
    %105 = vector.shape_cast %104 : vector<16xf32> to vector<16x1xf32>
    %cst_36 = arith.constant 1.600000e+01 : f32
    %106 = vector.broadcast %cst_36 : f32 to vector<16x1xf32>
    %107 = arith.divf %105, %106 : vector<16x1xf32>
    %cst_37 = arith.constant 9.99999974E-6 : f32
    %108 = vector.broadcast %cst_37 : f32 to vector<16x1xf32>
    %109 = arith.addf %107, %108 : vector<16x1xf32>
    %110 = math.rsqrt %109 : vector<16x1xf32>
    %111 = vector.broadcast %110 : vector<16x1xf32> to vector<16x16xf32>
    %112 = arith.mulf %102, %111 : vector<16x16xf32>
    %113 = vector.extract_strided_slice %24 {offsets = [0, 16], sizes = [16, 16], strides = [1, 1]} : vector<16x32xf32> to vector<16x16xf32>
    %114 = arith.negf %113 : vector<16x16xf32>
    %115 = math.exp %114 : vector<16x16xf32>
    %cst_38 = arith.constant 1.000000e+00 : f32
    %116 = vector.broadcast %cst_38 : f32 to vector<16x16xf32>
    %117 = arith.addf %116, %115 : vector<16x16xf32>
    %118 = arith.divf %116, %117 : vector<16x16xf32>
    %119 = arith.mulf %113, %118 : vector<16x16xf32>
    %120 = arith.mulf %119, %112 : vector<16x16xf32>
    %c16 = arith.constant 16 : index
    %c0_39 = arith.constant 0 : index
    %121 = vector.load %arg4[%c16, %c0_39] : memref<160x32xf32, #tpu.memory_space<vmem>>, vector<16x32xf32>
    %cst_40 = arith.constant dense<0.000000e+00> : vector<16x32xf32>
    %122 = tpu.matmul %120, %121, %cst_40 {dimension_numbers = #tpu.dot_dimension_numbers<[1], [0], [0], [1], [0, 0, 1, 1], [], []>} : vector<16x16xf32>, vector<16x32xf32>, vector<16x32xf32> -> vector<16x32xf32>
    %123 = arith.addf %90, %122 : vector<16x32xf32>
    %124 = tpu.iota {dimensions = array<i32: 0>} : vector<8x128xi32>
    %125 = tpu.iota {dimensions = array<i32: 1>} : vector<8x128xi32>
    %c4_i32 = arith.constant 4 : i32
    %126 = vector.broadcast %c4_i32 : i32 to vector<8x128xi32>
    %127 = arith.shrsi %125, %126 : vector<8x128xi32>
    %128 = arith.cmpi eq, %127, %124 : vector<8x128xi32>
    %cst_41 = arith.constant 1.000000e+00 : f32
    %cst_42 = arith.constant 0.000000e+00 : f32
    %129 = vector.broadcast %cst_41 : f32 to vector<8x128xf32>
    %130 = vector.broadcast %cst_42 : f32 to vector<8x128xf32>
    %131 = arith.select %128, %129, %130 : vector<8x128xi1>, vector<8x128xf32>
    %132 = tpu.iota {dimensions = array<i32: 0>} : vector<16x128xi32>
    %133 = tpu.iota {dimensions = array<i32: 1>} : vector<16x128xi32>
    %c15_i32 = arith.constant 15 : i32
    %134 = vector.broadcast %c15_i32 : i32 to vector<16x128xi32>
    %135 = arith.andi %133, %134 : vector<16x128xi32>
    %136 = arith.cmpi eq, %135, %132 : vector<16x128xi32>
    %cst_43 = arith.constant 1.000000e+00 : f32
    %cst_44 = arith.constant 0.000000e+00 : f32
    %137 = vector.broadcast %cst_43 : f32 to vector<16x128xf32>
    %138 = vector.broadcast %cst_44 : f32 to vector<16x128xf32>
    %139 = arith.select %136, %137, %138 : vector<16x128xi1>, vector<16x128xf32>
    %140 = vector.extract_strided_slice %50 {offsets = [7, 0], sizes = [1, 16], strides = [1, 1]} : vector<16x16xf32> to vector<1x16xf32>
    %141 = vector.extract_strided_slice %20 {offsets = [0, 0], sizes = [8, 16], strides = [1, 1]} : vector<16x16xf32> to vector<8x16xf32>
    %142 = vector.extract_strided_slice %50 {offsets = [0, 0], sizes = [8, 16], strides = [1, 1]} : vector<16x16xf32> to vector<8x16xf32>
    %143 = vector.broadcast %140 : vector<1x16xf32> to vector<8x16xf32>
    %144 = arith.subf %143, %142 : vector<8x16xf32>
    %145 = math.exp %144 : vector<8x16xf32>
    %146 = arith.mulf %141, %145 : vector<8x16xf32>
    %147 = vector.extract_strided_slice %146 {offsets = [0, 0], sizes = [8, 8], strides = [1, 1]} : vector<8x16xf32> to vector<8x8xf32>
    %cst_45 = arith.constant dense<0.000000e+00> : vector<8x128xf32>
    %148 = tpu.matmul %147, %131, %cst_45 {dimension_numbers = #tpu.dot_dimension_numbers<[1], [0], [0], [1], [0, 0, 1, 1], [], []>, precision = #tpu.contract_precision<fp32>} : vector<8x8xf32>, vector<8x128xf32>, vector<8x128xf32> -> vector<8x128xf32>
    %149 = vector.extract_strided_slice %21 {offsets = [0, 0], sizes = [8, 16], strides = [1, 1]} : vector<16x32xf32> to vector<8x16xf32>
    %cst_46 = arith.constant dense<0.000000e+00> : vector<8x128xf32>
    %150 = tpu.matmul %149, %139, %cst_46 {dimension_numbers = #tpu.dot_dimension_numbers<[1], [0], [0], [1], [0, 0, 1, 1], [], []>, precision = #tpu.contract_precision<fp32>} : vector<8x16xf32>, vector<16x128xf32>, vector<8x128xf32> -> vector<8x128xf32>
    %151 = arith.mulf %148, %150 : vector<8x128xf32>
    %cst_47 = arith.constant dense<0.000000e+00> : vector<128xf32>
    %152 = vector.multi_reduction <add>, %151, %cst_47 [0] : vector<8x128xf32> to vector<128xf32>
    %153 = vector.shape_cast %152 : vector<128xf32> to vector<1x128xf32>
    %154 = vector.extract_strided_slice %146 {offsets = [0, 8], sizes = [8, 8], strides = [1, 1]} : vector<8x16xf32> to vector<8x8xf32>
    %cst_48 = arith.constant dense<0.000000e+00> : vector<8x128xf32>
    %155 = tpu.matmul %154, %131, %cst_48 {dimension_numbers = #tpu.dot_dimension_numbers<[1], [0], [0], [1], [0, 0, 1, 1], [], []>, precision = #tpu.contract_precision<fp32>} : vector<8x8xf32>, vector<8x128xf32>, vector<8x128xf32> -> vector<8x128xf32>
    %156 = vector.extract_strided_slice %21 {offsets = [0, 16], sizes = [8, 16], strides = [1, 1]} : vector<16x32xf32> to vector<8x16xf32>
    %cst_49 = arith.constant dense<0.000000e+00> : vector<8x128xf32>
    %157 = tpu.matmul %156, %139, %cst_49 {dimension_numbers = #tpu.dot_dimension_numbers<[1], [0], [0], [1], [0, 0, 1, 1], [], []>, precision = #tpu.contract_precision<fp32>} : vector<8x16xf32>, vector<16x128xf32>, vector<8x128xf32> -> vector<8x128xf32>
    %158 = arith.mulf %155, %157 : vector<8x128xf32>
    %cst_50 = arith.constant dense<0.000000e+00> : vector<128xf32>
    %159 = vector.multi_reduction <add>, %158, %cst_50 [0] : vector<8x128xf32> to vector<128xf32>
    %160 = vector.shape_cast %159 : vector<128xf32> to vector<1x128xf32>
    %161 = vector.extract_strided_slice %50 {offsets = [15, 0], sizes = [1, 16], strides = [1, 1]} : vector<16x16xf32> to vector<1x16xf32>
    %162 = vector.extract_strided_slice %20 {offsets = [8, 0], sizes = [8, 16], strides = [1, 1]} : vector<16x16xf32> to vector<8x16xf32>
    %163 = vector.extract_strided_slice %50 {offsets = [8, 0], sizes = [8, 16], strides = [1, 1]} : vector<16x16xf32> to vector<8x16xf32>
    %164 = vector.broadcast %161 : vector<1x16xf32> to vector<8x16xf32>
    %165 = arith.subf %164, %163 : vector<8x16xf32>
    %166 = math.exp %165 : vector<8x16xf32>
    %167 = arith.mulf %162, %166 : vector<8x16xf32>
    %168 = vector.extract_strided_slice %167 {offsets = [0, 0], sizes = [8, 8], strides = [1, 1]} : vector<8x16xf32> to vector<8x8xf32>
    %cst_51 = arith.constant dense<0.000000e+00> : vector<8x128xf32>
    %169 = tpu.matmul %168, %131, %cst_51 {dimension_numbers = #tpu.dot_dimension_numbers<[1], [0], [0], [1], [0, 0, 1, 1], [], []>, precision = #tpu.contract_precision<fp32>} : vector<8x8xf32>, vector<8x128xf32>, vector<8x128xf32> -> vector<8x128xf32>
    %170 = vector.extract_strided_slice %21 {offsets = [8, 0], sizes = [8, 16], strides = [1, 1]} : vector<16x32xf32> to vector<8x16xf32>
    %cst_52 = arith.constant dense<0.000000e+00> : vector<8x128xf32>
    %171 = tpu.matmul %170, %139, %cst_52 {dimension_numbers = #tpu.dot_dimension_numbers<[1], [0], [0], [1], [0, 0, 1, 1], [], []>, precision = #tpu.contract_precision<fp32>} : vector<8x16xf32>, vector<16x128xf32>, vector<8x128xf32> -> vector<8x128xf32>
    %172 = arith.mulf %169, %171 : vector<8x128xf32>
    %cst_53 = arith.constant dense<0.000000e+00> : vector<128xf32>
    %173 = vector.multi_reduction <add>, %172, %cst_53 [0] : vector<8x128xf32> to vector<128xf32>
    %174 = vector.shape_cast %173 : vector<128xf32> to vector<1x128xf32>
    %175 = vector.extract_strided_slice %167 {offsets = [0, 8], sizes = [8, 8], strides = [1, 1]} : vector<8x16xf32> to vector<8x8xf32>
    %cst_54 = arith.constant dense<0.000000e+00> : vector<8x128xf32>
    %176 = tpu.matmul %175, %131, %cst_54 {dimension_numbers = #tpu.dot_dimension_numbers<[1], [0], [0], [1], [0, 0, 1, 1], [], []>, precision = #tpu.contract_precision<fp32>} : vector<8x8xf32>, vector<8x128xf32>, vector<8x128xf32> -> vector<8x128xf32>
    %177 = vector.extract_strided_slice %21 {offsets = [8, 16], sizes = [8, 16], strides = [1, 1]} : vector<16x32xf32> to vector<8x16xf32>
    %cst_55 = arith.constant dense<0.000000e+00> : vector<8x128xf32>
    %178 = tpu.matmul %177, %139, %cst_55 {dimension_numbers = #tpu.dot_dimension_numbers<[1], [0], [0], [1], [0, 0, 1, 1], [], []>, precision = #tpu.contract_precision<fp32>} : vector<8x16xf32>, vector<16x128xf32>, vector<8x128xf32> -> vector<8x128xf32>
    %179 = arith.mulf %176, %178 : vector<8x128xf32>
    %cst_56 = arith.constant dense<0.000000e+00> : vector<128xf32>
    %180 = vector.multi_reduction <add>, %179, %cst_56 [0] : vector<8x128xf32> to vector<128xf32>
    %181 = vector.shape_cast %180 : vector<128xf32> to vector<1x128xf32>
    %182 = tpu.concatenate %153, %160, %174, %181 in 0 : vector<1x128xf32>, vector<1x128xf32>, vector<1x128xf32>, vector<1x128xf32> -> vector<4x128xf32>
    %c0_57 = arith.constant 0 : index
    %c0_58 = arith.constant 0 : index
    %183 = vector.load %arg6[%c0_57, %c0_58] : memref<4x128xf32, #tpu.memory_space<vmem>>, vector<4x128xf32>
    tpu.vector_store %arg6[%c0_57, %c0_58], %182 {strides = array<i32>} : memref<4x128xf32, #tpu.memory_space<vmem>>, vector<4x128xf32>,
    %184 = arith.addf %0, %123 : vector<16x32xf32>
    %185 = arith.mulf %184, %184 : vector<16x32xf32>
    %cst_59 = arith.constant dense<0.000000e+00> : vector<16xf32>
    %186 = vector.multi_reduction <add>, %185, %cst_59 [1] : vector<16x32xf32> to vector<16xf32>
    %187 = vector.shape_cast %186 : vector<16xf32> to vector<16x1xf32>
    %cst_60 = arith.constant 3.200000e+01 : f32
    %188 = vector.broadcast %cst_60 : f32 to vector<16x1xf32>
    %189 = arith.divf %187, %188 : vector<16x1xf32>
    %cst_61 = arith.constant 9.99999974E-6 : f32
    %190 = vector.broadcast %cst_61 : f32 to vector<16x1xf32>
    %191 = arith.addf %189, %190 : vector<16x1xf32>
    %192 = math.rsqrt %191 : vector<16x1xf32>
    %193 = vector.broadcast %192 : vector<16x1xf32> to vector<16x32xf32>
    %194 = arith.mulf %184, %193 : vector<16x32xf32>
    %195 = vector.broadcast %2 : vector<1x32xf32> to vector<16x32xf32>
    %196 = arith.mulf %194, %195 : vector<16x32xf32>
    %c0_62 = arith.constant 0 : index
    %c0_63 = arith.constant 0 : index
    %197 = vector.load %arg3[%c0_62, %c0_63] : memref<32x256xf32, #tpu.memory_space<vmem>>, vector<32x256xf32>
    %cst_64 = arith.constant dense<0.000000e+00> : vector<16x256xf32>
    %198 = tpu.matmul %196, %197, %cst_64 {dimension_numbers = #tpu.dot_dimension_numbers<[1], [0], [0], [1], [0, 0, 1, 1], [], []>} : vector<16x32xf32>, vector<32x256xf32>, vector<16x256xf32> -> vector<16x256xf32>
    %199 = vector.extract_strided_slice %198 {offsets = [0, 0], sizes = [16, 128], strides = [1, 1]} : vector<16x256xf32> to vector<16x128xf32>
    %200 = vector.extract_strided_slice %198 {offsets = [0, 128], sizes = [16, 128], strides = [1, 1]} : vector<16x256xf32> to vector<16x128xf32>
    %201 = arith.negf %199 : vector<16x128xf32>
    %202 = math.exp %201 : vector<16x128xf32>
    %cst_65 = arith.constant 1.000000e+00 : f32
    %203 = vector.broadcast %cst_65 : f32 to vector<16x128xf32>
    %204 = arith.addf %203, %202 : vector<16x128xf32>
    %205 = arith.divf %203, %204 : vector<16x128xf32>
    %206 = arith.mulf %199, %205 : vector<16x128xf32>
    %207 = arith.mulf %206, %200 : vector<16x128xf32>
    %c32 = arith.constant 32 : index
    %c0_66 = arith.constant 0 : index
    %208 = vector.load %arg4[%c32, %c0_66] : memref<160x32xf32, #tpu.memory_space<vmem>>, vector<128x32xf32>
    %cst_67 = arith.constant dense<0.000000e+00> : vector<16x32xf32>
    %209 = tpu.matmul %207, %208, %cst_67 {dimension_numbers = #tpu.dot_dimension_numbers<[1], [0], [0], [1], [0, 0, 1, 1], [], []>} : vector<16x128xf32>, vector<128x32xf32>, vector<16x32xf32> -> vector<16x32xf32>
    %210 = arith.addf %184, %209 : vector<16x32xf32>
    %c0_68 = arith.constant 0 : index
    %c0_69 = arith.constant 0 : index
    %211 = vector.load %arg5[%c0_68, %c0_69] : memref<16x32xf32, #tpu.memory_space<vmem>>, vector<16x32xf32>
    tpu.vector_store %arg5[%c0_68, %c0_69], %210 {strides = array<i32>} : memref<16x32xf32, #tpu.memory_space<vmem>>, vector<16x32xf32>,
    return
  }
}

</mosaic_0001>

<llo_original>
// kernel: gla_block_forward.1
$region0: #{gla_block_forward.1}
  #allocation0 [shape = 'u32[]', space=smem, size = 0x4, offset = 0x4, fixed_abs, tag = 'smem constant byte address 0x4 - core index']
  #allocation1 [shape = 'u32[144,128]{1,0:T(1,128)}', space=vmem, size = 0x12000, scoped, tag = 'internal scratch']
  %s0 = inlined_call_operand.vmem [shape: f32[16,32], index: 0, kind: input, shape index: {}]
  %s1 = inlined_call_operand.vmem [shape: f32[4,128], index: 1, kind: input, shape index: {}]
  %s2 = inlined_call_operand.vmem [shape: f32[32,128], index: 2, kind: input, shape index: {}]
  %s3 = inlined_call_operand.vmem [shape: f32[32,256], index: 3, kind: input, shape index: {}]
  %s4 = inlined_call_operand.vmem [shape: f32[160,32], index: 4, kind: input, shape index: {}]
  %s5 = inlined_call_operand.hbm [shape: f32[16,32], index: 5, kind: output, shape index: {0}]
  %s6 = inlined_call_operand.vmem [shape: f32[4,128], index: 6, kind: output, shape index: {1}]
  %7 = xla_tuple %s5, %s6
  %s8 = sld [smem:[#allocation0]]
  $region38: #{gla_block_forward.1} parent=0
    _
  %s10 = ssub.s32 1, %s8
  %s11 = scalar_select 0, %s10, %s8
  $region1: #{gla_block_forward.1} parent=0
    #allocation2 [shape = 'u8[8192]{0}', space=vmem, size = 0x2000, scoped, tag = 'output window, operand 0, single buffered']
    #allocation3 [shape = 's32[1]{0}', space=sflag, size = 0x4, scoped, tag = 'scoped memory for gla_block_forward.1']
    %12 = vsyncpa [#allocation3], 0
    // Predicated region
    $region2: #{gla_block_forward.1} parent=1 // pred_check
      _
    $region3: #{gla_block_forward.1} parent=1 // pred_check_branch
      %14 = sbr.rel (0) target = $region5
    $region4: #{gla_block_forward.1} parent=1 // pred_region
      _
    $region5: #{gla_block_forward.1} parent=1 // pred_fallthru
      _
    // Predicated region
    $region6: #{gla_block_forward.1} parent=1 // pred_check
      _
    $region7: #{gla_block_forward.1} parent=1 // pred_check_branch
      %16 = sbr.rel (0) target = $region9
    $region8: #{gla_block_forward.1} parent=1 // pred_region
      _
    $region9: #{gla_block_forward.1} parent=1 // pred_fallthru
      _
    // Predicated region
    $region10: #{gla_block_forward.1} parent=1 // pred_check
      _
    $region11: #{gla_block_forward.1} parent=1 // pred_check_branch
      %18 = sbr.rel (0) target = $region13
    $region12: #{gla_block_forward.1} parent=1 // pred_region
      _
    $region13: #{gla_block_forward.1} parent=1 // pred_fallthru
      _
    // Predicated region
    $region14: #{gla_block_forward.1} parent=1 // pred_check
      _
    $region15: #{gla_block_forward.1} parent=1 // pred_check_branch
      %20 = sbr.rel (0) target = $region17
    $region16: #{gla_block_forward.1} parent=1 // pred_region
      _
    $region17: #{gla_block_forward.1} parent=1 // pred_fallthru
      _
    // Predicated region
    $region18: #{gla_block_forward.1} parent=1 // pred_check
      _
    $region19: #{gla_block_forward.1} parent=1 // pred_check_branch
      %22 = sbr.rel (0) target = $region21
    $region20: #{gla_block_forward.1} parent=1 // pred_region
      _
    $region21: #{gla_block_forward.1} parent=1 // pred_fallthru
      _
    %v23 = vld [vmem:[%s0] sm:$0xff]
    %v24 = vld [vmem:[%s0 + $0x8] sm:$0xff]
    %v25 = vld [vmem:[%s1] sm:$0x1]
    %v26 = vld [vmem:[%s1 + $0x1] sm:$0x1]
    %v27 = vld [vmem:[%s1 + $0x2] sm:$0x1]
    %v28 = vld [vmem:[%s1 + $0x3] sm:$0x1]
    %v29 = vmul.f32 %v23, %v23
    %v30 = vmul.f32 %v24, %v24
    %vm31 = vcmask 261120
    %v32 = vsel %vm31, %v29, 0.0
    %33 = vadd.xlane.f32.xlu0 %v32
    %v34 = vpop.xlane.xlu0 %33
    %v35 = vsel %vm31, %v30, 0.0
    %36 = vadd.xlane.f32.xlu0 %v35
    %v37 = vpop.xlane.xlu0 %36
    %v38 = vrcp.pop 32.0
    %v39 = vmul.f32 %v34, %v38
    %v40 = vmul.f32 %v37, %v38
    %v41 = vadd.f32 %v39, 1e-05
    %v42 = vadd.f32 %v40, 1e-05
    %v43 = vrsqrt.pop %v41
    %v44 = vrsqrt.pop %v42
    %v45 = vmul.f32 %v23, %v43
    %v46 = vmul.f32 %v24, %v44
    %v47 = vlaneseq
    %v48 = vshrl.u32 %v47, 7
    %v49 = vsub.s32 0, %v48
    %v50 = vrot.slane %v25, %v49
    %v51 = vmul.f32 %v45, %v50
    %v52 = vmul.f32 %v46, %v50
    %v53 = vld [vmem:[%s2] sm:$0xff]
    %v54 = vld [vmem:[%s2 + $0x8] sm:$0xff]
    %v55 = vld [vmem:[%s2 + $0x10] sm:$0xff]
    %v56 = vld [vmem:[%s2 + $0x18] sm:$0xff]
    %v58 = vsel %vm31, %v51, 0
    %v61 = vsel %vm31, %v52, 0
    %63 = vmatprep.subr.mxu0 0.0
    %64 = vmatpush1.msra.mxu0 %v53
    %65 = vmatprep.subr.mxu0 0.0
    %66 = vmatpush1.msra.mxu0 %v54
    %67 = vmatprep.subr.mxu0 0.0
    %68 = vmatpush1.msra.mxu0 %v55
    %69 = vmatprep.subr.mxu0 0.0
    %70 = vmatpush1.msra.mxu0 %v56
    %71 = vmatprep.subr.mxu0 0.0
    %72 = vmatpush1.msra.mxu0 0.0
    %73 = vmatprep.subr.mxu0 0.0
    %74 = vmatpush1.msra.mxu0 0.0
    %75 = vmatprep.subr.mxu0 0.0
    %76 = vmatpush1.msra.mxu0 0.0
    %77 = vmatprep.subr.mxu0 0.0
    %78 = vmatpush1.msra.mxu0 0.0
    %79 = vmatprep.subr.mxu0 0.0
    %80 = vmatpush1.msra.mxu0 0.0
    %81 = vmatprep.subr.mxu0 0.0
    %82 = vmatpush1.msra.mxu0 0.0
    %83 = vmatprep.subr.mxu0 0.0
    %84 = vmatpush1.msra.mxu0 0.0
    %85 = vmatprep.subr.mxu0 0.0
    %86 = vmatpush1.msra.mxu0 0.0
    %87 = vmatprep.subr.mxu0 0.0
    %88 = vmatpush1.msra.mxu0 0.0
    %89 = vmatprep.subr.mxu0 0.0
    %90 = vmatpush1.msra.mxu0 0.0
    %91 = vmatprep.subr.mxu0 0.0
    %92 = vmatpush1.msra.mxu0 0.0
    %93 = vmatprep.subr.mxu0 0.0
    %94 = vmatpush1.msra.mxu0 0.0
    %95 = vmatprep.subr.mxu0 0.0
    %96 = vmatpush1.msra.mxu0 0.0
    %97 = vmatprep.subr.mxu0 0.0
    %98 = vmatpush1.msra.mxu0 0.0
    %99 = vmatprep.subr.mxu0 0.0
    %100 = vmatpush1.msra.mxu0 0.0
    %101 = vmatprep.subr.mxu0 0.0
    %102 = vmatpush1.msra.mxu0 0.0
    %103 = vmatprep.subr.mxu0 0.0
    %104 = vmatpush1.msra.mxu0 0.0
    %105 = vmatprep.subr.mxu0 0.0
    %106 = vmatpush1.msra.mxu0 0.0
    %107 = vmatprep.subr.mxu0 0.0
    %108 = vmatpush1.msra.mxu0 0.0
    %109 = vmatprep.subr.mxu0 0.0
    %110 = vmatpush1.msra.mxu0 0.0
    %111 = vmatprep.subr.mxu0 0.0
    %112 = vmatpush1.msra.mxu0 0.0
    %113 = vmatprep.subr.mxu0 0.0
    %114 = vmatpush1.msra.mxu0 0.0
    %115 = vmatprep.subr.mxu0 0.0
    %116 = vmatpush1.msra.mxu0 0.0
    %117 = vmatprep.subr.mxu0 0.0
    %118 = vmatpush1.msra.mxu0 0.0
    %119 = vmatprep.subr.mxu0 0.0
    %120 = vmatpush1.msra.mxu0 0.0
    %121 = vmatprep.subr.mxu0 0.0
    %122 = vmatpush1.msra.mxu0 0.0
    %123 = vmatprep.subr.mxu0 0.0
    %124 = vmatpush1.msra.mxu0 0.0
    %125 = vmatprep.subr.mxu0 0.0
    %126 = vmatpush1.msra.mxu0 0.0
    %127 = vmatprep.mubr.f32.mxu0 0.0
    %128 = vmatmul.mubr.f32.gmra.mrb[0].mxu0 %v58
    %v129 = vpop.f32.mrb[0].mxu0
    %v130 = vadd.f32 0.0, %v129
    %v131 = vpop.f32.mrb[0].mxu0
    %132 = vmatprep.mubr.f32.mxu0 0.0
    %133 = vmatmul.mubr.f32.gmra.mrb[0].mxu0 %v61
    %v134 = vpop.f32.mrb[0].mxu0
    %v135 = vadd.f32 0.0, %v134
    %v136 = vpop.f32.mrb[0].mxu0
    %137 = vdwg.mxu0
    %v138 = vlaneseq
    %v139 = vshrl.u32 %v138, 7
    %v140 = vsub.s32 0, %v139
    %v141 = vrot.slane %v27, %v140
    %143 = vrot.lane.b32.xlu0 %v141, 64
    %v144 = vpop.permute.xlu0 %143
    %v146 = vadd.f32 %v130, %v144
    %v147 = vadd.f32 %v135, %v144
    %v148 = vlaneseq
    %v149 = vshrl.u32 %v148, 7
    %v150 = vsub.s32 0, %v149
    %v151 = vrot.slane %v28, %v150
    %153 = vrot.lane.b32.xlu0 %v151, 96
    %v154 = vpop.permute.xlu0 %153
    %v156 = vadd.f32 %v130, %v154
    %v157 = vadd.f32 %v135, %v154
    %v158 = vmin.f32 %v156, 0.0
    %v159 = vmin.f32 %v157, 0.0
    %v160 = vand.u32 2147483647, %v156
    %v161 = vand.u32 2147483647, %v157
    %v162 = vsub.f32 0.0, %v160
    %v163 = vsub.f32 0.0, %v161
    %v164 = vmul.f32 %v162, 1.442695
    %v165 = vpow.pop %v164
    %v166 = vmul.f32 %v163, 1.442695
    %v167 = vpow.pop %v166
    %v168 = vadd.f32 %v165, 1.0
    %v169 = vlog2.pop %v168
    %v170 = vmul.f32 %v169, 0.6931472
    %v171 = vmul.f32 -0.5, %v165
    %v172 = vadd.f32 %v171, 1.0
    %v173 = vmul.f32 %v172, %v165
    %v174 = vand.u32 2147483647, %v165
    %vm175 = vcmp.lt.f32.partialorder %v174, 0.0004427343
    %v176 = vsel %vm175, %v173, %v170
    %v177 = vadd.f32 %v167, 1.0
    %v178 = vlog2.pop %v177
    %v179 = vmul.f32 %v178, 0.6931472
    %v180 = vmul.f32 -0.5, %v167
    %v181 = vadd.f32 %v180, 1.0
    %v182 = vmul.f32 %v181, %v167
    %v183 = vand.u32 2147483647, %v167
    %vm184 = vcmp.lt.f32.partialorder %v183, 0.0004427343
    %v185 = vsel %vm184, %v182, %v179
    %v186 = vsub.f32 %v158, %v176
    %v187 = vsub.f32 %v159, %v185
    %v188 = vrcp.pop 16.0
    %v189 = vmul.f32 %v186, %v188
    %v190 = vmul.f32 %v187, %v188
    %v191 = vlaneseq
    %v192 = vshrl.u32 %v191, 7
    %v193 = vadd.s32 %v192, 8
    %v194 = vlaneseq
    %v195 = vand.u32 %v194, 127
    %v196 = vshra.s32 %v192, 3
    %v197 = vshra.s32 %v193, 3
    %v198 = vshra.s32 %v195, 3
    %vm199 = vcmp.eq.s32.totalorder %v196, %v198
    %vm200 = vcmp.eq.s32.totalorder %v197, %v198
    %vm201 = vcmp.le.s32.totalorder %v195, %v192
    %vm202 = vcmp.le.s32.totalorder %v195, %v193
    %vm203 = vmand %vm201, %vm199
    %vm204 = vmand %vm202, %vm200
    %v205 = vsel %vm203, 1.0, 0.0
    %v206 = vsel %vm204, 1.0, 0.0
    %209 = vrot.lane.b32.xlu0 %v189, 32
    %v210 = vpop.permute.xlu0 %209
    %211 = vrot.lane.b32.xlu0 %v190, 32
    %v212 = vpop.permute.xlu0 %211
    %vm215 = vcmask 130048
    %v217 = vsel %vm215, %v205, 0
    %v220 = vsel %vm215, %v206, 0
    %222 = vmatprep.subr.mxu0 0.0
    %223 = vmatpush1.msra.mxu0 %v210
    %224 = vmatprep.subr.mxu0 0.0
    %225 = vmatpush1.msra.mxu0 %v212
    %226 = vmatprep.subr.mxu0 0.0
    %227 = vmatpush1.msra.mxu0 0.0
    %228 = vmatprep.subr.mxu0 0.0
    %229 = vmatpush1.msra.mxu0 0.0
    %230 = vmatprep.subr.mxu0 0.0
    %231 = vmatpush1.msra.mxu0 0.0
    %232 = vmatprep.subr.mxu0 0.0
    %233 = vmatpush1.msra.mxu0 0.0
    %234 = vmatprep.subr.mxu0 0.0
    %235 = vmatpush1.msra.mxu0 0.0
    %236 = vmatprep.subr.mxu0 0.0
    %237 = vmatpush1.msra.mxu0 0.0
    %238 = vmatprep.subr.mxu0 0.0
    %239 = vmatpush1.msra.mxu0 0.0
    %240 = vmatprep.subr.mxu0 0.0
    %241 = vmatpush1.msra.mxu0 0.0
    %242 = vmatprep.subr.mxu0 0.0
    %243 = vmatpush1.msra.mxu0 0.0
    %244 = vmatprep.subr.mxu0 0.0
    %245 = vmatpush1.msra.mxu0 0.0
    %246 = vmatprep.subr.mxu0 0.0
    %247 = vmatpush1.msra.mxu0 0.0
    %248 = vmatprep.subr.mxu0 0.0
    %249 = vmatpush1.msra.mxu0 0.0
    %250 = vmatprep.subr.mxu0 0.0
    %251 = vmatpush1.msra.mxu0 0.0
    %252 = vmatprep.subr.mxu0 0.0
    %253 = vmatpush1.msra.mxu0 0.0
    %254 = vmatprep.subr.mxu0 0.0
    %255 = vmatpush1.msra.mxu0 0.0
    %256 = vmatprep.subr.mxu0 0.0
    %257 = vmatpush1.msra.mxu0 0.0
    %258 = vmatprep.subr.mxu0 0.0
    %259 = vmatpush1.msra.mxu0 0.0
    %260 = vmatprep.subr.mxu0 0.0
    %261 = vmatpush1.msra.mxu0 0.0
    %262 = vmatprep.subr.mxu0 0.0
    %263 = vmatpush1.msra.mxu0 0.0
    %264 = vmatprep.subr.mxu0 0.0
    %265 = vmatpush1.msra.mxu0 0.0
    %266 = vmatprep.subr.mxu0 0.0
    %267 = vmatpush1.msra.mxu0 0.0
    %268 = vmatprep.subr.mxu0 0.0
    %269 = vmatpush1.msra.mxu0 0.0
    %270 = vmatprep.subr.mxu0 0.0
    %271 = vmatpush1.msra.mxu0 0.0
    %272 = vmatprep.subr.mxu0 0.0
    %273 = vmatpush1.msra.mxu0 0.0
    %274 = vmatprep.subr.mxu0 0.0
    %275 = vmatpush1.msra.mxu0 0.0
    %276 = vmatprep.subr.mxu0 0.0
    %277 = vmatpush1.msra.mxu0 0.0
    %278 = vmatprep.subr.mxu0 0.0
    %279 = vmatpush1.msra.mxu0 0.0
    %280 = vmatprep.subr.mxu0 0.0
    %281 = vmatpush1.msra.mxu0 0.0
    %282 = vmatprep.subr.mxu0 0.0
    %283 = vmatpush1.msra.mxu0 0.0
    %284 = vmatprep.subr.mxu0 0.0
    %285 = vmatpush1.msra.mxu0 0.0
    %286 = vmatprep.mubr.f32.mxu0 0.0
    %287 = vmatmul.mubr.f32.gmra.mrb[0].mxu0 %v217
    %v288 = vpop.f32.mrb[0].mxu0
    %v289 = vadd.f32 0.0, %v288
    %v290 = vpop.f32.mrb[0].mxu0
    %291 = vmatprep.mubr.f32.mxu0 0.0
    %292 = vmatmul.mubr.f32.gmra.mrb[0].mxu0 %v220
    %v293 = vpop.f32.mrb[0].mxu0
    %v294 = vadd.f32 0.0, %v293
    %v295 = vpop.f32.mrb[0].mxu0
    %296 = vdwg.mxu0
    %v297 = vmul.f32 %v289, 1.442695
    %v298 = vpow.pop %v297
    %v299 = vmul.f32 %v294, 1.442695
    %v300 = vpow.pop %v299
    %v301 = vmul.f32 %v130, %v298
    %v302 = vmul.f32 %v135, %v300
    %v303 = vsub.f32 0.0, %v289
    %v304 = vsub.f32 0.0, %v294
    %v305 = vmul.f32 %v303, 1.442695
    %v306 = vpow.pop %v305
    %v307 = vmul.f32 %v304, 1.442695
    %v308 = vpow.pop %v307
    %311 = vrot.lane.b32.xlu0 %v306, 16
    %v312 = vpop.permute.xlu0 %311
    %313 = vrot.lane.b32.xlu0 %v308, 16
    %v314 = vpop.permute.xlu0 %313
    %v317 = vmul.f32 %v130, %v312
    %v318 = vmul.f32 %v135, %v314
    %321 = vrot.lane.b32.xlu0 %v317, 112
    %v322 = vpop.permute.xlu0 %321
    %323 = vrot.lane.b32.xlu0 %v318, 112
    %v324 = vpop.permute.xlu0 %323
    %vm325 = vcmask 64512
    %v327 = vsel %vm325, %v301, 0
    %v330 = vsel %vm325, %v302, 0
    %v332 = vsel %vm325, %v322, 0
    %v334 = vsel %vm325, %v324, 0
    %336 = vmatprep.subr.mxu0 0.0
    %v337 = vand.u32 %v332, 4294901760
    %338 = vmatpush1.xpose.msra.mxu0 %v337
    %339 = vmatprep.subr.mxu0 0.0
    %v340 = vand.u32 %v334, 4294901760
    %341 = vmatpush1.xpose.msra.mxu0 %v340
    %342 = vmatprep.subr.mxu0 0.0
    %343 = vmatpush1.xpose.msra.mxu0 0.0
    %344 = vmatprep.subr.mxu0 0.0
    %345 = vmatpush1.xpose.msra.mxu0 0.0
    %346 = vmatprep.subr.mxu0 0.0
    %347 = vmatpush1.xpose.msra.mxu0 0.0
    %348 = vmatprep.subr.mxu0 0.0
    %349 = vmatpush1.xpose.msra.mxu0 0.0
    %350 = vmatprep.subr.mxu0 0.0
    %351 = vmatpush1.xpose.msra.mxu0 0.0
    %352 = vmatprep.subr.mxu0 0.0
    %353 = vmatpush1.xpose.msra.mxu0 0.0
    %354 = vmatprep.subr.mxu0 0.0
    %355 = vmatpush1.xpose.msra.mxu0 0.0
    %356 = vmatprep.subr.mxu0 0.0
    %357 = vmatpush1.xpose.msra.mxu0 0.0
    %358 = vmatprep.subr.mxu0 0.0
    %359 = vmatpush1.xpose.msra.mxu0 0.0
    %360 = vmatprep.subr.mxu0 0.0
    %361 = vmatpush1.xpose.msra.mxu0 0.0
    %362 = vmatprep.subr.mxu0 0.0
    %363 = vmatpush1.xpose.msra.mxu0 0.0
    %364 = vmatprep.subr.mxu0 0.0
    %365 = vmatpush1.xpose.msra.mxu0 0.0
    %366 = vmatprep.subr.mxu0 0.0
    %367 = vmatpush1.xpose.msra.mxu0 0.0
    %368 = vmatprep.subr.mxu0 0.0
    %369 = vmatpush1.xpose.msra.mxu0 0.0
    %370 = vmatprep.subr.mxu0 0.0
    %371 = vmatpush1.xpose.msra.mxu0 0.0
    %372 = vmatprep.subr.mxu0 0.0
    %373 = vmatpush1.xpose.msra.mxu0 0.0
    %374 = vmatprep.subr.mxu0 0.0
    %375 = vmatpush1.xpose.msra.mxu0 0.0
    %376 = vmatprep.subr.mxu0 0.0
    %377 = vmatpush1.xpose.msra.mxu0 0.0
    %378 = vmatprep.subr.mxu0 0.0
    %379 = vmatpush1.xpose.msra.mxu0 0.0
    %380 = vmatprep.subr.mxu0 0.0
    %381 = vmatpush1.xpose.msra.mxu0 0.0
    %382 = vmatprep.subr.mxu0 0.0
    %383 = vmatpush1.xpose.msra.mxu0 0.0
    %384 = vmatprep.subr.mxu0 0.0
    %385 = vmatpush1.xpose.msra.mxu0 0.0
    %386 = vmatprep.subr.mxu0 0.0
    %387 = vmatpush1.xpose.msra.mxu0 0.0
    %388 = vmatprep.subr.mxu0 0.0
    %389 = vmatpush1.xpose.msra.mxu0 0.0
    %390 = vmatprep.subr.mxu0 0.0
    %391 = vmatpush1.xpose.msra.mxu0 0.0
    %392 = vmatprep.subr.mxu0 0.0
    %393 = vmatpush1.xpose.msra.mxu0 0.0
    %394 = vmatprep.subr.mxu0 0.0
    %395 = vmatpush1.xpose.msra.mxu0 0.0
    %396 = vmatprep.subr.mxu0 0.0
    %397 = vmatpush1.xpose.msra.mxu0 0.0
    %398 = vmatprep.subr.mxu0 0.0
    %399 = vmatpush1.xpose.msra.mxu0 0.0
    %400 = vmatprep.subr.mxu0 0.0
    %401 = vmatpush1.xpose.msra.mxu0 0.0
    %402 = vmatprep.mubr.f32.mxu0 0.0
    %v403 = vand.u32 %v327, 4294901760
    %v404 = vsub.f32 %v327, %v403
    %v405 = vand.u32 %v404, 4294901760
    %v406 = vsub.f32 %v404, %v405
    %v407 = vand.u32 %v406, 4294901760
    %408 = vmatmul.mubr.f32.gmra.mrb[0].mxu0 %v407
    %v409 = vpop.f32.mrb[0].mxu0
    %v410 = vadd.f32 0.0, %v409
    %v411 = vpop.f32.mrb[0].mxu0
    %412 = vmatprep.mubr.f32.mxu0 0.0
    %v413 = vand.u32 %v330, 4294901760
    %v414 = vsub.f32 %v330, %v413
    %v415 = vand.u32 %v414, 4294901760
    %v416 = vsub.f32 %v414, %v415
    %v417 = vand.u32 %v416, 4294901760
    %418 = vmatmul.mubr.f32.gmra.mrb[0].mxu0 %v417
    %v419 = vpop.f32.mrb[0].mxu0
    %v420 = vadd.f32 0.0, %v419
    %v421 = vpop.f32.mrb[0].mxu0
    %422 = vdwg.mxu0
    %423 = vmatprep.subr.mxu0 0.0
    %v424 = vand.u32 %v332, 4294901760
    %v425 = vsub.f32 %v332, %v424
    %v426 = vand.u32 %v425, 4294901760
    %v427 = vsub.f32 %v425, %v426
    %v428 = vand.u32 %v427, 4294901760
    %429 = vmatpush1.xpose.msra.mxu0 %v428
    %430 = vmatprep.subr.mxu0 0.0
    %v431 = vand.u32 %v334, 4294901760
    %v432 = vsub.f32 %v334, %v431
    %v433 = vand.u32 %v432, 4294901760
    %v434 = vsub.f32 %v432, %v433
    %v435 = vand.u32 %v434, 4294901760
    %436 = vmatpush1.xpose.msra.mxu0 %v435
    %437 = vmatprep.subr.mxu0 0.0
    %438 = vmatpush1.xpose.msra.mxu0 0.0
    %439 = vmatprep.subr.mxu0 0.0
    %440 = vmatpush1.xpose.msra.mxu0 0.0
    %441 = vmatprep.subr.mxu0 0.0
    %442 = vmatpush1.xpose.msra.mxu0 0.0
    %443 = vmatprep.subr.mxu0 0.0
    %444 = vmatpush1.xpose.msra.mxu0 0.0
    %445 = vmatprep.subr.mxu0 0.0
    %446 = vmatpush1.xpose.msra.mxu0 0.0
    %447 = vmatprep.subr.mxu0 0.0
    %448 = vmatpush1.xpose.msra.mxu0 0.0
    %449 = vmatprep.subr.mxu0 0.0
    %450 = vmatpush1.xpose.msra.mxu0 0.0
    %451 = vmatprep.subr.mxu0 0.0
    %452 = vmatpush1.xpose.msra.mxu0 0.0
    %453 = vmatprep.subr.mxu0 0.0
    %454 = vmatpush1.xpose.msra.mxu0 0.0
    %455 = vmatprep.subr.mxu0 0.0
    %456 = vmatpush1.xpose.msra.mxu0 0.0
    %457 = vmatprep.subr.mxu0 0.0
    %458 = vmatpush1.xpose.msra.mxu0 0.0
    %459 = vmatprep.subr.mxu0 0.0
    %460 = vmatpush1.xpose.msra.mxu0 0.0
    %461 = vmatprep.subr.mxu0 0.0
    %462 = vmatpush1.xpose.msra.mxu0 0.0
    %463 = vmatprep.subr.mxu0 0.0
    %464 = vmatpush1.xpose.msra.mxu0 0.0
    %465 = vmatprep.subr.mxu0 0.0
    %466 = vmatpush1.xpose.msra.mxu0 0.0
    %467 = vmatprep.subr.mxu0 0.0
    %468 = vmatpush1.xpose.msra.mxu0 0.0
    %469 = vmatprep.subr.mxu0 0.0
    %470 = vmatpush1.xpose.msra.mxu0 0.0
    %471 = vmatprep.subr.mxu0 0.0
    %472 = vmatpush1.xpose.msra.mxu0 0.0
    %473 = vmatprep.subr.mxu0 0.0
    %474 = vmatpush1.xpose.msra.mxu0 0.0
    %475 = vmatprep.subr.mxu0 0.0
    %476 = vmatpush1.xpose.msra.mxu0 0.0
    %477 = vmatprep.subr.mxu0 0.0
    %478 = vmatpush1.xpose.msra.mxu0 0.0
    %479 = vmatprep.subr.mxu0 0.0
    %480 = vmatpush1.xpose.msra.mxu0 0.0
    %481 = vmatprep.subr.mxu0 0.0
    %482 = vmatpush1.xpose.msra.mxu0 0.0
    %483 = vmatprep.subr.mxu0 0.0
    %484 = vmatpush1.xpose.msra.mxu0 0.0
    %485 = vmatprep.subr.mxu0 0.0
    %486 = vmatpush1.xpose.msra.mxu0 0.0
    %487 = vmatprep.subr.mxu0 0.0
    %488 = vmatpush1.xpose.msra.mxu0 0.0
    %489 = vmatprep.subr.mxu0 0.0
    %490 = vmatpush1.xpose.msra.mxu0 0.0
    %491 = vmatprep.subr.mxu0 0.0
    %492 = vmatpush1.xpose.msra.mxu0 0.0
    %493 = vmatprep.subr.mxu0 0.0
    %494 = vmatpush1.xpose.msra.mxu0 0.0
    %495 = vmatprep.subr.mxu0 0.0
    %496 = vmatpush1.xpose.msra.mxu0 0.0
    %497 = vmatprep.mubr.f32.mxu0 0.0
    %v498 = vand.u32 %v327, 4294901760
    %499 = vmatmul.mubr.f32.gmra.mrb[0].mxu0 %v498
    %v500 = vpop.f32.mrb[0].mxu0
    %v501 = vadd.f32 %v410, %v500
    %v502 = vpop.f32.mrb[0].mxu0
    %503 = vmatprep.mubr.f32.mxu0 0.0
    %v504 = vand.u32 %v330, 4294901760
    %505 = vmatmul.mubr.f32.gmra.mrb[0].mxu0 %v504
    %v506 = vpop.f32.mrb[0].mxu0
    %v507 = vadd.f32 %v420, %v506
    %v508 = vpop.f32.mrb[0].mxu0
    %509 = vdwg.mxu0
    %510 = vmatprep.subr.mxu0 0.0
    %v511 = vand.u32 %v332, 4294901760
    %v512 = vsub.f32 %v332, %v511
    %513 = vmatpush1.xpose.msra.mxu0 %v512
    %514 = vmatprep.subr.mxu0 0.0
    %v515 = vand.u32 %v334, 4294901760
    %v516 = vsub.f32 %v334, %v515
    %517 = vmatpush1.xpose.msra.mxu0 %v516
    %518 = vmatprep.subr.mxu0 0.0
    %519 = vmatpush1.xpose.msra.mxu0 0.0
    %520 = vmatprep.subr.mxu0 0.0
    %521 = vmatpush1.xpose.msra.mxu0 0.0
    %522 = vmatprep.subr.mxu0 0.0
    %523 = vmatpush1.xpose.msra.mxu0 0.0
    %524 = vmatprep.subr.mxu0 0.0
    %525 = vmatpush1.xpose.msra.mxu0 0.0
    %526 = vmatprep.subr.mxu0 0.0
    %527 = vmatpush1.xpose.msra.mxu0 0.0
    %528 = vmatprep.subr.mxu0 0.0
    %529 = vmatpush1.xpose.msra.mxu0 0.0
    %530 = vmatprep.subr.mxu0 0.0
    %531 = vmatpush1.xpose.msra.mxu0 0.0
    %532 = vmatprep.subr.mxu0 0.0
    %533 = vmatpush1.xpose.msra.mxu0 0.0
    %534 = vmatprep.subr.mxu0 0.0
    %535 = vmatpush1.xpose.msra.mxu0 0.0
    %536 = vmatprep.subr.mxu0 0.0
    %537 = vmatpush1.xpose.msra.mxu0 0.0
    %538 = vmatprep.subr.mxu0 0.0
    %539 = vmatpush1.xpose.msra.mxu0 0.0
    %540 = vmatprep.subr.mxu0 0.0
    %541 = vmatpush1.xpose.msra.mxu0 0.0
    %542 = vmatprep.subr.mxu0 0.0
    %543 = vmatpush1.xpose.msra.mxu0 0.0
    %544 = vmatprep.subr.mxu0 0.0
    %545 = vmatpush1.xpose.msra.mxu0 0.0
    %546 = vmatprep.subr.mxu0 0.0
    %547 = vmatpush1.xpose.msra.mxu0 0.0
    %548 = vmatprep.subr.mxu0 0.0
    %549 = vmatpush1.xpose.msra.mxu0 0.0
    %550 = vmatprep.subr.mxu0 0.0
    %551 = vmatpush1.xpose.msra.mxu0 0.0
    %552 = vmatprep.subr.mxu0 0.0
    %553 = vmatpush1.xpose.msra.mxu0 0.0
    %554 = vmatprep.subr.mxu0 0.0
    %555 = vmatpush1.xpose.msra.mxu0 0.0
    %556 = vmatprep.subr.mxu0 0.0
    %557 = vmatpush1.xpose.msra.mxu0 0.0
    %558 = vmatprep.subr.mxu0 0.0
    %559 = vmatpush1.xpose.msra.mxu0 0.0
    %560 = vmatprep.subr.mxu0 0.0
    %561 = vmatpush1.xpose.msra.mxu0 0.0
    %562 = vmatprep.subr.mxu0 0.0
    %563 = vmatpush1.xpose.msra.mxu0 0.0
    %564 = vmatprep.subr.mxu0 0.0
    %565 = vmatpush1.xpose.msra.mxu0 0.0
    %566 = vmatprep.subr.mxu0 0.0
    %567 = vmatpush1.xpose.msra.mxu0 0.0
    %568 = vmatprep.subr.mxu0 0.0
    %569 = vmatpush1.xpose.msra.mxu0 0.0
    %570 = vmatprep.subr.mxu0 0.0
    %571 = vmatpush1.xpose.msra.mxu0 0.0
    %572 = vmatprep.subr.mxu0 0.0
    %573 = vmatpush1.xpose.msra.mxu0 0.0
    %574 = vmatprep.subr.mxu0 0.0
    %575 = vmatpush1.xpose.msra.mxu0 0.0
    %576 = vmatprep.subr.mxu0 0.0
    %577 = vmatpush1.xpose.msra.mxu0 0.0
    %578 = vmatprep.mubr.f32.mxu0 0.0
    %v579 = vand.u32 %v327, 4294901760
    %v580 = vsub.f32 %v327, %v579
    %581 = vmatmul.mubr.f32.gmra.mrb[0].mxu0 %v580
    %v582 = vpop.f32.mrb[0].mxu0
    %v583 = vadd.f32 %v501, %v582
    %v584 = vpop.f32.mrb[0].mxu0
    %585 = vmatprep.mubr.f32.mxu0 0.0
    %v586 = vand.u32 %v330, 4294901760
    %v587 = vsub.f32 %v330, %v586
    %588 = vmatmul.mubr.f32.gmra.mrb[0].mxu0 %v587
    %v589 = vpop.f32.mrb[0].mxu0
    %v590 = vadd.f32 %v507, %v589
    %v591 = vpop.f32.mrb[0].mxu0
    %592 = vdwg.mxu0
    %593 = vmatprep.subr.mxu0 0.0
    %v594 = vand.u32 %v332, 4294901760
    %595 = vmatpush1.xpose.msra.mxu0 %v594
    %596 = vmatprep.subr.mxu0 0.0
    %v597 = vand.u32 %v334, 4294901760
    %598 = vmatpush1.xpose.msra.mxu0 %v597
    %599 = vmatprep.subr.mxu0 0.0
    %600 = vmatpush1.xpose.msra.mxu0 0.0
    %601 = vmatprep.subr.mxu0 0.0
    %602 = vmatpush1.xpose.msra.mxu0 0.0
    %603 = vmatprep.subr.mxu0 0.0
    %604 = vmatpush1.xpose.msra.mxu0 0.0
    %605 = vmatprep.subr.mxu0 0.0
    %606 = vmatpush1.xpose.msra.mxu0 0.0
    %607 = vmatprep.subr.mxu0 0.0
    %608 = vmatpush1.xpose.msra.mxu0 0.0
    %609 = vmatprep.subr.mxu0 0.0
    %610 = vmatpush1.xpose.msra.mxu0 0.0
    %611 = vmatprep.subr.mxu0 0.0
    %612 = vmatpush1.xpose.msra.mxu0 0.0
    %613 = vmatprep.subr.mxu0 0.0
    %614 = vmatpush1.xpose.msra.mxu0 0.0
    %615 = vmatprep.subr.mxu0 0.0
    %616 = vmatpush1.xpose.msra.mxu0 0.0
    %617 = vmatprep.subr.mxu0 0.0
    %618 = vmatpush1.xpose.msra.mxu0 0.0
    %619 = vmatprep.subr.mxu0 0.0
    %620 = vmatpush1.xpose.msra.mxu0 0.0
    %621 = vmatprep.subr.mxu0 0.0
    %622 = vmatpush1.xpose.msra.mxu0 0.0
    %623 = vmatprep.subr.mxu0 0.0
    %624 = vmatpush1.xpose.msra.mxu0 0.0
    %625 = vmatprep.subr.mxu0 0.0
    %626 = vmatpush1.xpose.msra.mxu0 0.0
    %627 = vmatprep.subr.mxu0 0.0
    %628 = vmatpush1.xpose.msra.mxu0 0.0
    %629 = vmatprep.subr.mxu0 0.0
    %630 = vmatpush1.xpose.msra.mxu0 0.0
    %631 = vmatprep.subr.mxu0 0.0
    %632 = vmatpush1.xpose.msra.mxu0 0.0
    %633 = vmatprep.subr.mxu0 0.0
    %634 = vmatpush1.xpose.msra.mxu0 0.0
    %635 = vmatprep.subr.mxu0 0.0
    %636 = vmatpush1.xpose.msra.mxu0 0.0
    %637 = vmatprep.subr.mxu0 0.0
    %638 = vmatpush1.xpose.msra.mxu0 0.0
    %639 = vmatprep.subr.mxu0 0.0
    %640 = vmatpush1.xpose.msra.mxu0 0.0
    %641 = vmatprep.subr.mxu0 0.0
    %642 = vmatpush1.xpose.msra.mxu0 0.0
    %643 = vmatprep.subr.mxu0 0.0
    %644 = vmatpush1.xpose.msra.mxu0 0.0
    %645 = vmatprep.subr.mxu0 0.0
    %646 = vmatpush1.xpose.msra.mxu0 0.0
    %647 = vmatprep.subr.mxu0 0.0
    %648 = vmatpush1.xpose.msra.mxu0 0.0
    %649 = vmatprep.subr.mxu0 0.0
    %650 = vmatpush1.xpose.msra.mxu0 0.0
    %651 = vmatprep.subr.mxu0 0.0
    %652 = vmatpush1.xpose.msra.mxu0 0.0
    %653 = vmatprep.subr.mxu0 0.0
    %654 = vmatpush1.xpose.msra.mxu0 0.0
    %655 = vmatprep.subr.mxu0 0.0
    %656 = vmatpush1.xpose.msra.mxu0 0.0
    %657 = vmatprep.subr.mxu0 0.0
    %658 = vmatpush1.xpose.msra.mxu0 0.0
    %659 = vmatprep.mubr.f32.mxu0 0.0
    %v660 = vand.u32 %v327, 4294901760
    %v661 = vsub.f32 %v327, %v660
    %v662 = vand.u32 %v661, 4294901760
    %663 = vmatmul.mubr.f32.gmra.mrb[0].mxu0 %v662
    %v664 = vpop.f32.mrb[0].mxu0
    %v665 = vadd.f32 %v583, %v664
    %v666 = vpop.f32.mrb[0].mxu0
    %667 = vmatprep.mubr.f32.mxu0 0.0
    %v668 = vand.u32 %v330, 4294901760
    %v669 = vsub.f32 %v330, %v668
    %v670 = vand.u32 %v669, 4294901760
    %671 = vmatmul.mubr.f32.gmra.mrb[0].mxu0 %v670
    %v672 = vpop.f32.mrb[0].mxu0
    %v673 = vadd.f32 %v590, %v672
    %v674 = vpop.f32.mrb[0].mxu0
    %675 = vdwg.mxu0
    %676 = vmatprep.subr.mxu0 0.0
    %v677 = vand.u32 %v332, 4294901760
    %v678 = vsub.f32 %v332, %v677
    %v679 = vand.u32 %v678, 4294901760
    %680 = vmatpush1.xpose.msra.mxu0 %v679
    %681 = vmatprep.subr.mxu0 0.0
    %v682 = vand.u32 %v334, 4294901760
    %v683 = vsub.f32 %v334, %v682
    %v684 = vand.u32 %v683, 4294901760
    %685 = vmatpush1.xpose.msra.mxu0 %v684
    %686 = vmatprep.subr.mxu0 0.0
    %687 = vmatpush1.xpose.msra.mxu0 0.0
    %688 = vmatprep.subr.mxu0 0.0
    %689 = vmatpush1.xpose.msra.mxu0 0.0
    %690 = vmatprep.subr.mxu0 0.0
    %691 = vmatpush1.xpose.msra.mxu0 0.0
    %692 = vmatprep.subr.mxu0 0.0
    %693 = vmatpush1.xpose.msra.mxu0 0.0
    %694 = vmatprep.subr.mxu0 0.0
    %695 = vmatpush1.xpose.msra.mxu0 0.0
    %696 = vmatprep.subr.mxu0 0.0
    %697 = vmatpush1.xpose.msra.mxu0 0.0
    %698 = vmatprep.subr.mxu0 0.0
    %699 = vmatpush1.xpose.msra.mxu0 0.0
    %700 = vmatprep.subr.mxu0 0.0
    %701 = vmatpush1.xpose.msra.mxu0 0.0
    %702 = vmatprep.subr.mxu0 0.0
    %703 = vmatpush1.xpose.msra.mxu0 0.0
    %704 = vmatprep.subr.mxu0 0.0
    %705 = vmatpush1.xpose.msra.mxu0 0.0
    %706 = vmatprep.subr.mxu0 0.0
    %707 = vmatpush1.xpose.msra.mxu0 0.0
    %708 = vmatprep.subr.mxu0 0.0
    %709 = vmatpush1.xpose.msra.mxu0 0.0
    %710 = vmatprep.subr.mxu0 0.0
    %711 = vmatpush1.xpose.msra.mxu0 0.0
    %712 = vmatprep.subr.mxu0 0.0
    %713 = vmatpush1.xpose.msra.mxu0 0.0
    %714 = vmatprep.subr.mxu0 0.0
    %715 = vmatpush1.xpose.msra.mxu0 0.0
    %716 = vmatprep.subr.mxu0 0.0
    %717 = vmatpush1.xpose.msra.mxu0 0.0
    %718 = vmatprep.subr.mxu0 0.0
    %719 = vmatpush1.xpose.msra.mxu0 0.0
    %720 = vmatprep.subr.mxu0 0.0
    %721 = vmatpush1.xpose.msra.mxu0 0.0
    %722 = vmatprep.subr.mxu0 0.0
    %723 = vmatpush1.xpose.msra.mxu0 0.0
    %724 = vmatprep.subr.mxu0 0.0
    %725 = vmatpush1.xpose.msra.mxu0 0.0
    %726 = vmatprep.subr.mxu0 0.0
    %727 = vmatpush1.xpose.msra.mxu0 0.0
    %728 = vmatprep.subr.mxu0 0.0
    %729 = vmatpush1.xpose.msra.mxu0 0.0
    %730 = vmatprep.subr.mxu0 0.0
    %731 = vmatpush1.xpose.msra.mxu0 0.0
    %732 = vmatprep.subr.mxu0 0.0
    %733 = vmatpush1.xpose.msra.mxu0 0.0
    %734 = vmatprep.subr.mxu0 0.0
    %735 = vmatpush1.xpose.msra.mxu0 0.0
    %736 = vmatprep.subr.mxu0 0.0
    %737 = vmatpush1.xpose.msra.mxu0 0.0
    %738 = vmatprep.subr.mxu0 0.0
    %739 = vmatpush1.xpose.msra.mxu0 0.0
    %740 = vmatprep.subr.mxu0 0.0
    %741 = vmatpush1.xpose.msra.mxu0 0.0
    %742 = vmatprep.subr.mxu0 0.0
    %743 = vmatpush1.xpose.msra.mxu0 0.0
    %744 = vmatprep.subr.mxu0 0.0
    %745 = vmatpush1.xpose.msra.mxu0 0.0
    %746 = vmatprep.mubr.f32.mxu0 0.0
    %v747 = vand.u32 %v327, 4294901760
    %748 = vmatmul.mubr.f32.gmra.mrb[0].mxu0 %v747
    %v749 = vpop.f32.mrb[0].mxu0
    %v750 = vadd.f32 %v665, %v749
    %v751 = vpop.f32.mrb[0].mxu0
    %752 = vmatprep.mubr.f32.mxu0 0.0
    %v753 = vand.u32 %v330, 4294901760
    %754 = vmatmul.mubr.f32.gmra.mrb[0].mxu0 %v753
    %v755 = vpop.f32.mrb[0].mxu0
    %v756 = vadd.f32 %v673, %v755
    %v757 = vpop.f32.mrb[0].mxu0
    %758 = vdwg.mxu0
    %759 = vmatprep.subr.mxu0 0.0
    %v760 = vand.u32 %v332, 4294901760
    %761 = vmatpush1.xpose.msra.mxu0 %v760
    %762 = vmatprep.subr.mxu0 0.0
    %v763 = vand.u32 %v334, 4294901760
    %764 = vmatpush1.xpose.msra.mxu0 %v763
    %765 = vmatprep.subr.mxu0 0.0
    %766 = vmatpush1.xpose.msra.mxu0 0.0
    %767 = vmatprep.subr.mxu0 0.0
    %768 = vmatpush1.xpose.msra.mxu0 0.0
    %769 = vmatprep.subr.mxu0 0.0
    %770 = vmatpush1.xpose.msra.mxu0 0.0
    %771 = vmatprep.subr.mxu0 0.0
    %772 = vmatpush1.xpose.msra.mxu0 0.0
    %773 = vmatprep.subr.mxu0 0.0
    %774 = vmatpush1.xpose.msra.mxu0 0.0
    %775 = vmatprep.subr.mxu0 0.0
    %776 = vmatpush1.xpose.msra.mxu0 0.0
    %777 = vmatprep.subr.mxu0 0.0
    %778 = vmatpush1.xpose.msra.mxu0 0.0
    %779 = vmatprep.subr.mxu0 0.0
    %780 = vmatpush1.xpose.msra.mxu0 0.0
    %781 = vmatprep.subr.mxu0 0.0
    %782 = vmatpush1.xpose.msra.mxu0 0.0
    %783 = vmatprep.subr.mxu0 0.0
    %784 = vmatpush1.xpose.msra.mxu0 0.0
    %785 = vmatprep.subr.mxu0 0.0
    %786 = vmatpush1.xpose.msra.mxu0 0.0
    %787 = vmatprep.subr.mxu0 0.0
    %788 = vmatpush1.xpose.msra.mxu0 0.0
    %789 = vmatprep.subr.mxu0 0.0
    %790 = vmatpush1.xpose.msra.mxu0 0.0
    %791 = vmatprep.subr.mxu0 0.0
    %792 = vmatpush1.xpose.msra.mxu0 0.0
    %793 = vmatprep.subr.mxu0 0.0
    %794 = vmatpush1.xpose.msra.mxu0 0.0
    %795 = vmatprep.subr.mxu0 0.0
    %796 = vmatpush1.xpose.msra.mxu0 0.0
    %797 = vmatprep.subr.mxu0 0.0
    %798 = vmatpush1.xpose.msra.mxu0 0.0
    %799 = vmatprep.subr.mxu0 0.0
    %800 = vmatpush1.xpose.msra.mxu0 0.0
    %801 = vmatprep.subr.mxu0 0.0
    %802 = vmatpush1.xpose.msra.mxu0 0.0
    %803 = vmatprep.subr.mxu0 0.0
    %804 = vmatpush1.xpose.msra.mxu0 0.0
    %805 = vmatprep.subr.mxu0 0.0
    %806 = vmatpush1.xpose.msra.mxu0 0.0
    %807 = vmatprep.subr.mxu0 0.0
    %808 = vmatpush1.xpose.msra.mxu0 0.0
    %809 = vmatprep.subr.mxu0 0.0
    %810 = vmatpush1.xpose.msra.mxu0 0.0
    %811 = vmatprep.subr.mxu0 0.0
    %812 = vmatpush1.xpose.msra.mxu0 0.0
    %813 = vmatprep.subr.mxu0 0.0
    %814 = vmatpush1.xpose.msra.mxu0 0.0
    %815 = vmatprep.subr.mxu0 0.0
    %816 = vmatpush1.xpose.msra.mxu0 0.0
    %817 = vmatprep.subr.mxu0 0.0
    %818 = vmatpush1.xpose.msra.mxu0 0.0
    %819 = vmatprep.subr.mxu0 0.0
    %820 = vmatpush1.xpose.msra.mxu0 0.0
    %821 = vmatprep.subr.mxu0 0.0
    %822 = vmatpush1.xpose.msra.mxu0 0.0
    %823 = vmatprep.subr.mxu0 0.0
    %824 = vmatpush1.xpose.msra.mxu0 0.0
    %825 = vmatprep.mubr.f32.mxu0 0.0
    %v826 = vand.u32 %v327, 4294901760
    %827 = vmatmul.mubr.f32.gmra.mrb[0].mxu0 %v826
    %v828 = vpop.f32.mrb[0].mxu0
    %v829 = vadd.f32 %v750, %v828
    %v830 = vpop.f32.mrb[0].mxu0
    %831 = vmatprep.mubr.f32.mxu0 0.0
    %v832 = vand.u32 %v330, 4294901760
    %833 = vmatmul.mubr.f32.gmra.mrb[0].mxu0 %v832
    %v834 = vpop.f32.mrb[0].mxu0
    %v835 = vadd.f32 %v756, %v834
    %v836 = vpop.f32.mrb[0].mxu0
    %837 = vdwg.mxu0
    %v838 = vmul.f32 %v829, %v205
    %v839 = vmul.f32 %v835, %v206
    %842 = vrot.lane.b32.xlu0 %v130, 96
    %v843 = vpop.permute.xlu0 %842
    %844 = vrot.lane.b32.xlu0 %v135, 96
    %v845 = vpop.permute.xlu0 %844
    %v849 = vsel %vm215, %v838, 0
    %v852 = vsel %vm215, %v839, 0
    %854 = vmatprep.subr.mxu0 0.0
    %v855 = vand.u32 %v843, 4294901760
    %856 = vmatpush1.msra.mxu0 %v855
    %857 = vmatprep.subr.mxu0 0.0
    %v858 = vand.u32 %v845, 4294901760
    %859 = vmatpush1.msra.mxu0 %v858
    %860 = vmatprep.subr.mxu0 0.0
    %861 = vmatpush1.msra.mxu0 0.0
    %862 = vmatprep.subr.mxu0 0.0
    %863 = vmatpush1.msra.mxu0 0.0
    %864 = vmatprep.subr.mxu0 0.0
    %865 = vmatpush1.msra.mxu0 0.0
    %866 = vmatprep.subr.mxu0 0.0
    %867 = vmatpush1.msra.mxu0 0.0
    %868 = vmatprep.subr.mxu0 0.0
    %869 = vmatpush1.msra.mxu0 0.0
    %870 = vmatprep.subr.mxu0 0.0
    %871 = vmatpush1.msra.mxu0 0.0
    %872 = vmatprep.subr.mxu0 0.0
    %873 = vmatpush1.msra.mxu0 0.0
    %874 = vmatprep.subr.mxu0 0.0
    %875 = vmatpush1.msra.mxu0 0.0
    %876 = vmatprep.subr.mxu0 0.0
    %877 = vmatpush1.msra.mxu0 0.0
    %878 = vmatprep.subr.mxu0 0.0
    %879 = vmatpush1.msra.mxu0 0.0
    %880 = vmatprep.subr.mxu0 0.0
    %881 = vmatpush1.msra.mxu0 0.0
    %882 = vmatprep.subr.mxu0 0.0
    %883 = vmatpush1.msra.mxu0 0.0
    %884 = vmatprep.subr.mxu0 0.0
    %885 = vmatpush1.msra.mxu0 0.0
    %886 = vmatprep.subr.mxu0 0.0
    %887 = vmatpush1.msra.mxu0 0.0
    %888 = vmatprep.subr.mxu0 0.0
    %889 = vmatpush1.msra.mxu0 0.0
    %890 = vmatprep.subr.mxu0 0.0
    %891 = vmatpush1.msra.mxu0 0.0
    %892 = vmatprep.subr.mxu0 0.0
    %893 = vmatpush1.msra.mxu0 0.0
    %894 = vmatprep.subr.mxu0 0.0
    %895 = vmatpush1.msra.mxu0 0.0
    %896 = vmatprep.subr.mxu0 0.0
    %897 = vmatpush1.msra.mxu0 0.0
    %898 = vmatprep.subr.mxu0 0.0
    %899 = vmatpush1.msra.mxu0 0.0
    %900 = vmatprep.subr.mxu0 0.0
    %901 = vmatpush1.msra.mxu0 0.0
    %902 = vmatprep.subr.mxu0 0.0
    %903 = vmatpush1.msra.mxu0 0.0
    %904 = vmatprep.subr.mxu0 0.0
    %905 = vmatpush1.msra.mxu0 0.0
    %906 = vmatprep.subr.mxu0 0.0
    %907 = vmatpush1.msra.mxu0 0.0
    %908 = vmatprep.subr.mxu0 0.0
    %909 = vmatpush1.msra.mxu0 0.0
    %910 = vmatprep.subr.mxu0 0.0
    %911 = vmatpush1.msra.mxu0 0.0
    %912 = vmatprep.subr.mxu0 0.0
    %913 = vmatpush1.msra.mxu0 0.0
    %914 = vmatprep.subr.mxu0 0.0
    %915 = vmatpush1.msra.mxu0 0.0
    %916 = vmatprep.subr.mxu0 0.0
    %917 = vmatpush1.msra.mxu0 0.0
    %918 = vmatprep.subr.mxu0 0.0
    %919 = vmatpush1.msra.mxu0 0.0
    %920 = vmatprep.mubr.f32.mxu0 0.0
    %v921 = vand.u32 %v849, 4294901760
    %v922 = vsub.f32 %v849, %v921
    %v923 = vand.u32 %v922, 4294901760
    %v924 = vsub.f32 %v922, %v923
    %v925 = vand.u32 %v924, 4294901760
    %926 = vmatmul.mubr.f32.gmra.mrb[0].mxu0 %v925
    %v927 = vpop.f32.mrb[0].mxu0
    %v928 = vadd.f32 0.0, %v927
    %v929 = vpop.f32.mrb[0].mxu0
    %930 = vmatprep.mubr.f32.mxu0 0.0
    %v931 = vand.u32 %v852, 4294901760
    %v932 = vsub.f32 %v852, %v931
    %v933 = vand.u32 %v932, 4294901760
    %v934 = vsub.f32 %v932, %v933
    %v935 = vand.u32 %v934, 4294901760
    %936 = vmatmul.mubr.f32.gmra.mrb[0].mxu0 %v935
    %v937 = vpop.f32.mrb[0].mxu0
    %v938 = vadd.f32 0.0, %v937
    %v939 = vpop.f32.mrb[0].mxu0
    %940 = vdwg.mxu0
    %941 = vmatprep.subr.mxu0 0.0
    %v942 = vand.u32 %v843, 4294901760
    %v943 = vsub.f32 %v843, %v942
    %v944 = vand.u32 %v943, 4294901760
    %v945 = vsub.f32 %v943, %v944
    %v946 = vand.u32 %v945, 4294901760
    %947 = vmatpush1.msra.mxu0 %v946
    %948 = vmatprep.subr.mxu0 0.0
    %v949 = vand.u32 %v845, 4294901760
    %v950 = vsub.f32 %v845, %v949
    %v951 = vand.u32 %v950, 4294901760
    %v952 = vsub.f32 %v950, %v951
    %v953 = vand.u32 %v952, 4294901760
    %954 = vmatpush1.msra.mxu0 %v953
    %955 = vmatprep.subr.mxu0 0.0
    %956 = vmatpush1.msra.mxu0 0.0
    %957 = vmatprep.subr.mxu0 0.0
    %958 = vmatpush1.msra.mxu0 0.0
    %959 = vmatprep.subr.mxu0 0.0
    %960 = vmatpush1.msra.mxu0 0.0
    %961 = vmatprep.subr.mxu0 0.0
    %962 = vmatpush1.msra.mxu0 0.0
    %963 = vmatprep.subr.mxu0 0.0
    %964 = vmatpush1.msra.mxu0 0.0
    %965 = vmatprep.subr.mxu0 0.0
    %966 = vmatpush1.msra.mxu0 0.0
    %967 = vmatprep.subr.mxu0 0.0
    %968 = vmatpush1.msra.mxu0 0.0
    %969 = vmatprep.subr.mxu0 0.0
    %970 = vmatpush1.msra.mxu0 0.0
    %971 = vmatprep.subr.mxu0 0.0
    %972 = vmatpush1.msra.mxu0 0.0
    %973 = vmatprep.subr.mxu0 0.0
    %974 = vmatpush1.msra.mxu0 0.0
    %975 = vmatprep.subr.mxu0 0.0
    %976 = vmatpush1.msra.mxu0 0.0
    %977 = vmatprep.subr.mxu0 0.0
    %978 = vmatpush1.msra.mxu0 0.0
    %979 = vmatprep.subr.mxu0 0.0
    %980 = vmatpush1.msra.mxu0 0.0
    %981 = vmatprep.subr.mxu0 0.0
    %982 = vmatpush1.msra.mxu0 0.0
    %983 = vmatprep.subr.mxu0 0.0
    %984 = vmatpush1.msra.mxu0 0.0
    %985 = vmatprep.subr.mxu0 0.0
    %986 = vmatpush1.msra.mxu0 0.0
    %987 = vmatprep.subr.mxu0 0.0
    %988 = vmatpush1.msra.mxu0 0.0
    %989 = vmatprep.subr.mxu0 0.0
    %990 = vmatpush1.msra.mxu0 0.0
    %991 = vmatprep.subr.mxu0 0.0
    %992 = vmatpush1.msra.mxu0 0.0
    %993 = vmatprep.subr.mxu0 0.0
    %994 = vmatpush1.msra.mxu0 0.0
    %995 = vmatprep.subr.mxu0 0.0
    %996 = vmatpush1.msra.mxu0 0.0
    %997 = vmatprep.subr.mxu0 0.0
    %998 = vmatpush1.msra.mxu0 0.0
    %999 = vmatprep.subr.mxu0 0.0
    %1000 = vmatpush1.msra.mxu0 0.0
    %1001 = vmatprep.subr.mxu0 0.0
    %1002 = vmatpush1.msra.mxu0 0.0
    %1003 = vmatprep.subr.mxu0 0.0
    %1004 = vmatpush1.msra.mxu0 0.0
    %1005 = vmatprep.subr.mxu0 0.0
    %1006 = vmatpush1.msra.mxu0 0.0
    %1007 = vmatprep.subr.mxu0 0.0
    %1008 = vmatpush1.msra.mxu0 0.0
    %1009 = vmatprep.subr.mxu0 0.0
    %1010 = vmatpush1.msra.mxu0 0.0
    %1011 = vmatprep.subr.mxu0 0.0
    %1012 = vmatpush1.msra.mxu0 0.0
    %1013 = vmatprep.subr.mxu0 0.0
    %1014 = vmatpush1.msra.mxu0 0.0
    %1015 = vmatprep.mubr.f32.mxu0 0.0
    %v1016 = vand.u32 %v849, 4294901760
    %1017 = vmatmul.mubr.f32.gmra.mrb[0].mxu0 %v1016
    %v1018 = vpop.f32.mrb[0].mxu0
    %v1019 = vadd.f32 %v928, %v1018
    %v1020 = vpop.f32.mrb[0].mxu0
    %1021 = vmatprep.mubr.f32.mxu0 0.0
    %v1022 = vand.u32 %v852, 4294901760
    %1023 = vmatmul.mubr.f32.gmra.mrb[0].mxu0 %v1022
    %v1024 = vpop.f32.mrb[0].mxu0
    %v1025 = vadd.f32 %v938, %v1024
    %v1026 = vpop.f32.mrb[0].mxu0
    %1027 = vdwg.mxu0
    %1028 = vmatprep.subr.mxu0 0.0
    %v1029 = vand.u32 %v843, 4294901760
    %v1030 = vsub.f32 %v843, %v1029
    %1031 = vmatpush1.msra.mxu0 %v1030
    %1032 = vmatprep.subr.mxu0 0.0
    %v1033 = vand.u32 %v845, 4294901760
    %v1034 = vsub.f32 %v845, %v1033
    %1035 = vmatpush1.msra.mxu0 %v1034
    %1036 = vmatprep.subr.mxu0 0.0
    %1037 = vmatpush1.msra.mxu0 0.0
    %1038 = vmatprep.subr.mxu0 0.0
    %1039 = vmatpush1.msra.mxu0 0.0
    %1040 = vmatprep.subr.mxu0 0.0
    %1041 = vmatpush1.msra.mxu0 0.0
    %1042 = vmatprep.subr.mxu0 0.0
    %1043 = vmatpush1.msra.mxu0 0.0
    %1044 = vmatprep.subr.mxu0 0.0
    %1045 = vmatpush1.msra.mxu0 0.0
    %1046 = vmatprep.subr.mxu0 0.0
    %1047 = vmatpush1.msra.mxu0 0.0
    %1048 = vmatprep.subr.mxu0 0.0
    %1049 = vmatpush1.msra.mxu0 0.0
    %1050 = vmatprep.subr.mxu0 0.0
    %1051 = vmatpush1.msra.mxu0 0.0
    %1052 = vmatprep.subr.mxu0 0.0
    %1053 = vmatpush1.msra.mxu0 0.0
    %1054 = vmatprep.subr.mxu0 0.0
    %1055 = vmatpush1.msra.mxu0 0.0
    %1056 = vmatprep.subr.mxu0 0.0
    %1057 = vmatpush1.msra.mxu0 0.0
    %1058 = vmatprep.subr.mxu0 0.0
    %1059 = vmatpush1.msra.mxu0 0.0
    %1060 = vmatprep.subr.mxu0 0.0
    %1061 = vmatpush1.msra.mxu0 0.0
    %1062 = vmatprep.subr.mxu0 0.0
    %1063 = vmatpush1.msra.mxu0 0.0
    %1064 = vmatprep.subr.mxu0 0.0
    %1065 = vmatpush1.msra.mxu0 0.0
    %1066 = vmatprep.subr.mxu0 0.0
    %1067 = vmatpush1.msra.mxu0 0.0
    %1068 = vmatprep.subr.mxu0 0.0
    %1069 = vmatpush1.msra.mxu0 0.0
    %1070 = vmatprep.subr.mxu0 0.0
    %1071 = vmatpush1.msra.mxu0 0.0
    %1072 = vmatprep.subr.mxu0 0.0
    %1073 = vmatpush1.msra.mxu0 0.0
    %1074 = vmatprep.subr.mxu0 0.0
    %1075 = vmatpush1.msra.mxu0 0.0
    %1076 = vmatprep.subr.mxu0 0.0
    %1077 = vmatpush1.msra.mxu0 0.0
    %1078 = vmatprep.subr.mxu0 0.0
    %1079 = vmatpush1.msra.mxu0 0.0
    %1080 = vmatprep.subr.mxu0 0.0
    %1081 = vmatpush1.msra.mxu0 0.0
    %1082 = vmatprep.subr.mxu0 0.0
    %1083 = vmatpush1.msra.mxu0 0.0
    %1084 = vmatprep.subr.mxu0 0.0
    %1085 = vmatpush1.msra.mxu0 0.0
    %1086 = vmatprep.subr.mxu0 0.0
    %1087 = vmatpush1.msra.mxu0 0.0
    %1088 = vmatprep.subr.mxu0 0.0
    %1089 = vmatpush1.msra.mxu0 0.0
    %1090 = vmatprep.subr.mxu0 0.0
    %1091 = vmatpush1.msra.mxu0 0.0
    %1092 = vmatprep.subr.mxu0 0.0
    %1093 = vmatpush1.msra.mxu0 0.0
    %1094 = vmatprep.subr.mxu0 0.0
    %1095 = vmatpush1.msra.mxu0 0.0
    %1096 = vmatprep.mubr.f32.mxu0 0.0
    %v1097 = vand.u32 %v849, 4294901760
    %v1098 = vsub.f32 %v849, %v1097
    %1099 = vmatmul.mubr.f32.gmra.mrb[0].mxu0 %v1098
    %v1100 = vpop.f32.mrb[0].mxu0
    %v1101 = vadd.f32 %v1019, %v1100
    %v1102 = vpop.f32.mrb[0].mxu0
    %1103 = vmatprep.mubr.f32.mxu0 0.0
    %v1104 = vand.u32 %v852, 4294901760
    %v1105 = vsub.f32 %v852, %v1104
    %1106 = vmatmul.mubr.f32.gmra.mrb[0].mxu0 %v1105
    %v1107 = vpop.f32.mrb[0].mxu0
    %v1108 = vadd.f32 %v1025, %v1107
    %v1109 = vpop.f32.mrb[0].mxu0
    %1110 = vdwg.mxu0
    %1111 = vmatprep.subr.mxu0 0.0
    %v1112 = vand.u32 %v843, 4294901760
    %1113 = vmatpush1.msra.mxu0 %v1112
    %1114 = vmatprep.subr.mxu0 0.0
    %v1115 = vand.u32 %v845, 4294901760
    %1116 = vmatpush1.msra.mxu0 %v1115
    %1117 = vmatprep.subr.mxu0 0.0
    %1118 = vmatpush1.msra.mxu0 0.0
    %1119 = vmatprep.subr.mxu0 0.0
    %1120 = vmatpush1.msra.mxu0 0.0
    %1121 = vmatprep.subr.mxu0 0.0
    %1122 = vmatpush1.msra.mxu0 0.0
    %1123 = vmatprep.subr.mxu0 0.0
    %1124 = vmatpush1.msra.mxu0 0.0
    %1125 = vmatprep.subr.mxu0 0.0
    %1126 = vmatpush1.msra.mxu0 0.0
    %1127 = vmatprep.subr.mxu0 0.0
    %1128 = vmatpush1.msra.mxu0 0.0
    %1129 = vmatprep.subr.mxu0 0.0
    %1130 = vmatpush1.msra.mxu0 0.0
    %1131 = vmatprep.subr.mxu0 0.0
    %1132 = vmatpush1.msra.mxu0 0.0
    %1133 = vmatprep.subr.mxu0 0.0
    %1134 = vmatpush1.msra.mxu0 0.0
    %1135 = vmatprep.subr.mxu0 0.0
    %1136 = vmatpush1.msra.mxu0 0.0
    %1137 = vmatprep.subr.mxu0 0.0
    %1138 = vmatpush1.msra.mxu0 0.0
    %1139 = vmatprep.subr.mxu0 0.0
    %1140 = vmatpush1.msra.mxu0 0.0
    %1141 = vmatprep.subr.mxu0 0.0
    %1142 = vmatpush1.msra.mxu0 0.0
    %1143 = vmatprep.subr.mxu0 0.0
    %1144 = vmatpush1.msra.mxu0 0.0
    %1145 = vmatprep.subr.mxu0 0.0
    %1146 = vmatpush1.msra.mxu0 0.0
    %1147 = vmatprep.subr.mxu0 0.0
    %1148 = vmatpush1.msra.mxu0 0.0
    %1149 = vmatprep.subr.mxu0 0.0
    %1150 = vmatpush1.msra.mxu0 0.0
    %1151 = vmatprep.subr.mxu0 0.0
    %1152 = vmatpush1.msra.mxu0 0.0
    %1153 = vmatprep.subr.mxu0 0.0
    %1154 = vmatpush1.msra.mxu0 0.0
    %1155 = vmatprep.subr.mxu0 0.0
    %1156 = vmatpush1.msra.mxu0 0.0
    %1157 = vmatprep.subr.mxu0 0.0
    %1158 = vmatpush1.msra.mxu0 0.0
    %1159 = vmatprep.subr.mxu0 0.0
    %1160 = vmatpush1.msra.mxu0 0.0
    %1161 = vmatprep.subr.mxu0 0.0
    %1162 = vmatpush1.msra.mxu0 0.0
    %1163 = vmatprep.subr.mxu0 0.0
    %1164 = vmatpush1.msra.mxu0 0.0
    %1165 = vmatprep.subr.mxu0 0.0
    %1166 = vmatpush1.msra.mxu0 0.0
    %1167 = vmatprep.subr.mxu0 0.0
    %1168 = vmatpush1.msra.mxu0 0.0
    %1169 = vmatprep.subr.mxu0 0.0
    %1170 = vmatpush1.msra.mxu0 0.0
    %1171 = vmatprep.subr.mxu0 0.0
    %1172 = vmatpush1.msra.mxu0 0.0
    %1173 = vmatprep.subr.mxu0 0.0
    %1174 = vmatpush1.msra.mxu0 0.0
    %1175 = vmatprep.subr.mxu0 0.0
    %1176 = vmatpush1.msra.mxu0 0.0
    %1177 = vmatprep.mubr.f32.mxu0 0.0
    %v1178 = vand.u32 %v849, 4294901760
    %v1179 = vsub.f32 %v849, %v1178
    %v1180 = vand.u32 %v1179, 4294901760
    %1181 = vmatmul.mubr.f32.gmra.mrb[0].mxu0 %v1180
    %v1182 = vpop.f32.mrb[0].mxu0
    %v1183 = vadd.f32 %v1101, %v1182
    %v1184 = vpop.f32.mrb[0].mxu0
    %1185 = vmatprep.mubr.f32.mxu0 0.0
    %v1186 = vand.u32 %v852, 4294901760
    %v1187 = vsub.f32 %v852, %v1186
    %v1188 = vand.u32 %v1187, 4294901760
    %1189 = vmatmul.mubr.f32.gmra.mrb[0].mxu0 %v1188
    %v1190 = vpop.f32.mrb[0].mxu0
    %v1191 = vadd.f32 %v1108, %v1190
    %v1192 = vpop.f32.mrb[0].mxu0
    %1193 = vdwg.mxu0
    %1194 = vmatprep.subr.mxu0 0.0
    %v1195 = vand.u32 %v843, 4294901760
    %v1196 = vsub.f32 %v843, %v1195
    %v1197 = vand.u32 %v1196, 4294901760
    %1198 = vmatpush1.msra.mxu0 %v1197
    %1199 = vmatprep.subr.mxu0 0.0
    %v1200 = vand.u32 %v845, 4294901760
    %v1201 = vsub.f32 %v845, %v1200
    %v1202 = vand.u32 %v1201, 4294901760
    %1203 = vmatpush1.msra.mxu0 %v1202
    %1204 = vmatprep.subr.mxu0 0.0
    %1205 = vmatpush1.msra.mxu0 0.0
    %1206 = vmatprep.subr.mxu0 0.0
    %1207 = vmatpush1.msra.mxu0 0.0
    %1208 = vmatprep.subr.mxu0 0.0
    %1209 = vmatpush1.msra.mxu0 0.0
    %1210 = vmatprep.subr.mxu0 0.0
    %1211 = vmatpush1.msra.mxu0 0.0
    %1212 = vmatprep.subr.mxu0 0.0
    %1213 = vmatpush1.msra.mxu0 0.0
    %1214 = vmatprep.subr.mxu0 0.0
    %1215 = vmatpush1.msra.mxu0 0.0
    %1216 = vmatprep.subr.mxu0 0.0
    %1217 = vmatpush1.msra.mxu0 0.0
    %1218 = vmatprep.subr.mxu0 0.0
    %1219 = vmatpush1.msra.mxu0 0.0
    %1220 = vmatprep.subr.mxu0 0.0
    %1221 = vmatpush1.msra.mxu0 0.0
    %1222 = vmatprep.subr.mxu0 0.0
    %1223 = vmatpush1.msra.mxu0 0.0
    %1224 = vmatprep.subr.mxu0 0.0
    %1225 = vmatpush1.msra.mxu0 0.0
    %1226 = vmatprep.subr.mxu0 0.0
    %1227 = vmatpush1.msra.mxu0 0.0
    %1228 = vmatprep.subr.mxu0 0.0
    %1229 = vmatpush1.msra.mxu0 0.0
    %1230 = vmatprep.subr.mxu0 0.0
    %1231 = vmatpush1.msra.mxu0 0.0
    %1232 = vmatprep.subr.mxu0 0.0
    %1233 = vmatpush1.msra.mxu0 0.0
    %1234 = vmatprep.subr.mxu0 0.0
    %1235 = vmatpush1.msra.mxu0 0.0
    %1236 = vmatprep.subr.mxu0 0.0
    %1237 = vmatpush1.msra.mxu0 0.0
    %1238 = vmatprep.subr.mxu0 0.0
    %1239 = vmatpush1.msra.mxu0 0.0
    %1240 = vmatprep.subr.mxu0 0.0
    %1241 = vmatpush1.msra.mxu0 0.0
    %1242 = vmatprep.subr.mxu0 0.0
    %1243 = vmatpush1.msra.mxu0 0.0
    %1244 = vmatprep.subr.mxu0 0.0
    %1245 = vmatpush1.msra.mxu0 0.0
    %1246 = vmatprep.subr.mxu0 0.0
    %1247 = vmatpush1.msra.mxu0 0.0
    %1248 = vmatprep.subr.mxu0 0.0
    %1249 = vmatpush1.msra.mxu0 0.0
    %1250 = vmatprep.subr.mxu0 0.0
    %1251 = vmatpush1.msra.mxu0 0.0
    %1252 = vmatprep.subr.mxu0 0.0
    %1253 = vmatpush1.msra.mxu0 0.0
    %1254 = vmatprep.subr.mxu0 0.0
    %1255 = vmatpush1.msra.mxu0 0.0
    %1256 = vmatprep.subr.mxu0 0.0
    %1257 = vmatpush1.msra.mxu0 0.0
    %1258 = vmatprep.subr.mxu0 0.0
    %1259 = vmatpush1.msra.mxu0 0.0
    %1260 = vmatprep.subr.mxu0 0.0
    %1261 = vmatpush1.msra.mxu0 0.0
    %1262 = vmatprep.subr.mxu0 0.0
    %1263 = vmatpush1.msra.mxu0 0.0
    %1264 = vmatprep.mubr.f32.mxu0 0.0
    %v1265 = vand.u32 %v849, 4294901760
    %1266 = vmatmul.mubr.f32.gmra.mrb[0].mxu0 %v1265
    %v1267 = vpop.f32.mrb[0].mxu0
    %v1268 = vadd.f32 %v1183, %v1267
    %v1269 = vpop.f32.mrb[0].mxu0
    %1270 = vmatprep.mubr.f32.mxu0 0.0
    %v1271 = vand.u32 %v852, 4294901760
    %1272 = vmatmul.mubr.f32.gmra.mrb[0].mxu0 %v1271
    %v1273 = vpop.f32.mrb[0].mxu0
    %v1274 = vadd.f32 %v1191, %v1273
    %v1275 = vpop.f32.mrb[0].mxu0
    %1276 = vdwg.mxu0
    %1277 = vmatprep.subr.mxu0 0.0
    %v1278 = vand.u32 %v843, 4294901760
    %1279 = vmatpush1.msra.mxu0 %v1278
    %1280 = vmatprep.subr.mxu0 0.0
    %v1281 = vand.u32 %v845, 4294901760
    %1282 = vmatpush1.msra.mxu0 %v1281
    %1283 = vmatprep.subr.mxu0 0.0
    %1284 = vmatpush1.msra.mxu0 0.0
    %1285 = vmatprep.subr.mxu0 0.0
    %1286 = vmatpush1.msra.mxu0 0.0
    %1287 = vmatprep.subr.mxu0 0.0
    %1288 = vmatpush1.msra.mxu0 0.0
    %1289 = vmatprep.subr.mxu0 0.0
    %1290 = vmatpush1.msra.mxu0 0.0
    %1291 = vmatprep.subr.mxu0 0.0
    %1292 = vmatpush1.msra.mxu0 0.0
    %1293 = vmatprep.subr.mxu0 0.0
    %1294 = vmatpush1.msra.mxu0 0.0
    %1295 = vmatprep.subr.mxu0 0.0
    %1296 = vmatpush1.msra.mxu0 0.0
    %1297 = vmatprep.subr.mxu0 0.0
    %1298 = vmatpush1.msra.mxu0 0.0
    %1299 = vmatprep.subr.mxu0 0.0
    %1300 = vmatpush1.msra.mxu0 0.0
    %1301 = vmatprep.subr.mxu0 0.0
    %1302 = vmatpush1.msra.mxu0 0.0
    %1303 = vmatprep.subr.mxu0 0.0
    %1304 = vmatpush1.msra.mxu0 0.0
    %1305 = vmatprep.subr.mxu0 0.0
    %1306 = vmatpush1.msra.mxu0 0.0
    %1307 = vmatprep.subr.mxu0 0.0
    %1308 = vmatpush1.msra.mxu0 0.0
    %1309 = vmatprep.subr.mxu0 0.0
    %1310 = vmatpush1.msra.mxu0 0.0
    %1311 = vmatprep.subr.mxu0 0.0
    %1312 = vmatpush1.msra.mxu0 0.0
    %1313 = vmatprep.subr.mxu0 0.0
    %1314 = vmatpush1.msra.mxu0 0.0
    %1315 = vmatprep.subr.mxu0 0.0
    %1316 = vmatpush1.msra.mxu0 0.0
    %1317 = vmatprep.subr.mxu0 0.0
    %1318 = vmatpush1.msra.mxu0 0.0
    %1319 = vmatprep.subr.mxu0 0.0
    %1320 = vmatpush1.msra.mxu0 0.0
    %1321 = vmatprep.subr.mxu0 0.0
    %1322 = vmatpush1.msra.mxu0 0.0
    %1323 = vmatprep.subr.mxu0 0.0
    %1324 = vmatpush1.msra.mxu0 0.0
    %1325 = vmatprep.subr.mxu0 0.0
    %1326 = vmatpush1.msra.mxu0 0.0
    %1327 = vmatprep.subr.mxu0 0.0
    %1328 = vmatpush1.msra.mxu0 0.0
    %1329 = vmatprep.subr.mxu0 0.0
    %1330 = vmatpush1.msra.mxu0 0.0
    %1331 = vmatprep.subr.mxu0 0.0
    %1332 = vmatpush1.msra.mxu0 0.0
    %1333 = vmatprep.subr.mxu0 0.0
    %1334 = vmatpush1.msra.mxu0 0.0
    %1335 = vmatprep.subr.mxu0 0.0
    %1336 = vmatpush1.msra.mxu0 0.0
    %1337 = vmatprep.subr.mxu0 0.0
    %1338 = vmatpush1.msra.mxu0 0.0
    %1339 = vmatprep.subr.mxu0 0.0
    %1340 = vmatpush1.msra.mxu0 0.0
    %1341 = vmatprep.subr.mxu0 0.0
    %1342 = vmatpush1.msra.mxu0 0.0
    %1343 = vmatprep.mubr.f32.mxu0 0.0
    %v1344 = vand.u32 %v849, 4294901760
    %1345 = vmatmul.mubr.f32.gmra.mrb[0].mxu0 %v1344
    %v1346 = vpop.f32.mrb[0].mxu0
    %v1347 = vadd.f32 %v1268, %v1346
    %v1348 = vpop.f32.mrb[0].mxu0
    %1349 = vmatprep.mubr.f32.mxu0 0.0
    %v1350 = vand.u32 %v852, 4294901760
    %1351 = vmatmul.mubr.f32.gmra.mrb[0].mxu0 %v1350
    %v1352 = vpop.f32.mrb[0].mxu0
    %v1353 = vadd.f32 %v1274, %v1352
    %v1354 = vpop.f32.mrb[0].mxu0
    %1355 = vdwg.mxu0
    %v1356 = vsel %vm215, %v1347, 0.0
    %1357 = vadd.xlane.f32.xlu0 %v1356
    %v1358 = vpop.xlane.xlu0 %1357
    %v1359 = vsel %vm215, %v1353, 0.0
    %1360 = vadd.xlane.f32.xlu0 %v1359
    %v1361 = vpop.xlane.xlu0 %1360
    %v1362 = vmul.f32 %v1358, %v188
    %v1363 = vmul.f32 %v1361, %v188
    %v1364 = vsub.f32 %v1347, %v1362
    %v1365 = vsub.f32 %v1353, %v1363
    %v1366 = vmul.f32 %v1364, %v1364
    %v1367 = vmul.f32 %v1365, %v1365
    %v1368 = vsel %vm215, %v1366, 0.0
    %1369 = vadd.xlane.f32.xlu0 %v1368
    %v1370 = vpop.xlane.xlu0 %1369
    %v1371 = vsel %vm215, %v1367, 0.0
    %1372 = vadd.xlane.f32.xlu0 %v1371
    %v1373 = vpop.xlane.xlu0 %1372
    %v1374 = vmul.f32 %v1370, %v188
    %v1375 = vmul.f32 %v1373, %v188
    %v1376 = vadd.f32 %v1374, 1e-05
    %v1377 = vadd.f32 %v1375, 1e-05
    %v1378 = vrsqrt.pop %v1376
    %v1379 = vrsqrt.pop %v1377
    %v1380 = vmul.f32 %v1364, %v1378
    %v1381 = vmul.f32 %v1365, %v1379
    %v1382 = vxor.u32 %v146, 2147483648
    %v1383 = vxor.u32 %v147, 2147483648
    %v1384 = vmul.f32 %v1382, 1.442695
    %v1385 = vpow.pop %v1384
    %v1386 = vmul.f32 %v1383, 1.442695
    %v1387 = vpow.pop %v1386
    %v1388 = vadd.f32 %v1385, 1.0
    %v1389 = vadd.f32 %v1387, 1.0
    %v1390 = vrcp.pop %v1388
    %v1391 = vmul.f32 1.0, %v1390
    %v1392 = vrcp.pop %v1389
    %v1393 = vmul.f32 1.0, %v1392
    %v1394 = vmul.f32 %v146, %v1391
    %v1395 = vmul.f32 %v147, %v1393
    %1398 = vrot.lane.b32.xlu0 %v1380, 64
    %v1399 = vpop.permute.xlu0 %1398
    %1400 = vrot.lane.b32.xlu0 %v1381, 64
    %v1401 = vpop.permute.xlu0 %1400
    %v1404 = vmul.f32 %v1394, %v1399
    %v1405 = vmul.f32 %v1395, %v1401
    %v1406 = vld [vmem:[%s4] sm:$0xff]
    %v1407 = vld [vmem:[%s4 + $0x8] sm:$0xff]
    %1408 = vrot.lane.b32.xlu0 %v301, 120
    %v1409 = vpop.permute.xlu0 %1408
    %1410 = vrot.lane.b32.xlu0 %v302, 120
    %v1411 = vpop.permute.xlu0 %1410
    %1412 = vrot.lane.b32.xlu0 %v317, 104
    %v1413 = vpop.permute.xlu0 %1412
    %1414 = vrot.lane.b32.xlu0 %v318, 104
    %v1415 = vpop.permute.xlu0 %1414
    %v1416 = vsel %vm325, %v1409, 0
    %v1418 = vsel %vm325, %v1411, 0
    %v1420 = vsel %vm325, %v1413, 0
    %v1422 = vsel %vm325, %v1415, 0
    %1424 = vmatprep.subr.mxu0 0.0
    %v1425 = vand.u32 %v1420, 4294901760
    %1426 = vmatpush1.xpose.msra.mxu0 %v1425
    %1427 = vmatprep.subr.mxu0 0.0
    %v1428 = vand.u32 %v1422, 4294901760
    %1429 = vmatpush1.xpose.msra.mxu0 %v1428
    %1430 = vmatprep.subr.mxu0 0.0
    %1431 = vmatpush1.xpose.msra.mxu0 0.0
    %1432 = vmatprep.subr.mxu0 0.0
    %1433 = vmatpush1.xpose.msra.mxu0 0.0
    %1434 = vmatprep.subr.mxu0 0.0
    %1435 = vmatpush1.xpose.msra.mxu0 0.0
    %1436 = vmatprep.subr.mxu0 0.0
    %1437 = vmatpush1.xpose.msra.mxu0 0.0
    %1438 = vmatprep.subr.mxu0 0.0
    %1439 = vmatpush1.xpose.msra.mxu0 0.0
    %1440 = vmatprep.subr.mxu0 0.0
    %1441 = vmatpush1.xpose.msra.mxu0 0.0
    %1442 = vmatprep.subr.mxu0 0.0
    %1443 = vmatpush1.xpose.msra.mxu0 0.0
    %1444 = vmatprep.subr.mxu0 0.0
    %1445 = vmatpush1.xpose.msra.mxu0 0.0
    %1446 = vmatprep.subr.mxu0 0.0
    %1447 = vmatpush1.xpose.msra.mxu0 0.0
    %1448 = vmatprep.subr.mxu0 0.0
    %1449 = vmatpush1.xpose.msra.mxu0 0.0
    %1450 = vmatprep.subr.mxu0 0.0
    %1451 = vmatpush1.xpose.msra.mxu0 0.0
    %1452 = vmatprep.subr.mxu0 0.0
    %1453 = vmatpush1.xpose.msra.mxu0 0.0
    %1454 = vmatprep.subr.mxu0 0.0
    %1455 = vmatpush1.xpose.msra.mxu0 0.0
    %1456 = vmatprep.subr.mxu0 0.0
    %1457 = vmatpush1.xpose.msra.mxu0 0.0
    %1458 = vmatprep.subr.mxu0 0.0
    %1459 = vmatpush1.xpose.msra.mxu0 0.0
    %1460 = vmatprep.subr.mxu0 0.0
    %1461 = vmatpush1.xpose.msra.mxu0 0.0
    %1462 = vmatprep.subr.mxu0 0.0
    %1463 = vmatpush1.xpose.msra.mxu0 0.0
    %1464 = vmatprep.subr.mxu0 0.0
    %1465 = vmatpush1.xpose.msra.mxu0 0.0
    %1466 = vmatprep.subr.mxu0 0.0
    %1467 = vmatpush1.xpose.msra.mxu0 0.0
    %1468 = vmatprep.subr.mxu0 0.0
    %1469 = vmatpush1.xpose.msra.mxu0 0.0
    %1470 = vmatprep.subr.mxu0 0.0
    %1471 = vmatpush1.xpose.msra.mxu0 0.0
    %1472 = vmatprep.subr.mxu0 0.0
    %1473 = vmatpush1.xpose.msra.mxu0 0.0
    %1474 = vmatprep.subr.mxu0 0.0
    %1475 = vmatpush1.xpose.msra.mxu0 0.0
    %1476 = vmatprep.subr.mxu0 0.0
    %1477 = vmatpush1.xpose.msra.mxu0 0.0
    %1478 = vmatprep.subr.mxu0 0.0
    %1479 = vmatpush1.xpose.msra.mxu0 0.0
    %1480 = vmatprep.subr.mxu0 0.0
    %1481 = vmatpush1.xpose.msra.mxu0 0.0
    %1482 = vmatprep.subr.mxu0 0.0
    %1483 = vmatpush1.xpose.msra.mxu0 0.0
    %1484 = vmatprep.subr.mxu0 0.0
    %1485 = vmatpush1.xpose.msra.mxu0 0.0
    %1486 = vmatprep.subr.mxu0 0.0
    %1487 = vmatpush1.xpose.msra.mxu0 0.0
    %1488 = vmatprep.subr.mxu0 0.0
    %1489 = vmatpush1.xpose.msra.mxu0 0.0
    %1490 = vmatprep.mubr.f32.mxu0 0.0
    %v1491 = vand.u32 %v1416, 4294901760
    %v1492 = vsub.f32 %v1416, %v1491
    %v1493 = vand.u32 %v1492, 4294901760
    %v1494 = vsub.f32 %v1492, %v1493
    %v1495 = vand.u32 %v1494, 4294901760
    %1496 = vmatmul.mubr.f32.gmra.mrb[0].mxu0 %v1495
    %v1497 = vpop.f32.mrb[0].mxu0
    %v1498 = vadd.f32 0.0, %v1497
    %v1499 = vpop.f32.mrb[0].mxu0
    %1500 = vmatprep.mubr.f32.mxu0 0.0
    %v1501 = vand.u32 %v1418, 4294901760
    %v1502 = vsub.f32 %v1418, %v1501
    %v1503 = vand.u32 %v1502, 4294901760
    %v1504 = vsub.f32 %v1502, %v1503
    %v1505 = vand.u32 %v1504, 4294901760
    %1506 = vmatmul.mubr.f32.gmra.mrb[0].mxu0 %v1505
    %v1507 = vpop.f32.mrb[0].mxu0
    %v1508 = vadd.f32 0.0, %v1507
    %v1509 = vpop.f32.mrb[0].mxu0
    %1510 = vdwg.mxu0
    %1511 = vmatprep.subr.mxu0 0.0
    %v1512 = vand.u32 %v1420, 4294901760
    %v1513 = vsub.f32 %v1420, %v1512
    %v1514 = vand.u32 %v1513, 4294901760
    %v1515 = vsub.f32 %v1513, %v1514
    %v1516 = vand.u32 %v1515, 4294901760
    %1517 = vmatpush1.xpose.msra.mxu0 %v1516
    %1518 = vmatprep.subr.mxu0 0.0
    %v1519 = vand.u32 %v1422, 4294901760
    %v1520 = vsub.f32 %v1422, %v1519
    %v1521 = vand.u32 %v1520, 4294901760
    %v1522 = vsub.f32 %v1520, %v1521
    %v1523 = vand.u32 %v1522, 4294901760
    %1524 = vmatpush1.xpose.msra.mxu0 %v1523
    %1525 = vmatprep.subr.mxu0 0.0
    %1526 = vmatpush1.xpose.msra.mxu0 0.0
    %1527 = vmatprep.subr.mxu0 0.0
    %1528 = vmatpush1.xpose.msra.mxu0 0.0
    %1529 = vmatprep.subr.mxu0 0.0
    %1530 = vmatpush1.xpose.msra.mxu0 0.0
    %1531 = vmatprep.subr.mxu0 0.0
    %1532 = vmatpush1.xpose.msra.mxu0 0.0
    %1533 = vmatprep.subr.mxu0 0.0
    %1534 = vmatpush1.xpose.msra.mxu0 0.0
    %1535 = vmatprep.subr.mxu0 0.0
    %1536 = vmatpush1.xpose.msra.mxu0 0.0
    %1537 = vmatprep.subr.mxu0 0.0
    %1538 = vmatpush1.xpose.msra.mxu0 0.0
    %1539 = vmatprep.subr.mxu0 0.0
    %1540 = vmatpush1.xpose.msra.mxu0 0.0
    %1541 = vmatprep.subr.mxu0 0.0
    %1542 = vmatpush1.xpose.msra.mxu0 0.0
    %1543 = vmatprep.subr.mxu0 0.0
    %1544 = vmatpush1.xpose.msra.mxu0 0.0
    %1545 = vmatprep.subr.mxu0 0.0
    %1546 = vmatpush1.xpose.msra.mxu0 0.0
    %1547 = vmatprep.subr.mxu0 0.0
    %1548 = vmatpush1.xpose.msra.mxu0 0.0
    %1549 = vmatprep.subr.mxu0 0.0
    %1550 = vmatpush1.xpose.msra.mxu0 0.0
    %1551 = vmatprep.subr.mxu0 0.0
    %1552 = vmatpush1.xpose.msra.mxu0 0.0
    %1553 = vmatprep.subr.mxu0 0.0
    %1554 = vmatpush1.xpose.msra.mxu0 0.0
    %1555 = vmatprep.subr.mxu0 0.0
    %1556 = vmatpush1.xpose.msra.mxu0 0.0
    %1557 = vmatprep.subr.mxu0 0.0
    %1558 = vmatpush1.xpose.msra.mxu0 0.0
    %1559 = vmatprep.subr.mxu0 0.0
    %1560 = vmatpush1.xpose.msra.mxu0 0.0
    %1561 = vmatprep.subr.mxu0 0.0
    %1562 = vmatpush1.xpose.msra.mxu0 0.0
    %1563 = vmatprep.subr.mxu0 0.0
    %1564 = vmatpush1.xpose.msra.mxu0 0.0
    %1565 = vmatprep.subr.mxu0 0.0
    %1566 = vmatpush1.xpose.msra.mxu0 0.0
    %1567 = vmatprep.subr.mxu0 0.0
    %1568 = vmatpush1.xpose.msra.mxu0 0.0
    %1569 = vmatprep.subr.mxu0 0.0
    %1570 = vmatpush1.xpose.msra.mxu0 0.0
    %1571 = vmatprep.subr.mxu0 0.0
    %1572 = vmatpush1.xpose.msra.mxu0 0.0
    %1573 = vmatprep.subr.mxu0 0.0
    %1574 = vmatpush1.xpose.msra.mxu0 0.0
    %1575 = vmatprep.subr.mxu0 0.0
    %1576 = vmatpush1.xpose.msra.mxu0 0.0
    %1577 = vmatprep.subr.mxu0 0.0
    %1578 = vmatpush1.xpose.msra.mxu0 0.0
    %1579 = vmatprep.subr.mxu0 0.0
    %1580 = vmatpush1.xpose.msra.mxu0 0.0
    %1581 = vmatprep.subr.mxu0 0.0
    %1582 = vmatpush1.xpose.msra.mxu0 0.0
    %1583 = vmatprep.subr.mxu0 0.0
    %1584 = vmatpush1.xpose.msra.mxu0 0.0
    %1585 = vmatprep.mubr.f32.mxu0 0.0
    %v1586 = vand.u32 %v1416, 4294901760
    %1587 = vmatmul.mubr.f32.gmra.mrb[0].mxu0 %v1586
    %v1588 = vpop.f32.mrb[0].mxu0
    %v1589 = vadd.f32 %v1498, %v1588
    %v1590 = vpop.f32.mrb[0].mxu0
    %1591 = vmatprep.mubr.f32.mxu0 0.0
    %v1592 = vand.u32 %v1418, 4294901760
    %1593 = vmatmul.mubr.f32.gmra.mrb[0].mxu0 %v1592
    %v1594 = vpop.f32.mrb[0].mxu0
    %v1595 = vadd.f32 %v1508, %v1594
    %v1596 = vpop.f32.mrb[0].mxu0
    %1597 = vdwg.mxu0
    %1598 = vmatprep.subr.mxu0 0.0
    %v1599 = vand.u32 %v1420, 4294901760
    %v1600 = vsub.f32 %v1420, %v1599
    %1601 = vmatpush1.xpose.msra.mxu0 %v1600
    %1602 = vmatprep.subr.mxu0 0.0
    %v1603 = vand.u32 %v1422, 4294901760
    %v1604 = vsub.f32 %v1422, %v1603
    %1605 = vmatpush1.xpose.msra.mxu0 %v1604
    %1606 = vmatprep.subr.mxu0 0.0
    %1607 = vmatpush1.xpose.msra.mxu0 0.0
    %1608 = vmatprep.subr.mxu0 0.0
    %1609 = vmatpush1.xpose.msra.mxu0 0.0
    %1610 = vmatprep.subr.mxu0 0.0
    %1611 = vmatpush1.xpose.msra.mxu0 0.0
    %1612 = vmatprep.subr.mxu0 0.0
    %1613 = vmatpush1.xpose.msra.mxu0 0.0
    %1614 = vmatprep.subr.mxu0 0.0
    %1615 = vmatpush1.xpose.msra.mxu0 0.0
    %1616 = vmatprep.subr.mxu0 0.0
    %1617 = vmatpush1.xpose.msra.mxu0 0.0
    %1618 = vmatprep.subr.mxu0 0.0
    %1619 = vmatpush1.xpose.msra.mxu0 0.0
    %1620 = vmatprep.subr.mxu0 0.0
    %1621 = vmatpush1.xpose.msra.mxu0 0.0
    %1622 = vmatprep.subr.mxu0 0.0
    %1623 = vmatpush1.xpose.msra.mxu0 0.0
    %1624 = vmatprep.subr.mxu0 0.0
    %1625 = vmatpush1.xpose.msra.mxu0 0.0
    %1626 = vmatprep.subr.mxu0 0.0
    %1627 = vmatpush1.xpose.msra.mxu0 0.0
    %1628 = vmatprep.subr.mxu0 0.0
    %1629 = vmatpush1.xpose.msra.mxu0 0.0
    %1630 = vmatprep.subr.mxu0 0.0
    %1631 = vmatpush1.xpose.msra.mxu0 0.0
    %1632 = vmatprep.subr.mxu0 0.0
    %1633 = vmatpush1.xpose.msra.mxu0 0.0
    %1634 = vmatprep.subr.mxu0 0.0
    %1635 = vmatpush1.xpose.msra.mxu0 0.0
    %1636 = vmatprep.subr.mxu0 0.0
    %1637 = vmatpush1.xpose.msra.mxu0 0.0
    %1638 = vmatprep.subr.mxu0 0.0
    %1639 = vmatpush1.xpose.msra.mxu0 0.0
    %1640 = vmatprep.subr.mxu0 0.0
    %1641 = vmatpush1.xpose.msra.mxu0 0.0
    %1642 = vmatprep.subr.mxu0 0.0
    %1643 = vmatpush1.xpose.msra.mxu0 0.0
    %1644 = vmatprep.subr.mxu0 0.0
    %1645 = vmatpush1.xpose.msra.mxu0 0.0
    %1646 = vmatprep.subr.mxu0 0.0
    %1647 = vmatpush1.xpose.msra.mxu0 0.0
    %1648 = vmatprep.subr.mxu0 0.0
    %1649 = vmatpush1.xpose.msra.mxu0 0.0
    %1650 = vmatprep.subr.mxu0 0.0
    %1651 = vmatpush1.xpose.msra.mxu0 0.0
    %1652 = vmatprep.subr.mxu0 0.0
    %1653 = vmatpush1.xpose.msra.mxu0 0.0
    %1654 = vmatprep.subr.mxu0 0.0
    %1655 = vmatpush1.xpose.msra.mxu0 0.0
    %1656 = vmatprep.subr.mxu0 0.0
    %1657 = vmatpush1.xpose.msra.mxu0 0.0
    %1658 = vmatprep.subr.mxu0 0.0
    %1659 = vmatpush1.xpose.msra.mxu0 0.0
    %1660 = vmatprep.subr.mxu0 0.0
    %1661 = vmatpush1.xpose.msra.mxu0 0.0
    %1662 = vmatprep.subr.mxu0 0.0
    %1663 = vmatpush1.xpose.msra.mxu0 0.0
    %1664 = vmatprep.subr.mxu0 0.0
    %1665 = vmatpush1.xpose.msra.mxu0 0.0
    %1666 = vmatprep.mubr.f32.mxu0 0.0
    %v1667 = vand.u32 %v1416, 4294901760
    %v1668 = vsub.f32 %v1416, %v1667
    %1669 = vmatmul.mubr.f32.gmra.mrb[0].mxu0 %v1668
    %v1670 = vpop.f32.mrb[0].mxu0
    %v1671 = vadd.f32 %v1589, %v1670
    %v1672 = vpop.f32.mrb[0].mxu0
    %1673 = vmatprep.mubr.f32.mxu0 0.0
    %v1674 = vand.u32 %v1418, 4294901760
    %v1675 = vsub.f32 %v1418, %v1674
    %1676 = vmatmul.mubr.f32.gmra.mrb[0].mxu0 %v1675
    %v1677 = vpop.f32.mrb[0].mxu0
    %v1678 = vadd.f32 %v1595, %v1677
    %v1679 = vpop.f32.mrb[0].mxu0
    %1680 = vdwg.mxu0
    %1681 = vmatprep.subr.mxu0 0.0
    %v1682 = vand.u32 %v1420, 4294901760
    %1683 = vmatpush1.xpose.msra.mxu0 %v1682
    %1684 = vmatprep.subr.mxu0 0.0
    %v1685 = vand.u32 %v1422, 4294901760
    %1686 = vmatpush1.xpose.msra.mxu0 %v1685
    %1687 = vmatprep.subr.mxu0 0.0
    %1688 = vmatpush1.xpose.msra.mxu0 0.0
    %1689 = vmatprep.subr.mxu0 0.0
    %1690 = vmatpush1.xpose.msra.mxu0 0.0
    %1691 = vmatprep.subr.mxu0 0.0
    %1692 = vmatpush1.xpose.msra.mxu0 0.0
    %1693 = vmatprep.subr.mxu0 0.0
    %1694 = vmatpush1.xpose.msra.mxu0 0.0
    %1695 = vmatprep.subr.mxu0 0.0
    %1696 = vmatpush1.xpose.msra.mxu0 0.0
    %1697 = vmatprep.subr.mxu0 0.0
    %1698 = vmatpush1.xpose.msra.mxu0 0.0
    %1699 = vmatprep.subr.mxu0 0.0
    %1700 = vmatpush1.xpose.msra.mxu0 0.0
    %1701 = vmatprep.subr.mxu0 0.0
    %1702 = vmatpush1.xpose.msra.mxu0 0.0
    %1703 = vmatprep.subr.mxu0 0.0
    %1704 = vmatpush1.xpose.msra.mxu0 0.0
    %1705 = vmatprep.subr.mxu0 0.0
    %1706 = vmatpush1.xpose.msra.mxu0 0.0
    %1707 = vmatprep.subr.mxu0 0.0
    %1708 = vmatpush1.xpose.msra.mxu0 0.0
    %1709 = vmatprep.subr.mxu0 0.0
    %1710 = vmatpush1.xpose.msra.mxu0 0.0
    %1711 = vmatprep.subr.mxu0 0.0
    %1712 = vmatpush1.xpose.msra.mxu0 0.0
    %1713 = vmatprep.subr.mxu0 0.0
    %1714 = vmatpush1.xpose.msra.mxu0 0.0
    %1715 = vmatprep.subr.mxu0 0.0
    %1716 = vmatpush1.xpose.msra.mxu0 0.0
    %1717 = vmatprep.subr.mxu0 0.0
    %1718 = vmatpush1.xpose.msra.mxu0 0.0
    %1719 = vmatprep.subr.mxu0 0.0
    %1720 = vmatpush1.xpose.msra.mxu0 0.0
    %1721 = vmatprep.subr.mxu0 0.0
    %1722 = vmatpush1.xpose.msra.mxu0 0.0
    %1723 = vmatprep.subr.mxu0 0.0
    %1724 = vmatpush1.xpose.msra.mxu0 0.0
    %1725 = vmatprep.subr.mxu0 0.0
    %1726 = vmatpush1.xpose.msra.mxu0 0.0
    %1727 = vmatprep.subr.mxu0 0.0
    %1728 = vmatpush1.xpose.msra.mxu0 0.0
    %1729 = vmatprep.subr.mxu0 0.0
    %1730 = vmatpush1.xpose.msra.mxu0 0.0
    %1731 = vmatprep.subr.mxu0 0.0
    %1732 = vmatpush1.xpose.msra.mxu0 0.0
    %1733 = vmatprep.subr.mxu0 0.0
    %1734 = vmatpush1.xpose.msra.mxu0 0.0
    %1735 = vmatprep.subr.mxu0 0.0
    %1736 = vmatpush1.xpose.msra.mxu0 0.0
    %1737 = vmatprep.subr.mxu0 0.0
    %1738 = vmatpush1.xpose.msra.mxu0 0.0
    %1739 = vmatprep.subr.mxu0 0.0
    %1740 = vmatpush1.xpose.msra.mxu0 0.0
    %1741 = vmatprep.subr.mxu0 0.0
    %1742 = vmatpush1.xpose.msra.mxu0 0.0
    %1743 = vmatprep.subr.mxu0 0.0
    %1744 = vmatpush1.xpose.msra.mxu0 0.0
    %1745 = vmatprep.subr.mxu0 0.0
    %1746 = vmatpush1.xpose.msra.mxu0 0.0
    %1747 = vmatprep.mubr.f32.mxu0 0.0
    %v1748 = vand.u32 %v1416, 4294901760
    %v1749 = vsub.f32 %v1416, %v1748
    %v1750 = vand.u32 %v1749, 4294901760
    %1751 = vmatmul.mubr.f32.gmra.mrb[0].mxu0 %v1750
    %v1752 = vpop.f32.mrb[0].mxu0
    %v1753 = vadd.f32 %v1671, %v1752
    %v1754 = vpop.f32.mrb[0].mxu0
    %1755 = vmatprep.mubr.f32.mxu0 0.0
    %v1756 = vand.u32 %v1418, 4294901760
    %v1757 = vsub.f32 %v1418, %v1756
    %v1758 = vand.u32 %v1757, 4294901760
    %1759 = vmatmul.mubr.f32.gmra.mrb[0].mxu0 %v1758
    %v1760 = vpop.f32.mrb[0].mxu0
    %v1761 = vadd.f32 %v1678, %v1760
    %v1762 = vpop.f32.mrb[0].mxu0
    %1763 = vdwg.mxu0
    %1764 = vmatprep.subr.mxu0 0.0
    %v1765 = vand.u32 %v1420, 4294901760
    %v1766 = vsub.f32 %v1420, %v1765
    %v1767 = vand.u32 %v1766, 4294901760
    %1768 = vmatpush1.xpose.msra.mxu0 %v1767
    %1769 = vmatprep.subr.mxu0 0.0
    %v1770 = vand.u32 %v1422, 4294901760
    %v1771 = vsub.f32 %v1422, %v1770
    %v1772 = vand.u32 %v1771, 4294901760
    %1773 = vmatpush1.xpose.msra.mxu0 %v1772
    %1774 = vmatprep.subr.mxu0 0.0
    %1775 = vmatpush1.xpose.msra.mxu0 0.0
    %1776 = vmatprep.subr.mxu0 0.0
    %1777 = vmatpush1.xpose.msra.mxu0 0.0
    %1778 = vmatprep.subr.mxu0 0.0
    %1779 = vmatpush1.xpose.msra.mxu0 0.0
    %1780 = vmatprep.subr.mxu0 0.0
    %1781 = vmatpush1.xpose.msra.mxu0 0.0
    %1782 = vmatprep.subr.mxu0 0.0
    %1783 = vmatpush1.xpose.msra.mxu0 0.0
    %1784 = vmatprep.subr.mxu0 0.0
    %1785 = vmatpush1.xpose.msra.mxu0 0.0
    %1786 = vmatprep.subr.mxu0 0.0
    %1787 = vmatpush1.xpose.msra.mxu0 0.0
    %1788 = vmatprep.subr.mxu0 0.0
    %1789 = vmatpush1.xpose.msra.mxu0 0.0
    %1790 = vmatprep.subr.mxu0 0.0
    %1791 = vmatpush1.xpose.msra.mxu0 0.0
    %1792 = vmatprep.subr.mxu0 0.0
    %1793 = vmatpush1.xpose.msra.mxu0 0.0
    %1794 = vmatprep.subr.mxu0 0.0
    %1795 = vmatpush1.xpose.msra.mxu0 0.0
    %1796 = vmatprep.subr.mxu0 0.0
    %1797 = vmatpush1.xpose.msra.mxu0 0.0
    %1798 = vmatprep.subr.mxu0 0.0
    %1799 = vmatpush1.xpose.msra.mxu0 0.0
    %1800 = vmatprep.subr.mxu0 0.0
    %1801 = vmatpush1.xpose.msra.mxu0 0.0
    %1802 = vmatprep.subr.mxu0 0.0
    %1803 = vmatpush1.xpose.msra.mxu0 0.0
    %1804 = vmatprep.subr.mxu0 0.0
    %1805 = vmatpush1.xpose.msra.mxu0 0.0
    %1806 = vmatprep.subr.mxu0 0.0
    %1807 = vmatpush1.xpose.msra.mxu0 0.0
    %1808 = vmatprep.subr.mxu0 0.0
    %1809 = vmatpush1.xpose.msra.mxu0 0.0
    %1810 = vmatprep.subr.mxu0 0.0
    %1811 = vmatpush1.xpose.msra.mxu0 0.0
    %1812 = vmatprep.subr.mxu0 0.0
    %1813 = vmatpush1.xpose.msra.mxu0 0.0
    %1814 = vmatprep.subr.mxu0 0.0
    %1815 = vmatpush1.xpose.msra.mxu0 0.0
    %1816 = vmatprep.subr.mxu0 0.0
    %1817 = vmatpush1.xpose.msra.mxu0 0.0
    %1818 = vmatprep.subr.mxu0 0.0
    %1819 = vmatpush1.xpose.msra.mxu0 0.0
    %1820 = vmatprep.subr.mxu0 0.0
    %1821 = vmatpush1.xpose.msra.mxu0 0.0
    %1822 = vmatprep.subr.mxu0 0.0
    %1823 = vmatpush1.xpose.msra.mxu0 0.0
    %1824 = vmatprep.subr.mxu0 0.0
    %1825 = vmatpush1.xpose.msra.mxu0 0.0
    %1826 = vmatprep.subr.mxu0 0.0
    %1827 = vmatpush1.xpose.msra.mxu0 0.0
    %1828 = vmatprep.subr.mxu0 0.0
    %1829 = vmatpush1.xpose.msra.mxu0 0.0
    %1830 = vmatprep.subr.mxu0 0.0
    %1831 = vmatpush1.xpose.msra.mxu0 0.0
    %1832 = vmatprep.subr.mxu0 0.0
    %1833 = vmatpush1.xpose.msra.mxu0 0.0
    %1834 = vmatprep.mubr.f32.mxu0 0.0
    %v1835 = vand.u32 %v1416, 4294901760
    %1836 = vmatmul.mubr.f32.gmra.mrb[0].mxu0 %v1835
    %v1837 = vpop.f32.mrb[0].mxu0
    %v1838 = vadd.f32 %v1753, %v1837
    %v1839 = vpop.f32.mrb[0].mxu0
    %1840 = vmatprep.mubr.f32.mxu0 0.0
    %v1841 = vand.u32 %v1418, 4294901760
    %1842 = vmatmul.mubr.f32.gmra.mrb[0].mxu0 %v1841
    %v1843 = vpop.f32.mrb[0].mxu0
    %v1844 = vadd.f32 %v1761, %v1843
    %v1845 = vpop.f32.mrb[0].mxu0
    %1846 = vdwg.mxu0
    %1847 = vmatprep.subr.mxu0 0.0
    %v1848 = vand.u32 %v1420, 4294901760
    %1849 = vmatpush1.xpose.msra.mxu0 %v1848
    %1850 = vmatprep.subr.mxu0 0.0
    %v1851 = vand.u32 %v1422, 4294901760
    %1852 = vmatpush1.xpose.msra.mxu0 %v1851
    %1853 = vmatprep.subr.mxu0 0.0
    %1854 = vmatpush1.xpose.msra.mxu0 0.0
    %1855 = vmatprep.subr.mxu0 0.0
    %1856 = vmatpush1.xpose.msra.mxu0 0.0
    %1857 = vmatprep.subr.mxu0 0.0
    %1858 = vmatpush1.xpose.msra.mxu0 0.0
    %1859 = vmatprep.subr.mxu0 0.0
    %1860 = vmatpush1.xpose.msra.mxu0 0.0
    %1861 = vmatprep.subr.mxu0 0.0
    %1862 = vmatpush1.xpose.msra.mxu0 0.0
    %1863 = vmatprep.subr.mxu0 0.0
    %1864 = vmatpush1.xpose.msra.mxu0 0.0
    %1865 = vmatprep.subr.mxu0 0.0
    %1866 = vmatpush1.xpose.msra.mxu0 0.0
    %1867 = vmatprep.subr.mxu0 0.0
    %1868 = vmatpush1.xpose.msra.mxu0 0.0
    %1869 = vmatprep.subr.mxu0 0.0
    %1870 = vmatpush1.xpose.msra.mxu0 0.0
    %1871 = vmatprep.subr.mxu0 0.0
    %1872 = vmatpush1.xpose.msra.mxu0 0.0
    %1873 = vmatprep.subr.mxu0 0.0
    %1874 = vmatpush1.xpose.msra.mxu0 0.0
    %1875 = vmatprep.subr.mxu0 0.0
    %1876 = vmatpush1.xpose.msra.mxu0 0.0
    %1877 = vmatprep.subr.mxu0 0.0
    %1878 = vmatpush1.xpose.msra.mxu0 0.0
    %1879 = vmatprep.subr.mxu0 0.0
    %1880 = vmatpush1.xpose.msra.mxu0 0.0
    %1881 = vmatprep.subr.mxu0 0.0
    %1882 = vmatpush1.xpose.msra.mxu0 0.0
    %1883 = vmatprep.subr.mxu0 0.0
    %1884 = vmatpush1.xpose.msra.mxu0 0.0
    %1885 = vmatprep.subr.mxu0 0.0
    %1886 = vmatpush1.xpose.msra.mxu0 0.0
    %1887 = vmatprep.subr.mxu0 0.0
    %1888 = vmatpush1.xpose.msra.mxu0 0.0
    %1889 = vmatprep.subr.mxu0 0.0
    %1890 = vmatpush1.xpose.msra.mxu0 0.0
    %1891 = vmatprep.subr.mxu0 0.0
    %1892 = vmatpush1.xpose.msra.mxu0 0.0
    %1893 = vmatprep.subr.mxu0 0.0
    %1894 = vmatpush1.xpose.msra.mxu0 0.0
    %1895 = vmatprep.subr.mxu0 0.0
    %1896 = vmatpush1.xpose.msra.mxu0 0.0
    %1897 = vmatprep.subr.mxu0 0.0
    %1898 = vmatpush1.xpose.msra.mxu0 0.0
    %1899 = vmatprep.subr.mxu0 0.0
    %1900 = vmatpush1.xpose.msra.mxu0 0.0
    %1901 = vmatprep.subr.mxu0 0.0
    %1902 = vmatpush1.xpose.msra.mxu0 0.0
    %1903 = vmatprep.subr.mxu0 0.0
    %1904 = vmatpush1.xpose.msra.mxu0 0.0
    %1905 = vmatprep.subr.mxu0 0.0
    %1906 = vmatpush1.xpose.msra.mxu0 0.0
    %1907 = vmatprep.subr.mxu0 0.0
    %1908 = vmatpush1.xpose.msra.mxu0 0.0
    %1909 = vmatprep.subr.mxu0 0.0
    %1910 = vmatpush1.xpose.msra.mxu0 0.0
    %1911 = vmatprep.subr.mxu0 0.0
    %1912 = vmatpush1.xpose.msra.mxu0 0.0
    %1913 = vmatprep.mubr.f32.mxu0 0.0
    %v1914 = vand.u32 %v1416, 4294901760
    %1915 = vmatmul.mubr.f32.gmra.mrb[0].mxu0 %v1914
    %v1916 = vpop.f32.mrb[0].mxu0
    %v1917 = vadd.f32 %v1838, %v1916
    %v1918 = vpop.f32.mrb[0].mxu0
    %1919 = vmatprep.mubr.f32.mxu0 0.0
    %v1920 = vand.u32 %v1418, 4294901760
    %1921 = vmatmul.mubr.f32.gmra.mrb[0].mxu0 %v1920
    %v1922 = vpop.f32.mrb[0].mxu0
    %v1923 = vadd.f32 %v1844, %v1922
    %v1924 = vpop.f32.mrb[0].mxu0
    %1925 = vdwg.mxu0
    %v1926 = vmul.f32 %v1917, %v205
    %v1927 = vmul.f32 %v1923, %v206
    %1928 = vrot.lane.b32.xlu0 %v130, 80
    %v1929 = vpop.permute.xlu0 %1928
    %1930 = vrot.lane.b32.xlu0 %v135, 80
    %v1931 = vpop.permute.xlu0 %1930
    %v1935 = vsel %vm215, %v1926, 0
    %v1938 = vsel %vm215, %v1927, 0
    %1940 = vmatprep.subr.mxu0 0.0
    %v1941 = vand.u32 %v1929, 4294901760
    %1942 = vmatpush1.msra.mxu0 %v1941
    %1943 = vmatprep.subr.mxu0 0.0
    %v1944 = vand.u32 %v1931, 4294901760
    %1945 = vmatpush1.msra.mxu0 %v1944
    %1946 = vmatprep.subr.mxu0 0.0
    %1947 = vmatpush1.msra.mxu0 0.0
    %1948 = vmatprep.subr.mxu0 0.0
    %1949 = vmatpush1.msra.mxu0 0.0
    %1950 = vmatprep.subr.mxu0 0.0
    %1951 = vmatpush1.msra.mxu0 0.0
    %1952 = vmatprep.subr.mxu0 0.0
    %1953 = vmatpush1.msra.mxu0 0.0
    %1954 = vmatprep.subr.mxu0 0.0
    %1955 = vmatpush1.msra.mxu0 0.0
    %1956 = vmatprep.subr.mxu0 0.0
    %1957 = vmatpush1.msra.mxu0 0.0
    %1958 = vmatprep.subr.mxu0 0.0
    %1959 = vmatpush1.msra.mxu0 0.0
    %1960 = vmatprep.subr.mxu0 0.0
    %1961 = vmatpush1.msra.mxu0 0.0
    %1962 = vmatprep.subr.mxu0 0.0
    %1963 = vmatpush1.msra.mxu0 0.0
    %1964 = vmatprep.subr.mxu0 0.0
    %1965 = vmatpush1.msra.mxu0 0.0
    %1966 = vmatprep.subr.mxu0 0.0
    %1967 = vmatpush1.msra.mxu0 0.0
    %1968 = vmatprep.subr.mxu0 0.0
    %1969 = vmatpush1.msra.mxu0 0.0
    %1970 = vmatprep.subr.mxu0 0.0
    %1971 = vmatpush1.msra.mxu0 0.0
    %1972 = vmatprep.subr.mxu0 0.0
    %1973 = vmatpush1.msra.mxu0 0.0
    %1974 = vmatprep.subr.mxu0 0.0
    %1975 = vmatpush1.msra.mxu0 0.0
    %1976 = vmatprep.subr.mxu0 0.0
    %1977 = vmatpush1.msra.mxu0 0.0
    %1978 = vmatprep.subr.mxu0 0.0
    %1979 = vmatpush1.msra.mxu0 0.0
    %1980 = vmatprep.subr.mxu0 0.0
    %1981 = vmatpush1.msra.mxu0 0.0
    %1982 = vmatprep.subr.mxu0 0.0
    %1983 = vmatpush1.msra.mxu0 0.0
    %1984 = vmatprep.subr.mxu0 0.0
    %1985 = vmatpush1.msra.mxu0 0.0
    %1986 = vmatprep.subr.mxu0 0.0
    %1987 = vmatpush1.msra.mxu0 0.0
    %1988 = vmatprep.subr.mxu0 0.0
    %1989 = vmatpush1.msra.mxu0 0.0
    %1990 = vmatprep.subr.mxu0 0.0
    %1991 = vmatpush1.msra.mxu0 0.0
    %1992 = vmatprep.subr.mxu0 0.0
    %1993 = vmatpush1.msra.mxu0 0.0
    %1994 = vmatprep.subr.mxu0 0.0
    %1995 = vmatpush1.msra.mxu0 0.0
    %1996 = vmatprep.subr.mxu0 0.0
    %1997 = vmatpush1.msra.mxu0 0.0
    %1998 = vmatprep.subr.mxu0 0.0
    %1999 = vmatpush1.msra.mxu0 0.0
    %2000 = vmatprep.subr.mxu0 0.0
    %2001 = vmatpush1.msra.mxu0 0.0
    %2002 = vmatprep.subr.mxu0 0.0
    %2003 = vmatpush1.msra.mxu0 0.0
    %2004 = vmatprep.subr.mxu0 0.0
    %2005 = vmatpush1.msra.mxu0 0.0
    %2006 = vmatprep.mubr.f32.mxu0 0.0
    %v2007 = vand.u32 %v1935, 4294901760
    %v2008 = vsub.f32 %v1935, %v2007
    %v2009 = vand.u32 %v2008, 4294901760
    %v2010 = vsub.f32 %v2008, %v2009
    %v2011 = vand.u32 %v2010, 4294901760
    %2012 = vmatmul.mubr.f32.gmra.mrb[0].mxu0 %v2011
    %v2013 = vpop.f32.mrb[0].mxu0
    %v2014 = vadd.f32 0.0, %v2013
    %v2015 = vpop.f32.mrb[0].mxu0
    %2016 = vmatprep.mubr.f32.mxu0 0.0
    %v2017 = vand.u32 %v1938, 4294901760
    %v2018 = vsub.f32 %v1938, %v2017
    %v2019 = vand.u32 %v2018, 4294901760
    %v2020 = vsub.f32 %v2018, %v2019
    %v2021 = vand.u32 %v2020, 4294901760
    %2022 = vmatmul.mubr.f32.gmra.mrb[0].mxu0 %v2021
    %v2023 = vpop.f32.mrb[0].mxu0
    %v2024 = vadd.f32 0.0, %v2023
    %v2025 = vpop.f32.mrb[0].mxu0
    %2026 = vdwg.mxu0
    %2027 = vmatprep.subr.mxu0 0.0
    %v2028 = vand.u32 %v1929, 4294901760
    %v2029 = vsub.f32 %v1929, %v2028
    %v2030 = vand.u32 %v2029, 4294901760
    %v2031 = vsub.f32 %v2029, %v2030
    %v2032 = vand.u32 %v2031, 4294901760
    %2033 = vmatpush1.msra.mxu0 %v2032
    %2034 = vmatprep.subr.mxu0 0.0
    %v2035 = vand.u32 %v1931, 4294901760
    %v2036 = vsub.f32 %v1931, %v2035
    %v2037 = vand.u32 %v2036, 4294901760
    %v2038 = vsub.f32 %v2036, %v2037
    %v2039 = vand.u32 %v2038, 4294901760
    %2040 = vmatpush1.msra.mxu0 %v2039
    %2041 = vmatprep.subr.mxu0 0.0
    %2042 = vmatpush1.msra.mxu0 0.0
    %2043 = vmatprep.subr.mxu0 0.0
    %2044 = vmatpush1.msra.mxu0 0.0
    %2045 = vmatprep.subr.mxu0 0.0
    %2046 = vmatpush1.msra.mxu0 0.0
    %2047 = vmatprep.subr.mxu0 0.0
    %2048 = vmatpush1.msra.mxu0 0.0
    %2049 = vmatprep.subr.mxu0 0.0
    %2050 = vmatpush1.msra.mxu0 0.0
    %2051 = vmatprep.subr.mxu0 0.0
    %2052 = vmatpush1.msra.mxu0 0.0
    %2053 = vmatprep.subr.mxu0 0.0
    %2054 = vmatpush1.msra.mxu0 0.0
    %2055 = vmatprep.subr.mxu0 0.0
    %2056 = vmatpush1.msra.mxu0 0.0
    %2057 = vmatprep.subr.mxu0 0.0
    %2058 = vmatpush1.msra.mxu0 0.0
    %2059 = vmatprep.subr.mxu0 0.0
    %2060 = vmatpush1.msra.mxu0 0.0
    %2061 = vmatprep.subr.mxu0 0.0
    %2062 = vmatpush1.msra.mxu0 0.0
    %2063 = vmatprep.subr.mxu0 0.0
    %2064 = vmatpush1.msra.mxu0 0.0
    %2065 = vmatprep.subr.mxu0 0.0
    %2066 = vmatpush1.msra.mxu0 0.0
    %2067 = vmatprep.subr.mxu0 0.0
    %2068 = vmatpush1.msra.mxu0 0.0
    %2069 = vmatprep.subr.mxu0 0.0
    %2070 = vmatpush1.msra.mxu0 0.0
    %2071 = vmatprep.subr.mxu0 0.0
    %2072 = vmatpush1.msra.mxu0 0.0
    %2073 = vmatprep.subr.mxu0 0.0
    %2074 = vmatpush1.msra.mxu0 0.0
    %2075 = vmatprep.subr.mxu0 0.0
    %2076 = vmatpush1.msra.mxu0 0.0
    %2077 = vmatprep.subr.mxu0 0.0
    %2078 = vmatpush1.msra.mxu0 0.0
    %2079 = vmatprep.subr.mxu0 0.0
    %2080 = vmatpush1.msra.mxu0 0.0
    %2081 = vmatprep.subr.mxu0 0.0
    %2082 = vmatpush1.msra.mxu0 0.0
    %2083 = vmatprep.subr.mxu0 0.0
    %2084 = vmatpush1.msra.mxu0 0.0
    %2085 = vmatprep.subr.mxu0 0.0
    %2086 = vmatpush1.msra.mxu0 0.0
    %2087 = vmatprep.subr.mxu0 0.0
    %2088 = vmatpush1.msra.mxu0 0.0
    %2089 = vmatprep.subr.mxu0 0.0
    %2090 = vmatpush1.msra.mxu0 0.0
    %2091 = vmatprep.subr.mxu0 0.0
    %2092 = vmatpush1.msra.mxu0 0.0
    %2093 = vmatprep.subr.mxu0 0.0
    %2094 = vmatpush1.msra.mxu0 0.0
    %2095 = vmatprep.subr.mxu0 0.0
    %2096 = vmatpush1.msra.mxu0 0.0
    %2097 = vmatprep.subr.mxu0 0.0
    %2098 = vmatpush1.msra.mxu0 0.0
    %2099 = vmatprep.subr.mxu0 0.0
    %2100 = vmatpush1.msra.mxu0 0.0
    %2101 = vmatprep.mubr.f32.mxu0 0.0
    %v2102 = vand.u32 %v1935, 4294901760
    %2103 = vmatmul.mubr.f32.gmra.mrb[0].mxu0 %v2102
    %v2104 = vpop.f32.mrb[0].mxu0
    %v2105 = vadd.f32 %v2014, %v2104
    %v2106 = vpop.f32.mrb[0].mxu0
    %2107 = vmatprep.mubr.f32.mxu0 0.0
    %v2108 = vand.u32 %v1938, 4294901760
    %2109 = vmatmul.mubr.f32.gmra.mrb[0].mxu0 %v2108
    %v2110 = vpop.f32.mrb[0].mxu0
    %v2111 = vadd.f32 %v2024, %v2110
    %v2112 = vpop.f32.mrb[0].mxu0
    %2113 = vdwg.mxu0
    %2114 = vmatprep.subr.mxu0 0.0
    %v2115 = vand.u32 %v1929, 4294901760
    %v2116 = vsub.f32 %v1929, %v2115
    %2117 = vmatpush1.msra.mxu0 %v2116
    %2118 = vmatprep.subr.mxu0 0.0
    %v2119 = vand.u32 %v1931, 4294901760
    %v2120 = vsub.f32 %v1931, %v2119
    %2121 = vmatpush1.msra.mxu0 %v2120
    %2122 = vmatprep.subr.mxu0 0.0
    %2123 = vmatpush1.msra.mxu0 0.0
    %2124 = vmatprep.subr.mxu0 0.0
    %2125 = vmatpush1.msra.mxu0 0.0
    %2126 = vmatprep.subr.mxu0 0.0
    %2127 = vmatpush1.msra.mxu0 0.0
    %2128 = vmatprep.subr.mxu0 0.0
    %2129 = vmatpush1.msra.mxu0 0.0
    %2130 = vmatprep.subr.mxu0 0.0
    %2131 = vmatpush1.msra.mxu0 0.0
    %2132 = vmatprep.subr.mxu0 0.0
    %2133 = vmatpush1.msra.mxu0 0.0
    %2134 = vmatprep.subr.mxu0 0.0
    %2135 = vmatpush1.msra.mxu0 0.0
    %2136 = vmatprep.subr.mxu0 0.0
    %2137 = vmatpush1.msra.mxu0 0.0
    %2138 = vmatprep.subr.mxu0 0.0
    %2139 = vmatpush1.msra.mxu0 0.0
    %2140 = vmatprep.subr.mxu0 0.0
    %2141 = vmatpush1.msra.mxu0 0.0
    %2142 = vmatprep.subr.mxu0 0.0
    %2143 = vmatpush1.msra.mxu0 0.0
    %2144 = vmatprep.subr.mxu0 0.0
    %2145 = vmatpush1.msra.mxu0 0.0
    %2146 = vmatprep.subr.mxu0 0.0
    %2147 = vmatpush1.msra.mxu0 0.0
    %2148 = vmatprep.subr.mxu0 0.0
    %2149 = vmatpush1.msra.mxu0 0.0
    %2150 = vmatprep.subr.mxu0 0.0
    %2151 = vmatpush1.msra.mxu0 0.0
    %2152 = vmatprep.subr.mxu0 0.0
    %2153 = vmatpush1.msra.mxu0 0.0
    %2154 = vmatprep.subr.mxu0 0.0
    %2155 = vmatpush1.msra.mxu0 0.0
    %2156 = vmatprep.subr.mxu0 0.0
    %2157 = vmatpush1.msra.mxu0 0.0
    %2158 = vmatprep.subr.mxu0 0.0
    %2159 = vmatpush1.msra.mxu0 0.0
    %2160 = vmatprep.subr.mxu0 0.0
    %2161 = vmatpush1.msra.mxu0 0.0
    %2162 = vmatprep.subr.mxu0 0.0
    %2163 = vmatpush1.msra.mxu0 0.0
    %2164 = vmatprep.subr.mxu0 0.0
    %2165 = vmatpush1.msra.mxu0 0.0
    %2166 = vmatprep.subr.mxu0 0.0
    %2167 = vmatpush1.msra.mxu0 0.0
    %2168 = vmatprep.subr.mxu0 0.0
    %2169 = vmatpush1.msra.mxu0 0.0
    %2170 = vmatprep.subr.mxu0 0.0
    %2171 = vmatpush1.msra.mxu0 0.0
    %2172 = vmatprep.subr.mxu0 0.0
    %2173 = vmatpush1.msra.mxu0 0.0
    %2174 = vmatprep.subr.mxu0 0.0
    %2175 = vmatpush1.msra.mxu0 0.0
    %2176 = vmatprep.subr.mxu0 0.0
    %2177 = vmatpush1.msra.mxu0 0.0
    %2178 = vmatprep.subr.mxu0 0.0
    %2179 = vmatpush1.msra.mxu0 0.0
    %2180 = vmatprep.subr.mxu0 0.0
    %2181 = vmatpush1.msra.mxu0 0.0
    %2182 = vmatprep.mubr.f32.mxu0 0.0
    %v2183 = vand.u32 %v1935, 4294901760
    %v2184 = vsub.f32 %v1935, %v2183
    %2185 = vmatmul.mubr.f32.gmra.mrb[0].mxu0 %v2184
    %v2186 = vpop.f32.mrb[0].mxu0
    %v2187 = vadd.f32 %v2105, %v2186
    %v2188 = vpop.f32.mrb[0].mxu0
    %2189 = vmatprep.mubr.f32.mxu0 0.0
    %v2190 = vand.u32 %v1938, 4294901760
    %v2191 = vsub.f32 %v1938, %v2190
    %2192 = vmatmul.mubr.f32.gmra.mrb[0].mxu0 %v2191
    %v2193 = vpop.f32.mrb[0].mxu0
    %v2194 = vadd.f32 %v2111, %v2193
    %v2195 = vpop.f32.mrb[0].mxu0
    %2196 = vdwg.mxu0
    %2197 = vmatprep.subr.mxu0 0.0
    %v2198 = vand.u32 %v1929, 4294901760
    %2199 = vmatpush1.msra.mxu0 %v2198
    %2200 = vmatprep.subr.mxu0 0.0
    %v2201 = vand.u32 %v1931, 4294901760
    %2202 = vmatpush1.msra.mxu0 %v2201
    %2203 = vmatprep.subr.mxu0 0.0
    %2204 = vmatpush1.msra.mxu0 0.0
    %2205 = vmatprep.subr.mxu0 0.0
    %2206 = vmatpush1.msra.mxu0 0.0
    %2207 = vmatprep.subr.mxu0 0.0
    %2208 = vmatpush1.msra.mxu0 0.0
    %2209 = vmatprep.subr.mxu0 0.0
    %2210 = vmatpush1.msra.mxu0 0.0
    %2211 = vmatprep.subr.mxu0 0.0
    %2212 = vmatpush1.msra.mxu0 0.0
    %2213 = vmatprep.subr.mxu0 0.0
    %2214 = vmatpush1.msra.mxu0 0.0
    %2215 = vmatprep.subr.mxu0 0.0
    %2216 = vmatpush1.msra.mxu0 0.0
    %2217 = vmatprep.subr.mxu0 0.0
    %2218 = vmatpush1.msra.mxu0 0.0
    %2219 = vmatprep.subr.mxu0 0.0
    %2220 = vmatpush1.msra.mxu0 0.0
    %2221 = vmatprep.subr.mxu0 0.0
    %2222 = vmatpush1.msra.mxu0 0.0
    %2223 = vmatprep.subr.mxu0 0.0
    %2224 = vmatpush1.msra.mxu0 0.0
    %2225 = vmatprep.subr.mxu0 0.0
    %2226 = vmatpush1.msra.mxu0 0.0
    %2227 = vmatprep.subr.mxu0 0.0
    %2228 = vmatpush1.msra.mxu0 0.0
    %2229 = vmatprep.subr.mxu0 0.0
    %2230 = vmatpush1.msra.mxu0 0.0
    %2231 = vmatprep.subr.mxu0 0.0
    %2232 = vmatpush1.msra.mxu0 0.0
    %2233 = vmatprep.subr.mxu0 0.0
    %2234 = vmatpush1.msra.mxu0 0.0
    %2235 = vmatprep.subr.mxu0 0.0
    %2236 = vmatpush1.msra.mxu0 0.0
    %2237 = vmatprep.subr.mxu0 0.0
    %2238 = vmatpush1.msra.mxu0 0.0
    %2239 = vmatprep.subr.mxu0 0.0
    %2240 = vmatpush1.msra.mxu0 0.0
    %2241 = vmatprep.subr.mxu0 0.0
    %2242 = vmatpush1.msra.mxu0 0.0
    %2243 = vmatprep.subr.mxu0 0.0
    %2244 = vmatpush1.msra.mxu0 0.0
    %2245 = vmatprep.subr.mxu0 0.0
    %2246 = vmatpush1.msra.mxu0 0.0
    %2247 = vmatprep.subr.mxu0 0.0
    %2248 = vmatpush1.msra.mxu0 0.0
    %2249 = vmatprep.subr.mxu0 0.0
    %2250 = vmatpush1.msra.mxu0 0.0
    %2251 = vmatprep.subr.mxu0 0.0
    %2252 = vmatpush1.msra.mxu0 0.0
    %2253 = vmatprep.subr.mxu0 0.0
    %2254 = vmatpush1.msra.mxu0 0.0
    %2255 = vmatprep.subr.mxu0 0.0
    %2256 = vmatpush1.msra.mxu0 0.0
    %2257 = vmatprep.subr.mxu0 0.0
    %2258 = vmatpush1.msra.mxu0 0.0
    %2259 = vmatprep.subr.mxu0 0.0
    %2260 = vmatpush1.msra.mxu0 0.0
    %2261 = vmatprep.subr.mxu0 0.0
    %2262 = vmatpush1.msra.mxu0 0.0
    %2263 = vmatprep.mubr.f32.mxu0 0.0
    %v2264 = vand.u32 %v1935, 4294901760
    %v2265 = vsub.f32 %v1935, %v2264
    %v2266 = vand.u32 %v2265, 4294901760
    %2267 = vmatmul.mubr.f32.gmra.mrb[0].mxu0 %v2266
    %v2268 = vpop.f32.mrb[0].mxu0
    %v2269 = vadd.f32 %v2187, %v2268
    %v2270 = vpop.f32.mrb[0].mxu0
    %2271 = vmatprep.mubr.f32.mxu0 0.0
    %v2272 = vand.u32 %v1938, 4294901760
    %v2273 = vsub.f32 %v1938, %v2272
    %v2274 = vand.u32 %v2273, 4294901760
    %2275 = vmatmul.mubr.f32.gmra.mrb[0].mxu0 %v2274
    %v2276 = vpop.f32.mrb[0].mxu0
    %v2277 = vadd.f32 %v2194, %v2276
    %v2278 = vpop.f32.mrb[0].mxu0
    %2279 = vdwg.mxu0
    %2280 = vmatprep.subr.mxu0 0.0
    %v2281 = vand.u32 %v1929, 4294901760
    %v2282 = vsub.f32 %v1929, %v2281
    %v2283 = vand.u32 %v2282, 4294901760
    %2284 = vmatpush1.msra.mxu0 %v2283
    %2285 = vmatprep.subr.mxu0 0.0
    %v2286 = vand.u32 %v1931, 4294901760
    %v2287 = vsub.f32 %v1931, %v2286
    %v2288 = vand.u32 %v2287, 4294901760
    %2289 = vmatpush1.msra.mxu0 %v2288
    %2290 = vmatprep.subr.mxu0 0.0
    %2291 = vmatpush1.msra.mxu0 0.0
    %2292 = vmatprep.subr.mxu0 0.0
    %2293 = vmatpush1.msra.mxu0 0.0
    %2294 = vmatprep.subr.mxu0 0.0
    %2295 = vmatpush1.msra.mxu0 0.0
    %2296 = vmatprep.subr.mxu0 0.0
    %2297 = vmatpush1.msra.mxu0 0.0
    %2298 = vmatprep.subr.mxu0 0.0
    %2299 = vmatpush1.msra.mxu0 0.0
    %2300 = vmatprep.subr.mxu0 0.0
    %2301 = vmatpush1.msra.mxu0 0.0
    %2302 = vmatprep.subr.mxu0 0.0
    %2303 = vmatpush1.msra.mxu0 0.0
    %2304 = vmatprep.subr.mxu0 0.0
    %2305 = vmatpush1.msra.mxu0 0.0
    %2306 = vmatprep.subr.mxu0 0.0
    %2307 = vmatpush1.msra.mxu0 0.0
    %2308 = vmatprep.subr.mxu0 0.0
    %2309 = vmatpush1.msra.mxu0 0.0
    %2310 = vmatprep.subr.mxu0 0.0
    %2311 = vmatpush1.msra.mxu0 0.0
    %2312 = vmatprep.subr.mxu0 0.0
    %2313 = vmatpush1.msra.mxu0 0.0
    %2314 = vmatprep.subr.mxu0 0.0
    %2315 = vmatpush1.msra.mxu0 0.0
    %2316 = vmatprep.subr.mxu0 0.0
    %2317 = vmatpush1.msra.mxu0 0.0
    %2318 = vmatprep.subr.mxu0 0.0
    %2319 = vmatpush1.msra.mxu0 0.0
    %2320 = vmatprep.subr.mxu0 0.0
    %2321 = vmatpush1.msra.mxu0 0.0
    %2322 = vmatprep.subr.mxu0 0.0
    %2323 = vmatpush1.msra.mxu0 0.0
    %2324 = vmatprep.subr.mxu0 0.0
    %2325 = vmatpush1.msra.mxu0 0.0
    %2326 = vmatprep.subr.mxu0 0.0
    %2327 = vmatpush1.msra.mxu0 0.0
    %2328 = vmatprep.subr.mxu0 0.0
    %2329 = vmatpush1.msra.mxu0 0.0
    %2330 = vmatprep.subr.mxu0 0.0
    %2331 = vmatpush1.msra.mxu0 0.0
    %2332 = vmatprep.subr.mxu0 0.0
    %2333 = vmatpush1.msra.mxu0 0.0
    %2334 = vmatprep.subr.mxu0 0.0
    %2335 = vmatpush1.msra.mxu0 0.0
    %2336 = vmatprep.subr.mxu0 0.0
    %2337 = vmatpush1.msra.mxu0 0.0
    %2338 = vmatprep.subr.mxu0 0.0
    %2339 = vmatpush1.msra.mxu0 0.0
    %2340 = vmatprep.subr.mxu0 0.0
    %2341 = vmatpush1.msra.mxu0 0.0
    %2342 = vmatprep.subr.mxu0 0.0
    %2343 = vmatpush1.msra.mxu0 0.0
    %2344 = vmatprep.subr.mxu0 0.0
    %2345 = vmatpush1.msra.mxu0 0.0
    %2346 = vmatprep.subr.mxu0 0.0
    %2347 = vmatpush1.msra.mxu0 0.0
    %2348 = vmatprep.subr.mxu0 0.0
    %2349 = vmatpush1.msra.mxu0 0.0
    %2350 = vmatprep.mubr.f32.mxu0 0.0
    %v2351 = vand.u32 %v1935, 4294901760
    %2352 = vmatmul.mubr.f32.gmra.mrb[0].mxu0 %v2351
    %v2353 = vpop.f32.mrb[0].mxu0
    %v2354 = vadd.f32 %v2269, %v2353
    %v2355 = vpop.f32.mrb[0].mxu0
    %2356 = vmatprep.mubr.f32.mxu0 0.0
    %v2357 = vand.u32 %v1938, 4294901760
    %2358 = vmatmul.mubr.f32.gmra.mrb[0].mxu0 %v2357
    %v2359 = vpop.f32.mrb[0].mxu0
    %v2360 = vadd.f32 %v2277, %v2359
    %v2361 = vpop.f32.mrb[0].mxu0
    %2362 = vdwg.mxu0
    %2363 = vmatprep.subr.mxu0 0.0
    %v2364 = vand.u32 %v1929, 4294901760
    %2365 = vmatpush1.msra.mxu0 %v2364
    %2366 = vmatprep.subr.mxu0 0.0
    %v2367 = vand.u32 %v1931, 4294901760
    %2368 = vmatpush1.msra.mxu0 %v2367
    %2369 = vmatprep.subr.mxu0 0.0
    %2370 = vmatpush1.msra.mxu0 0.0
    %2371 = vmatprep.subr.mxu0 0.0
    %2372 = vmatpush1.msra.mxu0 0.0
    %2373 = vmatprep.subr.mxu0 0.0
    %2374 = vmatpush1.msra.mxu0 0.0
    %2375 = vmatprep.subr.mxu0 0.0
    %2376 = vmatpush1.msra.mxu0 0.0
    %2377 = vmatprep.subr.mxu0 0.0
    %2378 = vmatpush1.msra.mxu0 0.0
    %2379 = vmatprep.subr.mxu0 0.0
    %2380 = vmatpush1.msra.mxu0 0.0
    %2381 = vmatprep.subr.mxu0 0.0
    %2382 = vmatpush1.msra.mxu0 0.0
    %2383 = vmatprep.subr.mxu0 0.0
    %2384 = vmatpush1.msra.mxu0 0.0
    %2385 = vmatprep.subr.mxu0 0.0
    %2386 = vmatpush1.msra.mxu0 0.0
    %2387 = vmatprep.subr.mxu0 0.0
    %2388 = vmatpush1.msra.mxu0 0.0
    %2389 = vmatprep.subr.mxu0 0.0
    %2390 = vmatpush1.msra.mxu0 0.0
    %2391 = vmatprep.subr.mxu0 0.0
    %2392 = vmatpush1.msra.mxu0 0.0
    %2393 = vmatprep.subr.mxu0 0.0
    %2394 = vmatpush1.msra.mxu0 0.0
    %2395 = vmatprep.subr.mxu0 0.0
    %2396 = vmatpush1.msra.mxu0 0.0
    %2397 = vmatprep.subr.mxu0 0.0
    %2398 = vmatpush1.msra.mxu0 0.0
    %2399 = vmatprep.subr.mxu0 0.0
    %2400 = vmatpush1.msra.mxu0 0.0
    %2401 = vmatprep.subr.mxu0 0.0
    %2402 = vmatpush1.msra.mxu0 0.0
    %2403 = vmatprep.subr.mxu0 0.0
    %2404 = vmatpush1.msra.mxu0 0.0
    %2405 = vmatprep.subr.mxu0 0.0
    %2406 = vmatpush1.msra.mxu0 0.0
    %2407 = vmatprep.subr.mxu0 0.0
    %2408 = vmatpush1.msra.mxu0 0.0
    %2409 = vmatprep.subr.mxu0 0.0
    %2410 = vmatpush1.msra.mxu0 0.0
    %2411 = vmatprep.subr.mxu0 0.0
    %2412 = vmatpush1.msra.mxu0 0.0
    %2413 = vmatprep.subr.mxu0 0.0
    %2414 = vmatpush1.msra.mxu0 0.0
    %2415 = vmatprep.subr.mxu0 0.0
    %2416 = vmatpush1.msra.mxu0 0.0
    %2417 = vmatprep.subr.mxu0 0.0
    %2418 = vmatpush1.msra.mxu0 0.0
    %2419 = vmatprep.subr.mxu0 0.0
    %2420 = vmatpush1.msra.mxu0 0.0
    %2421 = vmatprep.subr.mxu0 0.0
    %2422 = vmatpush1.msra.mxu0 0.0
    %2423 = vmatprep.subr.mxu0 0.0
    %2424 = vmatpush1.msra.mxu0 0.0
    %2425 = vmatprep.subr.mxu0 0.0
    %2426 = vmatpush1.msra.mxu0 0.0
    %2427 = vmatprep.subr.mxu0 0.0
    %2428 = vmatpush1.msra.mxu0 0.0
    %2429 = vmatprep.mubr.f32.mxu0 0.0
    %v2430 = vand.u32 %v1935, 4294901760
    %2431 = vmatmul.mubr.f32.gmra.mrb[0].mxu0 %v2430
    %v2432 = vpop.f32.mrb[0].mxu0
    %v2433 = vadd.f32 %v2354, %v2432
    %v2434 = vpop.f32.mrb[0].mxu0
    %2435 = vmatprep.mubr.f32.mxu0 0.0
    %v2436 = vand.u32 %v1938, 4294901760
    %2437 = vmatmul.mubr.f32.gmra.mrb[0].mxu0 %v2436
    %v2438 = vpop.f32.mrb[0].mxu0
    %v2439 = vadd.f32 %v2360, %v2438
    %v2440 = vpop.f32.mrb[0].mxu0
    %2441 = vdwg.mxu0
    %v2442 = vsel %vm215, %v2433, 0.0
    %2443 = vadd.xlane.f32.xlu0 %v2442
    %v2444 = vpop.xlane.xlu0 %2443
    %v2445 = vsel %vm215, %v2439, 0.0
    %2446 = vadd.xlane.f32.xlu0 %v2445
    %v2447 = vpop.xlane.xlu0 %2446
    %v2448 = vmul.f32 %v2444, %v188
    %v2449 = vmul.f32 %v2447, %v188
    %v2450 = vsub.f32 %v2433, %v2448
    %v2451 = vsub.f32 %v2439, %v2449
    %v2452 = vmul.f32 %v2450, %v2450
    %v2453 = vmul.f32 %v2451, %v2451
    %v2454 = vsel %vm215, %v2452, 0.0
    %2455 = vadd.xlane.f32.xlu0 %v2454
    %v2456 = vpop.xlane.xlu0 %2455
    %v2457 = vsel %vm215, %v2453, 0.0
    %2458 = vadd.xlane.f32.xlu0 %v2457
    %v2459 = vpop.xlane.xlu0 %2458
    %v2460 = vmul.f32 %v2456, %v188
    %v2461 = vmul.f32 %v2459, %v188
    %v2462 = vadd.f32 %v2460, 1e-05
    %v2463 = vadd.f32 %v2461, 1e-05
    %v2464 = vrsqrt.pop %v2462
    %v2465 = vrsqrt.pop %v2463
    %v2466 = vmul.f32 %v2450, %v2464
    %v2467 = vmul.f32 %v2451, %v2465
    %2470 = vrot.lane.b32.xlu0 %v2466, 80
    %v2471 = vpop.permute.xlu0 %2470
    %2472 = vrot.lane.b32.xlu0 %v2467, 80
    %v2473 = vpop.permute.xlu0 %2472
    %v2476 = vmul.f32 %v1394, %v2471
    %v2477 = vmul.f32 %v1395, %v2473
    %v2478 = vld [vmem:[%s4 + $0x10] sm:$0xff]
    %v2479 = vld [vmem:[%s4 + $0x18] sm:$0xff]
    %2482 = vrot.lane.b32.xlu0 %v2476, 48
    %v2483 = vpop.permute.xlu0 %2482
    %2484 = vrot.lane.b32.xlu0 %v2477, 48
    %v2485 = vpop.permute.xlu0 %2484
    %v2486 = vsel %vm215, %v2483, 0
    %v2488 = vsel %vm215, %v2485, 0
    %2490 = vmatprep.subr.mxu0 0.0
    %2491 = vmatpush1.msra.mxu0 %v2478
    %2492 = vmatprep.subr.mxu0 0.0
    %2493 = vmatpush1.msra.mxu0 %v2479
    %2494 = vmatprep.subr.mxu0 0.0
    %2495 = vmatpush1.msra.mxu0 0.0
    %2496 = vmatprep.subr.mxu0 0.0
    %2497 = vmatpush1.msra.mxu0 0.0
    %2498 = vmatprep.subr.mxu0 0.0
    %2499 = vmatpush1.msra.mxu0 0.0
    %2500 = vmatprep.subr.mxu0 0.0
    %2501 = vmatpush1.msra.mxu0 0.0
    %2502 = vmatprep.subr.mxu0 0.0
    %2503 = vmatpush1.msra.mxu0 0.0
    %2504 = vmatprep.subr.mxu0 0.0
    %2505 = vmatpush1.msra.mxu0 0.0
    %2506 = vmatprep.subr.mxu0 0.0
    %2507 = vmatpush1.msra.mxu0 0.0
    %2508 = vmatprep.subr.mxu0 0.0
    %2509 = vmatpush1.msra.mxu0 0.0
    %2510 = vmatprep.subr.mxu0 0.0
    %2511 = vmatpush1.msra.mxu0 0.0
    %2512 = vmatprep.subr.mxu0 0.0
    %2513 = vmatpush1.msra.mxu0 0.0
    %2514 = vmatprep.subr.mxu0 0.0
    %2515 = vmatpush1.msra.mxu0 0.0
    %2516 = vmatprep.subr.mxu0 0.0
    %2517 = vmatpush1.msra.mxu0 0.0
    %2518 = vmatprep.subr.mxu0 0.0
    %2519 = vmatpush1.msra.mxu0 0.0
    %2520 = vmatprep.subr.mxu0 0.0
    %2521 = vmatpush1.msra.mxu0 0.0
    %2522 = vmatprep.subr.mxu0 0.0
    %2523 = vmatpush1.msra.mxu0 0.0
    %2524 = vmatprep.subr.mxu0 0.0
    %2525 = vmatpush1.msra.mxu0 0.0
    %2526 = vmatprep.subr.mxu0 0.0
    %2527 = vmatpush1.msra.mxu0 0.0
    %2528 = vmatprep.subr.mxu0 0.0
    %2529 = vmatpush1.msra.mxu0 0.0
    %2530 = vmatprep.subr.mxu0 0.0
    %2531 = vmatpush1.msra.mxu0 0.0
    %2532 = vmatprep.subr.mxu0 0.0
    %2533 = vmatpush1.msra.mxu0 0.0
    %2534 = vmatprep.subr.mxu0 0.0
    %2535 = vmatpush1.msra.mxu0 0.0
    %2536 = vmatprep.subr.mxu0 0.0
    %2537 = vmatpush1.msra.mxu0 0.0
    %2538 = vmatprep.subr.mxu0 0.0
    %2539 = vmatpush1.msra.mxu0 0.0
    %2540 = vmatprep.subr.mxu0 0.0
    %2541 = vmatpush1.msra.mxu0 0.0
    %2542 = vmatprep.subr.mxu0 0.0
    %2543 = vmatpush1.msra.mxu0 0.0
    %2544 = vmatprep.subr.mxu0 0.0
    %2545 = vmatpush1.msra.mxu0 0.0
    %2546 = vmatprep.subr.mxu0 0.0
    %2547 = vmatpush1.msra.mxu0 0.0
    %2548 = vmatprep.subr.mxu0 0.0
    %2549 = vmatpush1.msra.mxu0 0.0
    %2550 = vmatprep.subr.mxu0 0.0
    %2551 = vmatpush1.msra.mxu0 0.0
    %2552 = vmatprep.subr.mxu0 0.0
    %2553 = vmatpush1.msra.mxu0 0.0
    %2554 = vmatprep.mubr.f32.mxu0 0.0
    %2555 = vmatmul.mubr.f32.gmra.mrb[0].mxu0 %v2486
    %v2556 = vpop.f32.mrb[0].mxu0
    %v2557 = vadd.f32 0.0, %v2556
    %v2558 = vpop.f32.mrb[0].mxu0
    %2559 = vmatprep.mubr.f32.mxu0 0.0
    %2560 = vmatmul.mubr.f32.gmra.mrb[0].mxu0 %v2488
    %v2561 = vpop.f32.mrb[0].mxu0
    %v2562 = vadd.f32 0.0, %v2561
    %v2563 = vpop.f32.mrb[0].mxu0
    %2564 = vdwg.mxu0
    %2567 = vrot.lane.b32.xlu0 %v1404, 64
    %v2568 = vpop.permute.xlu0 %2567
    %2569 = vrot.lane.b32.xlu0 %v1405, 64
    %v2570 = vpop.permute.xlu0 %2569
    %v2571 = vsel %vm215, %v2568, 0
    %v2573 = vsel %vm215, %v2570, 0
    %2575 = vmatprep.subr.mxu0 0.0
    %2576 = vmatpush1.msra.mxu0 %v1406
    %2577 = vmatprep.subr.mxu0 0.0
    %2578 = vmatpush1.msra.mxu0 %v1407
    %2579 = vmatprep.subr.mxu0 0.0
    %2580 = vmatpush1.msra.mxu0 0.0
    %2581 = vmatprep.subr.mxu0 0.0
    %2582 = vmatpush1.msra.mxu0 0.0
    %2583 = vmatprep.subr.mxu0 0.0
    %2584 = vmatpush1.msra.mxu0 0.0
    %2585 = vmatprep.subr.mxu0 0.0
    %2586 = vmatpush1.msra.mxu0 0.0
    %2587 = vmatprep.subr.mxu0 0.0
    %2588 = vmatpush1.msra.mxu0 0.0
    %2589 = vmatprep.subr.mxu0 0.0
    %2590 = vmatpush1.msra.mxu0 0.0
    %2591 = vmatprep.subr.mxu0 0.0
    %2592 = vmatpush1.msra.mxu0 0.0
    %2593 = vmatprep.subr.mxu0 0.0
    %2594 = vmatpush1.msra.mxu0 0.0
    %2595 = vmatprep.subr.mxu0 0.0
    %2596 = vmatpush1.msra.mxu0 0.0
    %2597 = vmatprep.subr.mxu0 0.0
    %2598 = vmatpush1.msra.mxu0 0.0
    %2599 = vmatprep.subr.mxu0 0.0
    %2600 = vmatpush1.msra.mxu0 0.0
    %2601 = vmatprep.subr.mxu0 0.0
    %2602 = vmatpush1.msra.mxu0 0.0
    %2603 = vmatprep.subr.mxu0 0.0
    %2604 = vmatpush1.msra.mxu0 0.0
    %2605 = vmatprep.subr.mxu0 0.0
    %2606 = vmatpush1.msra.mxu0 0.0
    %2607 = vmatprep.subr.mxu0 0.0
    %2608 = vmatpush1.msra.mxu0 0.0
    %2609 = vmatprep.subr.mxu0 0.0
    %2610 = vmatpush1.msra.mxu0 0.0
    %2611 = vmatprep.subr.mxu0 0.0
    %2612 = vmatpush1.msra.mxu0 0.0
    %2613 = vmatprep.subr.mxu0 0.0
    %2614 = vmatpush1.msra.mxu0 0.0
    %2615 = vmatprep.subr.mxu0 0.0
    %2616 = vmatpush1.msra.mxu0 0.0
    %2617 = vmatprep.subr.mxu0 0.0
    %2618 = vmatpush1.msra.mxu0 0.0
    %2619 = vmatprep.subr.mxu0 0.0
    %2620 = vmatpush1.msra.mxu0 0.0
    %2621 = vmatprep.subr.mxu0 0.0
    %2622 = vmatpush1.msra.mxu0 0.0
    %2623 = vmatprep.subr.mxu0 0.0
    %2624 = vmatpush1.msra.mxu0 0.0
    %2625 = vmatprep.subr.mxu0 0.0
    %2626 = vmatpush1.msra.mxu0 0.0
    %2627 = vmatprep.subr.mxu0 0.0
    %2628 = vmatpush1.msra.mxu0 0.0
    %2629 = vmatprep.subr.mxu0 0.0
    %2630 = vmatpush1.msra.mxu0 0.0
    %2631 = vmatprep.subr.mxu0 0.0
    %2632 = vmatpush1.msra.mxu0 0.0
    %2633 = vmatprep.subr.mxu0 0.0
    %2634 = vmatpush1.msra.mxu0 0.0
    %2635 = vmatprep.subr.mxu0 0.0
    %2636 = vmatpush1.msra.mxu0 0.0
    %2637 = vmatprep.subr.mxu0 0.0
    %2638 = vmatpush1.msra.mxu0 0.0
    %2639 = vmatprep.mubr.f32.mxu0 0.0
    %2640 = vmatmul.mubr.f32.gmra.mrb[0].mxu0 %v2571
    %v2641 = vpop.f32.mrb[0].mxu0
    %v2642 = vadd.f32 %v2557, %v2641
    %v2643 = vpop.f32.mrb[0].mxu0
    %2644 = vmatprep.mubr.f32.mxu0 0.0
    %2645 = vmatmul.mubr.f32.gmra.mrb[0].mxu0 %v2573
    %v2646 = vpop.f32.mrb[0].mxu0
    %v2647 = vadd.f32 %v2562, %v2646
    %v2648 = vpop.f32.mrb[0].mxu0
    %2649 = vdwg.mxu0
    %v2650 = vshra.s32 %v195, 4
    %vm2651 = vcmp.eq.s32.totalorder %v2650, %v192
    %v2652 = vsel %vm2651, 1.0, 0.0
    %v2653 = vand.u32 %v195, 15
    %vm2654 = vcmp.eq.s32.totalorder %v2653, %v192
    %vm2655 = vcmp.eq.s32.totalorder %v2653, %v193
    %v2656 = vsel %vm2654, 1.0, 0.0
    %v2657 = vsel %vm2655, 1.0, 0.0
    %v2658 = vlaneseq
    %v2659 = vshrl.u32 %v2658, 7
    %v2660 = vsub.s32 7, %v2659
    %v2661 = vrot.slane %v289, %v2660
    %v2662 = vsub.f32 %v2661, %v289
    %v2663 = vmul.f32 %v2662, 1.442695
    %v2664 = vpow.pop %v2663
    %2666 = vrot.lane.b32.xlu0 %v2664, 16
    %v2667 = vpop.permute.xlu0 %2666
    %v2669 = vmul.f32 %v130, %v2667
    %2671 = vrot.lane.b32.xlu0 %v2669, 112
    %v2672 = vpop.permute.xlu0 %2671
    %v2673 = vsel %vm325, %v2672, 0
    %2675 = vmatprep.subr.mxu0 0.0
    %2676 = vmatpush1.msra.mxu0 %v2652
    %2677 = vmatprep.subr.mxu0 0.0
    %2678 = vmatpush1.msra.mxu0 0.0
    %2679 = vmatprep.subr.mxu0 0.0
    %2680 = vmatpush1.msra.mxu0 0.0
    %2681 = vmatprep.subr.mxu0 0.0
    %2682 = vmatpush1.msra.mxu0 0.0
    %2683 = vmatprep.subr.mxu0 0.0
    %2684 = vmatpush1.msra.mxu0 0.0
    %2685 = vmatprep.subr.mxu0 0.0
    %2686 = vmatpush1.msra.mxu0 0.0
    %2687 = vmatprep.subr.mxu0 0.0
    %2688 = vmatpush1.msra.mxu0 0.0
    %2689 = vmatprep.subr.mxu0 0.0
    %2690 = vmatpush1.msra.mxu0 0.0
    %2691 = vmatprep.subr.mxu0 0.0
    %2692 = vmatpush1.msra.mxu0 0.0
    %2693 = vmatprep.subr.mxu0 0.0
    %2694 = vmatpush1.msra.mxu0 0.0
    %2695 = vmatprep.subr.mxu0 0.0
    %2696 = vmatpush1.msra.mxu0 0.0
    %2697 = vmatprep.subr.mxu0 0.0
    %2698 = vmatpush1.msra.mxu0 0.0
    %2699 = vmatprep.subr.mxu0 0.0
    %2700 = vmatpush1.msra.mxu0 0.0
    %2701 = vmatprep.subr.mxu0 0.0
    %2702 = vmatpush1.msra.mxu0 0.0
    %2703 = vmatprep.subr.mxu0 0.0
    %2704 = vmatpush1.msra.mxu0 0.0
    %2705 = vmatprep.subr.mxu0 0.0
    %2706 = vmatpush1.msra.mxu0 0.0
    %2707 = vmatprep.subr.mxu0 0.0
    %2708 = vmatpush1.msra.mxu0 0.0
    %2709 = vmatprep.subr.mxu0 0.0
    %2710 = vmatpush1.msra.mxu0 0.0
    %2711 = vmatprep.subr.mxu0 0.0
    %2712 = vmatpush1.msra.mxu0 0.0
    %2713 = vmatprep.subr.mxu0 0.0
    %2714 = vmatpush1.msra.mxu0 0.0
    %2715 = vmatprep.subr.mxu0 0.0
    %2716 = vmatpush1.msra.mxu0 0.0
    %2717 = vmatprep.subr.mxu0 0.0
    %2718 = vmatpush1.msra.mxu0 0.0
    %2719 = vmatprep.subr.mxu0 0.0
    %2720 = vmatpush1.msra.mxu0 0.0
    %2721 = vmatprep.subr.mxu0 0.0
    %2722 = vmatpush1.msra.mxu0 0.0
    %2723 = vmatprep.subr.mxu0 0.0
    %2724 = vmatpush1.msra.mxu0 0.0
    %2725 = vmatprep.subr.mxu0 0.0
    %2726 = vmatpush1.msra.mxu0 0.0
    %2727 = vmatprep.subr.mxu0 0.0
    %2728 = vmatpush1.msra.mxu0 0.0
    %2729 = vmatprep.subr.mxu0 0.0
    %2730 = vmatpush1.msra.mxu0 0.0
    %2731 = vmatprep.subr.mxu0 0.0
    %2732 = vmatpush1.msra.mxu0 0.0
    %2733 = vmatprep.subr.mxu0 0.0
    %2734 = vmatpush1.msra.mxu0 0.0
    %2735 = vmatprep.subr.mxu0 0.0
    %2736 = vmatpush1.msra.mxu0 0.0
    %2737 = vmatprep.subr.mxu0 0.0
    %2738 = vmatpush1.msra.mxu0 0.0
    %2739 = vmatprep.mubr.f32.mxu0 0.0
    %v2740 = vand.u32 %v2673, 4294901760
    %v2741 = vsub.f32 %v2673, %v2740
    %v2742 = vand.u32 %v2741, 4294901760
    %v2743 = vsub.f32 %v2741, %v2742
    %v2744 = vand.u32 %v2743, 4294901760
    %2745 = vmatmul.mubr.f32.gmra.mrb[0].mxu0 %v2744
    %v2746 = vpop.f32.mrb[0].mxu0
    %v2747 = vadd.f32 0.0, %v2746
    %v2748 = vpop.f32.mrb[0].mxu0
    %2749 = vdwg.mxu0
    %2750 = vmatprep.subr.mxu0 0.0
    %v2751 = vsub.f32 %v2652, %v2652
    %v2752 = vand.u32 %v2751, 4294901760
    %v2753 = vsub.f32 %v2751, %v2752
    %v2754 = vand.u32 %v2753, 4294901760
    %2755 = vmatpush1.msra.mxu0 %v2754
    %2756 = vmatprep.subr.mxu0 0.0
    %2757 = vmatpush1.msra.mxu0 0.0
    %2758 = vmatprep.subr.mxu0 0.0
    %2759 = vmatpush1.msra.mxu0 0.0
    %2760 = vmatprep.subr.mxu0 0.0
    %2761 = vmatpush1.msra.mxu0 0.0
    %2762 = vmatprep.subr.mxu0 0.0
    %2763 = vmatpush1.msra.mxu0 0.0
    %2764 = vmatprep.subr.mxu0 0.0
    %2765 = vmatpush1.msra.mxu0 0.0
    %2766 = vmatprep.subr.mxu0 0.0
    %2767 = vmatpush1.msra.mxu0 0.0
    %2768 = vmatprep.subr.mxu0 0.0
    %2769 = vmatpush1.msra.mxu0 0.0
    %2770 = vmatprep.subr.mxu0 0.0
    %2771 = vmatpush1.msra.mxu0 0.0
    %2772 = vmatprep.subr.mxu0 0.0
    %2773 = vmatpush1.msra.mxu0 0.0
    %2774 = vmatprep.subr.mxu0 0.0
    %2775 = vmatpush1.msra.mxu0 0.0
    %2776 = vmatprep.subr.mxu0 0.0
    %2777 = vmatpush1.msra.mxu0 0.0
    %2778 = vmatprep.subr.mxu0 0.0
    %2779 = vmatpush1.msra.mxu0 0.0
    %2780 = vmatprep.subr.mxu0 0.0
    %2781 = vmatpush1.msra.mxu0 0.0
    %2782 = vmatprep.subr.mxu0 0.0
    %2783 = vmatpush1.msra.mxu0 0.0
    %2784 = vmatprep.subr.mxu0 0.0
    %2785 = vmatpush1.msra.mxu0 0.0
    %2786 = vmatprep.subr.mxu0 0.0
    %2787 = vmatpush1.msra.mxu0 0.0
    %2788 = vmatprep.subr.mxu0 0.0
    %2789 = vmatpush1.msra.mxu0 0.0
    %2790 = vmatprep.subr.mxu0 0.0
    %2791 = vmatpush1.msra.mxu0 0.0
    %2792 = vmatprep.subr.mxu0 0.0
    %2793 = vmatpush1.msra.mxu0 0.0
    %2794 = vmatprep.subr.mxu0 0.0
    %2795 = vmatpush1.msra.mxu0 0.0
    %2796 = vmatprep.subr.mxu0 0.0
    %2797 = vmatpush1.msra.mxu0 0.0
    %2798 = vmatprep.subr.mxu0 0.0
    %2799 = vmatpush1.msra.mxu0 0.0
    %2800 = vmatprep.subr.mxu0 0.0
    %2801 = vmatpush1.msra.mxu0 0.0
    %2802 = vmatprep.subr.mxu0 0.0
    %2803 = vmatpush1.msra.mxu0 0.0
    %2804 = vmatprep.subr.mxu0 0.0
    %2805 = vmatpush1.msra.mxu0 0.0
    %2806 = vmatprep.subr.mxu0 0.0
    %2807 = vmatpush1.msra.mxu0 0.0
    %2808 = vmatprep.subr.mxu0 0.0
    %2809 = vmatpush1.msra.mxu0 0.0
    %2810 = vmatprep.subr.mxu0 0.0
    %2811 = vmatpush1.msra.mxu0 0.0
    %2812 = vmatprep.subr.mxu0 0.0
    %2813 = vmatpush1.msra.mxu0 0.0
    %2814 = vmatprep.subr.mxu0 0.0
    %2815 = vmatpush1.msra.mxu0 0.0
    %2816 = vmatprep.subr.mxu0 0.0
    %2817 = vmatpush1.msra.mxu0 0.0
    %2818 = vmatprep.mubr.f32.mxu0 0.0
    %v2819 = vand.u32 %v2673, 4294901760
    %2820 = vmatmul.mubr.f32.gmra.mrb[0].mxu0 %v2819
    %v2821 = vpop.f32.mrb[0].mxu0
    %v2822 = vadd.f32 %v2747, %v2821
    %v2823 = vpop.f32.mrb[0].mxu0
    %2824 = vdwg.mxu0
    %2825 = vmatprep.subr.mxu0 0.0
    %v2826 = vsub.f32 %v2652, %v2652
    %2827 = vmatpush1.msra.mxu0 %v2826
    %2828 = vmatprep.subr.mxu0 0.0
    %2829 = vmatpush1.msra.mxu0 0.0
    %2830 = vmatprep.subr.mxu0 0.0
    %2831 = vmatpush1.msra.mxu0 0.0
    %2832 = vmatprep.subr.mxu0 0.0
    %2833 = vmatpush1.msra.mxu0 0.0
    %2834 = vmatprep.subr.mxu0 0.0
    %2835 = vmatpush1.msra.mxu0 0.0
    %2836 = vmatprep.subr.mxu0 0.0
    %2837 = vmatpush1.msra.mxu0 0.0
    %2838 = vmatprep.subr.mxu0 0.0
    %2839 = vmatpush1.msra.mxu0 0.0
    %2840 = vmatprep.subr.mxu0 0.0
    %2841 = vmatpush1.msra.mxu0 0.0
    %2842 = vmatprep.subr.mxu0 0.0
    %2843 = vmatpush1.msra.mxu0 0.0
    %2844 = vmatprep.subr.mxu0 0.0
    %2845 = vmatpush1.msra.mxu0 0.0
    %2846 = vmatprep.subr.mxu0 0.0
    %2847 = vmatpush1.msra.mxu0 0.0
    %2848 = vmatprep.subr.mxu0 0.0
    %2849 = vmatpush1.msra.mxu0 0.0
    %2850 = vmatprep.subr.mxu0 0.0
    %2851 = vmatpush1.msra.mxu0 0.0
    %2852 = vmatprep.subr.mxu0 0.0
    %2853 = vmatpush1.msra.mxu0 0.0
    %2854 = vmatprep.subr.mxu0 0.0
    %2855 = vmatpush1.msra.mxu0 0.0
    %2856 = vmatprep.subr.mxu0 0.0
    %2857 = vmatpush1.msra.mxu0 0.0
    %2858 = vmatprep.subr.mxu0 0.0
    %2859 = vmatpush1.msra.mxu0 0.0
    %2860 = vmatprep.subr.mxu0 0.0
    %2861 = vmatpush1.msra.mxu0 0.0
    %2862 = vmatprep.subr.mxu0 0.0
    %2863 = vmatpush1.msra.mxu0 0.0
    %2864 = vmatprep.subr.mxu0 0.0
    %2865 = vmatpush1.msra.mxu0 0.0
    %2866 = vmatprep.subr.mxu0 0.0
    %2867 = vmatpush1.msra.mxu0 0.0
    %2868 = vmatprep.subr.mxu0 0.0
    %2869 = vmatpush1.msra.mxu0 0.0
    %2870 = vmatprep.subr.mxu0 0.0
    %2871 = vmatpush1.msra.mxu0 0.0
    %2872 = vmatprep.subr.mxu0 0.0
    %2873 = vmatpush1.msra.mxu0 0.0
    %2874 = vmatprep.subr.mxu0 0.0
    %2875 = vmatpush1.msra.mxu0 0.0
    %2876 = vmatprep.subr.mxu0 0.0
    %2877 = vmatpush1.msra.mxu0 0.0
    %2878 = vmatprep.subr.mxu0 0.0
    %2879 = vmatpush1.msra.mxu0 0.0
    %2880 = vmatprep.subr.mxu0 0.0
    %2881 = vmatpush1.msra.mxu0 0.0
    %2882 = vmatprep.subr.mxu0 0.0
    %2883 = vmatpush1.msra.mxu0 0.0
    %2884 = vmatprep.subr.mxu0 0.0
    %2885 = vmatpush1.msra.mxu0 0.0
    %2886 = vmatprep.subr.mxu0 0.0
    %2887 = vmatpush1.msra.mxu0 0.0
    %2888 = vmatprep.subr.mxu0 0.0
    %2889 = vmatpush1.msra.mxu0 0.0
    %2890 = vmatprep.mubr.f32.mxu0 0.0
    %v2891 = vand.u32 %v2673, 4294901760
    %v2892 = vsub.f32 %v2673, %v2891
    %2893 = vmatmul.mubr.f32.gmra.mrb[0].mxu0 %v2892
    %v2894 = vpop.f32.mrb[0].mxu0
    %v2895 = vadd.f32 %v2822, %v2894
    %v2896 = vpop.f32.mrb[0].mxu0
    %2897 = vdwg.mxu0
    %2898 = vmatprep.subr.mxu0 0.0
    %2899 = vmatpush1.msra.mxu0 %v2652
    %2900 = vmatprep.subr.mxu0 0.0
    %2901 = vmatpush1.msra.mxu0 0.0
    %2902 = vmatprep.subr.mxu0 0.0
    %2903 = vmatpush1.msra.mxu0 0.0
    %2904 = vmatprep.subr.mxu0 0.0
    %2905 = vmatpush1.msra.mxu0 0.0
    %2906 = vmatprep.subr.mxu0 0.0
    %2907 = vmatpush1.msra.mxu0 0.0
    %2908 = vmatprep.subr.mxu0 0.0
    %2909 = vmatpush1.msra.mxu0 0.0
    %2910 = vmatprep.subr.mxu0 0.0
    %2911 = vmatpush1.msra.mxu0 0.0
    %2912 = vmatprep.subr.mxu0 0.0
    %2913 = vmatpush1.msra.mxu0 0.0
    %2914 = vmatprep.subr.mxu0 0.0
    %2915 = vmatpush1.msra.mxu0 0.0
    %2916 = vmatprep.subr.mxu0 0.0
    %2917 = vmatpush1.msra.mxu0 0.0
    %2918 = vmatprep.subr.mxu0 0.0
    %2919 = vmatpush1.msra.mxu0 0.0
    %2920 = vmatprep.subr.mxu0 0.0
    %2921 = vmatpush1.msra.mxu0 0.0
    %2922 = vmatprep.subr.mxu0 0.0
    %2923 = vmatpush1.msra.mxu0 0.0
    %2924 = vmatprep.subr.mxu0 0.0
    %2925 = vmatpush1.msra.mxu0 0.0
    %2926 = vmatprep.subr.mxu0 0.0
    %2927 = vmatpush1.msra.mxu0 0.0
    %2928 = vmatprep.subr.mxu0 0.0
    %2929 = vmatpush1.msra.mxu0 0.0
    %2930 = vmatprep.subr.mxu0 0.0
    %2931 = vmatpush1.msra.mxu0 0.0
    %2932 = vmatprep.subr.mxu0 0.0
    %2933 = vmatpush1.msra.mxu0 0.0
    %2934 = vmatprep.subr.mxu0 0.0
    %2935 = vmatpush1.msra.mxu0 0.0
    %2936 = vmatprep.subr.mxu0 0.0
    %2937 = vmatpush1.msra.mxu0 0.0
    %2938 = vmatprep.subr.mxu0 0.0
    %2939 = vmatpush1.msra.mxu0 0.0
    %2940 = vmatprep.subr.mxu0 0.0
    %2941 = vmatpush1.msra.mxu0 0.0
    %2942 = vmatprep.subr.mxu0 0.0
    %2943 = vmatpush1.msra.mxu0 0.0
    %2944 = vmatprep.subr.mxu0 0.0
    %2945 = vmatpush1.msra.mxu0 0.0
    %2946 = vmatprep.subr.mxu0 0.0
    %2947 = vmatpush1.msra.mxu0 0.0
    %2948 = vmatprep.subr.mxu0 0.0
    %2949 = vmatpush1.msra.mxu0 0.0
    %2950 = vmatprep.subr.mxu0 0.0
    %2951 = vmatpush1.msra.mxu0 0.0
    %2952 = vmatprep.subr.mxu0 0.0
    %2953 = vmatpush1.msra.mxu0 0.0
    %2954 = vmatprep.subr.mxu0 0.0
    %2955 = vmatpush1.msra.mxu0 0.0
    %2956 = vmatprep.subr.mxu0 0.0
    %2957 = vmatpush1.msra.mxu0 0.0
    %2958 = vmatprep.subr.mxu0 0.0
    %2959 = vmatpush1.msra.mxu0 0.0
    %2960 = vmatprep.subr.mxu0 0.0
    %2961 = vmatpush1.msra.mxu0 0.0
    %2962 = vmatprep.mubr.f32.mxu0 0.0
    %v2963 = vand.u32 %v2673, 4294901760
    %v2964 = vsub.f32 %v2673, %v2963
    %v2965 = vand.u32 %v2964, 4294901760
    %2966 = vmatmul.mubr.f32.gmra.mrb[0].mxu0 %v2965
    %v2967 = vpop.f32.mrb[0].mxu0
    %v2968 = vadd.f32 %v2895, %v2967
    %v2969 = vpop.f32.mrb[0].mxu0
    %2970 = vdwg.mxu0
    %2971 = vmatprep.subr.mxu0 0.0
    %v2972 = vsub.f32 %v2652, %v2652
    %v2973 = vand.u32 %v2972, 4294901760
    %2974 = vmatpush1.msra.mxu0 %v2973
    %2975 = vmatprep.subr.mxu0 0.0
    %2976 = vmatpush1.msra.mxu0 0.0
    %2977 = vmatprep.subr.mxu0 0.0
    %2978 = vmatpush1.msra.mxu0 0.0
    %2979 = vmatprep.subr.mxu0 0.0
    %2980 = vmatpush1.msra.mxu0 0.0
    %2981 = vmatprep.subr.mxu0 0.0
    %2982 = vmatpush1.msra.mxu0 0.0
    %2983 = vmatprep.subr.mxu0 0.0
    %2984 = vmatpush1.msra.mxu0 0.0
    %2985 = vmatprep.subr.mxu0 0.0
    %2986 = vmatpush1.msra.mxu0 0.0
    %2987 = vmatprep.subr.mxu0 0.0
    %2988 = vmatpush1.msra.mxu0 0.0
    %2989 = vmatprep.subr.mxu0 0.0
    %2990 = vmatpush1.msra.mxu0 0.0
    %2991 = vmatprep.subr.mxu0 0.0
    %2992 = vmatpush1.msra.mxu0 0.0
    %2993 = vmatprep.subr.mxu0 0.0
    %2994 = vmatpush1.msra.mxu0 0.0
    %2995 = vmatprep.subr.mxu0 0.0
    %2996 = vmatpush1.msra.mxu0 0.0
    %2997 = vmatprep.subr.mxu0 0.0
    %2998 = vmatpush1.msra.mxu0 0.0
    %2999 = vmatprep.subr.mxu0 0.0
    %3000 = vmatpush1.msra.mxu0 0.0
    %3001 = vmatprep.subr.mxu0 0.0
    %3002 = vmatpush1.msra.mxu0 0.0
    %3003 = vmatprep.subr.mxu0 0.0
    %3004 = vmatpush1.msra.mxu0 0.0
    %3005 = vmatprep.subr.mxu0 0.0
    %3006 = vmatpush1.msra.mxu0 0.0
    %3007 = vmatprep.subr.mxu0 0.0
    %3008 = vmatpush1.msra.mxu0 0.0
    %3009 = vmatprep.subr.mxu0 0.0
    %3010 = vmatpush1.msra.mxu0 0.0
    %3011 = vmatprep.subr.mxu0 0.0
    %3012 = vmatpush1.msra.mxu0 0.0
    %3013 = vmatprep.subr.mxu0 0.0
    %3014 = vmatpush1.msra.mxu0 0.0
    %3015 = vmatprep.subr.mxu0 0.0
    %3016 = vmatpush1.msra.mxu0 0.0
    %3017 = vmatprep.subr.mxu0 0.0
    %3018 = vmatpush1.msra.mxu0 0.0
    %3019 = vmatprep.subr.mxu0 0.0
    %3020 = vmatpush1.msra.mxu0 0.0
    %3021 = vmatprep.subr.mxu0 0.0
    %3022 = vmatpush1.msra.mxu0 0.0
    %3023 = vmatprep.subr.mxu0 0.0
    %3024 = vmatpush1.msra.mxu0 0.0
    %3025 = vmatprep.subr.mxu0 0.0
    %3026 = vmatpush1.msra.mxu0 0.0
    %3027 = vmatprep.subr.mxu0 0.0
    %3028 = vmatpush1.msra.mxu0 0.0
    %3029 = vmatprep.subr.mxu0 0.0
    %3030 = vmatpush1.msra.mxu0 0.0
    %3031 = vmatprep.subr.mxu0 0.0
    %3032 = vmatpush1.msra.mxu0 0.0
    %3033 = vmatprep.subr.mxu0 0.0
    %3034 = vmatpush1.msra.mxu0 0.0
    %3035 = vmatprep.subr.mxu0 0.0
    %3036 = vmatpush1.msra.mxu0 0.0
    %3037 = vmatprep.mubr.f32.mxu0 0.0
    %v3038 = vand.u32 %v2673, 4294901760
    %3039 = vmatmul.mubr.f32.gmra.mrb[0].mxu0 %v3038
    %v3040 = vpop.f32.mrb[0].mxu0
    %v3041 = vadd.f32 %v2968, %v3040
    %v3042 = vpop.f32.mrb[0].mxu0
    %3043 = vdwg.mxu0
    %3044 = vmatprep.subr.mxu0 0.0
    %3045 = vmatpush1.msra.mxu0 %v2652
    %3046 = vmatprep.subr.mxu0 0.0
    %3047 = vmatpush1.msra.mxu0 0.0
    %3048 = vmatprep.subr.mxu0 0.0
    %3049 = vmatpush1.msra.mxu0 0.0
    %3050 = vmatprep.subr.mxu0 0.0
    %3051 = vmatpush1.msra.mxu0 0.0
    %3052 = vmatprep.subr.mxu0 0.0
    %3053 = vmatpush1.msra.mxu0 0.0
    %3054 = vmatprep.subr.mxu0 0.0
    %3055 = vmatpush1.msra.mxu0 0.0
    %3056 = vmatprep.subr.mxu0 0.0
    %3057 = vmatpush1.msra.mxu0 0.0
    %3058 = vmatprep.subr.mxu0 0.0
    %3059 = vmatpush1.msra.mxu0 0.0
    %3060 = vmatprep.subr.mxu0 0.0
    %3061 = vmatpush1.msra.mxu0 0.0
    %3062 = vmatprep.subr.mxu0 0.0
    %3063 = vmatpush1.msra.mxu0 0.0
    %3064 = vmatprep.subr.mxu0 0.0
    %3065 = vmatpush1.msra.mxu0 0.0
    %3066 = vmatprep.subr.mxu0 0.0
    %3067 = vmatpush1.msra.mxu0 0.0
    %3068 = vmatprep.subr.mxu0 0.0
    %3069 = vmatpush1.msra.mxu0 0.0
    %3070 = vmatprep.subr.mxu0 0.0
    %3071 = vmatpush1.msra.mxu0 0.0
    %3072 = vmatprep.subr.mxu0 0.0
    %3073 = vmatpush1.msra.mxu0 0.0
    %3074 = vmatprep.subr.mxu0 0.0
    %3075 = vmatpush1.msra.mxu0 0.0
    %3076 = vmatprep.subr.mxu0 0.0
    %3077 = vmatpush1.msra.mxu0 0.0
    %3078 = vmatprep.subr.mxu0 0.0
    %3079 = vmatpush1.msra.mxu0 0.0
    %3080 = vmatprep.subr.mxu0 0.0
    %3081 = vmatpush1.msra.mxu0 0.0
    %3082 = vmatprep.subr.mxu0 0.0
    %3083 = vmatpush1.msra.mxu0 0.0
    %3084 = vmatprep.subr.mxu0 0.0
    %3085 = vmatpush1.msra.mxu0 0.0
    %3086 = vmatprep.subr.mxu0 0.0
    %3087 = vmatpush1.msra.mxu0 0.0
    %3088 = vmatprep.subr.mxu0 0.0
    %3089 = vmatpush1.msra.mxu0 0.0
    %3090 = vmatprep.subr.mxu0 0.0
    %3091 = vmatpush1.msra.mxu0 0.0
    %3092 = vmatprep.subr.mxu0 0.0
    %3093 = vmatpush1.msra.mxu0 0.0
    %3094 = vmatprep.subr.mxu0 0.0
    %3095 = vmatpush1.msra.mxu0 0.0
    %3096 = vmatprep.subr.mxu0 0.0
    %3097 = vmatpush1.msra.mxu0 0.0
    %3098 = vmatprep.subr.mxu0 0.0
    %3099 = vmatpush1.msra.mxu0 0.0
    %3100 = vmatprep.subr.mxu0 0.0
    %3101 = vmatpush1.msra.mxu0 0.0
    %3102 = vmatprep.subr.mxu0 0.0
    %3103 = vmatpush1.msra.mxu0 0.0
    %3104 = vmatprep.subr.mxu0 0.0
    %3105 = vmatpush1.msra.mxu0 0.0
    %3106 = vmatprep.subr.mxu0 0.0
    %3107 = vmatpush1.msra.mxu0 0.0
    %3108 = vmatprep.mubr.f32.mxu0 0.0
    %v3109 = vand.u32 %v2673, 4294901760
    %3110 = vmatmul.mubr.f32.gmra.mrb[0].mxu0 %v3109
    %v3111 = vpop.f32.mrb[0].mxu0
    %v3112 = vadd.f32 %v3041, %v3111
    %v3113 = vpop.f32.mrb[0].mxu0
    %3114 = vdwg.mxu0
    %v3115 = vsel %vm215, %v843, 0
    %3117 = vmatprep.subr.mxu0 0.0
    %3118 = vmatpush1.msra.mxu0 %v2656
    %3119 = vmatprep.subr.mxu0 0.0
    %3120 = vmatpush1.msra.mxu0 %v2657
    %3121 = vmatprep.subr.mxu0 0.0
    %3122 = vmatpush1.msra.mxu0 0.0
    %3123 = vmatprep.subr.mxu0 0.0
    %3124 = vmatpush1.msra.mxu0 0.0
    %3125 = vmatprep.subr.mxu0 0.0
    %3126 = vmatpush1.msra.mxu0 0.0
    %3127 = vmatprep.subr.mxu0 0.0
    %3128 = vmatpush1.msra.mxu0 0.0
    %3129 = vmatprep.subr.mxu0 0.0
    %3130 = vmatpush1.msra.mxu0 0.0
    %3131 = vmatprep.subr.mxu0 0.0
    %3132 = vmatpush1.msra.mxu0 0.0
    %3133 = vmatprep.subr.mxu0 0.0
    %3134 = vmatpush1.msra.mxu0 0.0
    %3135 = vmatprep.subr.mxu0 0.0
    %3136 = vmatpush1.msra.mxu0 0.0
    %3137 = vmatprep.subr.mxu0 0.0
    %3138 = vmatpush1.msra.mxu0 0.0
    %3139 = vmatprep.subr.mxu0 0.0
    %3140 = vmatpush1.msra.mxu0 0.0
    %3141 = vmatprep.subr.mxu0 0.0
    %3142 = vmatpush1.msra.mxu0 0.0
    %3143 = vmatprep.subr.mxu0 0.0
    %3144 = vmatpush1.msra.mxu0 0.0
    %3145 = vmatprep.subr.mxu0 0.0
    %3146 = vmatpush1.msra.mxu0 0.0
    %3147 = vmatprep.subr.mxu0 0.0
    %3148 = vmatpush1.msra.mxu0 0.0
    %3149 = vmatprep.subr.mxu0 0.0
    %3150 = vmatpush1.msra.mxu0 0.0
    %3151 = vmatprep.subr.mxu0 0.0
    %3152 = vmatpush1.msra.mxu0 0.0
    %3153 = vmatprep.subr.mxu0 0.0
    %3154 = vmatpush1.msra.mxu0 0.0
    %3155 = vmatprep.subr.mxu0 0.0
    %3156 = vmatpush1.msra.mxu0 0.0
    %3157 = vmatprep.subr.mxu0 0.0
    %3158 = vmatpush1.msra.mxu0 0.0
    %3159 = vmatprep.subr.mxu0 0.0
    %3160 = vmatpush1.msra.mxu0 0.0
    %3161 = vmatprep.subr.mxu0 0.0
    %3162 = vmatpush1.msra.mxu0 0.0
    %3163 = vmatprep.subr.mxu0 0.0
    %3164 = vmatpush1.msra.mxu0 0.0
    %3165 = vmatprep.subr.mxu0 0.0
    %3166 = vmatpush1.msra.mxu0 0.0
    %3167 = vmatprep.subr.mxu0 0.0
    %3168 = vmatpush1.msra.mxu0 0.0
    %3169 = vmatprep.subr.mxu0 0.0
    %3170 = vmatpush1.msra.mxu0 0.0
    %3171 = vmatprep.subr.mxu0 0.0
    %3172 = vmatpush1.msra.mxu0 0.0
    %3173 = vmatprep.subr.mxu0 0.0
    %3174 = vmatpush1.msra.mxu0 0.0
    %3175 = vmatprep.subr.mxu0 0.0
    %3176 = vmatpush1.msra.mxu0 0.0
    %3177 = vmatprep.subr.mxu0 0.0
    %3178 = vmatpush1.msra.mxu0 0.0
    %3179 = vmatprep.subr.mxu0 0.0
    %3180 = vmatpush1.msra.mxu0 0.0
    %3181 = vmatprep.mubr.f32.mxu0 0.0
    %v3182 = vand.u32 %v3115, 4294901760
    %v3183 = vsub.f32 %v3115, %v3182
    %v3184 = vand.u32 %v3183, 4294901760
    %v3185 = vsub.f32 %v3183, %v3184
    %v3186 = vand.u32 %v3185, 4294901760
    %3187 = vmatmul.mubr.f32.gmra.mrb[0].mxu0 %v3186
    %v3188 = vpop.f32.mrb[0].mxu0
    %v3189 = vadd.f32 0.0, %v3188
    %v3190 = vpop.f32.mrb[0].mxu0
    %3191 = vdwg.mxu0
    %3192 = vmatprep.subr.mxu0 0.0
    %v3193 = vsub.f32 %v2656, %v2656
    %v3194 = vand.u32 %v3193, 4294901760
    %v3195 = vsub.f32 %v3193, %v3194
    %v3196 = vand.u32 %v3195, 4294901760
    %3197 = vmatpush1.msra.mxu0 %v3196
    %3198 = vmatprep.subr.mxu0 0.0
    %v3199 = vsub.f32 %v2657, %v2657
    %v3200 = vand.u32 %v3199, 4294901760
    %v3201 = vsub.f32 %v3199, %v3200
    %v3202 = vand.u32 %v3201, 4294901760
    %3203 = vmatpush1.msra.mxu0 %v3202
    %3204 = vmatprep.subr.mxu0 0.0
    %3205 = vmatpush1.msra.mxu0 0.0
    %3206 = vmatprep.subr.mxu0 0.0
    %3207 = vmatpush1.msra.mxu0 0.0
    %3208 = vmatprep.subr.mxu0 0.0
    %3209 = vmatpush1.msra.mxu0 0.0
    %3210 = vmatprep.subr.mxu0 0.0
    %3211 = vmatpush1.msra.mxu0 0.0
    %3212 = vmatprep.subr.mxu0 0.0
    %3213 = vmatpush1.msra.mxu0 0.0
    %3214 = vmatprep.subr.mxu0 0.0
    %3215 = vmatpush1.msra.mxu0 0.0
    %3216 = vmatprep.subr.mxu0 0.0
    %3217 = vmatpush1.msra.mxu0 0.0
    %3218 = vmatprep.subr.mxu0 0.0
    %3219 = vmatpush1.msra.mxu0 0.0
    %3220 = vmatprep.subr.mxu0 0.0
    %3221 = vmatpush1.msra.mxu0 0.0
    %3222 = vmatprep.subr.mxu0 0.0
    %3223 = vmatpush1.msra.mxu0 0.0
    %3224 = vmatprep.subr.mxu0 0.0
    %3225 = vmatpush1.msra.mxu0 0.0
    %3226 = vmatprep.subr.mxu0 0.0
    %3227 = vmatpush1.msra.mxu0 0.0
    %3228 = vmatprep.subr.mxu0 0.0
    %3229 = vmatpush1.msra.mxu0 0.0
    %3230 = vmatprep.subr.mxu0 0.0
    %3231 = vmatpush1.msra.mxu0 0.0
    %3232 = vmatprep.subr.mxu0 0.0
    %3233 = vmatpush1.msra.mxu0 0.0
    %3234 = vmatprep.subr.mxu0 0.0
    %3235 = vmatpush1.msra.mxu0 0.0
    %3236 = vmatprep.subr.mxu0 0.0
    %3237 = vmatpush1.msra.mxu0 0.0
    %3238 = vmatprep.subr.mxu0 0.0
    %3239 = vmatpush1.msra.mxu0 0.0
    %3240 = vmatprep.subr.mxu0 0.0
    %3241 = vmatpush1.msra.mxu0 0.0
    %3242 = vmatprep.subr.mxu0 0.0
    %3243 = vmatpush1.msra.mxu0 0.0
    %3244 = vmatprep.subr.mxu0 0.0
    %3245 = vmatpush1.msra.mxu0 0.0
    %3246 = vmatprep.subr.mxu0 0.0
    %3247 = vmatpush1.msra.mxu0 0.0
    %3248 = vmatprep.subr.mxu0 0.0
    %3249 = vmatpush1.msra.mxu0 0.0
    %3250 = vmatprep.subr.mxu0 0.0
    %3251 = vmatpush1.msra.mxu0 0.0
    %3252 = vmatprep.subr.mxu0 0.0
    %3253 = vmatpush1.msra.mxu0 0.0
    %3254 = vmatprep.subr.mxu0 0.0
    %3255 = vmatpush1.msra.mxu0 0.0
    %3256 = vmatprep.subr.mxu0 0.0
    %3257 = vmatpush1.msra.mxu0 0.0
    %3258 = vmatprep.subr.mxu0 0.0
    %3259 = vmatpush1.msra.mxu0 0.0
    %3260 = vmatprep.subr.mxu0 0.0
    %3261 = vmatpush1.msra.mxu0 0.0
    %3262 = vmatprep.subr.mxu0 0.0
    %3263 = vmatpush1.msra.mxu0 0.0
    %3264 = vmatprep.mubr.f32.mxu0 0.0
    %v3265 = vand.u32 %v3115, 4294901760
    %3266 = vmatmul.mubr.f32.gmra.mrb[0].mxu0 %v3265
    %v3267 = vpop.f32.mrb[0].mxu0
    %v3268 = vadd.f32 %v3189, %v3267
    %v3269 = vpop.f32.mrb[0].mxu0
    %3270 = vdwg.mxu0
    %3271 = vmatprep.subr.mxu0 0.0
    %v3272 = vsub.f32 %v2656, %v2656
    %3273 = vmatpush1.msra.mxu0 %v3272
    %3274 = vmatprep.subr.mxu0 0.0
    %v3275 = vsub.f32 %v2657, %v2657
    %3276 = vmatpush1.msra.mxu0 %v3275
    %3277 = vmatprep.subr.mxu0 0.0
    %3278 = vmatpush1.msra.mxu0 0.0
    %3279 = vmatprep.subr.mxu0 0.0
    %3280 = vmatpush1.msra.mxu0 0.0
    %3281 = vmatprep.subr.mxu0 0.0
    %3282 = vmatpush1.msra.mxu0 0.0
    %3283 = vmatprep.subr.mxu0 0.0
    %3284 = vmatpush1.msra.mxu0 0.0
    %3285 = vmatprep.subr.mxu0 0.0
    %3286 = vmatpush1.msra.mxu0 0.0
    %3287 = vmatprep.subr.mxu0 0.0
    %3288 = vmatpush1.msra.mxu0 0.0
    %3289 = vmatprep.subr.mxu0 0.0
    %3290 = vmatpush1.msra.mxu0 0.0
    %3291 = vmatprep.subr.mxu0 0.0
    %3292 = vmatpush1.msra.mxu0 0.0
    %3293 = vmatprep.subr.mxu0 0.0
    %3294 = vmatpush1.msra.mxu0 0.0
    %3295 = vmatprep.subr.mxu0 0.0
    %3296 = vmatpush1.msra.mxu0 0.0
    %3297 = vmatprep.subr.mxu0 0.0
    %3298 = vmatpush1.msra.mxu0 0.0
    %3299 = vmatprep.subr.mxu0 0.0
    %3300 = vmatpush1.msra.mxu0 0.0
    %3301 = vmatprep.subr.mxu0 0.0
    %3302 = vmatpush1.msra.mxu0 0.0
    %3303 = vmatprep.subr.mxu0 0.0
    %3304 = vmatpush1.msra.mxu0 0.0
    %3305 = vmatprep.subr.mxu0 0.0
    %3306 = vmatpush1.msra.mxu0 0.0
    %3307 = vmatprep.subr.mxu0 0.0
    %3308 = vmatpush1.msra.mxu0 0.0
    %3309 = vmatprep.subr.mxu0 0.0
    %3310 = vmatpush1.msra.mxu0 0.0
    %3311 = vmatprep.subr.mxu0 0.0
    %3312 = vmatpush1.msra.mxu0 0.0
    %3313 = vmatprep.subr.mxu0 0.0
    %3314 = vmatpush1.msra.mxu0 0.0
    %3315 = vmatprep.subr.mxu0 0.0
    %3316 = vmatpush1.msra.mxu0 0.0
    %3317 = vmatprep.subr.mxu0 0.0
    %3318 = vmatpush1.msra.mxu0 0.0
    %3319 = vmatprep.subr.mxu0 0.0
    %3320 = vmatpush1.msra.mxu0 0.0
    %3321 = vmatprep.subr.mxu0 0.0
    %3322 = vmatpush1.msra.mxu0 0.0
    %3323 = vmatprep.subr.mxu0 0.0
    %3324 = vmatpush1.msra.mxu0 0.0
    %3325 = vmatprep.subr.mxu0 0.0
    %3326 = vmatpush1.msra.mxu0 0.0
    %3327 = vmatprep.subr.mxu0 0.0
    %3328 = vmatpush1.msra.mxu0 0.0
    %3329 = vmatprep.subr.mxu0 0.0
    %3330 = vmatpush1.msra.mxu0 0.0
    %3331 = vmatprep.subr.mxu0 0.0
    %3332 = vmatpush1.msra.mxu0 0.0
    %3333 = vmatprep.subr.mxu0 0.0
    %3334 = vmatpush1.msra.mxu0 0.0
    %3335 = vmatprep.subr.mxu0 0.0
    %3336 = vmatpush1.msra.mxu0 0.0
    %3337 = vmatprep.mubr.f32.mxu0 0.0
    %v3338 = vand.u32 %v3115, 4294901760
    %v3339 = vsub.f32 %v3115, %v3338
    %3340 = vmatmul.mubr.f32.gmra.mrb[0].mxu0 %v3339
    %v3341 = vpop.f32.mrb[0].mxu0
    %v3342 = vadd.f32 %v3268, %v3341
    %v3343 = vpop.f32.mrb[0].mxu0
    %3344 = vdwg.mxu0
    %3345 = vmatprep.subr.mxu0 0.0
    %3346 = vmatpush1.msra.mxu0 %v2656
    %3347 = vmatprep.subr.mxu0 0.0
    %3348 = vmatpush1.msra.mxu0 %v2657
    %3349 = vmatprep.subr.mxu0 0.0
    %3350 = vmatpush1.msra.mxu0 0.0
    %3351 = vmatprep.subr.mxu0 0.0
    %3352 = vmatpush1.msra.mxu0 0.0
    %3353 = vmatprep.subr.mxu0 0.0
    %3354 = vmatpush1.msra.mxu0 0.0
    %3355 = vmatprep.subr.mxu0 0.0
    %3356 = vmatpush1.msra.mxu0 0.0
    %3357 = vmatprep.subr.mxu0 0.0
    %3358 = vmatpush1.msra.mxu0 0.0
    %3359 = vmatprep.subr.mxu0 0.0
    %3360 = vmatpush1.msra.mxu0 0.0
    %3361 = vmatprep.subr.mxu0 0.0
    %3362 = vmatpush1.msra.mxu0 0.0
    %3363 = vmatprep.subr.mxu0 0.0
    %3364 = vmatpush1.msra.mxu0 0.0
    %3365 = vmatprep.subr.mxu0 0.0
    %3366 = vmatpush1.msra.mxu0 0.0
    %3367 = vmatprep.subr.mxu0 0.0
    %3368 = vmatpush1.msra.mxu0 0.0
    %3369 = vmatprep.subr.mxu0 0.0
    %3370 = vmatpush1.msra.mxu0 0.0
    %3371 = vmatprep.subr.mxu0 0.0
    %3372 = vmatpush1.msra.mxu0 0.0
    %3373 = vmatprep.subr.mxu0 0.0
    %3374 = vmatpush1.msra.mxu0 0.0
    %3375 = vmatprep.subr.mxu0 0.0
    %3376 = vmatpush1.msra.mxu0 0.0
    %3377 = vmatprep.subr.mxu0 0.0
    %3378 = vmatpush1.msra.mxu0 0.0
    %3379 = vmatprep.subr.mxu0 0.0
    %3380 = vmatpush1.msra.mxu0 0.0
    %3381 = vmatprep.subr.mxu0 0.0
    %3382 = vmatpush1.msra.mxu0 0.0
    %3383 = vmatprep.subr.mxu0 0.0
    %3384 = vmatpush1.msra.mxu0 0.0
    %3385 = vmatprep.subr.mxu0 0.0
    %3386 = vmatpush1.msra.mxu0 0.0
    %3387 = vmatprep.subr.mxu0 0.0
    %3388 = vmatpush1.msra.mxu0 0.0
    %3389 = vmatprep.subr.mxu0 0.0
    %3390 = vmatpush1.msra.mxu0 0.0
    %3391 = vmatprep.subr.mxu0 0.0
    %3392 = vmatpush1.msra.mxu0 0.0
    %3393 = vmatprep.subr.mxu0 0.0
    %3394 = vmatpush1.msra.mxu0 0.0
    %3395 = vmatprep.subr.mxu0 0.0
    %3396 = vmatpush1.msra.mxu0 0.0
    %3397 = vmatprep.subr.mxu0 0.0
    %3398 = vmatpush1.msra.mxu0 0.0
    %3399 = vmatprep.subr.mxu0 0.0
    %3400 = vmatpush1.msra.mxu0 0.0
    %3401 = vmatprep.subr.mxu0 0.0
    %3402 = vmatpush1.msra.mxu0 0.0
    %3403 = vmatprep.subr.mxu0 0.0
    %3404 = vmatpush1.msra.mxu0 0.0
    %3405 = vmatprep.subr.mxu0 0.0
    %3406 = vmatpush1.msra.mxu0 0.0
    %3407 = vmatprep.subr.mxu0 0.0
    %3408 = vmatpush1.msra.mxu0 0.0
    %3409 = vmatprep.mubr.f32.mxu0 0.0
    %v3410 = vand.u32 %v3115, 4294901760
    %v3411 = vsub.f32 %v3115, %v3410
    %v3412 = vand.u32 %v3411, 4294901760
    %3413 = vmatmul.mubr.f32.gmra.mrb[0].mxu0 %v3412
    %v3414 = vpop.f32.mrb[0].mxu0
    %v3415 = vadd.f32 %v3342, %v3414
    %v3416 = vpop.f32.mrb[0].mxu0
    %3417 = vdwg.mxu0
    %3418 = vmatprep.subr.mxu0 0.0
    %v3419 = vsub.f32 %v2656, %v2656
    %v3420 = vand.u32 %v3419, 4294901760
    %3421 = vmatpush1.msra.mxu0 %v3420
    %3422 = vmatprep.subr.mxu0 0.0
    %v3423 = vsub.f32 %v2657, %v2657
    %v3424 = vand.u32 %v3423, 4294901760
    %3425 = vmatpush1.msra.mxu0 %v3424
    %3426 = vmatprep.subr.mxu0 0.0
    %3427 = vmatpush1.msra.mxu0 0.0
    %3428 = vmatprep.subr.mxu0 0.0
    %3429 = vmatpush1.msra.mxu0 0.0
    %3430 = vmatprep.subr.mxu0 0.0
    %3431 = vmatpush1.msra.mxu0 0.0
    %3432 = vmatprep.subr.mxu0 0.0
    %3433 = vmatpush1.msra.mxu0 0.0
    %3434 = vmatprep.subr.mxu0 0.0
    %3435 = vmatpush1.msra.mxu0 0.0
    %3436 = vmatprep.subr.mxu0 0.0
    %3437 = vmatpush1.msra.mxu0 0.0
    %3438 = vmatprep.subr.mxu0 0.0
    %3439 = vmatpush1.msra.mxu0 0.0
    %3440 = vmatprep.subr.mxu0 0.0
    %3441 = vmatpush1.msra.mxu0 0.0
    %3442 = vmatprep.subr.mxu0 0.0
    %3443 = vmatpush1.msra.mxu0 0.0
    %3444 = vmatprep.subr.mxu0 0.0
    %3445 = vmatpush1.msra.mxu0 0.0
    %3446 = vmatprep.subr.mxu0 0.0
    %3447 = vmatpush1.msra.mxu0 0.0
    %3448 = vmatprep.subr.mxu0 0.0
    %3449 = vmatpush1.msra.mxu0 0.0
    %3450 = vmatprep.subr.mxu0 0.0
    %3451 = vmatpush1.msra.mxu0 0.0
    %3452 = vmatprep.subr.mxu0 0.0
    %3453 = vmatpush1.msra.mxu0 0.0
    %3454 = vmatprep.subr.mxu0 0.0
    %3455 = vmatpush1.msra.mxu0 0.0
    %3456 = vmatprep.subr.mxu0 0.0
    %3457 = vmatpush1.msra.mxu0 0.0
    %3458 = vmatprep.subr.mxu0 0.0
    %3459 = vmatpush1.msra.mxu0 0.0
    %3460 = vmatprep.subr.mxu0 0.0
    %3461 = vmatpush1.msra.mxu0 0.0
    %3462 = vmatprep.subr.mxu0 0.0
    %3463 = vmatpush1.msra.mxu0 0.0
    %3464 = vmatprep.subr.mxu0 0.0
    %3465 = vmatpush1.msra.mxu0 0.0
    %3466 = vmatprep.subr.mxu0 0.0
    %3467 = vmatpush1.msra.mxu0 0.0
    %3468 = vmatprep.subr.mxu0 0.0
    %3469 = vmatpush1.msra.mxu0 0.0
    %3470 = vmatprep.subr.mxu0 0.0
    %3471 = vmatpush1.msra.mxu0 0.0
    %3472 = vmatprep.subr.mxu0 0.0
    %3473 = vmatpush1.msra.mxu0 0.0
    %3474 = vmatprep.subr.mxu0 0.0
    %3475 = vmatpush1.msra.mxu0 0.0
    %3476 = vmatprep.subr.mxu0 0.0
    %3477 = vmatpush1.msra.mxu0 0.0
    %3478 = vmatprep.subr.mxu0 0.0
    %3479 = vmatpush1.msra.mxu0 0.0
    %3480 = vmatprep.subr.mxu0 0.0
    %3481 = vmatpush1.msra.mxu0 0.0
    %3482 = vmatprep.subr.mxu0 0.0
    %3483 = vmatpush1.msra.mxu0 0.0
    %3484 = vmatprep.subr.mxu0 0.0
    %3485 = vmatpush1.msra.mxu0 0.0
    %3486 = vmatprep.mubr.f32.mxu0 0.0
    %v3487 = vand.u32 %v3115, 4294901760
    %3488 = vmatmul.mubr.f32.gmra.mrb[0].mxu0 %v3487
    %v3489 = vpop.f32.mrb[0].mxu0
    %v3490 = vadd.f32 %v3415, %v3489
    %v3491 = vpop.f32.mrb[0].mxu0
    %3492 = vdwg.mxu0
    %3493 = vmatprep.subr.mxu0 0.0
    %3494 = vmatpush1.msra.mxu0 %v2656
    %3495 = vmatprep.subr.mxu0 0.0
    %3496 = vmatpush1.msra.mxu0 %v2657
    %3497 = vmatprep.subr.mxu0 0.0
    %3498 = vmatpush1.msra.mxu0 0.0
    %3499 = vmatprep.subr.mxu0 0.0
    %3500 = vmatpush1.msra.mxu0 0.0
    %3501 = vmatprep.subr.mxu0 0.0
    %3502 = vmatpush1.msra.mxu0 0.0
    %3503 = vmatprep.subr.mxu0 0.0
    %3504 = vmatpush1.msra.mxu0 0.0
    %3505 = vmatprep.subr.mxu0 0.0
    %3506 = vmatpush1.msra.mxu0 0.0
    %3507 = vmatprep.subr.mxu0 0.0
    %3508 = vmatpush1.msra.mxu0 0.0
    %3509 = vmatprep.subr.mxu0 0.0
    %3510 = vmatpush1.msra.mxu0 0.0
    %3511 = vmatprep.subr.mxu0 0.0
    %3512 = vmatpush1.msra.mxu0 0.0
    %3513 = vmatprep.subr.mxu0 0.0
    %3514 = vmatpush1.msra.mxu0 0.0
    %3515 = vmatprep.subr.mxu0 0.0
    %3516 = vmatpush1.msra.mxu0 0.0
    %3517 = vmatprep.subr.mxu0 0.0
    %3518 = vmatpush1.msra.mxu0 0.0
    %3519 = vmatprep.subr.mxu0 0.0
    %3520 = vmatpush1.msra.mxu0 0.0
    %3521 = vmatprep.subr.mxu0 0.0
    %3522 = vmatpush1.msra.mxu0 0.0
    %3523 = vmatprep.subr.mxu0 0.0
    %3524 = vmatpush1.msra.mxu0 0.0
    %3525 = vmatprep.subr.mxu0 0.0
    %3526 = vmatpush1.msra.mxu0 0.0
    %3527 = vmatprep.subr.mxu0 0.0
    %3528 = vmatpush1.msra.mxu0 0.0
    %3529 = vmatprep.subr.mxu0 0.0
    %3530 = vmatpush1.msra.mxu0 0.0
    %3531 = vmatprep.subr.mxu0 0.0
    %3532 = vmatpush1.msra.mxu0 0.0
    %3533 = vmatprep.subr.mxu0 0.0
    %3534 = vmatpush1.msra.mxu0 0.0
    %3535 = vmatprep.subr.mxu0 0.0
    %3536 = vmatpush1.msra.mxu0 0.0
    %3537 = vmatprep.subr.mxu0 0.0
    %3538 = vmatpush1.msra.mxu0 0.0
    %3539 = vmatprep.subr.mxu0 0.0
    %3540 = vmatpush1.msra.mxu0 0.0
    %3541 = vmatprep.subr.mxu0 0.0
    %3542 = vmatpush1.msra.mxu0 0.0
    %3543 = vmatprep.subr.mxu0 0.0
    %3544 = vmatpush1.msra.mxu0 0.0
    %3545 = vmatprep.subr.mxu0 0.0
    %3546 = vmatpush1.msra.mxu0 0.0
    %3547 = vmatprep.subr.mxu0 0.0
    %3548 = vmatpush1.msra.mxu0 0.0
    %3549 = vmatprep.subr.mxu0 0.0
    %3550 = vmatpush1.msra.mxu0 0.0
    %3551 = vmatprep.subr.mxu0 0.0
    %3552 = vmatpush1.msra.mxu0 0.0
    %3553 = vmatprep.subr.mxu0 0.0
    %3554 = vmatpush1.msra.mxu0 0.0
    %3555 = vmatprep.subr.mxu0 0.0
    %3556 = vmatpush1.msra.mxu0 0.0
    %3557 = vmatprep.mubr.f32.mxu0 0.0
    %v3558 = vand.u32 %v3115, 4294901760
    %3559 = vmatmul.mubr.f32.gmra.mrb[0].mxu0 %v3558
    %v3560 = vpop.f32.mrb[0].mxu0
    %v3561 = vadd.f32 %v3490, %v3560
    %v3562 = vpop.f32.mrb[0].mxu0
    %3563 = vdwg.mxu0
    %v3564 = vmul.f32 %v3112, %v3561
    %v3565 = vrot.slane %v3564, 4
    %v3566 = vadd.f32 %v3564, %v3565
    %v3567 = vrot.slane %v3566, 2
    %v3568 = vadd.f32 %v3566, %v3567
    %v3569 = vrot.slane %v3568, 1
    %v3570 = vadd.f32 %v3568, %v3569
    %3571 = vrot.lane.b32.xlu0 %v2669, 104
    %v3572 = vpop.permute.xlu0 %3571
    %v3573 = vsel %vm325, %v3572, 0
    %3575 = vmatprep.subr.mxu0 0.0
    %3576 = vmatpush1.msra.mxu0 %v2652
    %3577 = vmatprep.subr.mxu0 0.0
    %3578 = vmatpush1.msra.mxu0 0.0
    %3579 = vmatprep.subr.mxu0 0.0
    %3580 = vmatpush1.msra.mxu0 0.0
    %3581 = vmatprep.subr.mxu0 0.0
    %3582 = vmatpush1.msra.mxu0 0.0
    %3583 = vmatprep.subr.mxu0 0.0
    %3584 = vmatpush1.msra.mxu0 0.0
    %3585 = vmatprep.subr.mxu0 0.0
    %3586 = vmatpush1.msra.mxu0 0.0
    %3587 = vmatprep.subr.mxu0 0.0
    %3588 = vmatpush1.msra.mxu0 0.0
    %3589 = vmatprep.subr.mxu0 0.0
    %3590 = vmatpush1.msra.mxu0 0.0
    %3591 = vmatprep.subr.mxu0 0.0
    %3592 = vmatpush1.msra.mxu0 0.0
    %3593 = vmatprep.subr.mxu0 0.0
    %3594 = vmatpush1.msra.mxu0 0.0
    %3595 = vmatprep.subr.mxu0 0.0
    %3596 = vmatpush1.msra.mxu0 0.0
    %3597 = vmatprep.subr.mxu0 0.0
    %3598 = vmatpush1.msra.mxu0 0.0
    %3599 = vmatprep.subr.mxu0 0.0
    %3600 = vmatpush1.msra.mxu0 0.0
    %3601 = vmatprep.subr.mxu0 0.0
    %3602 = vmatpush1.msra.mxu0 0.0
    %3603 = vmatprep.subr.mxu0 0.0
    %3604 = vmatpush1.msra.mxu0 0.0
    %3605 = vmatprep.subr.mxu0 0.0
    %3606 = vmatpush1.msra.mxu0 0.0
    %3607 = vmatprep.subr.mxu0 0.0
    %3608 = vmatpush1.msra.mxu0 0.0
    %3609 = vmatprep.subr.mxu0 0.0
    %3610 = vmatpush1.msra.mxu0 0.0
    %3611 = vmatprep.subr.mxu0 0.0
    %3612 = vmatpush1.msra.mxu0 0.0
    %3613 = vmatprep.subr.mxu0 0.0
    %3614 = vmatpush1.msra.mxu0 0.0
    %3615 = vmatprep.subr.mxu0 0.0
    %3616 = vmatpush1.msra.mxu0 0.0
    %3617 = vmatprep.subr.mxu0 0.0
    %3618 = vmatpush1.msra.mxu0 0.0
    %3619 = vmatprep.subr.mxu0 0.0
    %3620 = vmatpush1.msra.mxu0 0.0
    %3621 = vmatprep.subr.mxu0 0.0
    %3622 = vmatpush1.msra.mxu0 0.0
    %3623 = vmatprep.subr.mxu0 0.0
    %3624 = vmatpush1.msra.mxu0 0.0
    %3625 = vmatprep.subr.mxu0 0.0
    %3626 = vmatpush1.msra.mxu0 0.0
    %3627 = vmatprep.subr.mxu0 0.0
    %3628 = vmatpush1.msra.mxu0 0.0
    %3629 = vmatprep.subr.mxu0 0.0
    %3630 = vmatpush1.msra.mxu0 0.0
    %3631 = vmatprep.subr.mxu0 0.0
    %3632 = vmatpush1.msra.mxu0 0.0
    %3633 = vmatprep.subr.mxu0 0.0
    %3634 = vmatpush1.msra.mxu0 0.0
    %3635 = vmatprep.subr.mxu0 0.0
    %3636 = vmatpush1.msra.mxu0 0.0
    %3637 = vmatprep.subr.mxu0 0.0
    %3638 = vmatpush1.msra.mxu0 0.0
    %3639 = vmatprep.mubr.f32.mxu0 0.0
    %v3640 = vand.u32 %v3573, 4294901760
    %v3641 = vsub.f32 %v3573, %v3640
    %v3642 = vand.u32 %v3641, 4294901760
    %v3643 = vsub.f32 %v3641, %v3642
    %v3644 = vand.u32 %v3643, 4294901760
    %3645 = vmatmul.mubr.f32.gmra.mrb[0].mxu0 %v3644
    %v3646 = vpop.f32.mrb[0].mxu0
    %v3647 = vadd.f32 0.0, %v3646
    %v3648 = vpop.f32.mrb[0].mxu0
    %3649 = vdwg.mxu0
    %3650 = vmatprep.subr.mxu0 0.0
    %v3651 = vsub.f32 %v2652, %v2652
    %v3652 = vand.u32 %v3651, 4294901760
    %v3653 = vsub.f32 %v3651, %v3652
    %v3654 = vand.u32 %v3653, 4294901760
    %3655 = vmatpush1.msra.mxu0 %v3654
    %3656 = vmatprep.subr.mxu0 0.0
    %3657 = vmatpush1.msra.mxu0 0.0
    %3658 = vmatprep.subr.mxu0 0.0
    %3659 = vmatpush1.msra.mxu0 0.0
    %3660 = vmatprep.subr.mxu0 0.0
    %3661 = vmatpush1.msra.mxu0 0.0
    %3662 = vmatprep.subr.mxu0 0.0
    %3663 = vmatpush1.msra.mxu0 0.0
    %3664 = vmatprep.subr.mxu0 0.0
    %3665 = vmatpush1.msra.mxu0 0.0
    %3666 = vmatprep.subr.mxu0 0.0
    %3667 = vmatpush1.msra.mxu0 0.0
    %3668 = vmatprep.subr.mxu0 0.0
    %3669 = vmatpush1.msra.mxu0 0.0
    %3670 = vmatprep.subr.mxu0 0.0
    %3671 = vmatpush1.msra.mxu0 0.0
    %3672 = vmatprep.subr.mxu0 0.0
    %3673 = vmatpush1.msra.mxu0 0.0
    %3674 = vmatprep.subr.mxu0 0.0
    %3675 = vmatpush1.msra.mxu0 0.0
    %3676 = vmatprep.subr.mxu0 0.0
    %3677 = vmatpush1.msra.mxu0 0.0
    %3678 = vmatprep.subr.mxu0 0.0
    %3679 = vmatpush1.msra.mxu0 0.0
    %3680 = vmatprep.subr.mxu0 0.0
    %3681 = vmatpush1.msra.mxu0 0.0
    %3682 = vmatprep.subr.mxu0 0.0
    %3683 = vmatpush1.msra.mxu0 0.0
    %3684 = vmatprep.subr.mxu0 0.0
    %3685 = vmatpush1.msra.mxu0 0.0
    %3686 = vmatprep.subr.mxu0 0.0
    %3687 = vmatpush1.msra.mxu0 0.0
    %3688 = vmatprep.subr.mxu0 0.0
    %3689 = vmatpush1.msra.mxu0 0.0
    %3690 = vmatprep.subr.mxu0 0.0
    %3691 = vmatpush1.msra.mxu0 0.0
    %3692 = vmatprep.subr.mxu0 0.0
    %3693 = vmatpush1.msra.mxu0 0.0
    %3694 = vmatprep.subr.mxu0 0.0
    %3695 = vmatpush1.msra.mxu0 0.0
    %3696 = vmatprep.subr.mxu0 0.0
    %3697 = vmatpush1.msra.mxu0 0.0
    %3698 = vmatprep.subr.mxu0 0.0
    %3699 = vmatpush1.msra.mxu0 0.0
    %3700 = vmatprep.subr.mxu0 0.0
    %3701 = vmatpush1.msra.mxu0 0.0
    %3702 = vmatprep.subr.mxu0 0.0
    %3703 = vmatpush1.msra.mxu0 0.0
    %3704 = vmatprep.subr.mxu0 0.0
    %3705 = vmatpush1.msra.mxu0 0.0
    %3706 = vmatprep.subr.mxu0 0.0
    %3707 = vmatpush1.msra.mxu0 0.0
    %3708 = vmatprep.subr.mxu0 0.0
    %3709 = vmatpush1.msra.mxu0 0.0
    %3710 = vmatprep.subr.mxu0 0.0
    %3711 = vmatpush1.msra.mxu0 0.0
    %3712 = vmatprep.subr.mxu0 0.0
    %3713 = vmatpush1.msra.mxu0 0.0
    %3714 = vmatprep.subr.mxu0 0.0
    %3715 = vmatpush1.msra.mxu0 0.0
    %3716 = vmatprep.subr.mxu0 0.0
    %3717 = vmatpush1.msra.mxu0 0.0
    %3718 = vmatprep.mubr.f32.mxu0 0.0
    %v3719 = vand.u32 %v3573, 4294901760
    %3720 = vmatmul.mubr.f32.gmra.mrb[0].mxu0 %v3719
    %v3721 = vpop.f32.mrb[0].mxu0
    %v3722 = vadd.f32 %v3647, %v3721
    %v3723 = vpop.f32.mrb[0].mxu0
    %3724 = vdwg.mxu0
    %3725 = vmatprep.subr.mxu0 0.0
    %v3726 = vsub.f32 %v2652, %v2652
    %3727 = vmatpush1.msra.mxu0 %v3726
    %3728 = vmatprep.subr.mxu0 0.0
    %3729 = vmatpush1.msra.mxu0 0.0
    %3730 = vmatprep.subr.mxu0 0.0
    %3731 = vmatpush1.msra.mxu0 0.0
    %3732 = vmatprep.subr.mxu0 0.0
    %3733 = vmatpush1.msra.mxu0 0.0
    %3734 = vmatprep.subr.mxu0 0.0
    %3735 = vmatpush1.msra.mxu0 0.0
    %3736 = vmatprep.subr.mxu0 0.0
    %3737 = vmatpush1.msra.mxu0 0.0
    %3738 = vmatprep.subr.mxu0 0.0
    %3739 = vmatpush1.msra.mxu0 0.0
    %3740 = vmatprep.subr.mxu0 0.0
    %3741 = vmatpush1.msra.mxu0 0.0
    %3742 = vmatprep.subr.mxu0 0.0
    %3743 = vmatpush1.msra.mxu0 0.0
    %3744 = vmatprep.subr.mxu0 0.0
    %3745 = vmatpush1.msra.mxu0 0.0
    %3746 = vmatprep.subr.mxu0 0.0
    %3747 = vmatpush1.msra.mxu0 0.0
    %3748 = vmatprep.subr.mxu0 0.0
    %3749 = vmatpush1.msra.mxu0 0.0
    %3750 = vmatprep.subr.mxu0 0.0
    %3751 = vmatpush1.msra.mxu0 0.0
    %3752 = vmatprep.subr.mxu0 0.0
    %3753 = vmatpush1.msra.mxu0 0.0
    %3754 = vmatprep.subr.mxu0 0.0
    %3755 = vmatpush1.msra.mxu0 0.0
    %3756 = vmatprep.subr.mxu0 0.0
    %3757 = vmatpush1.msra.mxu0 0.0
    %3758 = vmatprep.subr.mxu0 0.0
    %3759 = vmatpush1.msra.mxu0 0.0
    %3760 = vmatprep.subr.mxu0 0.0
    %3761 = vmatpush1.msra.mxu0 0.0
    %3762 = vmatprep.subr.mxu0 0.0
    %3763 = vmatpush1.msra.mxu0 0.0
    %3764 = vmatprep.subr.mxu0 0.0
    %3765 = vmatpush1.msra.mxu0 0.0
    %3766 = vmatprep.subr.mxu0 0.0
    %3767 = vmatpush1.msra.mxu0 0.0
    %3768 = vmatprep.subr.mxu0 0.0
    %3769 = vmatpush1.msra.mxu0 0.0
    %3770 = vmatprep.subr.mxu0 0.0
    %3771 = vmatpush1.msra.mxu0 0.0
    %3772 = vmatprep.subr.mxu0 0.0
    %3773 = vmatpush1.msra.mxu0 0.0
    %3774 = vmatprep.subr.mxu0 0.0
    %3775 = vmatpush1.msra.mxu0 0.0
    %3776 = vmatprep.subr.mxu0 0.0
    %3777 = vmatpush1.msra.mxu0 0.0
    %3778 = vmatprep.subr.mxu0 0.0
    %3779 = vmatpush1.msra.mxu0 0.0
    %3780 = vmatprep.subr.mxu0 0.0
    %3781 = vmatpush1.msra.mxu0 0.0
    %3782 = vmatprep.subr.mxu0 0.0
    %3783 = vmatpush1.msra.mxu0 0.0
    %3784 = vmatprep.subr.mxu0 0.0
    %3785 = vmatpush1.msra.mxu0 0.0
    %3786 = vmatprep.subr.mxu0 0.0
    %3787 = vmatpush1.msra.mxu0 0.0
    %3788 = vmatprep.subr.mxu0 0.0
    %3789 = vmatpush1.msra.mxu0 0.0
    %3790 = vmatprep.mubr.f32.mxu0 0.0
    %v3791 = vand.u32 %v3573, 4294901760
    %v3792 = vsub.f32 %v3573, %v3791
    %3793 = vmatmul.mubr.f32.gmra.mrb[0].mxu0 %v3792
    %v3794 = vpop.f32.mrb[0].mxu0
    %v3795 = vadd.f32 %v3722, %v3794
    %v3796 = vpop.f32.mrb[0].mxu0
    %3797 = vdwg.mxu0
    %3798 = vmatprep.subr.mxu0 0.0
    %3799 = vmatpush1.msra.mxu0 %v2652
    %3800 = vmatprep.subr.mxu0 0.0
    %3801 = vmatpush1.msra.mxu0 0.0
    %3802 = vmatprep.subr.mxu0 0.0
    %3803 = vmatpush1.msra.mxu0 0.0
    %3804 = vmatprep.subr.mxu0 0.0
    %3805 = vmatpush1.msra.mxu0 0.0
    %3806 = vmatprep.subr.mxu0 0.0
    %3807 = vmatpush1.msra.mxu0 0.0
    %3808 = vmatprep.subr.mxu0 0.0
    %3809 = vmatpush1.msra.mxu0 0.0
    %3810 = vmatprep.subr.mxu0 0.0
    %3811 = vmatpush1.msra.mxu0 0.0
    %3812 = vmatprep.subr.mxu0 0.0
    %3813 = vmatpush1.msra.mxu0 0.0
    %3814 = vmatprep.subr.mxu0 0.0
    %3815 = vmatpush1.msra.mxu0 0.0
    %3816 = vmatprep.subr.mxu0 0.0
    %3817 = vmatpush1.msra.mxu0 0.0
    %3818 = vmatprep.subr.mxu0 0.0
    %3819 = vmatpush1.msra.mxu0 0.0
    %3820 = vmatprep.subr.mxu0 0.0
    %3821 = vmatpush1.msra.mxu0 0.0
    %3822 = vmatprep.subr.mxu0 0.0
    %3823 = vmatpush1.msra.mxu0 0.0
    %3824 = vmatprep.subr.mxu0 0.0
    %3825 = vmatpush1.msra.mxu0 0.0
    %3826 = vmatprep.subr.mxu0 0.0
    %3827 = vmatpush1.msra.mxu0 0.0
    %3828 = vmatprep.subr.mxu0 0.0
    %3829 = vmatpush1.msra.mxu0 0.0
    %3830 = vmatprep.subr.mxu0 0.0
    %3831 = vmatpush1.msra.mxu0 0.0
    %3832 = vmatprep.subr.mxu0 0.0
    %3833 = vmatpush1.msra.mxu0 0.0
    %3834 = vmatprep.subr.mxu0 0.0
    %3835 = vmatpush1.msra.mxu0 0.0
    %3836 = vmatprep.subr.mxu0 0.0
    %3837 = vmatpush1.msra.mxu0 0.0
    %3838 = vmatprep.subr.mxu0 0.0
    %3839 = vmatpush1.msra.mxu0 0.0
    %3840 = vmatprep.subr.mxu0 0.0
    %3841 = vmatpush1.msra.mxu0 0.0
    %3842 = vmatprep.subr.mxu0 0.0
    %3843 = vmatpush1.msra.mxu0 0.0
    %3844 = vmatprep.subr.mxu0 0.0
    %3845 = vmatpush1.msra.mxu0 0.0
    %3846 = vmatprep.subr.mxu0 0.0
    %3847 = vmatpush1.msra.mxu0 0.0
    %3848 = vmatprep.subr.mxu0 0.0
    %3849 = vmatpush1.msra.mxu0 0.0
    %3850 = vmatprep.subr.mxu0 0.0
    %3851 = vmatpush1.msra.mxu0 0.0
    %3852 = vmatprep.subr.mxu0 0.0
    %3853 = vmatpush1.msra.mxu0 0.0
    %3854 = vmatprep.subr.mxu0 0.0
    %3855 = vmatpush1.msra.mxu0 0.0
    %3856 = vmatprep.subr.mxu0 0.0
    %3857 = vmatpush1.msra.mxu0 0.0
    %3858 = vmatprep.subr.mxu0 0.0
    %3859 = vmatpush1.msra.mxu0 0.0
    %3860 = vmatprep.subr.mxu0 0.0
    %3861 = vmatpush1.msra.mxu0 0.0
    %3862 = vmatprep.mubr.f32.mxu0 0.0
    %v3863 = vand.u32 %v3573, 4294901760
    %v3864 = vsub.f32 %v3573, %v3863
    %v3865 = vand.u32 %v3864, 4294901760
    %3866 = vmatmul.mubr.f32.gmra.mrb[0].mxu0 %v3865
    %v3867 = vpop.f32.mrb[0].mxu0
    %v3868 = vadd.f32 %v3795, %v3867
    %v3869 = vpop.f32.mrb[0].mxu0
    %3870 = vdwg.mxu0
    %3871 = vmatprep.subr.mxu0 0.0
    %v3872 = vsub.f32 %v2652, %v2652
    %v3873 = vand.u32 %v3872, 4294901760
    %3874 = vmatpush1.msra.mxu0 %v3873
    %3875 = vmatprep.subr.mxu0 0.0
    %3876 = vmatpush1.msra.mxu0 0.0
    %3877 = vmatprep.subr.mxu0 0.0
    %3878 = vmatpush1.msra.mxu0 0.0
    %3879 = vmatprep.subr.mxu0 0.0
    %3880 = vmatpush1.msra.mxu0 0.0
    %3881 = vmatprep.subr.mxu0 0.0
    %3882 = vmatpush1.msra.mxu0 0.0
    %3883 = vmatprep.subr.mxu0 0.0
    %3884 = vmatpush1.msra.mxu0 0.0
    %3885 = vmatprep.subr.mxu0 0.0
    %3886 = vmatpush1.msra.mxu0 0.0
    %3887 = vmatprep.subr.mxu0 0.0
    %3888 = vmatpush1.msra.mxu0 0.0
    %3889 = vmatprep.subr.mxu0 0.0
    %3890 = vmatpush1.msra.mxu0 0.0
    %3891 = vmatprep.subr.mxu0 0.0
    %3892 = vmatpush1.msra.mxu0 0.0
    %3893 = vmatprep.subr.mxu0 0.0
    %3894 = vmatpush1.msra.mxu0 0.0
    %3895 = vmatprep.subr.mxu0 0.0
    %3896 = vmatpush1.msra.mxu0 0.0
    %3897 = vmatprep.subr.mxu0 0.0
    %3898 = vmatpush1.msra.mxu0 0.0
    %3899 = vmatprep.subr.mxu0 0.0
    %3900 = vmatpush1.msra.mxu0 0.0
    %3901 = vmatprep.subr.mxu0 0.0
    %3902 = vmatpush1.msra.mxu0 0.0
    %3903 = vmatprep.subr.mxu0 0.0
    %3904 = vmatpush1.msra.mxu0 0.0
    %3905 = vmatprep.subr.mxu0 0.0
    %3906 = vmatpush1.msra.mxu0 0.0
    %3907 = vmatprep.subr.mxu0 0.0
    %3908 = vmatpush1.msra.mxu0 0.0
    %3909 = vmatprep.subr.mxu0 0.0
    %3910 = vmatpush1.msra.mxu0 0.0
    %3911 = vmatprep.subr.mxu0 0.0
    %3912 = vmatpush1.msra.mxu0 0.0
    %3913 = vmatprep.subr.mxu0 0.0
    %3914 = vmatpush1.msra.mxu0 0.0
    %3915 = vmatprep.subr.mxu0 0.0
    %3916 = vmatpush1.msra.mxu0 0.0
    %3917 = vmatprep.subr.mxu0 0.0
    %3918 = vmatpush1.msra.mxu0 0.0
    %3919 = vmatprep.subr.mxu0 0.0
    %3920 = vmatpush1.msra.mxu0 0.0
    %3921 = vmatprep.subr.mxu0 0.0
    %3922 = vmatpush1.msra.mxu0 0.0
    %3923 = vmatprep.subr.mxu0 0.0
    %3924 = vmatpush1.msra.mxu0 0.0
    %3925 = vmatprep.subr.mxu0 0.0
    %3926 = vmatpush1.msra.mxu0 0.0
    %3927 = vmatprep.subr.mxu0 0.0
    %3928 = vmatpush1.msra.mxu0 0.0
    %3929 = vmatprep.subr.mxu0 0.0
    %3930 = vmatpush1.msra.mxu0 0.0
    %3931 = vmatprep.subr.mxu0 0.0
    %3932 = vmatpush1.msra.mxu0 0.0
    %3933 = vmatprep.subr.mxu0 0.0
    %3934 = vmatpush1.msra.mxu0 0.0
    %3935 = vmatprep.subr.mxu0 0.0
    %3936 = vmatpush1.msra.mxu0 0.0
    %3937 = vmatprep.mubr.f32.mxu0 0.0
    %v3938 = vand.u32 %v3573, 4294901760
    %3939 = vmatmul.mubr.f32.gmra.mrb[0].mxu0 %v3938
    %v3940 = vpop.f32.mrb[0].mxu0
    %v3941 = vadd.f32 %v3868, %v3940
    %v3942 = vpop.f32.mrb[0].mxu0
    %3943 = vdwg.mxu0
    %3944 = vmatprep.subr.mxu0 0.0
    %3945 = vmatpush1.msra.mxu0 %v2652
    %3946 = vmatprep.subr.mxu0 0.0
    %3947 = vmatpush1.msra.mxu0 0.0
    %3948 = vmatprep.subr.mxu0 0.0
    %3949 = vmatpush1.msra.mxu0 0.0
    %3950 = vmatprep.subr.mxu0 0.0
    %3951 = vmatpush1.msra.mxu0 0.0
    %3952 = vmatprep.subr.mxu0 0.0
    %3953 = vmatpush1.msra.mxu0 0.0
    %3954 = vmatprep.subr.mxu0 0.0
    %3955 = vmatpush1.msra.mxu0 0.0
    %3956 = vmatprep.subr.mxu0 0.0
    %3957 = vmatpush1.msra.mxu0 0.0
    %3958 = vmatprep.subr.mxu0 0.0
    %3959 = vmatpush1.msra.mxu0 0.0
    %3960 = vmatprep.subr.mxu0 0.0
    %3961 = vmatpush1.msra.mxu0 0.0
    %3962 = vmatprep.subr.mxu0 0.0
    %3963 = vmatpush1.msra.mxu0 0.0
    %3964 = vmatprep.subr.mxu0 0.0
    %3965 = vmatpush1.msra.mxu0 0.0
    %3966 = vmatprep.subr.mxu0 0.0
    %3967 = vmatpush1.msra.mxu0 0.0
    %3968 = vmatprep.subr.mxu0 0.0
    %3969 = vmatpush1.msra.mxu0 0.0
    %3970 = vmatprep.subr.mxu0 0.0
    %3971 = vmatpush1.msra.mxu0 0.0
    %3972 = vmatprep.subr.mxu0 0.0
    %3973 = vmatpush1.msra.mxu0 0.0
    %3974 = vmatprep.subr.mxu0 0.0
    %3975 = vmatpush1.msra.mxu0 0.0
    %3976 = vmatprep.subr.mxu0 0.0
    %3977 = vmatpush1.msra.mxu0 0.0
    %3978 = vmatprep.subr.mxu0 0.0
    %3979 = vmatpush1.msra.mxu0 0.0
    %3980 = vmatprep.subr.mxu0 0.0
    %3981 = vmatpush1.msra.mxu0 0.0
    %3982 = vmatprep.subr.mxu0 0.0
    %3983 = vmatpush1.msra.mxu0 0.0
    %3984 = vmatprep.subr.mxu0 0.0
    %3985 = vmatpush1.msra.mxu0 0.0
    %3986 = vmatprep.subr.mxu0 0.0
    %3987 = vmatpush1.msra.mxu0 0.0
    %3988 = vmatprep.subr.mxu0 0.0
    %3989 = vmatpush1.msra.mxu0 0.0
    %3990 = vmatprep.subr.mxu0 0.0
    %3991 = vmatpush1.msra.mxu0 0.0
    %3992 = vmatprep.subr.mxu0 0.0
    %3993 = vmatpush1.msra.mxu0 0.0
    %3994 = vmatprep.subr.mxu0 0.0
    %3995 = vmatpush1.msra.mxu0 0.0
    %3996 = vmatprep.subr.mxu0 0.0
    %3997 = vmatpush1.msra.mxu0 0.0
    %3998 = vmatprep.subr.mxu0 0.0
    %3999 = vmatpush1.msra.mxu0 0.0
    %4000 = vmatprep.subr.mxu0 0.0
    %4001 = vmatpush1.msra.mxu0 0.0
    %4002 = vmatprep.subr.mxu0 0.0
    %4003 = vmatpush1.msra.mxu0 0.0
    %4004 = vmatprep.subr.mxu0 0.0
    %4005 = vmatpush1.msra.mxu0 0.0
    %4006 = vmatprep.subr.mxu0 0.0
    %4007 = vmatpush1.msra.mxu0 0.0
    %4008 = vmatprep.mubr.f32.mxu0 0.0
    %v4009 = vand.u32 %v3573, 4294901760
    %4010 = vmatmul.mubr.f32.gmra.mrb[0].mxu0 %v4009
    %v4011 = vpop.f32.mrb[0].mxu0
    %v4012 = vadd.f32 %v3941, %v4011
    %v4013 = vpop.f32.mrb[0].mxu0
    %4014 = vdwg.mxu0
    %v4015 = vsel %vm215, %v1929, 0
    %4017 = vmatprep.subr.mxu0 0.0
    %4018 = vmatpush1.msra.mxu0 %v2656
    %4019 = vmatprep.subr.mxu0 0.0
    %4020 = vmatpush1.msra.mxu0 %v2657
    %4021 = vmatprep.subr.mxu0 0.0
    %4022 = vmatpush1.msra.mxu0 0.0
    %4023 = vmatprep.subr.mxu0 0.0
    %4024 = vmatpush1.msra.mxu0 0.0
    %4025 = vmatprep.subr.mxu0 0.0
    %4026 = vmatpush1.msra.mxu0 0.0
    %4027 = vmatprep.subr.mxu0 0.0
    %4028 = vmatpush1.msra.mxu0 0.0
    %4029 = vmatprep.subr.mxu0 0.0
    %4030 = vmatpush1.msra.mxu0 0.0
    %4031 = vmatprep.subr.mxu0 0.0
    %4032 = vmatpush1.msra.mxu0 0.0
    %4033 = vmatprep.subr.mxu0 0.0
    %4034 = vmatpush1.msra.mxu0 0.0
    %4035 = vmatprep.subr.mxu0 0.0
    %4036 = vmatpush1.msra.mxu0 0.0
    %4037 = vmatprep.subr.mxu0 0.0
    %4038 = vmatpush1.msra.mxu0 0.0
    %4039 = vmatprep.subr.mxu0 0.0
    %4040 = vmatpush1.msra.mxu0 0.0
    %4041 = vmatprep.subr.mxu0 0.0
    %4042 = vmatpush1.msra.mxu0 0.0
    %4043 = vmatprep.subr.mxu0 0.0
    %4044 = vmatpush1.msra.mxu0 0.0
    %4045 = vmatprep.subr.mxu0 0.0
    %4046 = vmatpush1.msra.mxu0 0.0
    %4047 = vmatprep.subr.mxu0 0.0
    %4048 = vmatpush1.msra.mxu0 0.0
    %4049 = vmatprep.subr.mxu0 0.0
    %4050 = vmatpush1.msra.mxu0 0.0
    %4051 = vmatprep.subr.mxu0 0.0
    %4052 = vmatpush1.msra.mxu0 0.0
    %4053 = vmatprep.subr.mxu0 0.0
    %4054 = vmatpush1.msra.mxu0 0.0
    %4055 = vmatprep.subr.mxu0 0.0
    %4056 = vmatpush1.msra.mxu0 0.0
    %4057 = vmatprep.subr.mxu0 0.0
    %4058 = vmatpush1.msra.mxu0 0.0
    %4059 = vmatprep.subr.mxu0 0.0
    %4060 = vmatpush1.msra.mxu0 0.0
    %4061 = vmatprep.subr.mxu0 0.0
    %4062 = vmatpush1.msra.mxu0 0.0
    %4063 = vmatprep.subr.mxu0 0.0
    %4064 = vmatpush1.msra.mxu0 0.0
    %4065 = vmatprep.subr.mxu0 0.0
    %4066 = vmatpush1.msra.mxu0 0.0
    %4067 = vmatprep.subr.mxu0 0.0
    %4068 = vmatpush1.msra.mxu0 0.0
    %4069 = vmatprep.subr.mxu0 0.0
    %4070 = vmatpush1.msra.mxu0 0.0
    %4071 = vmatprep.subr.mxu0 0.0
    %4072 = vmatpush1.msra.mxu0 0.0
    %4073 = vmatprep.subr.mxu0 0.0
    %4074 = vmatpush1.msra.mxu0 0.0
    %4075 = vmatprep.subr.mxu0 0.0
    %4076 = vmatpush1.msra.mxu0 0.0
    %4077 = vmatprep.subr.mxu0 0.0
    %4078 = vmatpush1.msra.mxu0 0.0
    %4079 = vmatprep.subr.mxu0 0.0
    %4080 = vmatpush1.msra.mxu0 0.0
    %4081 = vmatprep.mubr.f32.mxu0 0.0
    %v4082 = vand.u32 %v4015, 4294901760
    %v4083 = vsub.f32 %v4015, %v4082
    %v4084 = vand.u32 %v4083, 4294901760
    %v4085 = vsub.f32 %v4083, %v4084
    %v4086 = vand.u32 %v4085, 4294901760
    %4087 = vmatmul.mubr.f32.gmra.mrb[0].mxu0 %v4086
    %v4088 = vpop.f32.mrb[0].mxu0
    %v4089 = vadd.f32 0.0, %v4088
    %v4090 = vpop.f32.mrb[0].mxu0
    %4091 = vdwg.mxu0
    %4092 = vmatprep.subr.mxu0 0.0
    %v4093 = vsub.f32 %v2656, %v2656
    %v4094 = vand.u32 %v4093, 4294901760
    %v4095 = vsub.f32 %v4093, %v4094
    %v4096 = vand.u32 %v4095, 4294901760
    %4097 = vmatpush1.msra.mxu0 %v4096
    %4098 = vmatprep.subr.mxu0 0.0
    %v4099 = vsub.f32 %v2657, %v2657
    %v4100 = vand.u32 %v4099, 4294901760
    %v4101 = vsub.f32 %v4099, %v4100
    %v4102 = vand.u32 %v4101, 4294901760
    %4103 = vmatpush1.msra.mxu0 %v4102
    %4104 = vmatprep.subr.mxu0 0.0
    %4105 = vmatpush1.msra.mxu0 0.0
    %4106 = vmatprep.subr.mxu0 0.0
    %4107 = vmatpush1.msra.mxu0 0.0
    %4108 = vmatprep.subr.mxu0 0.0
    %4109 = vmatpush1.msra.mxu0 0.0
    %4110 = vmatprep.subr.mxu0 0.0
    %4111 = vmatpush1.msra.mxu0 0.0
    %4112 = vmatprep.subr.mxu0 0.0
    %4113 = vmatpush1.msra.mxu0 0.0
    %4114 = vmatprep.subr.mxu0 0.0
    %4115 = vmatpush1.msra.mxu0 0.0
    %4116 = vmatprep.subr.mxu0 0.0
    %4117 = vmatpush1.msra.mxu0 0.0
    %4118 = vmatprep.subr.mxu0 0.0
    %4119 = vmatpush1.msra.mxu0 0.0
    %4120 = vmatprep.subr.mxu0 0.0
    %4121 = vmatpush1.msra.mxu0 0.0
    %4122 = vmatprep.subr.mxu0 0.0
    %4123 = vmatpush1.msra.mxu0 0.0
    %4124 = vmatprep.subr.mxu0 0.0
    %4125 = vmatpush1.msra.mxu0 0.0
    %4126 = vmatprep.subr.mxu0 0.0
    %4127 = vmatpush1.msra.mxu0 0.0
    %4128 = vmatprep.subr.mxu0 0.0
    %4129 = vmatpush1.msra.mxu0 0.0
    %4130 = vmatprep.subr.mxu0 0.0
    %4131 = vmatpush1.msra.mxu0 0.0
    %4132 = vmatprep.subr.mxu0 0.0
    %4133 = vmatpush1.msra.mxu0 0.0
    %4134 = vmatprep.subr.mxu0 0.0
    %4135 = vmatpush1.msra.mxu0 0.0
    %4136 = vmatprep.subr.mxu0 0.0
    %4137 = vmatpush1.msra.mxu0 0.0
    %4138 = vmatprep.subr.mxu0 0.0
    %4139 = vmatpush1.msra.mxu0 0.0
    %4140 = vmatprep.subr.mxu0 0.0
    %4141 = vmatpush1.msra.mxu0 0.0
    %4142 = vmatprep.subr.mxu0 0.0
    %4143 = vmatpush1.msra.mxu0 0.0
    %4144 = vmatprep.subr.mxu0 0.0
    %4145 = vmatpush1.msra.mxu0 0.0
    %4146 = vmatprep.subr.mxu0 0.0
    %4147 = vmatpush1.msra.mxu0 0.0
    %4148 = vmatprep.subr.mxu0 0.0
    %4149 = vmatpush1.msra.mxu0 0.0
    %4150 = vmatprep.subr.mxu0 0.0
    %4151 = vmatpush1.msra.mxu0 0.0
    %4152 = vmatprep.subr.mxu0 0.0
    %4153 = vmatpush1.msra.mxu0 0.0
    %4154 = vmatprep.subr.mxu0 0.0
    %4155 = vmatpush1.msra.mxu0 0.0
    %4156 = vmatprep.subr.mxu0 0.0
    %4157 = vmatpush1.msra.mxu0 0.0
    %4158 = vmatprep.subr.mxu0 0.0
    %4159 = vmatpush1.msra.mxu0 0.0
    %4160 = vmatprep.subr.mxu0 0.0
    %4161 = vmatpush1.msra.mxu0 0.0
    %4162 = vmatprep.subr.mxu0 0.0
    %4163 = vmatpush1.msra.mxu0 0.0
    %4164 = vmatprep.mubr.f32.mxu0 0.0
    %v4165 = vand.u32 %v4015, 4294901760
    %4166 = vmatmul.mubr.f32.gmra.mrb[0].mxu0 %v4165
    %v4167 = vpop.f32.mrb[0].mxu0
    %v4168 = vadd.f32 %v4089, %v4167
    %v4169 = vpop.f32.mrb[0].mxu0
    %4170 = vdwg.mxu0
    %4171 = vmatprep.subr.mxu0 0.0
    %v4172 = vsub.f32 %v2656, %v2656
    %4173 = vmatpush1.msra.mxu0 %v4172
    %4174 = vmatprep.subr.mxu0 0.0
    %v4175 = vsub.f32 %v2657, %v2657
    %4176 = vmatpush1.msra.mxu0 %v4175
    %4177 = vmatprep.subr.mxu0 0.0
    %4178 = vmatpush1.msra.mxu0 0.0
    %4179 = vmatprep.subr.mxu0 0.0
    %4180 = vmatpush1.msra.mxu0 0.0
    %4181 = vmatprep.subr.mxu0 0.0
    %4182 = vmatpush1.msra.mxu0 0.0
    %4183 = vmatprep.subr.mxu0 0.0
    %4184 = vmatpush1.msra.mxu0 0.0
    %4185 = vmatprep.subr.mxu0 0.0
    %4186 = vmatpush1.msra.mxu0 0.0
    %4187 = vmatprep.subr.mxu0 0.0
    %4188 = vmatpush1.msra.mxu0 0.0
    %4189 = vmatprep.subr.mxu0 0.0
    %4190 = vmatpush1.msra.mxu0 0.0
    %4191 = vmatprep.subr.mxu0 0.0
    %4192 = vmatpush1.msra.mxu0 0.0
    %4193 = vmatprep.subr.mxu0 0.0
    %4194 = vmatpush1.msra.mxu0 0.0
    %4195 = vmatprep.subr.mxu0 0.0
    %4196 = vmatpush1.msra.mxu0 0.0
    %4197 = vmatprep.subr.mxu0 0.0
    %4198 = vmatpush1.msra.mxu0 0.0
    %4199 = vmatprep.subr.mxu0 0.0
    %4200 = vmatpush1.msra.mxu0 0.0
    %4201 = vmatprep.subr.mxu0 0.0
    %4202 = vmatpush1.msra.mxu0 0.0
    %4203 = vmatprep.subr.mxu0 0.0
    %4204 = vmatpush1.msra.mxu0 0.0
    %4205 = vmatprep.subr.mxu0 0.0
    %4206 = vmatpush1.msra.mxu0 0.0
    %4207 = vmatprep.subr.mxu0 0.0
    %4208 = vmatpush1.msra.mxu0 0.0
    %4209 = vmatprep.subr.mxu0 0.0
    %4210 = vmatpush1.msra.mxu0 0.0
    %4211 = vmatprep.subr.mxu0 0.0
    %4212 = vmatpush1.msra.mxu0 0.0
    %4213 = vmatprep.subr.mxu0 0.0
    %4214 = vmatpush1.msra.mxu0 0.0
    %4215 = vmatprep.subr.mxu0 0.0
    %4216 = vmatpush1.msra.mxu0 0.0
    %4217 = vmatprep.subr.mxu0 0.0
    %4218 = vmatpush1.msra.mxu0 0.0
    %4219 = vmatprep.subr.mxu0 0.0
    %4220 = vmatpush1.msra.mxu0 0.0
    %4221 = vmatprep.subr.mxu0 0.0
    %4222 = vmatpush1.msra.mxu0 0.0
    %4223 = vmatprep.subr.mxu0 0.0
    %4224 = vmatpush1.msra.mxu0 0.0
    %4225 = vmatprep.subr.mxu0 0.0
    %4226 = vmatpush1.msra.mxu0 0.0
    %4227 = vmatprep.subr.mxu0 0.0
    %4228 = vmatpush1.msra.mxu0 0.0
    %4229 = vmatprep.subr.mxu0 0.0
    %4230 = vmatpush1.msra.mxu0 0.0
    %4231 = vmatprep.subr.mxu0 0.0
    %4232 = vmatpush1.msra.mxu0 0.0
    %4233 = vmatprep.subr.mxu0 0.0
    %4234 = vmatpush1.msra.mxu0 0.0
    %4235 = vmatprep.subr.mxu0 0.0
    %4236 = vmatpush1.msra.mxu0 0.0
    %4237 = vmatprep.mubr.f32.mxu0 0.0
    %v4238 = vand.u32 %v4015, 4294901760
    %v4239 = vsub.f32 %v4015, %v4238
    %4240 = vmatmul.mubr.f32.gmra.mrb[0].mxu0 %v4239
    %v4241 = vpop.f32.mrb[0].mxu0
    %v4242 = vadd.f32 %v4168, %v4241
    %v4243 = vpop.f32.mrb[0].mxu0
    %4244 = vdwg.mxu0
    %4245 = vmatprep.subr.mxu0 0.0
    %4246 = vmatpush1.msra.mxu0 %v2656
    %4247 = vmatprep.subr.mxu0 0.0
    %4248 = vmatpush1.msra.mxu0 %v2657
    %4249 = vmatprep.subr.mxu0 0.0
    %4250 = vmatpush1.msra.mxu0 0.0
    %4251 = vmatprep.subr.mxu0 0.0
    %4252 = vmatpush1.msra.mxu0 0.0
    %4253 = vmatprep.subr.mxu0 0.0
    %4254 = vmatpush1.msra.mxu0 0.0
    %4255 = vmatprep.subr.mxu0 0.0
    %4256 = vmatpush1.msra.mxu0 0.0
    %4257 = vmatprep.subr.mxu0 0.0
    %4258 = vmatpush1.msra.mxu0 0.0
    %4259 = vmatprep.subr.mxu0 0.0
    %4260 = vmatpush1.msra.mxu0 0.0
    %4261 = vmatprep.subr.mxu0 0.0
    %4262 = vmatpush1.msra.mxu0 0.0
    %4263 = vmatprep.subr.mxu0 0.0
    %4264 = vmatpush1.msra.mxu0 0.0
    %4265 = vmatprep.subr.mxu0 0.0
    %4266 = vmatpush1.msra.mxu0 0.0
    %4267 = vmatprep.subr.mxu0 0.0
    %4268 = vmatpush1.msra.mxu0 0.0
    %4269 = vmatprep.subr.mxu0 0.0
    %4270 = vmatpush1.msra.mxu0 0.0
    %4271 = vmatprep.subr.mxu0 0.0
    %4272 = vmatpush1.msra.mxu0 0.0
    %4273 = vmatprep.subr.mxu0 0.0
    %4274 = vmatpush1.msra.mxu0 0.0
    %4275 = vmatprep.subr.mxu0 0.0
    %4276 = vmatpush1.msra.mxu0 0.0
    %4277 = vmatprep.subr.mxu0 0.0
    %4278 = vmatpush1.msra.mxu0 0.0
    %4279 = vmatprep.subr.mxu0 0.0
    %4280 = vmatpush1.msra.mxu0 0.0
    %4281 = vmatprep.subr.mxu0 0.0
    %4282 = vmatpush1.msra.mxu0 0.0
    %4283 = vmatprep.subr.mxu0 0.0
    %4284 = vmatpush1.msra.mxu0 0.0
    %4285 = vmatprep.subr.mxu0 0.0
    %4286 = vmatpush1.msra.mxu0 0.0
    %4287 = vmatprep.subr.mxu0 0.0
    %4288 = vmatpush1.msra.mxu0 0.0
    %4289 = vmatprep.subr.mxu0 0.0
    %4290 = vmatpush1.msra.mxu0 0.0
    %4291 = vmatprep.subr.mxu0 0.0
    %4292 = vmatpush1.msra.mxu0 0.0
    %4293 = vmatprep.subr.mxu0 0.0
    %4294 = vmatpush1.msra.mxu0 0.0
    %4295 = vmatprep.subr.mxu0 0.0
    %4296 = vmatpush1.msra.mxu0 0.0
    %4297 = vmatprep.subr.mxu0 0.0
    %4298 = vmatpush1.msra.mxu0 0.0
    %4299 = vmatprep.subr.mxu0 0.0
    %4300 = vmatpush1.msra.mxu0 0.0
    %4301 = vmatprep.subr.mxu0 0.0
    %4302 = vmatpush1.msra.mxu0 0.0
    %4303 = vmatprep.subr.mxu0 0.0
    %4304 = vmatpush1.msra.mxu0 0.0
    %4305 = vmatprep.subr.mxu0 0.0
    %4306 = vmatpush1.msra.mxu0 0.0
    %4307 = vmatprep.subr.mxu0 0.0
    %4308 = vmatpush1.msra.mxu0 0.0
    %4309 = vmatprep.mubr.f32.mxu0 0.0
    %v4310 = vand.u32 %v4015, 4294901760
    %v4311 = vsub.f32 %v4015, %v4310
    %v4312 = vand.u32 %v4311, 4294901760
    %4313 = vmatmul.mubr.f32.gmra.mrb[0].mxu0 %v4312
    %v4314 = vpop.f32.mrb[0].mxu0
    %v4315 = vadd.f32 %v4242, %v4314
    %v4316 = vpop.f32.mrb[0].mxu0
    %4317 = vdwg.mxu0
    %4318 = vmatprep.subr.mxu0 0.0
    %v4319 = vsub.f32 %v2656, %v2656
    %v4320 = vand.u32 %v4319, 4294901760
    %4321 = vmatpush1.msra.mxu0 %v4320
    %4322 = vmatprep.subr.mxu0 0.0
    %v4323 = vsub.f32 %v2657, %v2657
    %v4324 = vand.u32 %v4323, 4294901760
    %4325 = vmatpush1.msra.mxu0 %v4324
    %4326 = vmatprep.subr.mxu0 0.0
    %4327 = vmatpush1.msra.mxu0 0.0
    %4328 = vmatprep.subr.mxu0 0.0
    %4329 = vmatpush1.msra.mxu0 0.0
    %4330 = vmatprep.subr.mxu0 0.0
    %4331 = vmatpush1.msra.mxu0 0.0
    %4332 = vmatprep.subr.mxu0 0.0
    %4333 = vmatpush1.msra.mxu0 0.0
    %4334 = vmatprep.subr.mxu0 0.0
    %4335 = vmatpush1.msra.mxu0 0.0
    %4336 = vmatprep.subr.mxu0 0.0
    %4337 = vmatpush1.msra.mxu0 0.0
    %4338 = vmatprep.subr.mxu0 0.0
    %4339 = vmatpush1.msra.mxu0 0.0
    %4340 = vmatprep.subr.mxu0 0.0
    %4341 = vmatpush1.msra.mxu0 0.0
    %4342 = vmatprep.subr.mxu0 0.0
    %4343 = vmatpush1.msra.mxu0 0.0
    %4344 = vmatprep.subr.mxu0 0.0
    %4345 = vmatpush1.msra.mxu0 0.0
    %4346 = vmatprep.subr.mxu0 0.0
    %4347 = vmatpush1.msra.mxu0 0.0
    %4348 = vmatprep.subr.mxu0 0.0
    %4349 = vmatpush1.msra.mxu0 0.0
    %4350 = vmatprep.subr.mxu0 0.0
    %4351 = vmatpush1.msra.mxu0 0.0
    %4352 = vmatprep.subr.mxu0 0.0
    %4353 = vmatpush1.msra.mxu0 0.0
    %4354 = vmatprep.subr.mxu0 0.0
    %4355 = vmatpush1.msra.mxu0 0.0
    %4356 = vmatprep.subr.mxu0 0.0
    %4357 = vmatpush1.msra.mxu0 0.0
    %4358 = vmatprep.subr.mxu0 0.0
    %4359 = vmatpush1.msra.mxu0 0.0
    %4360 = vmatprep.subr.mxu0 0.0
    %4361 = vmatpush1.msra.mxu0 0.0
    %4362 = vmatprep.subr.mxu0 0.0
    %4363 = vmatpush1.msra.mxu0 0.0
    %4364 = vmatprep.subr.mxu0 0.0
    %4365 = vmatpush1.msra.mxu0 0.0
    %4366 = vmatprep.subr.mxu0 0.0
    %4367 = vmatpush1.msra.mxu0 0.0
    %4368 = vmatprep.subr.mxu0 0.0
    %4369 = vmatpush1.msra.mxu0 0.0
    %4370 = vmatprep.subr.mxu0 0.0
    %4371 = vmatpush1.msra.mxu0 0.0
    %4372 = vmatprep.subr.mxu0 0.0
    %4373 = vmatpush1.msra.mxu0 0.0
    %4374 = vmatprep.subr.mxu0 0.0
    %4375 = vmatpush1.msra.mxu0 0.0
    %4376 = vmatprep.subr.mxu0 0.0
    %4377 = vmatpush1.msra.mxu0 0.0
    %4378 = vmatprep.subr.mxu0 0.0
    %4379 = vmatpush1.msra.mxu0 0.0
    %4380 = vmatprep.subr.mxu0 0.0
    %4381 = vmatpush1.msra.mxu0 0.0
    %4382 = vmatprep.subr.mxu0 0.0
    %4383 = vmatpush1.msra.mxu0 0.0
    %4384 = vmatprep.subr.mxu0 0.0
    %4385 = vmatpush1.msra.mxu0 0.0
    %4386 = vmatprep.mubr.f32.mxu0 0.0
    %v4387 = vand.u32 %v4015, 4294901760
    %4388 = vmatmul.mubr.f32.gmra.mrb[0].mxu0 %v4387
    %v4389 = vpop.f32.mrb[0].mxu0
    %v4390 = vadd.f32 %v4315, %v4389
    %v4391 = vpop.f32.mrb[0].mxu0
    %4392 = vdwg.mxu0
    %4393 = vmatprep.subr.mxu0 0.0
    %4394 = vmatpush1.msra.mxu0 %v2656
    %4395 = vmatprep.subr.mxu0 0.0
    %4396 = vmatpush1.msra.mxu0 %v2657
    %4397 = vmatprep.subr.mxu0 0.0
    %4398 = vmatpush1.msra.mxu0 0.0
    %4399 = vmatprep.subr.mxu0 0.0
    %4400 = vmatpush1.msra.mxu0 0.0
    %4401 = vmatprep.subr.mxu0 0.0
    %4402 = vmatpush1.msra.mxu0 0.0
    %4403 = vmatprep.subr.mxu0 0.0
    %4404 = vmatpush1.msra.mxu0 0.0
    %4405 = vmatprep.subr.mxu0 0.0
    %4406 = vmatpush1.msra.mxu0 0.0
    %4407 = vmatprep.subr.mxu0 0.0
    %4408 = vmatpush1.msra.mxu0 0.0
    %4409 = vmatprep.subr.mxu0 0.0
    %4410 = vmatpush1.msra.mxu0 0.0
    %4411 = vmatprep.subr.mxu0 0.0
    %4412 = vmatpush1.msra.mxu0 0.0
    %4413 = vmatprep.subr.mxu0 0.0
    %4414 = vmatpush1.msra.mxu0 0.0
    %4415 = vmatprep.subr.mxu0 0.0
    %4416 = vmatpush1.msra.mxu0 0.0
    %4417 = vmatprep.subr.mxu0 0.0
    %4418 = vmatpush1.msra.mxu0 0.0
    %4419 = vmatprep.subr.mxu0 0.0
    %4420 = vmatpush1.msra.mxu0 0.0
    %4421 = vmatprep.subr.mxu0 0.0
    %4422 = vmatpush1.msra.mxu0 0.0
    %4423 = vmatprep.subr.mxu0 0.0
    %4424 = vmatpush1.msra.mxu0 0.0
    %4425 = vmatprep.subr.mxu0 0.0
    %4426 = vmatpush1.msra.mxu0 0.0
    %4427 = vmatprep.subr.mxu0 0.0
    %4428 = vmatpush1.msra.mxu0 0.0
    %4429 = vmatprep.subr.mxu0 0.0
    %4430 = vmatpush1.msra.mxu0 0.0
    %4431 = vmatprep.subr.mxu0 0.0
    %4432 = vmatpush1.msra.mxu0 0.0
    %4433 = vmatprep.subr.mxu0 0.0
    %4434 = vmatpush1.msra.mxu0 0.0
    %4435 = vmatprep.subr.mxu0 0.0
    %4436 = vmatpush1.msra.mxu0 0.0
    %4437 = vmatprep.subr.mxu0 0.0
    %4438 = vmatpush1.msra.mxu0 0.0
    %4439 = vmatprep.subr.mxu0 0.0
    %4440 = vmatpush1.msra.mxu0 0.0
    %4441 = vmatprep.subr.mxu0 0.0
    %4442 = vmatpush1.msra.mxu0 0.0
    %4443 = vmatprep.subr.mxu0 0.0
    %4444 = vmatpush1.msra.mxu0 0.0
    %4445 = vmatprep.subr.mxu0 0.0
    %4446 = vmatpush1.msra.mxu0 0.0
    %4447 = vmatprep.subr.mxu0 0.0
    %4448 = vmatpush1.msra.mxu0 0.0
    %4449 = vmatprep.subr.mxu0 0.0
    %4450 = vmatpush1.msra.mxu0 0.0
    %4451 = vmatprep.subr.mxu0 0.0
    %4452 = vmatpush1.msra.mxu0 0.0
    %4453 = vmatprep.subr.mxu0 0.0
    %4454 = vmatpush1.msra.mxu0 0.0
    %4455 = vmatprep.subr.mxu0 0.0
    %4456 = vmatpush1.msra.mxu0 0.0
    %4457 = vmatprep.mubr.f32.mxu0 0.0
    %v4458 = vand.u32 %v4015, 4294901760
    %4459 = vmatmul.mubr.f32.gmra.mrb[0].mxu0 %v4458
    %v4460 = vpop.f32.mrb[0].mxu0
    %v4461 = vadd.f32 %v4390, %v4460
    %v4462 = vpop.f32.mrb[0].mxu0
    %4463 = vdwg.mxu0
    %v4464 = vmul.f32 %v4012, %v4461
    %v4465 = vrot.slane %v4464, 4
    %v4466 = vadd.f32 %v4464, %v4465
    %v4467 = vrot.slane %v4466, 2
    %v4468 = vadd.f32 %v4466, %v4467
    %v4469 = vrot.slane %v4468, 1
    %v4470 = vadd.f32 %v4468, %v4469
    %v4471 = vlaneseq
    %v4472 = vshrl.u32 %v4471, 7
    %v4473 = vsub.s32 7, %v4472
    %v4474 = vrot.slane %v294, %v4473
    %v4475 = vsub.f32 %v4474, %v294
    %v4476 = vmul.f32 %v4475, 1.442695
    %v4477 = vpow.pop %v4476
    %4479 = vrot.lane.b32.xlu0 %v4477, 16
    %v4480 = vpop.permute.xlu0 %4479
    %v4482 = vmul.f32 %v135, %v4480
    %4484 = vrot.lane.b32.xlu0 %v4482, 112
    %v4485 = vpop.permute.xlu0 %4484
    %v4486 = vsel %vm325, %v4485, 0
    %4488 = vmatprep.subr.mxu0 0.0
    %4489 = vmatpush1.msra.mxu0 %v2652
    %4490 = vmatprep.subr.mxu0 0.0
    %4491 = vmatpush1.msra.mxu0 0.0
    %4492 = vmatprep.subr.mxu0 0.0
    %4493 = vmatpush1.msra.mxu0 0.0
    %4494 = vmatprep.subr.mxu0 0.0
    %4495 = vmatpush1.msra.mxu0 0.0
    %4496 = vmatprep.subr.mxu0 0.0
    %4497 = vmatpush1.msra.mxu0 0.0
    %4498 = vmatprep.subr.mxu0 0.0
    %4499 = vmatpush1.msra.mxu0 0.0
    %4500 = vmatprep.subr.mxu0 0.0
    %4501 = vmatpush1.msra.mxu0 0.0
    %4502 = vmatprep.subr.mxu0 0.0
    %4503 = vmatpush1.msra.mxu0 0.0
    %4504 = vmatprep.subr.mxu0 0.0
    %4505 = vmatpush1.msra.mxu0 0.0
    %4506 = vmatprep.subr.mxu0 0.0
    %4507 = vmatpush1.msra.mxu0 0.0
    %4508 = vmatprep.subr.mxu0 0.0
    %4509 = vmatpush1.msra.mxu0 0.0
    %4510 = vmatprep.subr.mxu0 0.0
    %4511 = vmatpush1.msra.mxu0 0.0
    %4512 = vmatprep.subr.mxu0 0.0
    %4513 = vmatpush1.msra.mxu0 0.0
    %4514 = vmatprep.subr.mxu0 0.0
    %4515 = vmatpush1.msra.mxu0 0.0
    %4516 = vmatprep.subr.mxu0 0.0
    %4517 = vmatpush1.msra.mxu0 0.0
    %4518 = vmatprep.subr.mxu0 0.0
    %4519 = vmatpush1.msra.mxu0 0.0
    %4520 = vmatprep.subr.mxu0 0.0
    %4521 = vmatpush1.msra.mxu0 0.0
    %4522 = vmatprep.subr.mxu0 0.0
    %4523 = vmatpush1.msra.mxu0 0.0
    %4524 = vmatprep.subr.mxu0 0.0
    %4525 = vmatpush1.msra.mxu0 0.0
    %4526 = vmatprep.subr.mxu0 0.0
    %4527 = vmatpush1.msra.mxu0 0.0
    %4528 = vmatprep.subr.mxu0 0.0
    %4529 = vmatpush1.msra.mxu0 0.0
    %4530 = vmatprep.subr.mxu0 0.0
    %4531 = vmatpush1.msra.mxu0 0.0
    %4532 = vmatprep.subr.mxu0 0.0
    %4533 = vmatpush1.msra.mxu0 0.0
    %4534 = vmatprep.subr.mxu0 0.0
    %4535 = vmatpush1.msra.mxu0 0.0
    %4536 = vmatprep.subr.mxu0 0.0
    %4537 = vmatpush1.msra.mxu0 0.0
    %4538 = vmatprep.subr.mxu0 0.0
    %4539 = vmatpush1.msra.mxu0 0.0
    %4540 = vmatprep.subr.mxu0 0.0
    %4541 = vmatpush1.msra.mxu0 0.0
    %4542 = vmatprep.subr.mxu0 0.0
    %4543 = vmatpush1.msra.mxu0 0.0
    %4544 = vmatprep.subr.mxu0 0.0
    %4545 = vmatpush1.msra.mxu0 0.0
    %4546 = vmatprep.subr.mxu0 0.0
    %4547 = vmatpush1.msra.mxu0 0.0
    %4548 = vmatprep.subr.mxu0 0.0
    %4549 = vmatpush1.msra.mxu0 0.0
    %4550 = vmatprep.subr.mxu0 0.0
    %4551 = vmatpush1.msra.mxu0 0.0
    %4552 = vmatprep.mubr.f32.mxu0 0.0
    %v4553 = vand.u32 %v4486, 4294901760
    %v4554 = vsub.f32 %v4486, %v4553
    %v4555 = vand.u32 %v4554, 4294901760
    %v4556 = vsub.f32 %v4554, %v4555
    %v4557 = vand.u32 %v4556, 4294901760
    %4558 = vmatmul.mubr.f32.gmra.mrb[0].mxu0 %v4557
    %v4559 = vpop.f32.mrb[0].mxu0
    %v4560 = vadd.f32 0.0, %v4559
    %v4561 = vpop.f32.mrb[0].mxu0
    %4562 = vdwg.mxu0
    %4563 = vmatprep.subr.mxu0 0.0
    %v4564 = vsub.f32 %v2652, %v2652
    %v4565 = vand.u32 %v4564, 4294901760
    %v4566 = vsub.f32 %v4564, %v4565
    %v4567 = vand.u32 %v4566, 4294901760
    %4568 = vmatpush1.msra.mxu0 %v4567
    %4569 = vmatprep.subr.mxu0 0.0
    %4570 = vmatpush1.msra.mxu0 0.0
    %4571 = vmatprep.subr.mxu0 0.0
    %4572 = vmatpush1.msra.mxu0 0.0
    %4573 = vmatprep.subr.mxu0 0.0
    %4574 = vmatpush1.msra.mxu0 0.0
    %4575 = vmatprep.subr.mxu0 0.0
    %4576 = vmatpush1.msra.mxu0 0.0
    %4577 = vmatprep.subr.mxu0 0.0
    %4578 = vmatpush1.msra.mxu0 0.0
    %4579 = vmatprep.subr.mxu0 0.0
    %4580 = vmatpush1.msra.mxu0 0.0
    %4581 = vmatprep.subr.mxu0 0.0
    %4582 = vmatpush1.msra.mxu0 0.0
    %4583 = vmatprep.subr.mxu0 0.0
    %4584 = vmatpush1.msra.mxu0 0.0
    %4585 = vmatprep.subr.mxu0 0.0
    %4586 = vmatpush1.msra.mxu0 0.0
    %4587 = vmatprep.subr.mxu0 0.0
    %4588 = vmatpush1.msra.mxu0 0.0
    %4589 = vmatprep.subr.mxu0 0.0
    %4590 = vmatpush1.msra.mxu0 0.0
    %4591 = vmatprep.subr.mxu0 0.0
    %4592 = vmatpush1.msra.mxu0 0.0
    %4593 = vmatprep.subr.mxu0 0.0
    %4594 = vmatpush1.msra.mxu0 0.0
    %4595 = vmatprep.subr.mxu0 0.0
    %4596 = vmatpush1.msra.mxu0 0.0
    %4597 = vmatprep.subr.mxu0 0.0
    %4598 = vmatpush1.msra.mxu0 0.0
    %4599 = vmatprep.subr.mxu0 0.0
    %4600 = vmatpush1.msra.mxu0 0.0
    %4601 = vmatprep.subr.mxu0 0.0
    %4602 = vmatpush1.msra.mxu0 0.0
    %4603 = vmatprep.subr.mxu0 0.0
    %4604 = vmatpush1.msra.mxu0 0.0
    %4605 = vmatprep.subr.mxu0 0.0
    %4606 = vmatpush1.msra.mxu0 0.0
    %4607 = vmatprep.subr.mxu0 0.0
    %4608 = vmatpush1.msra.mxu0 0.0
    %4609 = vmatprep.subr.mxu0 0.0
    %4610 = vmatpush1.msra.mxu0 0.0
    %4611 = vmatprep.subr.mxu0 0.0
    %4612 = vmatpush1.msra.mxu0 0.0
    %4613 = vmatprep.subr.mxu0 0.0
    %4614 = vmatpush1.msra.mxu0 0.0
    %4615 = vmatprep.subr.mxu0 0.0
    %4616 = vmatpush1.msra.mxu0 0.0
    %4617 = vmatprep.subr.mxu0 0.0
    %4618 = vmatpush1.msra.mxu0 0.0
    %4619 = vmatprep.subr.mxu0 0.0
    %4620 = vmatpush1.msra.mxu0 0.0
    %4621 = vmatprep.subr.mxu0 0.0
    %4622 = vmatpush1.msra.mxu0 0.0
    %4623 = vmatprep.subr.mxu0 0.0
    %4624 = vmatpush1.msra.mxu0 0.0
    %4625 = vmatprep.subr.mxu0 0.0
    %4626 = vmatpush1.msra.mxu0 0.0
    %4627 = vmatprep.subr.mxu0 0.0
    %4628 = vmatpush1.msra.mxu0 0.0
    %4629 = vmatprep.subr.mxu0 0.0
    %4630 = vmatpush1.msra.mxu0 0.0
    %4631 = vmatprep.mubr.f32.mxu0 0.0
    %v4632 = vand.u32 %v4486, 4294901760
    %4633 = vmatmul.mubr.f32.gmra.mrb[0].mxu0 %v4632
    %v4634 = vpop.f32.mrb[0].mxu0
    %v4635 = vadd.f32 %v4560, %v4634
    %v4636 = vpop.f32.mrb[0].mxu0
    %4637 = vdwg.mxu0
    %4638 = vmatprep.subr.mxu0 0.0
    %v4639 = vsub.f32 %v2652, %v2652
    %4640 = vmatpush1.msra.mxu0 %v4639
    %4641 = vmatprep.subr.mxu0 0.0
    %4642 = vmatpush1.msra.mxu0 0.0
    %4643 = vmatprep.subr.mxu0 0.0
    %4644 = vmatpush1.msra.mxu0 0.0
    %4645 = vmatprep.subr.mxu0 0.0
    %4646 = vmatpush1.msra.mxu0 0.0
    %4647 = vmatprep.subr.mxu0 0.0
    %4648 = vmatpush1.msra.mxu0 0.0
    %4649 = vmatprep.subr.mxu0 0.0
    %4650 = vmatpush1.msra.mxu0 0.0
    %4651 = vmatprep.subr.mxu0 0.0
    %4652 = vmatpush1.msra.mxu0 0.0
    %4653 = vmatprep.subr.mxu0 0.0
    %4654 = vmatpush1.msra.mxu0 0.0
    %4655 = vmatprep.subr.mxu0 0.0
    %4656 = vmatpush1.msra.mxu0 0.0
    %4657 = vmatprep.subr.mxu0 0.0
    %4658 = vmatpush1.msra.mxu0 0.0
    %4659 = vmatprep.subr.mxu0 0.0
    %4660 = vmatpush1.msra.mxu0 0.0
    %4661 = vmatprep.subr.mxu0 0.0
    %4662 = vmatpush1.msra.mxu0 0.0
    %4663 = vmatprep.subr.mxu0 0.0
    %4664 = vmatpush1.msra.mxu0 0.0
    %4665 = vmatprep.subr.mxu0 0.0
    %4666 = vmatpush1.msra.mxu0 0.0
    %4667 = vmatprep.subr.mxu0 0.0
    %4668 = vmatpush1.msra.mxu0 0.0
    %4669 = vmatprep.subr.mxu0 0.0
    %4670 = vmatpush1.msra.mxu0 0.0
    %4671 = vmatprep.subr.mxu0 0.0
    %4672 = vmatpush1.msra.mxu0 0.0
    %4673 = vmatprep.subr.mxu0 0.0
    %4674 = vmatpush1.msra.mxu0 0.0
    %4675 = vmatprep.subr.mxu0 0.0
    %4676 = vmatpush1.msra.mxu0 0.0
    %4677 = vmatprep.subr.mxu0 0.0
    %4678 = vmatpush1.msra.mxu0 0.0
    %4679 = vmatprep.subr.mxu0 0.0
    %4680 = vmatpush1.msra.mxu0 0.0
    %4681 = vmatprep.subr.mxu0 0.0
    %4682 = vmatpush1.msra.mxu0 0.0
    %4683 = vmatprep.subr.mxu0 0.0
    %4684 = vmatpush1.msra.mxu0 0.0
    %4685 = vmatprep.subr.mxu0 0.0
    %4686 = vmatpush1.msra.mxu0 0.0
    %4687 = vmatprep.subr.mxu0 0.0
    %4688 = vmatpush1.msra.mxu0 0.0
    %4689 = vmatprep.subr.mxu0 0.0
    %4690 = vmatpush1.msra.mxu0 0.0
    %4691 = vmatprep.subr.mxu0 0.0
    %4692 = vmatpush1.msra.mxu0 0.0
    %4693 = vmatprep.subr.mxu0 0.0
    %4694 = vmatpush1.msra.mxu0 0.0
    %4695 = vmatprep.subr.mxu0 0.0
    %4696 = vmatpush1.msra.mxu0 0.0
    %4697 = vmatprep.subr.mxu0 0.0
    %4698 = vmatpush1.msra.mxu0 0.0
    %4699 = vmatprep.subr.mxu0 0.0
    %4700 = vmatpush1.msra.mxu0 0.0
    %4701 = vmatprep.subr.mxu0 0.0
    %4702 = vmatpush1.msra.mxu0 0.0
    %4703 = vmatprep.mubr.f32.mxu0 0.0
    %v4704 = vand.u32 %v4486, 4294901760
    %v4705 = vsub.f32 %v4486, %v4704
    %4706 = vmatmul.mubr.f32.gmra.mrb[0].mxu0 %v4705
    %v4707 = vpop.f32.mrb[0].mxu0
    %v4708 = vadd.f32 %v4635, %v4707
    %v4709 = vpop.f32.mrb[0].mxu0
    %4710 = vdwg.mxu0
    %4711 = vmatprep.subr.mxu0 0.0
    %4712 = vmatpush1.msra.mxu0 %v2652
    %4713 = vmatprep.subr.mxu0 0.0
    %4714 = vmatpush1.msra.mxu0 0.0
    %4715 = vmatprep.subr.mxu0 0.0
    %4716 = vmatpush1.msra.mxu0 0.0
    %4717 = vmatprep.subr.mxu0 0.0
    %4718 = vmatpush1.msra.mxu0 0.0
    %4719 = vmatprep.subr.mxu0 0.0
    %4720 = vmatpush1.msra.mxu0 0.0
    %4721 = vmatprep.subr.mxu0 0.0
    %4722 = vmatpush1.msra.mxu0 0.0
    %4723 = vmatprep.subr.mxu0 0.0
    %4724 = vmatpush1.msra.mxu0 0.0
    %4725 = vmatprep.subr.mxu0 0.0
    %4726 = vmatpush1.msra.mxu0 0.0
    %4727 = vmatprep.subr.mxu0 0.0
    %4728 = vmatpush1.msra.mxu0 0.0
    %4729 = vmatprep.subr.mxu0 0.0
    %4730 = vmatpush1.msra.mxu0 0.0
    %4731 = vmatprep.subr.mxu0 0.0
    %4732 = vmatpush1.msra.mxu0 0.0
    %4733 = vmatprep.subr.mxu0 0.0
    %4734 = vmatpush1.msra.mxu0 0.0
    %4735 = vmatprep.subr.mxu0 0.0
    %4736 = vmatpush1.msra.mxu0 0.0
    %4737 = vmatprep.subr.mxu0 0.0
    %4738 = vmatpush1.msra.mxu0 0.0
    %4739 = vmatprep.subr.mxu0 0.0
    %4740 = vmatpush1.msra.mxu0 0.0
    %4741 = vmatprep.subr.mxu0 0.0
    %4742 = vmatpush1.msra.mxu0 0.0
    %4743 = vmatprep.subr.mxu0 0.0
    %4744 = vmatpush1.msra.mxu0 0.0
    %4745 = vmatprep.subr.mxu0 0.0
    %4746 = vmatpush1.msra.mxu0 0.0
    %4747 = vmatprep.subr.mxu0 0.0
    %4748 = vmatpush1.msra.mxu0 0.0
    %4749 = vmatprep.subr.mxu0 0.0
    %4750 = vmatpush1.msra.mxu0 0.0
    %4751 = vmatprep.subr.mxu0 0.0
    %4752 = vmatpush1.msra.mxu0 0.0
    %4753 = vmatprep.subr.mxu0 0.0
    %4754 = vmatpush1.msra.mxu0 0.0
    %4755 = vmatprep.subr.mxu0 0.0
    %4756 = vmatpush1.msra.mxu0 0.0
    %4757 = vmatprep.subr.mxu0 0.0
    %4758 = vmatpush1.msra.mxu0 0.0
    %4759 = vmatprep.subr.mxu0 0.0
    %4760 = vmatpush1.msra.mxu0 0.0
    %4761 = vmatprep.subr.mxu0 0.0
    %4762 = vmatpush1.msra.mxu0 0.0
    %4763 = vmatprep.subr.mxu0 0.0
    %4764 = vmatpush1.msra.mxu0 0.0
    %4765 = vmatprep.subr.mxu0 0.0
    %4766 = vmatpush1.msra.mxu0 0.0
    %4767 = vmatprep.subr.mxu0 0.0
    %4768 = vmatpush1.msra.mxu0 0.0
    %4769 = vmatprep.subr.mxu0 0.0
    %4770 = vmatpush1.msra.mxu0 0.0
    %4771 = vmatprep.subr.mxu0 0.0
    %4772 = vmatpush1.msra.mxu0 0.0
    %4773 = vmatprep.subr.mxu0 0.0
    %4774 = vmatpush1.msra.mxu0 0.0
    %4775 = vmatprep.mubr.f32.mxu0 0.0
    %v4776 = vand.u32 %v4486, 4294901760
    %v4777 = vsub.f32 %v4486, %v4776
    %v4778 = vand.u32 %v4777, 4294901760
    %4779 = vmatmul.mubr.f32.gmra.mrb[0].mxu0 %v4778
    %v4780 = vpop.f32.mrb[0].mxu0
    %v4781 = vadd.f32 %v4708, %v4780
    %v4782 = vpop.f32.mrb[0].mxu0
    %4783 = vdwg.mxu0
    %4784 = vmatprep.subr.mxu0 0.0
    %v4785 = vsub.f32 %v2652, %v2652
    %v4786 = vand.u32 %v4785, 4294901760
    %4787 = vmatpush1.msra.mxu0 %v4786
    %4788 = vmatprep.subr.mxu0 0.0
    %4789 = vmatpush1.msra.mxu0 0.0
    %4790 = vmatprep.subr.mxu0 0.0
    %4791 = vmatpush1.msra.mxu0 0.0
    %4792 = vmatprep.subr.mxu0 0.0
    %4793 = vmatpush1.msra.mxu0 0.0
    %4794 = vmatprep.subr.mxu0 0.0
    %4795 = vmatpush1.msra.mxu0 0.0
    %4796 = vmatprep.subr.mxu0 0.0
    %4797 = vmatpush1.msra.mxu0 0.0
    %4798 = vmatprep.subr.mxu0 0.0
    %4799 = vmatpush1.msra.mxu0 0.0
    %4800 = vmatprep.subr.mxu0 0.0
    %4801 = vmatpush1.msra.mxu0 0.0
    %4802 = vmatprep.subr.mxu0 0.0
    %4803 = vmatpush1.msra.mxu0 0.0
    %4804 = vmatprep.subr.mxu0 0.0
    %4805 = vmatpush1.msra.mxu0 0.0
    %4806 = vmatprep.subr.mxu0 0.0
    %4807 = vmatpush1.msra.mxu0 0.0
    %4808 = vmatprep.subr.mxu0 0.0
    %4809 = vmatpush1.msra.mxu0 0.0
    %4810 = vmatprep.subr.mxu0 0.0
    %4811 = vmatpush1.msra.mxu0 0.0
    %4812 = vmatprep.subr.mxu0 0.0
    %4813 = vmatpush1.msra.mxu0 0.0
    %4814 = vmatprep.subr.mxu0 0.0
    %4815 = vmatpush1.msra.mxu0 0.0
    %4816 = vmatprep.subr.mxu0 0.0
    %4817 = vmatpush1.msra.mxu0 0.0
    %4818 = vmatprep.subr.mxu0 0.0
    %4819 = vmatpush1.msra.mxu0 0.0
    %4820 = vmatprep.subr.mxu0 0.0
    %4821 = vmatpush1.msra.mxu0 0.0
    %4822 = vmatprep.subr.mxu0 0.0
    %4823 = vmatpush1.msra.mxu0 0.0
    %4824 = vmatprep.subr.mxu0 0.0
    %4825 = vmatpush1.msra.mxu0 0.0
    %4826 = vmatprep.subr.mxu0 0.0
    %4827 = vmatpush1.msra.mxu0 0.0
    %4828 = vmatprep.subr.mxu0 0.0
    %4829 = vmatpush1.msra.mxu0 0.0
    %4830 = vmatprep.subr.mxu0 0.0
    %4831 = vmatpush1.msra.mxu0 0.0
    %4832 = vmatprep.subr.mxu0 0.0
    %4833 = vmatpush1.msra.mxu0 0.0
    %4834 = vmatprep.subr.mxu0 0.0
    %4835 = vmatpush1.msra.mxu0 0.0
    %4836 = vmatprep.subr.mxu0 0.0
    %4837 = vmatpush1.msra.mxu0 0.0
    %4838 = vmatprep.subr.mxu0 0.0
    %4839 = vmatpush1.msra.mxu0 0.0
    %4840 = vmatprep.subr.mxu0 0.0
    %4841 = vmatpush1.msra.mxu0 0.0
    %4842 = vmatprep.subr.mxu0 0.0
    %4843 = vmatpush1.msra.mxu0 0.0
    %4844 = vmatprep.subr.mxu0 0.0
    %4845 = vmatpush1.msra.mxu0 0.0
    %4846 = vmatprep.subr.mxu0 0.0
    %4847 = vmatpush1.msra.mxu0 0.0
    %4848 = vmatprep.subr.mxu0 0.0
    %4849 = vmatpush1.msra.mxu0 0.0
    %4850 = vmatprep.mubr.f32.mxu0 0.0
    %v4851 = vand.u32 %v4486, 4294901760
    %4852 = vmatmul.mubr.f32.gmra.mrb[0].mxu0 %v4851
    %v4853 = vpop.f32.mrb[0].mxu0
    %v4854 = vadd.f32 %v4781, %v4853
    %v4855 = vpop.f32.mrb[0].mxu0
    %4856 = vdwg.mxu0
    %4857 = vmatprep.subr.mxu0 0.0
    %4858 = vmatpush1.msra.mxu0 %v2652
    %4859 = vmatprep.subr.mxu0 0.0
    %4860 = vmatpush1.msra.mxu0 0.0
    %4861 = vmatprep.subr.mxu0 0.0
    %4862 = vmatpush1.msra.mxu0 0.0
    %4863 = vmatprep.subr.mxu0 0.0
    %4864 = vmatpush1.msra.mxu0 0.0
    %4865 = vmatprep.subr.mxu0 0.0
    %4866 = vmatpush1.msra.mxu0 0.0
    %4867 = vmatprep.subr.mxu0 0.0
    %4868 = vmatpush1.msra.mxu0 0.0
    %4869 = vmatprep.subr.mxu0 0.0
    %4870 = vmatpush1.msra.mxu0 0.0
    %4871 = vmatprep.subr.mxu0 0.0
    %4872 = vmatpush1.msra.mxu0 0.0
    %4873 = vmatprep.subr.mxu0 0.0
    %4874 = vmatpush1.msra.mxu0 0.0
    %4875 = vmatprep.subr.mxu0 0.0
    %4876 = vmatpush1.msra.mxu0 0.0
    %4877 = vmatprep.subr.mxu0 0.0
    %4878 = vmatpush1.msra.mxu0 0.0
    %4879 = vmatprep.subr.mxu0 0.0
    %4880 = vmatpush1.msra.mxu0 0.0
    %4881 = vmatprep.subr.mxu0 0.0
    %4882 = vmatpush1.msra.mxu0 0.0
    %4883 = vmatprep.subr.mxu0 0.0
    %4884 = vmatpush1.msra.mxu0 0.0
    %4885 = vmatprep.subr.mxu0 0.0
    %4886 = vmatpush1.msra.mxu0 0.0
    %4887 = vmatprep.subr.mxu0 0.0
    %4888 = vmatpush1.msra.mxu0 0.0
    %4889 = vmatprep.subr.mxu0 0.0
    %4890 = vmatpush1.msra.mxu0 0.0
    %4891 = vmatprep.subr.mxu0 0.0
    %4892 = vmatpush1.msra.mxu0 0.0
    %4893 = vmatprep.subr.mxu0 0.0
    %4894 = vmatpush1.msra.mxu0 0.0
    %4895 = vmatprep.subr.mxu0 0.0
    %4896 = vmatpush1.msra.mxu0 0.0
    %4897 = vmatprep.subr.mxu0 0.0
    %4898 = vmatpush1.msra.mxu0 0.0
    %4899 = vmatprep.subr.mxu0 0.0
    %4900 = vmatpush1.msra.mxu0 0.0
    %4901 = vmatprep.subr.mxu0 0.0
    %4902 = vmatpush1.msra.mxu0 0.0
    %4903 = vmatprep.subr.mxu0 0.0
    %4904 = vmatpush1.msra.mxu0 0.0
    %4905 = vmatprep.subr.mxu0 0.0
    %4906 = vmatpush1.msra.mxu0 0.0
    %4907 = vmatprep.subr.mxu0 0.0
    %4908 = vmatpush1.msra.mxu0 0.0
    %4909 = vmatprep.subr.mxu0 0.0
    %4910 = vmatpush1.msra.mxu0 0.0
    %4911 = vmatprep.subr.mxu0 0.0
    %4912 = vmatpush1.msra.mxu0 0.0
    %4913 = vmatprep.subr.mxu0 0.0
    %4914 = vmatpush1.msra.mxu0 0.0
    %4915 = vmatprep.subr.mxu0 0.0
    %4916 = vmatpush1.msra.mxu0 0.0
    %4917 = vmatprep.subr.mxu0 0.0
    %4918 = vmatpush1.msra.mxu0 0.0
    %4919 = vmatprep.subr.mxu0 0.0
    %4920 = vmatpush1.msra.mxu0 0.0
    %4921 = vmatprep.mubr.f32.mxu0 0.0
    %v4922 = vand.u32 %v4486, 4294901760
    %4923 = vmatmul.mubr.f32.gmra.mrb[0].mxu0 %v4922
    %v4924 = vpop.f32.mrb[0].mxu0
    %v4925 = vadd.f32 %v4854, %v4924
    %v4926 = vpop.f32.mrb[0].mxu0
    %4927 = vdwg.mxu0
    %v4928 = vsel %vm215, %v845, 0
    %4930 = vmatprep.subr.mxu0 0.0
    %4931 = vmatpush1.msra.mxu0 %v2656
    %4932 = vmatprep.subr.mxu0 0.0
    %4933 = vmatpush1.msra.mxu0 %v2657
    %4934 = vmatprep.subr.mxu0 0.0
    %4935 = vmatpush1.msra.mxu0 0.0
    %4936 = vmatprep.subr.mxu0 0.0
    %4937 = vmatpush1.msra.mxu0 0.0
    %4938 = vmatprep.subr.mxu0 0.0
    %4939 = vmatpush1.msra.mxu0 0.0
    %4940 = vmatprep.subr.mxu0 0.0
    %4941 = vmatpush1.msra.mxu0 0.0
    %4942 = vmatprep.subr.mxu0 0.0
    %4943 = vmatpush1.msra.mxu0 0.0
    %4944 = vmatprep.subr.mxu0 0.0
    %4945 = vmatpush1.msra.mxu0 0.0
    %4946 = vmatprep.subr.mxu0 0.0
    %4947 = vmatpush1.msra.mxu0 0.0
    %4948 = vmatprep.subr.mxu0 0.0
    %4949 = vmatpush1.msra.mxu0 0.0
    %4950 = vmatprep.subr.mxu0 0.0
    %4951 = vmatpush1.msra.mxu0 0.0
    %4952 = vmatprep.subr.mxu0 0.0
    %4953 = vmatpush1.msra.mxu0 0.0
    %4954 = vmatprep.subr.mxu0 0.0
    %4955 = vmatpush1.msra.mxu0 0.0
    %4956 = vmatprep.subr.mxu0 0.0
    %4957 = vmatpush1.msra.mxu0 0.0
    %4958 = vmatprep.subr.mxu0 0.0
    %4959 = vmatpush1.msra.mxu0 0.0
    %4960 = vmatprep.subr.mxu0 0.0
    %4961 = vmatpush1.msra.mxu0 0.0
    %4962 = vmatprep.subr.mxu0 0.0
    %4963 = vmatpush1.msra.mxu0 0.0
    %4964 = vmatprep.subr.mxu0 0.0
    %4965 = vmatpush1.msra.mxu0 0.0
    %4966 = vmatprep.subr.mxu0 0.0
    %4967 = vmatpush1.msra.mxu0 0.0
    %4968 = vmatprep.subr.mxu0 0.0
    %4969 = vmatpush1.msra.mxu0 0.0
    %4970 = vmatprep.subr.mxu0 0.0
    %4971 = vmatpush1.msra.mxu0 0.0
    %4972 = vmatprep.subr.mxu0 0.0
    %4973 = vmatpush1.msra.mxu0 0.0
    %4974 = vmatprep.subr.mxu0 0.0
    %4975 = vmatpush1.msra.mxu0 0.0
    %4976 = vmatprep.subr.mxu0 0.0
    %4977 = vmatpush1.msra.mxu0 0.0
    %4978 = vmatprep.subr.mxu0 0.0
    %4979 = vmatpush1.msra.mxu0 0.0
    %4980 = vmatprep.subr.mxu0 0.0
    %4981 = vmatpush1.msra.mxu0 0.0
    %4982 = vmatprep.subr.mxu0 0.0
    %4983 = vmatpush1.msra.mxu0 0.0
    %4984 = vmatprep.subr.mxu0 0.0
    %4985 = vmatpush1.msra.mxu0 0.0
    %4986 = vmatprep.subr.mxu0 0.0
    %4987 = vmatpush1.msra.mxu0 0.0
    %4988 = vmatprep.subr.mxu0 0.0
    %4989 = vmatpush1.msra.mxu0 0.0
    %4990 = vmatprep.subr.mxu0 0.0
    %4991 = vmatpush1.msra.mxu0 0.0
    %4992 = vmatprep.subr.mxu0 0.0
    %4993 = vmatpush1.msra.mxu0 0.0
    %4994 = vmatprep.mubr.f32.mxu0 0.0
    %v4995 = vand.u32 %v4928, 4294901760
    %v4996 = vsub.f32 %v4928, %v4995
    %v4997 = vand.u32 %v4996, 4294901760
    %v4998 = vsub.f32 %v4996, %v4997
    %v4999 = vand.u32 %v4998, 4294901760
    %5000 = vmatmul.mubr.f32.gmra.mrb[0].mxu0 %v4999
    %v5001 = vpop.f32.mrb[0].mxu0
    %v5002 = vadd.f32 0.0, %v5001
    %v5003 = vpop.f32.mrb[0].mxu0
    %5004 = vdwg.mxu0
    %5005 = vmatprep.subr.mxu0 0.0
    %v5006 = vsub.f32 %v2656, %v2656
    %v5007 = vand.u32 %v5006, 4294901760
    %v5008 = vsub.f32 %v5006, %v5007
    %v5009 = vand.u32 %v5008, 4294901760
    %5010 = vmatpush1.msra.mxu0 %v5009
    %5011 = vmatprep.subr.mxu0 0.0
    %v5012 = vsub.f32 %v2657, %v2657
    %v5013 = vand.u32 %v5012, 4294901760
    %v5014 = vsub.f32 %v5012, %v5013
    %v5015 = vand.u32 %v5014, 4294901760
    %5016 = vmatpush1.msra.mxu0 %v5015
    %5017 = vmatprep.subr.mxu0 0.0
    %5018 = vmatpush1.msra.mxu0 0.0
    %5019 = vmatprep.subr.mxu0 0.0
    %5020 = vmatpush1.msra.mxu0 0.0
    %5021 = vmatprep.subr.mxu0 0.0
    %5022 = vmatpush1.msra.mxu0 0.0
    %5023 = vmatprep.subr.mxu0 0.0
    %5024 = vmatpush1.msra.mxu0 0.0
    %5025 = vmatprep.subr.mxu0 0.0
    %5026 = vmatpush1.msra.mxu0 0.0
    %5027 = vmatprep.subr.mxu0 0.0
    %5028 = vmatpush1.msra.mxu0 0.0
    %5029 = vmatprep.subr.mxu0 0.0
    %5030 = vmatpush1.msra.mxu0 0.0
    %5031 = vmatprep.subr.mxu0 0.0
    %5032 = vmatpush1.msra.mxu0 0.0
    %5033 = vmatprep.subr.mxu0 0.0
    %5034 = vmatpush1.msra.mxu0 0.0
    %5035 = vmatprep.subr.mxu0 0.0
    %5036 = vmatpush1.msra.mxu0 0.0
    %5037 = vmatprep.subr.mxu0 0.0
    %5038 = vmatpush1.msra.mxu0 0.0
    %5039 = vmatprep.subr.mxu0 0.0
    %5040 = vmatpush1.msra.mxu0 0.0
    %5041 = vmatprep.subr.mxu0 0.0
    %5042 = vmatpush1.msra.mxu0 0.0
    %5043 = vmatprep.subr.mxu0 0.0
    %5044 = vmatpush1.msra.mxu0 0.0
    %5045 = vmatprep.subr.mxu0 0.0
    %5046 = vmatpush1.msra.mxu0 0.0
    %5047 = vmatprep.subr.mxu0 0.0
    %5048 = vmatpush1.msra.mxu0 0.0
    %5049 = vmatprep.subr.mxu0 0.0
    %5050 = vmatpush1.msra.mxu0 0.0
    %5051 = vmatprep.subr.mxu0 0.0
    %5052 = vmatpush1.msra.mxu0 0.0
    %5053 = vmatprep.subr.mxu0 0.0
    %5054 = vmatpush1.msra.mxu0 0.0
    %5055 = vmatprep.subr.mxu0 0.0
    %5056 = vmatpush1.msra.mxu0 0.0
    %5057 = vmatprep.subr.mxu0 0.0
    %5058 = vmatpush1.msra.mxu0 0.0
    %5059 = vmatprep.subr.mxu0 0.0
    %5060 = vmatpush1.msra.mxu0 0.0
    %5061 = vmatprep.subr.mxu0 0.0
    %5062 = vmatpush1.msra.mxu0 0.0
    %5063 = vmatprep.subr.mxu0 0.0
    %5064 = vmatpush1.msra.mxu0 0.0
    %5065 = vmatprep.subr.mxu0 0.0
    %5066 = vmatpush1.msra.mxu0 0.0
    %5067 = vmatprep.subr.mxu0 0.0
    %5068 = vmatpush1.msra.mxu0 0.0
    %5069 = vmatprep.subr.mxu0 0.0
    %5070 = vmatpush1.msra.mxu0 0.0
    %5071 = vmatprep.subr.mxu0 0.0
    %5072 = vmatpush1.msra.mxu0 0.0
    %5073 = vmatprep.subr.mxu0 0.0
    %5074 = vmatpush1.msra.mxu0 0.0
    %5075 = vmatprep.subr.mxu0 0.0
    %5076 = vmatpush1.msra.mxu0 0.0
    %5077 = vmatprep.mubr.f32.mxu0 0.0
    %v5078 = vand.u32 %v4928, 4294901760
    %5079 = vmatmul.mubr.f32.gmra.mrb[0].mxu0 %v5078
    %v5080 = vpop.f32.mrb[0].mxu0
    %v5081 = vadd.f32 %v5002, %v5080
    %v5082 = vpop.f32.mrb[0].mxu0
    %5083 = vdwg.mxu0
    %5084 = vmatprep.subr.mxu0 0.0
    %v5085 = vsub.f32 %v2656, %v2656
    %5086 = vmatpush1.msra.mxu0 %v5085
    %5087 = vmatprep.subr.mxu0 0.0
    %v5088 = vsub.f32 %v2657, %v2657
    %5089 = vmatpush1.msra.mxu0 %v5088
    %5090 = vmatprep.subr.mxu0 0.0
    %5091 = vmatpush1.msra.mxu0 0.0
    %5092 = vmatprep.subr.mxu0 0.0
    %5093 = vmatpush1.msra.mxu0 0.0
    %5094 = vmatprep.subr.mxu0 0.0
    %5095 = vmatpush1.msra.mxu0 0.0
    %5096 = vmatprep.subr.mxu0 0.0
    %5097 = vmatpush1.msra.mxu0 0.0
    %5098 = vmatprep.subr.mxu0 0.0
    %5099 = vmatpush1.msra.mxu0 0.0
    %5100 = vmatprep.subr.mxu0 0.0
    %5101 = vmatpush1.msra.mxu0 0.0
    %5102 = vmatprep.subr.mxu0 0.0
    %5103 = vmatpush1.msra.mxu0 0.0
    %5104 = vmatprep.subr.mxu0 0.0
    %5105 = vmatpush1.msra.mxu0 0.0
    %5106 = vmatprep.subr.mxu0 0.0
    %5107 = vmatpush1.msra.mxu0 0.0
    %5108 = vmatprep.subr.mxu0 0.0
    %5109 = vmatpush1.msra.mxu0 0.0
    %5110 = vmatprep.subr.mxu0 0.0
    %5111 = vmatpush1.msra.mxu0 0.0
    %5112 = vmatprep.subr.mxu0 0.0
    %5113 = vmatpush1.msra.mxu0 0.0
    %5114 = vmatprep.subr.mxu0 0.0
    %5115 = vmatpush1.msra.mxu0 0.0
    %5116 = vmatprep.subr.mxu0 0.0
    %5117 = vmatpush1.msra.mxu0 0.0
    %5118 = vmatprep.subr.mxu0 0.0
    %5119 = vmatpush1.msra.mxu0 0.0
    %5120 = vmatprep.subr.mxu0 0.0
    %5121 = vmatpush1.msra.mxu0 0.0
    %5122 = vmatprep.subr.mxu0 0.0
    %5123 = vmatpush1.msra.mxu0 0.0
    %5124 = vmatprep.subr.mxu0 0.0
    %5125 = vmatpush1.msra.mxu0 0.0
    %5126 = vmatprep.subr.mxu0 0.0
    %5127 = vmatpush1.msra.mxu0 0.0
    %5128 = vmatprep.subr.mxu0 0.0
    %5129 = vmatpush1.msra.mxu0 0.0
    %5130 = vmatprep.subr.mxu0 0.0
    %5131 = vmatpush1.msra.mxu0 0.0
    %5132 = vmatprep.subr.mxu0 0.0
    %5133 = vmatpush1.msra.mxu0 0.0
    %5134 = vmatprep.subr.mxu0 0.0
    %5135 = vmatpush1.msra.mxu0 0.0
    %5136 = vmatprep.subr.mxu0 0.0
    %5137 = vmatpush1.msra.mxu0 0.0
    %5138 = vmatprep.subr.mxu0 0.0
    %5139 = vmatpush1.msra.mxu0 0.0
    %5140 = vmatprep.subr.mxu0 0.0
    %5141 = vmatpush1.msra.mxu0 0.0
    %5142 = vmatprep.subr.mxu0 0.0
    %5143 = vmatpush1.msra.mxu0 0.0
    %5144 = vmatprep.subr.mxu0 0.0
    %5145 = vmatpush1.msra.mxu0 0.0
    %5146 = vmatprep.subr.mxu0 0.0
    %5147 = vmatpush1.msra.mxu0 0.0
    %5148 = vmatprep.subr.mxu0 0.0
    %5149 = vmatpush1.msra.mxu0 0.0
    %5150 = vmatprep.mubr.f32.mxu0 0.0
    %v5151 = vand.u32 %v4928, 4294901760
    %v5152 = vsub.f32 %v4928, %v5151
    %5153 = vmatmul.mubr.f32.gmra.mrb[0].mxu0 %v5152
    %v5154 = vpop.f32.mrb[0].mxu0
    %v5155 = vadd.f32 %v5081, %v5154
    %v5156 = vpop.f32.mrb[0].mxu0
    %5157 = vdwg.mxu0
    %5158 = vmatprep.subr.mxu0 0.0
    %5159 = vmatpush1.msra.mxu0 %v2656
    %5160 = vmatprep.subr.mxu0 0.0
    %5161 = vmatpush1.msra.mxu0 %v2657
    %5162 = vmatprep.subr.mxu0 0.0
    %5163 = vmatpush1.msra.mxu0 0.0
    %5164 = vmatprep.subr.mxu0 0.0
    %5165 = vmatpush1.msra.mxu0 0.0
    %5166 = vmatprep.subr.mxu0 0.0
    %5167 = vmatpush1.msra.mxu0 0.0
    %5168 = vmatprep.subr.mxu0 0.0
    %5169 = vmatpush1.msra.mxu0 0.0
    %5170 = vmatprep.subr.mxu0 0.0
    %5171 = vmatpush1.msra.mxu0 0.0
    %5172 = vmatprep.subr.mxu0 0.0
    %5173 = vmatpush1.msra.mxu0 0.0
    %5174 = vmatprep.subr.mxu0 0.0
    %5175 = vmatpush1.msra.mxu0 0.0
    %5176 = vmatprep.subr.mxu0 0.0
    %5177 = vmatpush1.msra.mxu0 0.0
    %5178 = vmatprep.subr.mxu0 0.0
    %5179 = vmatpush1.msra.mxu0 0.0
    %5180 = vmatprep.subr.mxu0 0.0
    %5181 = vmatpush1.msra.mxu0 0.0
    %5182 = vmatprep.subr.mxu0 0.0
    %5183 = vmatpush1.msra.mxu0 0.0
    %5184 = vmatprep.subr.mxu0 0.0
    %5185 = vmatpush1.msra.mxu0 0.0
    %5186 = vmatprep.subr.mxu0 0.0
    %5187 = vmatpush1.msra.mxu0 0.0
    %5188 = vmatprep.subr.mxu0 0.0
    %5189 = vmatpush1.msra.mxu0 0.0
    %5190 = vmatprep.subr.mxu0 0.0
    %5191 = vmatpush1.msra.mxu0 0.0
    %5192 = vmatprep.subr.mxu0 0.0
    %5193 = vmatpush1.msra.mxu0 0.0
    %5194 = vmatprep.subr.mxu0 0.0
    %5195 = vmatpush1.msra.mxu0 0.0
    %5196 = vmatprep.subr.mxu0 0.0
    %5197 = vmatpush1.msra.mxu0 0.0
    %5198 = vmatprep.subr.mxu0 0.0
    %5199 = vmatpush1.msra.mxu0 0.0
    %5200 = vmatprep.subr.mxu0 0.0
    %5201 = vmatpush1.msra.mxu0 0.0
    %5202 = vmatprep.subr.mxu0 0.0
    %5203 = vmatpush1.msra.mxu0 0.0
    %5204 = vmatprep.subr.mxu0 0.0
    %5205 = vmatpush1.msra.mxu0 0.0
    %5206 = vmatprep.subr.mxu0 0.0
    %5207 = vmatpush1.msra.mxu0 0.0
    %5208 = vmatprep.subr.mxu0 0.0
    %5209 = vmatpush1.msra.mxu0 0.0
    %5210 = vmatprep.subr.mxu0 0.0
    %5211 = vmatpush1.msra.mxu0 0.0
    %5212 = vmatprep.subr.mxu0 0.0
    %5213 = vmatpush1.msra.mxu0 0.0
    %5214 = vmatprep.subr.mxu0 0.0
    %5215 = vmatpush1.msra.mxu0 0.0
    %5216 = vmatprep.subr.mxu0 0.0
    %5217 = vmatpush1.msra.mxu0 0.0
    %5218 = vmatprep.subr.mxu0 0.0
    %5219 = vmatpush1.msra.mxu0 0.0
    %5220 = vmatprep.subr.mxu0 0.0
    %5221 = vmatpush1.msra.mxu0 0.0
    %5222 = vmatprep.mubr.f32.mxu0 0.0
    %v5223 = vand.u32 %v4928, 4294901760
    %v5224 = vsub.f32 %v4928, %v5223
    %v5225 = vand.u32 %v5224, 4294901760
    %5226 = vmatmul.mubr.f32.gmra.mrb[0].mxu0 %v5225
    %v5227 = vpop.f32.mrb[0].mxu0
    %v5228 = vadd.f32 %v5155, %v5227
    %v5229 = vpop.f32.mrb[0].mxu0
    %5230 = vdwg.mxu0
    %5231 = vmatprep.subr.mxu0 0.0
    %v5232 = vsub.f32 %v2656, %v2656
    %v5233 = vand.u32 %v5232, 4294901760
    %5234 = vmatpush1.msra.mxu0 %v5233
    %5235 = vmatprep.subr.mxu0 0.0
    %v5236 = vsub.f32 %v2657, %v2657
    %v5237 = vand.u32 %v5236, 4294901760
    %5238 = vmatpush1.msra.mxu0 %v5237
    %5239 = vmatprep.subr.mxu0 0.0
    %5240 = vmatpush1.msra.mxu0 0.0
    %5241 = vmatprep.subr.mxu0 0.0
    %5242 = vmatpush1.msra.mxu0 0.0
    %5243 = vmatprep.subr.mxu0 0.0
    %5244 = vmatpush1.msra.mxu0 0.0
    %5245 = vmatprep.subr.mxu0 0.0
    %5246 = vmatpush1.msra.mxu0 0.0
    %5247 = vmatprep.subr.mxu0 0.0
    %5248 = vmatpush1.msra.mxu0 0.0
    %5249 = vmatprep.subr.mxu0 0.0
    %5250 = vmatpush1.msra.mxu0 0.0
    %5251 = vmatprep.subr.mxu0 0.0
    %5252 = vmatpush1.msra.mxu0 0.0
    %5253 = vmatprep.subr.mxu0 0.0
    %5254 = vmatpush1.msra.mxu0 0.0
    %5255 = vmatprep.subr.mxu0 0.0
    %5256 = vmatpush1.msra.mxu0 0.0
    %5257 = vmatprep.subr.mxu0 0.0
    %5258 = vmatpush1.msra.mxu0 0.0
    %5259 = vmatprep.subr.mxu0 0.0
    %5260 = vmatpush1.msra.mxu0 0.0
    %5261 = vmatprep.subr.mxu0 0.0
    %5262 = vmatpush1.msra.mxu0 0.0
    %5263 = vmatprep.subr.mxu0 0.0
    %5264 = vmatpush1.msra.mxu0 0.0
    %5265 = vmatprep.subr.mxu0 0.0
    %5266 = vmatpush1.msra.mxu0 0.0
    %5267 = vmatprep.subr.mxu0 0.0
    %5268 = vmatpush1.msra.mxu0 0.0
    %5269 = vmatprep.subr.mxu0 0.0
    %5270 = vmatpush1.msra.mxu0 0.0
    %5271 = vmatprep.subr.mxu0 0.0
    %5272 = vmatpush1.msra.mxu0 0.0
    %5273 = vmatprep.subr.mxu0 0.0
    %5274 = vmatpush1.msra.mxu0 0.0
    %5275 = vmatprep.subr.mxu0 0.0
    %5276 = vmatpush1.msra.mxu0 0.0
    %5277 = vmatprep.subr.mxu0 0.0
    %5278 = vmatpush1.msra.mxu0 0.0
    %5279 = vmatprep.subr.mxu0 0.0
    %5280 = vmatpush1.msra.mxu0 0.0
    %5281 = vmatprep.subr.mxu0 0.0
    %5282 = vmatpush1.msra.mxu0 0.0
    %5283 = vmatprep.subr.mxu0 0.0
    %5284 = vmatpush1.msra.mxu0 0.0
    %5285 = vmatprep.subr.mxu0 0.0
    %5286 = vmatpush1.msra.mxu0 0.0
    %5287 = vmatprep.subr.mxu0 0.0
    %5288 = vmatpush1.msra.mxu0 0.0
    %5289 = vmatprep.subr.mxu0 0.0
    %5290 = vmatpush1.msra.mxu0 0.0
    %5291 = vmatprep.subr.mxu0 0.0
    %5292 = vmatpush1.msra.mxu0 0.0
    %5293 = vmatprep.subr.mxu0 0.0
    %5294 = vmatpush1.msra.mxu0 0.0
    %5295 = vmatprep.subr.mxu0 0.0
    %5296 = vmatpush1.msra.mxu0 0.0
    %5297 = vmatprep.subr.mxu0 0.0
    %5298 = vmatpush1.msra.mxu0 0.0
    %5299 = vmatprep.mubr.f32.mxu0 0.0
    %v5300 = vand.u32 %v4928, 4294901760
    %5301 = vmatmul.mubr.f32.gmra.mrb[0].mxu0 %v5300
    %v5302 = vpop.f32.mrb[0].mxu0
    %v5303 = vadd.f32 %v5228, %v5302
    %v5304 = vpop.f32.mrb[0].mxu0
    %5305 = vdwg.mxu0
    %5306 = vmatprep.subr.mxu0 0.0
    %5307 = vmatpush1.msra.mxu0 %v2656
    %5308 = vmatprep.subr.mxu0 0.0
    %5309 = vmatpush1.msra.mxu0 %v2657
    %5310 = vmatprep.subr.mxu0 0.0
    %5311 = vmatpush1.msra.mxu0 0.0
    %5312 = vmatprep.subr.mxu0 0.0
    %5313 = vmatpush1.msra.mxu0 0.0
    %5314 = vmatprep.subr.mxu0 0.0
    %5315 = vmatpush1.msra.mxu0 0.0
    %5316 = vmatprep.subr.mxu0 0.0
    %5317 = vmatpush1.msra.mxu0 0.0
    %5318 = vmatprep.subr.mxu0 0.0
    %5319 = vmatpush1.msra.mxu0 0.0
    %5320 = vmatprep.subr.mxu0 0.0
    %5321 = vmatpush1.msra.mxu0 0.0
    %5322 = vmatprep.subr.mxu0 0.0
    %5323 = vmatpush1.msra.mxu0 0.0
    %5324 = vmatprep.subr.mxu0 0.0
    %5325 = vmatpush1.msra.mxu0 0.0
    %5326 = vmatprep.subr.mxu0 0.0
    %5327 = vmatpush1.msra.mxu0 0.0
    %5328 = vmatprep.subr.mxu0 0.0
    %5329 = vmatpush1.msra.mxu0 0.0
    %5330 = vmatprep.subr.mxu0 0.0
    %5331 = vmatpush1.msra.mxu0 0.0
    %5332 = vmatprep.subr.mxu0 0.0
    %5333 = vmatpush1.msra.mxu0 0.0
    %5334 = vmatprep.subr.mxu0 0.0
    %5335 = vmatpush1.msra.mxu0 0.0
    %5336 = vmatprep.subr.mxu0 0.0
    %5337 = vmatpush1.msra.mxu0 0.0
    %5338 = vmatprep.subr.mxu0 0.0
    %5339 = vmatpush1.msra.mxu0 0.0
    %5340 = vmatprep.subr.mxu0 0.0
    %5341 = vmatpush1.msra.mxu0 0.0
    %5342 = vmatprep.subr.mxu0 0.0
    %5343 = vmatpush1.msra.mxu0 0.0
    %5344 = vmatprep.subr.mxu0 0.0
    %5345 = vmatpush1.msra.mxu0 0.0
    %5346 = vmatprep.subr.mxu0 0.0
    %5347 = vmatpush1.msra.mxu0 0.0
    %5348 = vmatprep.subr.mxu0 0.0
    %5349 = vmatpush1.msra.mxu0 0.0
    %5350 = vmatprep.subr.mxu0 0.0
    %5351 = vmatpush1.msra.mxu0 0.0
    %5352 = vmatprep.subr.mxu0 0.0
    %5353 = vmatpush1.msra.mxu0 0.0
    %5354 = vmatprep.subr.mxu0 0.0
    %5355 = vmatpush1.msra.mxu0 0.0
    %5356 = vmatprep.subr.mxu0 0.0
    %5357 = vmatpush1.msra.mxu0 0.0
    %5358 = vmatprep.subr.mxu0 0.0
    %5359 = vmatpush1.msra.mxu0 0.0
    %5360 = vmatprep.subr.mxu0 0.0
    %5361 = vmatpush1.msra.mxu0 0.0
    %5362 = vmatprep.subr.mxu0 0.0
    %5363 = vmatpush1.msra.mxu0 0.0
    %5364 = vmatprep.subr.mxu0 0.0
    %5365 = vmatpush1.msra.mxu0 0.0
    %5366 = vmatprep.subr.mxu0 0.0
    %5367 = vmatpush1.msra.mxu0 0.0
    %5368 = vmatprep.subr.mxu0 0.0
    %5369 = vmatpush1.msra.mxu0 0.0
    %5370 = vmatprep.mubr.f32.mxu0 0.0
    %v5371 = vand.u32 %v4928, 4294901760
    %5372 = vmatmul.mubr.f32.gmra.mrb[0].mxu0 %v5371
    %v5373 = vpop.f32.mrb[0].mxu0
    %v5374 = vadd.f32 %v5303, %v5373
    %v5375 = vpop.f32.mrb[0].mxu0
    %5376 = vdwg.mxu0
    %v5377 = vmul.f32 %v4925, %v5374
    %v5378 = vrot.slane %v5377, 4
    %v5379 = vadd.f32 %v5377, %v5378
    %v5380 = vrot.slane %v5379, 2
    %v5381 = vadd.f32 %v5379, %v5380
    %v5382 = vrot.slane %v5381, 1
    %v5383 = vadd.f32 %v5381, %v5382
    %5384 = vrot.lane.b32.xlu0 %v4482, 104
    %v5385 = vpop.permute.xlu0 %5384
    %v5386 = vsel %vm325, %v5385, 0
    %5388 = vmatprep.subr.mxu0 0.0
    %5389 = vmatpush1.msra.mxu0 %v2652
    %5390 = vmatprep.subr.mxu0 0.0
    %5391 = vmatpush1.msra.mxu0 0.0
    %5392 = vmatprep.subr.mxu0 0.0
    %5393 = vmatpush1.msra.mxu0 0.0
    %5394 = vmatprep.subr.mxu0 0.0
    %5395 = vmatpush1.msra.mxu0 0.0
    %5396 = vmatprep.subr.mxu0 0.0
    %5397 = vmatpush1.msra.mxu0 0.0
    %5398 = vmatprep.subr.mxu0 0.0
    %5399 = vmatpush1.msra.mxu0 0.0
    %5400 = vmatprep.subr.mxu0 0.0
    %5401 = vmatpush1.msra.mxu0 0.0
    %5402 = vmatprep.subr.mxu0 0.0
    %5403 = vmatpush1.msra.mxu0 0.0
    %5404 = vmatprep.subr.mxu0 0.0
    %5405 = vmatpush1.msra.mxu0 0.0
    %5406 = vmatprep.subr.mxu0 0.0
    %5407 = vmatpush1.msra.mxu0 0.0
    %5408 = vmatprep.subr.mxu0 0.0
    %5409 = vmatpush1.msra.mxu0 0.0
    %5410 = vmatprep.subr.mxu0 0.0
    %5411 = vmatpush1.msra.mxu0 0.0
    %5412 = vmatprep.subr.mxu0 0.0
    %5413 = vmatpush1.msra.mxu0 0.0
    %5414 = vmatprep.subr.mxu0 0.0
    %5415 = vmatpush1.msra.mxu0 0.0
    %5416 = vmatprep.subr.mxu0 0.0
    %5417 = vmatpush1.msra.mxu0 0.0
    %5418 = vmatprep.subr.mxu0 0.0
    %5419 = vmatpush1.msra.mxu0 0.0
    %5420 = vmatprep.subr.mxu0 0.0
    %5421 = vmatpush1.msra.mxu0 0.0
    %5422 = vmatprep.subr.mxu0 0.0
    %5423 = vmatpush1.msra.mxu0 0.0
    %5424 = vmatprep.subr.mxu0 0.0
    %5425 = vmatpush1.msra.mxu0 0.0
    %5426 = vmatprep.subr.mxu0 0.0
    %5427 = vmatpush1.msra.mxu0 0.0
    %5428 = vmatprep.subr.mxu0 0.0
    %5429 = vmatpush1.msra.mxu0 0.0
    %5430 = vmatprep.subr.mxu0 0.0
    %5431 = vmatpush1.msra.mxu0 0.0
    %5432 = vmatprep.subr.mxu0 0.0
    %5433 = vmatpush1.msra.mxu0 0.0
    %5434 = vmatprep.subr.mxu0 0.0
    %5435 = vmatpush1.msra.mxu0 0.0
    %5436 = vmatprep.subr.mxu0 0.0
    %5437 = vmatpush1.msra.mxu0 0.0
    %5438 = vmatprep.subr.mxu0 0.0
    %5439 = vmatpush1.msra.mxu0 0.0
    %5440 = vmatprep.subr.mxu0 0.0
    %5441 = vmatpush1.msra.mxu0 0.0
    %5442 = vmatprep.subr.mxu0 0.0
    %5443 = vmatpush1.msra.mxu0 0.0
    %5444 = vmatprep.subr.mxu0 0.0
    %5445 = vmatpush1.msra.mxu0 0.0
    %5446 = vmatprep.subr.mxu0 0.0
    %5447 = vmatpush1.msra.mxu0 0.0
    %5448 = vmatprep.subr.mxu0 0.0
    %5449 = vmatpush1.msra.mxu0 0.0
    %5450 = vmatprep.subr.mxu0 0.0
    %5451 = vmatpush1.msra.mxu0 0.0
    %5452 = vmatprep.mubr.f32.mxu0 0.0
    %v5453 = vand.u32 %v5386, 4294901760
    %v5454 = vsub.f32 %v5386, %v5453
    %v5455 = vand.u32 %v5454, 4294901760
    %v5456 = vsub.f32 %v5454, %v5455
    %v5457 = vand.u32 %v5456, 4294901760
    %5458 = vmatmul.mubr.f32.gmra.mrb[0].mxu0 %v5457
    %v5459 = vpop.f32.mrb[0].mxu0
    %v5460 = vadd.f32 0.0, %v5459
    %v5461 = vpop.f32.mrb[0].mxu0
    %5462 = vdwg.mxu0
    %5463 = vmatprep.subr.mxu0 0.0
    %v5464 = vsub.f32 %v2652, %v2652
    %v5465 = vand.u32 %v5464, 4294901760
    %v5466 = vsub.f32 %v5464, %v5465
    %v5467 = vand.u32 %v5466, 4294901760
    %5468 = vmatpush1.msra.mxu0 %v5467
    %5469 = vmatprep.subr.mxu0 0.0
    %5470 = vmatpush1.msra.mxu0 0.0
    %5471 = vmatprep.subr.mxu0 0.0
    %5472 = vmatpush1.msra.mxu0 0.0
    %5473 = vmatprep.subr.mxu0 0.0
    %5474 = vmatpush1.msra.mxu0 0.0
    %5475 = vmatprep.subr.mxu0 0.0
    %5476 = vmatpush1.msra.mxu0 0.0
    %5477 = vmatprep.subr.mxu0 0.0
    %5478 = vmatpush1.msra.mxu0 0.0
    %5479 = vmatprep.subr.mxu0 0.0
    %5480 = vmatpush1.msra.mxu0 0.0
    %5481 = vmatprep.subr.mxu0 0.0
    %5482 = vmatpush1.msra.mxu0 0.0
    %5483 = vmatprep.subr.mxu0 0.0
    %5484 = vmatpush1.msra.mxu0 0.0
    %5485 = vmatprep.subr.mxu0 0.0
    %5486 = vmatpush1.msra.mxu0 0.0
    %5487 = vmatprep.subr.mxu0 0.0
    %5488 = vmatpush1.msra.mxu0 0.0
    %5489 = vmatprep.subr.mxu0 0.0
    %5490 = vmatpush1.msra.mxu0 0.0
    %5491 = vmatprep.subr.mxu0 0.0
    %5492 = vmatpush1.msra.mxu0 0.0
    %5493 = vmatprep.subr.mxu0 0.0
    %5494 = vmatpush1.msra.mxu0 0.0
    %5495 = vmatprep.subr.mxu0 0.0
    %5496 = vmatpush1.msra.mxu0 0.0
    %5497 = vmatprep.subr.mxu0 0.0
    %5498 = vmatpush1.msra.mxu0 0.0
    %5499 = vmatprep.subr.mxu0 0.0
    %5500 = vmatpush1.msra.mxu0 0.0
    %5501 = vmatprep.subr.mxu0 0.0
    %5502 = vmatpush1.msra.mxu0 0.0
    %5503 = vmatprep.subr.mxu0 0.0
    %5504 = vmatpush1.msra.mxu0 0.0
    %5505 = vmatprep.subr.mxu0 0.0
    %5506 = vmatpush1.msra.mxu0 0.0
    %5507 = vmatprep.subr.mxu0 0.0
    %5508 = vmatpush1.msra.mxu0 0.0
    %5509 = vmatprep.subr.mxu0 0.0
    %5510 = vmatpush1.msra.mxu0 0.0
    %5511 = vmatprep.subr.mxu0 0.0
    %5512 = vmatpush1.msra.mxu0 0.0
    %5513 = vmatprep.subr.mxu0 0.0
    %5514 = vmatpush1.msra.mxu0 0.0
    %5515 = vmatprep.subr.mxu0 0.0
    %5516 = vmatpush1.msra.mxu0 0.0
    %5517 = vmatprep.subr.mxu0 0.0
    %5518 = vmatpush1.msra.mxu0 0.0
    %5519 = vmatprep.subr.mxu0 0.0
    %5520 = vmatpush1.msra.mxu0 0.0
    %5521 = vmatprep.subr.mxu0 0.0
    %5522 = vmatpush1.msra.mxu0 0.0
    %5523 = vmatprep.subr.mxu0 0.0
    %5524 = vmatpush1.msra.mxu0 0.0
    %5525 = vmatprep.subr.mxu0 0.0
    %5526 = vmatpush1.msra.mxu0 0.0
    %5527 = vmatprep.subr.mxu0 0.0
    %5528 = vmatpush1.msra.mxu0 0.0
    %5529 = vmatprep.subr.mxu0 0.0
    %5530 = vmatpush1.msra.mxu0 0.0
    %5531 = vmatprep.mubr.f32.mxu0 0.0
    %v5532 = vand.u32 %v5386, 4294901760
    %5533 = vmatmul.mubr.f32.gmra.mrb[0].mxu0 %v5532
    %v5534 = vpop.f32.mrb[0].mxu0
    %v5535 = vadd.f32 %v5460, %v5534
    %v5536 = vpop.f32.mrb[0].mxu0
    %5537 = vdwg.mxu0
    %5538 = vmatprep.subr.mxu0 0.0
    %v5539 = vsub.f32 %v2652, %v2652
    %5540 = vmatpush1.msra.mxu0 %v5539
    %5541 = vmatprep.subr.mxu0 0.0
    %5542 = vmatpush1.msra.mxu0 0.0
    %5543 = vmatprep.subr.mxu0 0.0
    %5544 = vmatpush1.msra.mxu0 0.0
    %5545 = vmatprep.subr.mxu0 0.0
    %5546 = vmatpush1.msra.mxu0 0.0
    %5547 = vmatprep.subr.mxu0 0.0
    %5548 = vmatpush1.msra.mxu0 0.0
    %5549 = vmatprep.subr.mxu0 0.0
    %5550 = vmatpush1.msra.mxu0 0.0
    %5551 = vmatprep.subr.mxu0 0.0
    %5552 = vmatpush1.msra.mxu0 0.0
    %5553 = vmatprep.subr.mxu0 0.0
    %5554 = vmatpush1.msra.mxu0 0.0
    %5555 = vmatprep.subr.mxu0 0.0
    %5556 = vmatpush1.msra.mxu0 0.0
    %5557 = vmatprep.subr.mxu0 0.0
    %5558 = vmatpush1.msra.mxu0 0.0
    %5559 = vmatprep.subr.mxu0 0.0
    %5560 = vmatpush1.msra.mxu0 0.0
    %5561 = vmatprep.subr.mxu0 0.0
    %5562 = vmatpush1.msra.mxu0 0.0
    %5563 = vmatprep.subr.mxu0 0.0
    %5564 = vmatpush1.msra.mxu0 0.0
    %5565 = vmatprep.subr.mxu0 0.0
    %5566 = vmatpush1.msra.mxu0 0.0
    %5567 = vmatprep.subr.mxu0 0.0
    %5568 = vmatpush1.msra.mxu0 0.0
    %5569 = vmatprep.subr.mxu0 0.0
    %5570 = vmatpush1.msra.mxu0 0.0
    %5571 = vmatprep.subr.mxu0 0.0
    %5572 = vmatpush1.msra.mxu0 0.0
    %5573 = vmatprep.subr.mxu0 0.0
    %5574 = vmatpush1.msra.mxu0 0.0
    %5575 = vmatprep.subr.mxu0 0.0
    %5576 = vmatpush1.msra.mxu0 0.0
    %5577 = vmatprep.subr.mxu0 0.0
    %5578 = vmatpush1.msra.mxu0 0.0
    %5579 = vmatprep.subr.mxu0 0.0
    %5580 = vmatpush1.msra.mxu0 0.0
    %5581 = vmatprep.subr.mxu0 0.0
    %5582 = vmatpush1.msra.mxu0 0.0
    %5583 = vmatprep.subr.mxu0 0.0
    %5584 = vmatpush1.msra.mxu0 0.0
    %5585 = vmatprep.subr.mxu0 0.0
    %5586 = vmatpush1.msra.mxu0 0.0
    %5587 = vmatprep.subr.mxu0 0.0
    %5588 = vmatpush1.msra.mxu0 0.0
    %5589 = vmatprep.subr.mxu0 0.0
    %5590 = vmatpush1.msra.mxu0 0.0
    %5591 = vmatprep.subr.mxu0 0.0
    %5592 = vmatpush1.msra.mxu0 0.0
    %5593 = vmatprep.subr.mxu0 0.0
    %5594 = vmatpush1.msra.mxu0 0.0
    %5595 = vmatprep.subr.mxu0 0.0
    %5596 = vmatpush1.msra.mxu0 0.0
    %5597 = vmatprep.subr.mxu0 0.0
    %5598 = vmatpush1.msra.mxu0 0.0
    %5599 = vmatprep.subr.mxu0 0.0
    %5600 = vmatpush1.msra.mxu0 0.0
    %5601 = vmatprep.subr.mxu0 0.0
    %5602 = vmatpush1.msra.mxu0 0.0
    %5603 = vmatprep.mubr.f32.mxu0 0.0
    %v5604 = vand.u32 %v5386, 4294901760
    %v5605 = vsub.f32 %v5386, %v5604
    %5606 = vmatmul.mubr.f32.gmra.mrb[0].mxu0 %v5605
    %v5607 = vpop.f32.mrb[0].mxu0
    %v5608 = vadd.f32 %v5535, %v5607
    %v5609 = vpop.f32.mrb[0].mxu0
    %5610 = vdwg.mxu0
    %5611 = vmatprep.subr.mxu0 0.0
    %5612 = vmatpush1.msra.mxu0 %v2652
    %5613 = vmatprep.subr.mxu0 0.0
    %5614 = vmatpush1.msra.mxu0 0.0
    %5615 = vmatprep.subr.mxu0 0.0
    %5616 = vmatpush1.msra.mxu0 0.0
    %5617 = vmatprep.subr.mxu0 0.0
    %5618 = vmatpush1.msra.mxu0 0.0
    %5619 = vmatprep.subr.mxu0 0.0
    %5620 = vmatpush1.msra.mxu0 0.0
    %5621 = vmatprep.subr.mxu0 0.0
    %5622 = vmatpush1.msra.mxu0 0.0
    %5623 = vmatprep.subr.mxu0 0.0
    %5624 = vmatpush1.msra.mxu0 0.0
    %5625 = vmatprep.subr.mxu0 0.0
    %5626 = vmatpush1.msra.mxu0 0.0
    %5627 = vmatprep.subr.mxu0 0.0
    %5628 = vmatpush1.msra.mxu0 0.0
    %5629 = vmatprep.subr.mxu0 0.0
    %5630 = vmatpush1.msra.mxu0 0.0
    %5631 = vmatprep.subr.mxu0 0.0
    %5632 = vmatpush1.msra.mxu0 0.0
    %5633 = vmatprep.subr.mxu0 0.0
    %5634 = vmatpush1.msra.mxu0 0.0
    %5635 = vmatprep.subr.mxu0 0.0
    %5636 = vmatpush1.msra.mxu0 0.0
    %5637 = vmatprep.subr.mxu0 0.0
    %5638 = vmatpush1.msra.mxu0 0.0
    %5639 = vmatprep.subr.mxu0 0.0
    %5640 = vmatpush1.msra.mxu0 0.0
    %5641 = vmatprep.subr.mxu0 0.0
    %5642 = vmatpush1.msra.mxu0 0.0
    %5643 = vmatprep.subr.mxu0 0.0
    %5644 = vmatpush1.msra.mxu0 0.0
    %5645 = vmatprep.subr.mxu0 0.0
    %5646 = vmatpush1.msra.mxu0 0.0
    %5647 = vmatprep.subr.mxu0 0.0
    %5648 = vmatpush1.msra.mxu0 0.0
    %5649 = vmatprep.subr.mxu0 0.0
    %5650 = vmatpush1.msra.mxu0 0.0
    %5651 = vmatprep.subr.mxu0 0.0
    %5652 = vmatpush1.msra.mxu0 0.0
    %5653 = vmatprep.subr.mxu0 0.0
    %5654 = vmatpush1.msra.mxu0 0.0
    %5655 = vmatprep.subr.mxu0 0.0
    %5656 = vmatpush1.msra.mxu0 0.0
    %5657 = vmatprep.subr.mxu0 0.0
    %5658 = vmatpush1.msra.mxu0 0.0
    %5659 = vmatprep.subr.mxu0 0.0
    %5660 = vmatpush1.msra.mxu0 0.0
    %5661 = vmatprep.subr.mxu0 0.0
    %5662 = vmatpush1.msra.mxu0 0.0
    %5663 = vmatprep.subr.mxu0 0.0
    %5664 = vmatpush1.msra.mxu0 0.0
    %5665 = vmatprep.subr.mxu0 0.0
    %5666 = vmatpush1.msra.mxu0 0.0
    %5667 = vmatprep.subr.mxu0 0.0
    %5668 = vmatpush1.msra.mxu0 0.0
    %5669 = vmatprep.subr.mxu0 0.0
    %5670 = vmatpush1.msra.mxu0 0.0
    %5671 = vmatprep.subr.mxu0 0.0
    %5672 = vmatpush1.msra.mxu0 0.0
    %5673 = vmatprep.subr.mxu0 0.0
    %5674 = vmatpush1.msra.mxu0 0.0
    %5675 = vmatprep.mubr.f32.mxu0 0.0
    %v5676 = vand.u32 %v5386, 4294901760
    %v5677 = vsub.f32 %v5386, %v5676
    %v5678 = vand.u32 %v5677, 4294901760
    %5679 = vmatmul.mubr.f32.gmra.mrb[0].mxu0 %v5678
    %v5680 = vpop.f32.mrb[0].mxu0
    %v5681 = vadd.f32 %v5608, %v5680
    %v5682 = vpop.f32.mrb[0].mxu0
    %5683 = vdwg.mxu0
    %5684 = vmatprep.subr.mxu0 0.0
    %v5685 = vsub.f32 %v2652, %v2652
    %v5686 = vand.u32 %v5685, 4294901760
    %5687 = vmatpush1.msra.mxu0 %v5686
    %5688 = vmatprep.subr.mxu0 0.0
    %5689 = vmatpush1.msra.mxu0 0.0
    %5690 = vmatprep.subr.mxu0 0.0
    %5691 = vmatpush1.msra.mxu0 0.0
    %5692 = vmatprep.subr.mxu0 0.0
    %5693 = vmatpush1.msra.mxu0 0.0
    %5694 = vmatprep.subr.mxu0 0.0
    %5695 = vmatpush1.msra.mxu0 0.0
    %5696 = vmatprep.subr.mxu0 0.0
    %5697 = vmatpush1.msra.mxu0 0.0
    %5698 = vmatprep.subr.mxu0 0.0
    %5699 = vmatpush1.msra.mxu0 0.0
    %5700 = vmatprep.subr.mxu0 0.0
    %5701 = vmatpush1.msra.mxu0 0.0
    %5702 = vmatprep.subr.mxu0 0.0
    %5703 = vmatpush1.msra.mxu0 0.0
    %5704 = vmatprep.subr.mxu0 0.0
    %5705 = vmatpush1.msra.mxu0 0.0
    %5706 = vmatprep.subr.mxu0 0.0
    %5707 = vmatpush1.msra.mxu0 0.0
    %5708 = vmatprep.subr.mxu0 0.0
    %5709 = vmatpush1.msra.mxu0 0.0
    %5710 = vmatprep.subr.mxu0 0.0
    %5711 = vmatpush1.msra.mxu0 0.0
    %5712 = vmatprep.subr.mxu0 0.0
    %5713 = vmatpush1.msra.mxu0 0.0
    %5714 = vmatprep.subr.mxu0 0.0
    %5715 = vmatpush1.msra.mxu0 0.0
    %5716 = vmatprep.subr.mxu0 0.0
    %5717 = vmatpush1.msra.mxu0 0.0
    %5718 = vmatprep.subr.mxu0 0.0
    %5719 = vmatpush1.msra.mxu0 0.0
    %5720 = vmatprep.subr.mxu0 0.0
    %5721 = vmatpush1.msra.mxu0 0.0
    %5722 = vmatprep.subr.mxu0 0.0
    %5723 = vmatpush1.msra.mxu0 0.0
    %5724 = vmatprep.subr.mxu0 0.0
    %5725 = vmatpush1.msra.mxu0 0.0
    %5726 = vmatprep.subr.mxu0 0.0
    %5727 = vmatpush1.msra.mxu0 0.0
    %5728 = vmatprep.subr.mxu0 0.0
    %5729 = vmatpush1.msra.mxu0 0.0
    %5730 = vmatprep.subr.mxu0 0.0
    %5731 = vmatpush1.msra.mxu0 0.0
    %5732 = vmatprep.subr.mxu0 0.0
    %5733 = vmatpush1.msra.mxu0 0.0
    %5734 = vmatprep.subr.mxu0 0.0
    %5735 = vmatpush1.msra.mxu0 0.0
    %5736 = vmatprep.subr.mxu0 0.0
    %5737 = vmatpush1.msra.mxu0 0.0
    %5738 = vmatprep.subr.mxu0 0.0
    %5739 = vmatpush1.msra.mxu0 0.0
    %5740 = vmatprep.subr.mxu0 0.0
    %5741 = vmatpush1.msra.mxu0 0.0
    %5742 = vmatprep.subr.mxu0 0.0
    %5743 = vmatpush1.msra.mxu0 0.0
    %5744 = vmatprep.subr.mxu0 0.0
    %5745 = vmatpush1.msra.mxu0 0.0
    %5746 = vmatprep.subr.mxu0 0.0
    %5747 = vmatpush1.msra.mxu0 0.0
    %5748 = vmatprep.subr.mxu0 0.0
    %5749 = vmatpush1.msra.mxu0 0.0
    %5750 = vmatprep.mubr.f32.mxu0 0.0
    %v5751 = vand.u32 %v5386, 4294901760
    %5752 = vmatmul.mubr.f32.gmra.mrb[0].mxu0 %v5751
    %v5753 = vpop.f32.mrb[0].mxu0
    %v5754 = vadd.f32 %v5681, %v5753
    %v5755 = vpop.f32.mrb[0].mxu0
    %5756 = vdwg.mxu0
    %5757 = vmatprep.subr.mxu0 0.0
    %5758 = vmatpush1.msra.mxu0 %v2652
    %5759 = vmatprep.subr.mxu0 0.0
    %5760 = vmatpush1.msra.mxu0 0.0
    %5761 = vmatprep.subr.mxu0 0.0
    %5762 = vmatpush1.msra.mxu0 0.0
    %5763 = vmatprep.subr.mxu0 0.0
    %5764 = vmatpush1.msra.mxu0 0.0
    %5765 = vmatprep.subr.mxu0 0.0
    %5766 = vmatpush1.msra.mxu0 0.0
    %5767 = vmatprep.subr.mxu0 0.0
    %5768 = vmatpush1.msra.mxu0 0.0
    %5769 = vmatprep.subr.mxu0 0.0
    %5770 = vmatpush1.msra.mxu0 0.0
    %5771 = vmatprep.subr.mxu0 0.0
    %5772 = vmatpush1.msra.mxu0 0.0
    %5773 = vmatprep.subr.mxu0 0.0
    %5774 = vmatpush1.msra.mxu0 0.0
    %5775 = vmatprep.subr.mxu0 0.0
    %5776 = vmatpush1.msra.mxu0 0.0
    %5777 = vmatprep.subr.mxu0 0.0
    %5778 = vmatpush1.msra.mxu0 0.0
    %5779 = vmatprep.subr.mxu0 0.0
    %5780 = vmatpush1.msra.mxu0 0.0
    %5781 = vmatprep.subr.mxu0 0.0
    %5782 = vmatpush1.msra.mxu0 0.0
    %5783 = vmatprep.subr.mxu0 0.0
    %5784 = vmatpush1.msra.mxu0 0.0
    %5785 = vmatprep.subr.mxu0 0.0
    %5786 = vmatpush1.msra.mxu0 0.0
    %5787 = vmatprep.subr.mxu0 0.0
    %5788 = vmatpush1.msra.mxu0 0.0
    %5789 = vmatprep.subr.mxu0 0.0
    %5790 = vmatpush1.msra.mxu0 0.0
    %5791 = vmatprep.subr.mxu0 0.0
    %5792 = vmatpush1.msra.mxu0 0.0
    %5793 = vmatprep.subr.mxu0 0.0
    %5794 = vmatpush1.msra.mxu0 0.0
    %5795 = vmatprep.subr.mxu0 0.0
    %5796 = vmatpush1.msra.mxu0 0.0
    %5797 = vmatprep.subr.mxu0 0.0
    %5798 = vmatpush1.msra.mxu0 0.0
    %5799 = vmatprep.subr.mxu0 0.0
    %5800 = vmatpush1.msra.mxu0 0.0
    %5801 = vmatprep.subr.mxu0 0.0
    %5802 = vmatpush1.msra.mxu0 0.0
    %5803 = vmatprep.subr.mxu0 0.0
    %5804 = vmatpush1.msra.mxu0 0.0
    %5805 = vmatprep.subr.mxu0 0.0
    %5806 = vmatpush1.msra.mxu0 0.0
    %5807 = vmatprep.subr.mxu0 0.0
    %5808 = vmatpush1.msra.mxu0 0.0
    %5809 = vmatprep.subr.mxu0 0.0
    %5810 = vmatpush1.msra.mxu0 0.0
    %5811 = vmatprep.subr.mxu0 0.0
    %5812 = vmatpush1.msra.mxu0 0.0
    %5813 = vmatprep.subr.mxu0 0.0
    %5814 = vmatpush1.msra.mxu0 0.0
    %5815 = vmatprep.subr.mxu0 0.0
    %5816 = vmatpush1.msra.mxu0 0.0
    %5817 = vmatprep.subr.mxu0 0.0
    %5818 = vmatpush1.msra.mxu0 0.0
    %5819 = vmatprep.subr.mxu0 0.0
    %5820 = vmatpush1.msra.mxu0 0.0
    %5821 = vmatprep.mubr.f32.mxu0 0.0
    %v5822 = vand.u32 %v5386, 4294901760
    %5823 = vmatmul.mubr.f32.gmra.mrb[0].mxu0 %v5822
    %v5824 = vpop.f32.mrb[0].mxu0
    %v5825 = vadd.f32 %v5754, %v5824
    %v5826 = vpop.f32.mrb[0].mxu0
    %5827 = vdwg.mxu0
    %v5828 = vsel %vm215, %v1931, 0
    %5830 = vmatprep.subr.mxu0 0.0
    %5831 = vmatpush1.msra.mxu0 %v2656
    %5832 = vmatprep.subr.mxu0 0.0
    %5833 = vmatpush1.msra.mxu0 %v2657
    %5834 = vmatprep.subr.mxu0 0.0
    %5835 = vmatpush1.msra.mxu0 0.0
    %5836 = vmatprep.subr.mxu0 0.0
    %5837 = vmatpush1.msra.mxu0 0.0
    %5838 = vmatprep.subr.mxu0 0.0
    %5839 = vmatpush1.msra.mxu0 0.0
    %5840 = vmatprep.subr.mxu0 0.0
    %5841 = vmatpush1.msra.mxu0 0.0
    %5842 = vmatprep.subr.mxu0 0.0
    %5843 = vmatpush1.msra.mxu0 0.0
    %5844 = vmatprep.subr.mxu0 0.0
    %5845 = vmatpush1.msra.mxu0 0.0
    %5846 = vmatprep.subr.mxu0 0.0
    %5847 = vmatpush1.msra.mxu0 0.0
    %5848 = vmatprep.subr.mxu0 0.0
    %5849 = vmatpush1.msra.mxu0 0.0
    %5850 = vmatprep.subr.mxu0 0.0
    %5851 = vmatpush1.msra.mxu0 0.0
    %5852 = vmatprep.subr.mxu0 0.0
    %5853 = vmatpush1.msra.mxu0 0.0
    %5854 = vmatprep.subr.mxu0 0.0
    %5855 = vmatpush1.msra.mxu0 0.0
    %5856 = vmatprep.subr.mxu0 0.0
    %5857 = vmatpush1.msra.mxu0 0.0
    %5858 = vmatprep.subr.mxu0 0.0
    %5859 = vmatpush1.msra.mxu0 0.0
    %5860 = vmatprep.subr.mxu0 0.0
    %5861 = vmatpush1.msra.mxu0 0.0
    %5862 = vmatprep.subr.mxu0 0.0
    %5863 = vmatpush1.msra.mxu0 0.0
    %5864 = vmatprep.subr.mxu0 0.0
    %5865 = vmatpush1.msra.mxu0 0.0
    %5866 = vmatprep.subr.mxu0 0.0
    %5867 = vmatpush1.msra.mxu0 0.0
    %5868 = vmatprep.subr.mxu0 0.0
    %5869 = vmatpush1.msra.mxu0 0.0
    %5870 = vmatprep.subr.mxu0 0.0
    %5871 = vmatpush1.msra.mxu0 0.0
    %5872 = vmatprep.subr.mxu0 0.0
    %5873 = vmatpush1.msra.mxu0 0.0
    %5874 = vmatprep.subr.mxu0 0.0
    %5875 = vmatpush1.msra.mxu0 0.0
    %5876 = vmatprep.subr.mxu0 0.0
    %5877 = vmatpush1.msra.mxu0 0.0
    %5878 = vmatprep.subr.mxu0 0.0
    %5879 = vmatpush1.msra.mxu0 0.0
    %5880 = vmatprep.subr.mxu0 0.0
    %5881 = vmatpush1.msra.mxu0 0.0
    %5882 = vmatprep.subr.mxu0 0.0
    %5883 = vmatpush1.msra.mxu0 0.0
    %5884 = vmatprep.subr.mxu0 0.0
    %5885 = vmatpush1.msra.mxu0 0.0
    %5886 = vmatprep.subr.mxu0 0.0
    %5887 = vmatpush1.msra.mxu0 0.0
    %5888 = vmatprep.subr.mxu0 0.0
    %5889 = vmatpush1.msra.mxu0 0.0
    %5890 = vmatprep.subr.mxu0 0.0
    %5891 = vmatpush1.msra.mxu0 0.0
    %5892 = vmatprep.subr.mxu0 0.0
    %5893 = vmatpush1.msra.mxu0 0.0
    %5894 = vmatprep.mubr.f32.mxu0 0.0
    %v5895 = vand.u32 %v5828, 4294901760
    %v5896 = vsub.f32 %v5828, %v5895
    %v5897 = vand.u32 %v5896, 4294901760
    %v5898 = vsub.f32 %v5896, %v5897
    %v5899 = vand.u32 %v5898, 4294901760
    %5900 = vmatmul.mubr.f32.gmra.mrb[0].mxu0 %v5899
    %v5901 = vpop.f32.mrb[0].mxu0
    %v5902 = vadd.f32 0.0, %v5901
    %v5903 = vpop.f32.mrb[0].mxu0
    %5904 = vdwg.mxu0
    %5905 = vmatprep.subr.mxu0 0.0
    %v5906 = vsub.f32 %v2656, %v2656
    %v5907 = vand.u32 %v5906, 4294901760
    %v5908 = vsub.f32 %v5906, %v5907
    %v5909 = vand.u32 %v5908, 4294901760
    %5910 = vmatpush1.msra.mxu0 %v5909
    %5911 = vmatprep.subr.mxu0 0.0
    %v5912 = vsub.f32 %v2657, %v2657
    %v5913 = vand.u32 %v5912, 4294901760
    %v5914 = vsub.f32 %v5912, %v5913
    %v5915 = vand.u32 %v5914, 4294901760
    %5916 = vmatpush1.msra.mxu0 %v5915
    %5917 = vmatprep.subr.mxu0 0.0
    %5918 = vmatpush1.msra.mxu0 0.0
    %5919 = vmatprep.subr.mxu0 0.0
    %5920 = vmatpush1.msra.mxu0 0.0
    %5921 = vmatprep.subr.mxu0 0.0
    %5922 = vmatpush1.msra.mxu0 0.0
    %5923 = vmatprep.subr.mxu0 0.0
    %5924 = vmatpush1.msra.mxu0 0.0
    %5925 = vmatprep.subr.mxu0 0.0
    %5926 = vmatpush1.msra.mxu0 0.0
    %5927 = vmatprep.subr.mxu0 0.0
    %5928 = vmatpush1.msra.mxu0 0.0
    %5929 = vmatprep.subr.mxu0 0.0
    %5930 = vmatpush1.msra.mxu0 0.0
    %5931 = vmatprep.subr.mxu0 0.0
    %5932 = vmatpush1.msra.mxu0 0.0
    %5933 = vmatprep.subr.mxu0 0.0
    %5934 = vmatpush1.msra.mxu0 0.0
    %5935 = vmatprep.subr.mxu0 0.0
    %5936 = vmatpush1.msra.mxu0 0.0
    %5937 = vmatprep.subr.mxu0 0.0
    %5938 = vmatpush1.msra.mxu0 0.0
    %5939 = vmatprep.subr.mxu0 0.0
    %5940 = vmatpush1.msra.mxu0 0.0
    %5941 = vmatprep.subr.mxu0 0.0
    %5942 = vmatpush1.msra.mxu0 0.0
    %5943 = vmatprep.subr.mxu0 0.0
    %5944 = vmatpush1.msra.mxu0 0.0
    %5945 = vmatprep.subr.mxu0 0.0
    %5946 = vmatpush1.msra.mxu0 0.0
    %5947 = vmatprep.subr.mxu0 0.0
    %5948 = vmatpush1.msra.mxu0 0.0
    %5949 = vmatprep.subr.mxu0 0.0
    %5950 = vmatpush1.msra.mxu0 0.0
    %5951 = vmatprep.subr.mxu0 0.0
    %5952 = vmatpush1.msra.mxu0 0.0
    %5953 = vmatprep.subr.mxu0 0.0
    %5954 = vmatpush1.msra.mxu0 0.0
    %5955 = vmatprep.subr.mxu0 0.0
    %5956 = vmatpush1.msra.mxu0 0.0
    %5957 = vmatprep.subr.mxu0 0.0
    %5958 = vmatpush1.msra.mxu0 0.0
    %5959 = vmatprep.subr.mxu0 0.0
    %5960 = vmatpush1.msra.mxu0 0.0
    %5961 = vmatprep.subr.mxu0 0.0
    %5962 = vmatpush1.msra.mxu0 0.0
    %5963 = vmatprep.subr.mxu0 0.0
    %5964 = vmatpush1.msra.mxu0 0.0
    %5965 = vmatprep.subr.mxu0 0.0
    %5966 = vmatpush1.msra.mxu0 0.0
    %5967 = vmatprep.subr.mxu0 0.0
    %5968 = vmatpush1.msra.mxu0 0.0
    %5969 = vmatprep.subr.mxu0 0.0
    %5970 = vmatpush1.msra.mxu0 0.0
    %5971 = vmatprep.subr.mxu0 0.0
    %5972 = vmatpush1.msra.mxu0 0.0
    %5973 = vmatprep.subr.mxu0 0.0
    %5974 = vmatpush1.msra.mxu0 0.0
    %5975 = vmatprep.subr.mxu0 0.0
    %5976 = vmatpush1.msra.mxu0 0.0
    %5977 = vmatprep.mubr.f32.mxu0 0.0
    %v5978 = vand.u32 %v5828, 4294901760
    %5979 = vmatmul.mubr.f32.gmra.mrb[0].mxu0 %v5978
    %v5980 = vpop.f32.mrb[0].mxu0
    %v5981 = vadd.f32 %v5902, %v5980
    %v5982 = vpop.f32.mrb[0].mxu0
    %5983 = vdwg.mxu0
    %5984 = vmatprep.subr.mxu0 0.0
    %v5985 = vsub.f32 %v2656, %v2656
    %5986 = vmatpush1.msra.mxu0 %v5985
    %5987 = vmatprep.subr.mxu0 0.0
    %v5988 = vsub.f32 %v2657, %v2657
    %5989 = vmatpush1.msra.mxu0 %v5988
    %5990 = vmatprep.subr.mxu0 0.0
    %5991 = vmatpush1.msra.mxu0 0.0
    %5992 = vmatprep.subr.mxu0 0.0
    %5993 = vmatpush1.msra.mxu0 0.0
    %5994 = vmatprep.subr.mxu0 0.0
    %5995 = vmatpush1.msra.mxu0 0.0
    %5996 = vmatprep.subr.mxu0 0.0
    %5997 = vmatpush1.msra.mxu0 0.0
    %5998 = vmatprep.subr.mxu0 0.0
    %5999 = vmatpush1.msra.mxu0 0.0
    %6000 = vmatprep.subr.mxu0 0.0
    %6001 = vmatpush1.msra.mxu0 0.0
    %6002 = vmatprep.subr.mxu0 0.0
    %6003 = vmatpush1.msra.mxu0 0.0
    %6004 = vmatprep.subr.mxu0 0.0
    %6005 = vmatpush1.msra.mxu0 0.0
    %6006 = vmatprep.subr.mxu0 0.0
    %6007 = vmatpush1.msra.mxu0 0.0
    %6008 = vmatprep.subr.mxu0 0.0
    %6009 = vmatpush1.msra.mxu0 0.0
    %6010 = vmatprep.subr.mxu0 0.0
    %6011 = vmatpush1.msra.mxu0 0.0
    %6012 = vmatprep.subr.mxu0 0.0
    %6013 = vmatpush1.msra.mxu0 0.0
    %6014 = vmatprep.subr.mxu0 0.0
    %6015 = vmatpush1.msra.mxu0 0.0
    %6016 = vmatprep.subr.mxu0 0.0
    %6017 = vmatpush1.msra.mxu0 0.0
    %6018 = vmatprep.subr.mxu0 0.0
    %6019 = vmatpush1.msra.mxu0 0.0
    %6020 = vmatprep.subr.mxu0 0.0
    %6021 = vmatpush1.msra.mxu0 0.0
    %6022 = vmatprep.subr.mxu0 0.0
    %6023 = vmatpush1.msra.mxu0 0.0
    %6024 = vmatprep.subr.mxu0 0.0
    %6025 = vmatpush1.msra.mxu0 0.0
    %6026 = vmatprep.subr.mxu0 0.0
    %6027 = vmatpush1.msra.mxu0 0.0
    %6028 = vmatprep.subr.mxu0 0.0
    %6029 = vmatpush1.msra.mxu0 0.0
    %6030 = vmatprep.subr.mxu0 0.0
    %6031 = vmatpush1.msra.mxu0 0.0
    %6032 = vmatprep.subr.mxu0 0.0
    %6033 = vmatpush1.msra.mxu0 0.0
    %6034 = vmatprep.subr.mxu0 0.0
    %6035 = vmatpush1.msra.mxu0 0.0
    %6036 = vmatprep.subr.mxu0 0.0
    %6037 = vmatpush1.msra.mxu0 0.0
    %6038 = vmatprep.subr.mxu0 0.0
    %6039 = vmatpush1.msra.mxu0 0.0
    %6040 = vmatprep.subr.mxu0 0.0
    %6041 = vmatpush1.msra.mxu0 0.0
    %6042 = vmatprep.subr.mxu0 0.0
    %6043 = vmatpush1.msra.mxu0 0.0
    %6044 = vmatprep.subr.mxu0 0.0
    %6045 = vmatpush1.msra.mxu0 0.0
    %6046 = vmatprep.subr.mxu0 0.0
    %6047 = vmatpush1.msra.mxu0 0.0
    %6048 = vmatprep.subr.mxu0 0.0
    %6049 = vmatpush1.msra.mxu0 0.0
    %6050 = vmatprep.mubr.f32.mxu0 0.0
    %v6051 = vand.u32 %v5828, 4294901760
    %v6052 = vsub.f32 %v5828, %v6051
    %6053 = vmatmul.mubr.f32.gmra.mrb[0].mxu0 %v6052
    %v6054 = vpop.f32.mrb[0].mxu0
    %v6055 = vadd.f32 %v5981, %v6054
    %v6056 = vpop.f32.mrb[0].mxu0
    %6057 = vdwg.mxu0
    %6058 = vmatprep.subr.mxu0 0.0
    %6059 = vmatpush1.msra.mxu0 %v2656
    %6060 = vmatprep.subr.mxu0 0.0
    %6061 = vmatpush1.msra.mxu0 %v2657
    %6062 = vmatprep.subr.mxu0 0.0
    %6063 = vmatpush1.msra.mxu0 0.0
    %6064 = vmatprep.subr.mxu0 0.0
    %6065 = vmatpush1.msra.mxu0 0.0
    %6066 = vmatprep.subr.mxu0 0.0
    %6067 = vmatpush1.msra.mxu0 0.0
    %6068 = vmatprep.subr.mxu0 0.0
    %6069 = vmatpush1.msra.mxu0 0.0
    %6070 = vmatprep.subr.mxu0 0.0
    %6071 = vmatpush1.msra.mxu0 0.0
    %6072 = vmatprep.subr.mxu0 0.0
    %6073 = vmatpush1.msra.mxu0 0.0
    %6074 = vmatprep.subr.mxu0 0.0
    %6075 = vmatpush1.msra.mxu0 0.0
    %6076 = vmatprep.subr.mxu0 0.0
    %6077 = vmatpush1.msra.mxu0 0.0
    %6078 = vmatprep.subr.mxu0 0.0
    %6079 = vmatpush1.msra.mxu0 0.0
    %6080 = vmatprep.subr.mxu0 0.0
    %6081 = vmatpush1.msra.mxu0 0.0
    %6082 = vmatprep.subr.mxu0 0.0
    %6083 = vmatpush1.msra.mxu0 0.0
    %6084 = vmatprep.subr.mxu0 0.0
    %6085 = vmatpush1.msra.mxu0 0.0
    %6086 = vmatprep.subr.mxu0 0.0
    %6087 = vmatpush1.msra.mxu0 0.0
    %6088 = vmatprep.subr.mxu0 0.0
    %6089 = vmatpush1.msra.mxu0 0.0
    %6090 = vmatprep.subr.mxu0 0.0
    %6091 = vmatpush1.msra.mxu0 0.0
    %6092 = vmatprep.subr.mxu0 0.0
    %6093 = vmatpush1.msra.mxu0 0.0
    %6094 = vmatprep.subr.mxu0 0.0
    %6095 = vmatpush1.msra.mxu0 0.0
    %6096 = vmatprep.subr.mxu0 0.0
    %6097 = vmatpush1.msra.mxu0 0.0
    %6098 = vmatprep.subr.mxu0 0.0
    %6099 = vmatpush1.msra.mxu0 0.0
    %6100 = vmatprep.subr.mxu0 0.0
    %6101 = vmatpush1.msra.mxu0 0.0
    %6102 = vmatprep.subr.mxu0 0.0
    %6103 = vmatpush1.msra.mxu0 0.0
    %6104 = vmatprep.subr.mxu0 0.0
    %6105 = vmatpush1.msra.mxu0 0.0
    %6106 = vmatprep.subr.mxu0 0.0
    %6107 = vmatpush1.msra.mxu0 0.0
    %6108 = vmatprep.subr.mxu0 0.0
    %6109 = vmatpush1.msra.mxu0 0.0
    %6110 = vmatprep.subr.mxu0 0.0
    %6111 = vmatpush1.msra.mxu0 0.0
    %6112 = vmatprep.subr.mxu0 0.0
    %6113 = vmatpush1.msra.mxu0 0.0
    %6114 = vmatprep.subr.mxu0 0.0
    %6115 = vmatpush1.msra.mxu0 0.0
    %6116 = vmatprep.subr.mxu0 0.0
    %6117 = vmatpush1.msra.mxu0 0.0
    %6118 = vmatprep.subr.mxu0 0.0
    %6119 = vmatpush1.msra.mxu0 0.0
    %6120 = vmatprep.subr.mxu0 0.0
    %6121 = vmatpush1.msra.mxu0 0.0
    %6122 = vmatprep.mubr.f32.mxu0 0.0
    %v6123 = vand.u32 %v5828, 4294901760
    %v6124 = vsub.f32 %v5828, %v6123
    %v6125 = vand.u32 %v6124, 4294901760
    %6126 = vmatmul.mubr.f32.gmra.mrb[0].mxu0 %v6125
    %v6127 = vpop.f32.mrb[0].mxu0
    %v6128 = vadd.f32 %v6055, %v6127
    %v6129 = vpop.f32.mrb[0].mxu0
    %6130 = vdwg.mxu0
    %6131 = vmatprep.subr.mxu0 0.0
    %v6132 = vsub.f32 %v2656, %v2656
    %v6133 = vand.u32 %v6132, 4294901760
    %6134 = vmatpush1.msra.mxu0 %v6133
    %6135 = vmatprep.subr.mxu0 0.0
    %v6136 = vsub.f32 %v2657, %v2657
    %v6137 = vand.u32 %v6136, 4294901760
    %6138 = vmatpush1.msra.mxu0 %v6137
    %6139 = vmatprep.subr.mxu0 0.0
    %6140 = vmatpush1.msra.mxu0 0.0
    %6141 = vmatprep.subr.mxu0 0.0
    %6142 = vmatpush1.msra.mxu0 0.0
    %6143 = vmatprep.subr.mxu0 0.0
    %6144 = vmatpush1.msra.mxu0 0.0
    %6145 = vmatprep.subr.mxu0 0.0
    %6146 = vmatpush1.msra.mxu0 0.0
    %6147 = vmatprep.subr.mxu0 0.0
    %6148 = vmatpush1.msra.mxu0 0.0
    %6149 = vmatprep.subr.mxu0 0.0
    %6150 = vmatpush1.msra.mxu0 0.0
    %6151 = vmatprep.subr.mxu0 0.0
    %6152 = vmatpush1.msra.mxu0 0.0
    %6153 = vmatprep.subr.mxu0 0.0
    %6154 = vmatpush1.msra.mxu0 0.0
    %6155 = vmatprep.subr.mxu0 0.0
    %6156 = vmatpush1.msra.mxu0 0.0
    %6157 = vmatprep.subr.mxu0 0.0
    %6158 = vmatpush1.msra.mxu0 0.0
    %6159 = vmatprep.subr.mxu0 0.0
    %6160 = vmatpush1.msra.mxu0 0.0
    %6161 = vmatprep.subr.mxu0 0.0
    %6162 = vmatpush1.msra.mxu0 0.0
    %6163 = vmatprep.subr.mxu0 0.0
    %6164 = vmatpush1.msra.mxu0 0.0
    %6165 = vmatprep.subr.mxu0 0.0
    %6166 = vmatpush1.msra.mxu0 0.0
    %6167 = vmatprep.subr.mxu0 0.0
    %6168 = vmatpush1.msra.mxu0 0.0
    %6169 = vmatprep.subr.mxu0 0.0
    %6170 = vmatpush1.msra.mxu0 0.0
    %6171 = vmatprep.subr.mxu0 0.0
    %6172 = vmatpush1.msra.mxu0 0.0
    %6173 = vmatprep.subr.mxu0 0.0
    %6174 = vmatpush1.msra.mxu0 0.0
    %6175 = vmatprep.subr.mxu0 0.0
    %6176 = vmatpush1.msra.mxu0 0.0
    %6177 = vmatprep.subr.mxu0 0.0
    %6178 = vmatpush1.msra.mxu0 0.0
    %6179 = vmatprep.subr.mxu0 0.0
    %6180 = vmatpush1.msra.mxu0 0.0
    %6181 = vmatprep.subr.mxu0 0.0
    %6182 = vmatpush1.msra.mxu0 0.0
    %6183 = vmatprep.subr.mxu0 0.0
    %6184 = vmatpush1.msra.mxu0 0.0
    %6185 = vmatprep.subr.mxu0 0.0
    %6186 = vmatpush1.msra.mxu0 0.0
    %6187 = vmatprep.subr.mxu0 0.0
    %6188 = vmatpush1.msra.mxu0 0.0
    %6189 = vmatprep.subr.mxu0 0.0
    %6190 = vmatpush1.msra.mxu0 0.0
    %6191 = vmatprep.subr.mxu0 0.0
    %6192 = vmatpush1.msra.mxu0 0.0
    %6193 = vmatprep.subr.mxu0 0.0
    %6194 = vmatpush1.msra.mxu0 0.0
    %6195 = vmatprep.subr.mxu0 0.0
    %6196 = vmatpush1.msra.mxu0 0.0
    %6197 = vmatprep.subr.mxu0 0.0
    %6198 = vmatpush1.msra.mxu0 0.0
    %6199 = vmatprep.mubr.f32.mxu0 0.0
    %v6200 = vand.u32 %v5828, 4294901760
    %6201 = vmatmul.mubr.f32.gmra.mrb[0].mxu0 %v6200
    %v6202 = vpop.f32.mrb[0].mxu0
    %v6203 = vadd.f32 %v6128, %v6202
    %v6204 = vpop.f32.mrb[0].mxu0
    %6205 = vdwg.mxu0
    %6206 = vmatprep.subr.mxu0 0.0
    %6207 = vmatpush1.msra.mxu0 %v2656
    %6208 = vmatprep.subr.mxu0 0.0
    %6209 = vmatpush1.msra.mxu0 %v2657
    %6210 = vmatprep.subr.mxu0 0.0
    %6211 = vmatpush1.msra.mxu0 0.0
    %6212 = vmatprep.subr.mxu0 0.0
    %6213 = vmatpush1.msra.mxu0 0.0
    %6214 = vmatprep.subr.mxu0 0.0
    %6215 = vmatpush1.msra.mxu0 0.0
    %6216 = vmatprep.subr.mxu0 0.0
    %6217 = vmatpush1.msra.mxu0 0.0
    %6218 = vmatprep.subr.mxu0 0.0
    %6219 = vmatpush1.msra.mxu0 0.0
    %6220 = vmatprep.subr.mxu0 0.0
    %6221 = vmatpush1.msra.mxu0 0.0
    %6222 = vmatprep.subr.mxu0 0.0
    %6223 = vmatpush1.msra.mxu0 0.0
    %6224 = vmatprep.subr.mxu0 0.0
    %6225 = vmatpush1.msra.mxu0 0.0
    %6226 = vmatprep.subr.mxu0 0.0
    %6227 = vmatpush1.msra.mxu0 0.0
    %6228 = vmatprep.subr.mxu0 0.0
    %6229 = vmatpush1.msra.mxu0 0.0
    %6230 = vmatprep.subr.mxu0 0.0
    %6231 = vmatpush1.msra.mxu0 0.0
    %6232 = vmatprep.subr.mxu0 0.0
    %6233 = vmatpush1.msra.mxu0 0.0
    %6234 = vmatprep.subr.mxu0 0.0
    %6235 = vmatpush1.msra.mxu0 0.0
    %6236 = vmatprep.subr.mxu0 0.0
    %6237 = vmatpush1.msra.mxu0 0.0
    %6238 = vmatprep.subr.mxu0 0.0
    %6239 = vmatpush1.msra.mxu0 0.0
    %6240 = vmatprep.subr.mxu0 0.0
    %6241 = vmatpush1.msra.mxu0 0.0
    %6242 = vmatprep.subr.mxu0 0.0
    %6243 = vmatpush1.msra.mxu0 0.0
    %6244 = vmatprep.subr.mxu0 0.0
    %6245 = vmatpush1.msra.mxu0 0.0
    %6246 = vmatprep.subr.mxu0 0.0
    %6247 = vmatpush1.msra.mxu0 0.0
    %6248 = vmatprep.subr.mxu0 0.0
    %6249 = vmatpush1.msra.mxu0 0.0
    %6250 = vmatprep.subr.mxu0 0.0
    %6251 = vmatpush1.msra.mxu0 0.0
    %6252 = vmatprep.subr.mxu0 0.0
    %6253 = vmatpush1.msra.mxu0 0.0
    %6254 = vmatprep.subr.mxu0 0.0
    %6255 = vmatpush1.msra.mxu0 0.0
    %6256 = vmatprep.subr.mxu0 0.0
    %6257 = vmatpush1.msra.mxu0 0.0
    %6258 = vmatprep.subr.mxu0 0.0
    %6259 = vmatpush1.msra.mxu0 0.0
    %6260 = vmatprep.subr.mxu0 0.0
    %6261 = vmatpush1.msra.mxu0 0.0
    %6262 = vmatprep.subr.mxu0 0.0
    %6263 = vmatpush1.msra.mxu0 0.0
    %6264 = vmatprep.subr.mxu0 0.0
    %6265 = vmatpush1.msra.mxu0 0.0
    %6266 = vmatprep.subr.mxu0 0.0
    %6267 = vmatpush1.msra.mxu0 0.0
    %6268 = vmatprep.subr.mxu0 0.0
    %6269 = vmatpush1.msra.mxu0 0.0
    %6270 = vmatprep.mubr.f32.mxu0 0.0
    %v6271 = vand.u32 %v5828, 4294901760
    %6272 = vmatmul.mubr.f32.gmra.mrb[0].mxu0 %v6271
    %v6273 = vpop.f32.mrb[0].mxu0
    %v6274 = vadd.f32 %v6203, %v6273
    %v6275 = vpop.f32.mrb[0].mxu0
    %6276 = vdwg.mxu0
    %v6277 = vmul.f32 %v5825, %v6274
    %v6278 = vrot.slane %v6277, 4
    %v6279 = vadd.f32 %v6277, %v6278
    %v6280 = vrot.slane %v6279, 2
    %v6281 = vadd.f32 %v6279, %v6280
    %v6282 = vrot.slane %v6281, 1
    %v6283 = vadd.f32 %v6281, %v6282
    %vm6284 = vcmask 1040384
    %v6285 = vsel %vm6284, %v3570, %v4470
    %vm6286 = vcmask 1041408
    %v6287 = vsel %vm6286, %v6285, %v5383
    %vm6288 = vcmask 1042432
    %v6289 = vsel %vm6288, %v6287, %v6283
    %6290 = vst [vmem:[%s6] sm:$0xf] %v6289
    %v6291 = vadd.f32 %v23, %v2642
    %v6292 = vadd.f32 %v24, %v2647
    %v6293 = vmul.f32 %v6291, %v6291
    %v6294 = vmul.f32 %v6292, %v6292
    %v6295 = vsel %vm31, %v6293, 0.0
    %6296 = vadd.xlane.f32.xlu0 %v6295
    %v6297 = vpop.xlane.xlu0 %6296
    %v6298 = vsel %vm31, %v6294, 0.0
    %6299 = vadd.xlane.f32.xlu0 %v6298
    %v6300 = vpop.xlane.xlu0 %6299
    %v6301 = vmul.f32 %v6297, %v38
    %v6302 = vmul.f32 %v6300, %v38
    %v6303 = vadd.f32 %v6301, 1e-05
    %v6304 = vadd.f32 %v6302, 1e-05
    %v6305 = vrsqrt.pop %v6303
    %v6306 = vrsqrt.pop %v6304
    %v6307 = vmul.f32 %v6291, %v6305
    %v6308 = vmul.f32 %v6292, %v6306
    %v6309 = vlaneseq
    %v6310 = vshrl.u32 %v6309, 7
    %v6311 = vsub.s32 0, %v6310
    %v6312 = vrot.slane %v26, %v6311
    %v6313 = vmul.f32 %v6307, %v6312
    %v6314 = vmul.f32 %v6308, %v6312
    %v6315 = vld [vmem:[%s3] sm:$0xff]
    %v6316 = vld [vmem:[%s3 + $0x8] sm:$0xff]
    %v6317 = vld [vmem:[%s3 + $0x10] sm:$0xff]
    %v6318 = vld [vmem:[%s3 + $0x18] sm:$0xff]
    %v6319 = vld [vmem:[%s3 + $0x20] sm:$0xff]
    %v6320 = vld [vmem:[%s3 + $0x28] sm:$0xff]
    %v6321 = vld [vmem:[%s3 + $0x30] sm:$0xff]
    %v6322 = vld [vmem:[%s3 + $0x38] sm:$0xff]
    %v6324 = vsel %vm31, %v6313, 0
    %v6327 = vsel %vm31, %v6314, 0
    %6329 = vmatprep.subr.mxu0 %v6316
    %6330 = vmatpush1.msra.mxu0 %v6315
    %6331 = vmatprep.subr.mxu0 %v6318
    %6332 = vmatpush1.msra.mxu0 %v6317
    %6333 = vmatprep.subr.mxu0 %v6320
    %6334 = vmatpush1.msra.mxu0 %v6319
    %6335 = vmatprep.subr.mxu0 %v6322
    %6336 = vmatpush1.msra.mxu0 %v6321
    %6337 = vmatprep.subr.mxu0 0.0
    %6338 = vmatpush1.msra.mxu0 0.0
    %6339 = vmatprep.subr.mxu0 0.0
    %6340 = vmatpush1.msra.mxu0 0.0
    %6341 = vmatprep.subr.mxu0 0.0
    %6342 = vmatpush1.msra.mxu0 0.0
    %6343 = vmatprep.subr.mxu0 0.0
    %6344 = vmatpush1.msra.mxu0 0.0
    %6345 = vmatprep.subr.mxu0 0.0
    %6346 = vmatpush1.msra.mxu0 0.0
    %6347 = vmatprep.subr.mxu0 0.0
    %6348 = vmatpush1.msra.mxu0 0.0
    %6349 = vmatprep.subr.mxu0 0.0
    %6350 = vmatpush1.msra.mxu0 0.0
    %6351 = vmatprep.subr.mxu0 0.0
    %6352 = vmatpush1.msra.mxu0 0.0
    %6353 = vmatprep.subr.mxu0 0.0
    %6354 = vmatpush1.msra.mxu0 0.0
    %6355 = vmatprep.subr.mxu0 0.0
    %6356 = vmatpush1.msra.mxu0 0.0
    %6357 = vmatprep.subr.mxu0 0.0
    %6358 = vmatpush1.msra.mxu0 0.0
    %6359 = vmatprep.subr.mxu0 0.0
    %6360 = vmatpush1.msra.mxu0 0.0
    %6361 = vmatprep.subr.mxu0 0.0
    %6362 = vmatpush1.msra.mxu0 0.0
    %6363 = vmatprep.subr.mxu0 0.0
    %6364 = vmatpush1.msra.mxu0 0.0
    %6365 = vmatprep.subr.mxu0 0.0
    %6366 = vmatpush1.msra.mxu0 0.0
    %6367 = vmatprep.subr.mxu0 0.0
    %6368 = vmatpush1.msra.mxu0 0.0
    %6369 = vmatprep.subr.mxu0 0.0
    %6370 = vmatpush1.msra.mxu0 0.0
    %6371 = vmatprep.subr.mxu0 0.0
    %6372 = vmatpush1.msra.mxu0 0.0
    %6373 = vmatprep.subr.mxu0 0.0
    %6374 = vmatpush1.msra.mxu0 0.0
    %6375 = vmatprep.subr.mxu0 0.0
    %6376 = vmatpush1.msra.mxu0 0.0
    %6377 = vmatprep.subr.mxu0 0.0
    %6378 = vmatpush1.msra.mxu0 0.0
    %6379 = vmatprep.subr.mxu0 0.0
    %6380 = vmatpush1.msra.mxu0 0.0
    %6381 = vmatprep.subr.mxu0 0.0
    %6382 = vmatpush1.msra.mxu0 0.0
    %6383 = vmatprep.subr.mxu0 0.0
    %6384 = vmatpush1.msra.mxu0 0.0
    %6385 = vmatprep.subr.mxu0 0.0
    %6386 = vmatpush1.msra.mxu0 0.0
    %6387 = vmatprep.subr.mxu0 0.0
    %6388 = vmatpush1.msra.mxu0 0.0
    %6389 = vmatprep.subr.mxu0 0.0
    %6390 = vmatpush1.msra.mxu0 0.0
    %6391 = vmatprep.subr.mxu0 0.0
    %6392 = vmatpush1.msra.mxu0 0.0
    %6393 = vmatprep.mubr.f32.mxu0 0.0
    %6394 = vmatmul.mubr.f32.gmra.mrb[0].mxu0 %v6324
    %v6395 = vpop.f32.mrb[0].mxu0
    %v6396 = vadd.f32 0.0, %v6395
    %v6397 = vpop.f32.mrb[0].mxu0
    %v6398 = vadd.f32 0.0, %v6397
    %6399 = vmatprep.mubr.f32.mxu0 0.0
    %6400 = vmatmul.mubr.f32.gmra.mrb[0].mxu0 %v6327
    %v6401 = vpop.f32.mrb[0].mxu0
    %v6402 = vadd.f32 0.0, %v6401
    %v6403 = vpop.f32.mrb[0].mxu0
    %v6404 = vadd.f32 0.0, %v6403
    %6405 = vdwg.mxu0
    %v6406 = vxor.u32 %v6396, 2147483648
    %v6407 = vxor.u32 %v6402, 2147483648
    %v6408 = vmul.f32 %v6406, 1.442695
    %v6409 = vpow.pop %v6408
    %v6410 = vmul.f32 %v6407, 1.442695
    %v6411 = vpow.pop %v6410
    %v6412 = vadd.f32 %v6409, 1.0
    %v6413 = vadd.f32 %v6411, 1.0
    %v6414 = vrcp.pop %v6412
    %v6415 = vmul.f32 1.0, %v6414
    %v6416 = vrcp.pop %v6413
    %v6417 = vmul.f32 1.0, %v6416
    %v6418 = vmul.f32 %v6396, %v6415
    %v6419 = vmul.f32 %v6402, %v6417
    %v6420 = vmul.f32 %v6418, %v6398
    %v6421 = vmul.f32 %v6419, %v6404
    %v6422 = vld [vmem:[%s4 + $0x20] sm:$0xff]
    %v6423 = vld [vmem:[%s4 + $0x28] sm:$0xff]
    %v6424 = vld [vmem:[%s4 + $0x30] sm:$0xff]
    %v6425 = vld [vmem:[%s4 + $0x38] sm:$0xff]
    %v6426 = vld [vmem:[%s4 + $0x40] sm:$0xff]
    %v6427 = vld [vmem:[%s4 + $0x48] sm:$0xff]
    %v6428 = vld [vmem:[%s4 + $0x50] sm:$0xff]
    %v6429 = vld [vmem:[%s4 + $0x58] sm:$0xff]
    %v6430 = vld [vmem:[%s4 + $0x60] sm:$0xff]
    %v6431 = vld [vmem:[%s4 + $0x68] sm:$0xff]
    %v6432 = vld [vmem:[%s4 + $0x70] sm:$0xff]
    %v6433 = vld [vmem:[%s4 + $0x78] sm:$0xff]
    %v6434 = vld [vmem:[%s4 + $0x80] sm:$0xff]
    %v6435 = vld [vmem:[%s4 + $0x88] sm:$0xff]
    %v6436 = vld [vmem:[%s4 + $0x90] sm:$0xff]
    %v6437 = vld [vmem:[%s4 + $0x98] sm:$0xff]
    %6438 = vmatprep.subr.mxu0 0.0
    %6439 = vmatpush1.msra.mxu0 %v6422
    %6440 = vmatprep.subr.mxu0 0.0
    %6441 = vmatpush1.msra.mxu0 %v6423
    %6442 = vmatprep.subr.mxu0 0.0
    %6443 = vmatpush1.msra.mxu0 %v6424
    %6444 = vmatprep.subr.mxu0 0.0
    %6445 = vmatpush1.msra.mxu0 %v6425
    %6446 = vmatprep.subr.mxu0 0.0
    %6447 = vmatpush1.msra.mxu0 %v6426
    %6448 = vmatprep.subr.mxu0 0.0
    %6449 = vmatpush1.msra.mxu0 %v6427
    %6450 = vmatprep.subr.mxu0 0.0
    %6451 = vmatpush1.msra.mxu0 %v6428
    %6452 = vmatprep.subr.mxu0 0.0
    %6453 = vmatpush1.msra.mxu0 %v6429
    %6454 = vmatprep.subr.mxu0 0.0
    %6455 = vmatpush1.msra.mxu0 %v6430
    %6456 = vmatprep.subr.mxu0 0.0
    %6457 = vmatpush1.msra.mxu0 %v6431
    %6458 = vmatprep.subr.mxu0 0.0
    %6459 = vmatpush1.msra.mxu0 %v6432
    %6460 = vmatprep.subr.mxu0 0.0
    %6461 = vmatpush1.msra.mxu0 %v6433
    %6462 = vmatprep.subr.mxu0 0.0
    %6463 = vmatpush1.msra.mxu0 %v6434
    %6464 = vmatprep.subr.mxu0 0.0
    %6465 = vmatpush1.msra.mxu0 %v6435
    %6466 = vmatprep.subr.mxu0 0.0
    %6467 = vmatpush1.msra.mxu0 %v6436
    %6468 = vmatprep.subr.mxu0 0.0
    %6469 = vmatpush1.msra.mxu0 %v6437
    %6470 = vmatprep.subr.mxu0 0.0
    %6471 = vmatpush1.msra.mxu0 0.0
    %6472 = vmatprep.subr.mxu0 0.0
    %6473 = vmatpush1.msra.mxu0 0.0
    %6474 = vmatprep.subr.mxu0 0.0
    %6475 = vmatpush1.msra.mxu0 0.0
    %6476 = vmatprep.subr.mxu0 0.0
    %6477 = vmatpush1.msra.mxu0 0.0
    %6478 = vmatprep.subr.mxu0 0.0
    %6479 = vmatpush1.msra.mxu0 0.0
    %6480 = vmatprep.subr.mxu0 0.0
    %6481 = vmatpush1.msra.mxu0 0.0
    %6482 = vmatprep.subr.mxu0 0.0
    %6483 = vmatpush1.msra.mxu0 0.0
    %6484 = vmatprep.subr.mxu0 0.0
    %6485 = vmatpush1.msra.mxu0 0.0
    %6486 = vmatprep.subr.mxu0 0.0
    %6487 = vmatpush1.msra.mxu0 0.0
    %6488 = vmatprep.subr.mxu0 0.0
    %6489 = vmatpush1.msra.mxu0 0.0
    %6490 = vmatprep.subr.mxu0 0.0
    %6491 = vmatpush1.msra.mxu0 0.0
    %6492 = vmatprep.subr.mxu0 0.0
    %6493 = vmatpush1.msra.mxu0 0.0
    %6494 = vmatprep.subr.mxu0 0.0
    %6495 = vmatpush1.msra.mxu0 0.0
    %6496 = vmatprep.subr.mxu0 0.0
    %6497 = vmatpush1.msra.mxu0 0.0
    %6498 = vmatprep.subr.mxu0 0.0
    %6499 = vmatpush1.msra.mxu0 0.0
    %6500 = vmatprep.subr.mxu0 0.0
    %6501 = vmatpush1.msra.mxu0 0.0
    %6502 = vmatprep.mubr.f32.mxu0 0.0
    %6503 = vmatmul.mubr.f32.gmra.mrb[0].mxu0 %v6420
    %v6504 = vpop.f32.mrb[0].mxu0
    %v6505 = vadd.f32 0.0, %v6504
    %v6506 = vpop.f32.mrb[0].mxu0
    %6507 = vmatprep.mubr.f32.mxu0 0.0
    %6508 = vmatmul.mubr.f32.gmra.mrb[0].mxu0 %v6421
    %v6509 = vpop.f32.mrb[0].mxu0
    %v6510 = vadd.f32 0.0, %v6509
    %v6511 = vpop.f32.mrb[0].mxu0
    %6512 = vdwg.mxu0
    %v6513 = vadd.f32 %v6291, %v6505
    %v6514 = vadd.f32 %v6292, %v6510
    %6515 = vst.msk [vmem:[#allocation2] sm:$0xff] %vm31, %v6513
    %6516 = vst.msk [vmem:[#allocation2 + $0x8] sm:$0xff] %vm31, %v6514
    // Predicated region
    $region22: #{gla_block_forward.1} parent=1 // pred_check
      _
    $region23: #{gla_block_forward.1} parent=1 // pred_check_branch
      %6518 = sbr.rel (0) target = $region25
    $region24: #{gla_block_forward.1} parent=1 // pred_region
      %s6520 = ssub.s32 256, 256
      %6521 = vsyncadd [#allocation3], %s6520
      %s6522 = sshll.u32 [#allocation2], 4
      %s6523 = int_to_ptr.vmem [resolvable:$true] %s6522
      %6528 = dma.vmem_to_hbm [thread:$0]  %s6523, 256, %s5, [#allocation3], 128, 128, 8
    $region25: #{gla_block_forward.1} parent=1 // pred_fallthru
      _
    // Predicated region
    $region26: #{gla_block_forward.1} parent=1 // pred_check
      _
    $region27: #{gla_block_forward.1} parent=1 // pred_check_branch
      %6530 = sbr.rel (0) target = $region29
    $region28: #{gla_block_forward.1} parent=1 // pred_region
      _
    $region29: #{gla_block_forward.1} parent=1 // pred_fallthru
      _
    // Predicated region
    $region30: #{gla_block_forward.1} parent=1 // pred_check
      _
    $region31: #{gla_block_forward.1} parent=1 // pred_check_branch
      %6532 = sbr.rel (0) target = $region33
    $region32: #{gla_block_forward.1} parent=1 // pred_region
      %6533 = dma.done [#allocation3], 256
    $region33: #{gla_block_forward.1} parent=1 // pred_fallthru
      _
    // Predicated region
    $region34: #{gla_block_forward.1} parent=1 // pred_check
      _
    $region35: #{gla_block_forward.1} parent=1 // pred_check_branch
      %6535 = sbr.rel (0) target = $region37
    $region36: #{gla_block_forward.1} parent=1 // pred_region
      _
    $region37: #{gla_block_forward.1} parent=1 // pred_fallthru
      _
    %6536 = vsyncpa [#allocation3], 1

</llo_original>
